<compile_context>
chip_gen: v7x
topology: tpu7x:2x2x1
jax: 0.10.0
libtpu: 0.0.40
codegen_flags: <defaults>
</compile_context>

<pallas_src>
import jax
import jax.numpy as jnp
from jax.experimental import pallas as pl
from jax.experimental.pallas import tpu as pltpu


def _round_up(a: int, b: int) -> int:
    return pl.cdiv(a, b) * b


def _dir_encoding_kernel(x_ref, w_ref, o_ref):
    # x_ref: (tm_p, g*in_dim), w_ref: (g*in_dim, g*out_dim), o_ref: (tm_p, g*out_dim)
    z = jnp.dot(
        x_ref[...],
        w_ref[...],
        preferred_element_type=jnp.float32,
        precision=jax.lax.Precision.HIGHEST,  # small K; avoid 1-pass bf16 emulation error
    )
    # W already carries the 0.5 factor:  sigmoid(u)*2 - 1 == tanh(u/2)  (exact identity)
    o_ref[...] = jnp.sin(jnp.pi * jnp.tanh(z)).astype(o_ref.dtype)


def _packing_factor(in_dim: int, out_dim: int) -> int:
    """Rows packed per kernel row so the output minor dim is a multiple of 128 lanes."""
    if out_dim <= 128 and 128 % out_dim == 0:
        base = 128 // out_dim
        # Largest multiple of `base` keeping the packed x minor dim (g*in_dim) <= 128,
        # so the x tile is (nearly) lane-dense instead of padded ~10x.
        g = max(base, ((128 // in_dim) // base) * base) if in_dim <= 128 else base
        return g
    return 1  # out_dim already lane-dense (or awkward); no packing


def dir_encoding(x, B, *, max_block_rows=32768, min_rows_for_pallas=512, target_steps=8):
    """x: (N, in_dim) f32, B: (in_dim, out_dim) f32 -> (N, out_dim) f32."""
    assert x.ndim == 2, f"Expected 2D input (got {x.ndim}D input)"
    N, in_dim = x.shape
    in_dim_b, out_dim = B.shape
    assert in_dim == in_dim_b

    # Tiny problems are one vreg of work; pallas_call fixed overhead dwarfs compute there.
    if N < min_rows_for_pallas:
        return jnp.sin((jax.nn.sigmoid(x @ B) * 2.0 - 1.0) * jnp.pi)

    g = _packing_factor(in_dim, out_dim)
    row_group = g * 8  # original rows covered by one packed (8, *) sublane group

    # Pad only to a multiple of row_group (not a full block): the last grid step may be a
    # partial block, which Pallas masks on the store.  Padded rows map to sin(pi*tanh(0))=0
    # and are sliced off below, so they never pollute valid output.
    n_pad = _round_up(N, row_group)
    if n_pad != N:
        x = jnp.pad(x, ((0, n_pad - N), (0, 0)))

    # Packed operands:
    #   xp[r, i*in_dim + k] = x[r*g + i, k]     (free row-major reshape, no data reorder)
    #   W  = kron(I_g, 0.5*B)                   (block-diagonal, (g*in_dim, g*out_dim))
    # so (xp @ W)[r, j*out_dim + o] = 0.5 * sum_k x[r*g + j, k] * B[k, o].
    # NOTE: under jit this kron is constant-folded per B; if called eagerly in a hot loop,
    # hoist W construction out of the loop.
    xp = x.reshape(n_pad // g, g * in_dim)
    W = jnp.kron(jnp.eye(g, dtype=B.dtype), B * jnp.asarray(0.5, B.dtype))

    packed_rows = n_pad // g                      # multiple of 8 by construction
    max_tm_p = max(8, ((max_block_rows // g) // 8) * 8)

    # Aim for >= target_steps grid steps so the pipeline overlaps DMA and compute; cap the
    # tile by max_tm_p so big-N runs amortize the ~0.35us per-step overhead with large tiles.
    tm_p = min(max_tm_p, max(8, _round_up(pl.cdiv(packed_rows, target_steps), 8)))
    grid_steps = pl.cdiv(packed_rows, tm_p)
    # Best-effort: prefer an even step count so v7x shards tiles across both TensorCores.
    if grid_steps > 1 and grid_steps % 2 == 1:
        tm_p_even = max(8, _round_up(pl.cdiv(packed_rows, grid_steps + 1), 8))
        if pl.cdiv(packed_rows, tm_p_even) % 2 == 0:
            tm_p = tm_p_even
    grid_steps = pl.cdiv(packed_rows, tm_p)

    # VMEM budget: 2x double-buffered x tile + 2x out tile + resident W, with headroom.
    tile_bytes = 2 * tm_p * (g * in_dim + g * out_dim) * 4 + (g * in_dim) * (g * out_dim) * 4
    vmem_limit = min(96 * 1024 * 1024, max(32 * 1024 * 1024, 2 * tile_bytes))

    out_p = pl.pallas_call(
        _dir_encoding_kernel,
        out_shape=jax.ShapeDtypeStruct((packed_rows, g * out_dim), x.dtype),
        grid_spec=pltpu.PrefetchScalarGridSpec(
            num_scalar_prefetch=0,
            grid=(grid_steps,),
            in_specs=[
                pl.BlockSpec((tm_p, g * in_dim), lambda i: (i, 0)),
                pl.BlockSpec((g * in_dim, g * out_dim), lambda i: (0, 0)),  # resident W
            ],
            out_specs=pl.BlockSpec((tm_p, g * out_dim), lambda i: (i, 0)),
        ),
        compiler_params=pltpu.CompilerParams(
            dimension_semantics=("parallel",),  # independent row tiles -> megacore on v7x
            vmem_limit_bytes=vmem_limit,
        ),
    )(xp, W)

    out = out_p.reshape(n_pad, out_dim)
    # TODO(synk): callers that can consume a row_group-padded output should skip this slice
    # (it re-reads/re-writes the whole output outside the kernel on ragged N).
    return out[:N] if n_pad != N else out


def dir_encoding_ref(x, B):
    z = jnp.einsum("nk,ko->no", x, B, precision=jax.lax.Precision.HIGHEST)
    return jnp.sin((jax.nn.sigmoid(z) * 2.0 - 1.0) * jnp.pi)


if __name__ == "__main__":
    key = jax.random.PRNGKey(0)
    k_b, k_x1, k_x2, k_x3 = jax.random.split(key, 4)

    # Module hyperparameters (direction encoder): small feature dims, modest row counts.
    in_dim, out_dim, scale = 3, 32, 25.0
    B = jax.random.normal(k_b, (in_dim, out_dim), dtype=jnp.float32) * scale

    # Case 1: multi-step pipelined path (grid of several row tiles).
    N1 = 4096
    x1 = jax.random.normal(k_x1, (N1, in_dim), dtype=jnp.float32)
    out1 = jax.block_until_ready(dir_encoding(x1, B))
    ref1 = dir_encoding_ref(x1, B)
    assert out1.shape == (N1, out_dim)
    assert jnp.allclose(out1, ref1, atol=1e-4, rtol=1e-4), "mismatch vs reference (case 1)"

    # Case 2: ragged N (exercises the row_group padding + partial last block + slice path).
    N2 = 2500
    x2 = jax.random.normal(k_x2, (N2, in_dim), dtype=jnp.float32)
    out2 = jax.block_until_ready(dir_encoding(x2, B))
    ref2 = dir_encoding_ref(x2, B)
    assert out2.shape == (N2, out_dim)
    assert jnp.allclose(out2, ref2, atol=1e-4, rtol=1e-4), "mismatch vs reference (case 2)"

    # Case 3: tiny N -> XLA fallback path.
    N3 = 200
    x3 = jax.random.normal(k_x3, (N3, in_dim), dtype=jnp.float32)
    out3 = jax.block_until_ready(dir_encoding(x3, B))
    ref3 = dir_encoding_ref(x3, B)
    assert out3.shape == (N3, out_dim)
    assert jnp.allclose(out3, ref3, atol=1e-4, rtol=1e-4), "mismatch vs reference (case 3)"

    print("KERNEL_OK")
</pallas_src>

<mosaic_0001>
module attributes {stable_mosaic.version = 11 : i64} {
  func.func @_dir_encoding_kernel(%arg0: i32, %arg1: memref<16x120xf32, #tpu.memory_space<vmem>>, %arg2: memref<120x1280xf32, #tpu.memory_space<vmem>>, %arg3: memref<16x1280xf32, #tpu.memory_space<vmem>>) attributes {dimension_semantics = [#tpu.dimension_semantics<parallel>], iteration_bounds = array<i64: 7>, scalar_prefetch = 0 : i64, scratch_operands = 0 : i64, tpu.core_type = #tpu.core_type<tc>, window_params = [{transform_indices = @transform_0, window_bounds = array<i64: 16, 120>}, {pipeline_mode = #tpu.pipeline_mode<synchronous>, transform_indices = @transform_1, window_bounds = array<i64: 120, 1280>}, {transform_indices = @transform_2, window_bounds = array<i64: 16, 1280>}]} {
    %c0 = arith.constant 0 : index
    %c0_0 = arith.constant 0 : index
    %0 = vector.load %arg1[%c0, %c0_0] : memref<16x120xf32, #tpu.memory_space<vmem>>, vector<16x120xf32>
    %c0_1 = arith.constant 0 : index
    %c0_2 = arith.constant 0 : index
    %1 = vector.load %arg2[%c0_1, %c0_2] : memref<120x1280xf32, #tpu.memory_space<vmem>>, vector<120x1280xf32>
    %cst = arith.constant dense<0.000000e+00> : vector<16x1280xf32>
    %2 = tpu.matmul %0, %1, %cst {dimension_numbers = #tpu.dot_dimension_numbers<[1], [0], [0], [1], [0, 0, 1, 1], [], []>, precision = #tpu.contract_precision<fp32>} : vector<16x120xf32>, vector<120x1280xf32>, vector<16x1280xf32> -> vector<16x1280xf32>
    %3 = math.tanh %2 : vector<16x1280xf32>
    %cst_3 = arith.constant 3.14159274 : f32
    %4 = vector.broadcast %cst_3 : f32 to vector<16x1280xf32>
    %5 = arith.mulf %4, %3 : vector<16x1280xf32>
    %6 = math.sin %5 : vector<16x1280xf32>
    %c0_4 = arith.constant 0 : index
    %c0_5 = arith.constant 0 : index
    %7 = vector.load %arg3[%c0_4, %c0_5] : memref<16x1280xf32, #tpu.memory_space<vmem>>, vector<16x1280xf32>
    tpu.vector_store %arg3[%c0_4, %c0_5], %6 {strides = array<i32>} : memref<16x1280xf32, #tpu.memory_space<vmem>>, vector<16x1280xf32>,
    return
  }
  func.func @transform_0(%arg0: i32) -> (i32, i32) {
    %c0_i32 = arith.constant 0 : i32
    %c0_i32_0 = arith.constant 0 : i32
    return %arg0, %c0_i32 : i32, i32
  }
  func.func @transform_1(%arg0: i32) -> (i32, i32) {
    %c0_i32 = arith.constant 0 : i32
    %c0_i32_0 = arith.constant 0 : i32
    %c0_i32_1 = arith.constant 0 : i32
    return %c0_i32, %c0_i32_0 : i32, i32
  }
  func.func @transform_2(%arg0: i32) -> (i32, i32) {
    %c0_i32 = arith.constant 0 : i32
    %c0_i32_0 = arith.constant 0 : i32
    return %arg0, %c0_i32 : i32, i32
  }
}

</mosaic_0001>

<llo_original>
// kernel: tpu_custom_call.1
$region0: #{tpu_custom_call.1}
  #allocation0 [shape = 'u32[]', space=smem, size = 0x4, offset = 0x4, fixed_abs, tag = 'smem constant byte address 0x4 - core index']
  #allocation1 [shape = 'u32[144,128]{1,0:T(1,128)}', space=vmem, size = 0x12000, scoped, tag = 'internal scratch']
  %s0 = inlined_call_operand.hbm [shape: f32[104,120], index: 0, kind: input, shape index: {}]
  %s1 = inlined_call_operand.hbm [shape: f32[120,1280], index: 1, kind: input, shape index: {}]
  %s2 = inlined_call_operand.hbm [shape: f32[104,1280], index: 2, kind: output, shape index: {}]
  %s3 = sld [smem:[#allocation0]]
  $region49: #{tpu_custom_call.1} parent=0
    _
  %s5 = ssub.s32 1, %s3
  %s6 = scalar_select 0, %s5, %s3
  $region1: #{tpu_custom_call.1} parent=0
    #allocation2 [shape = 'u8[16384]{0}', space=vmem, size = 0x4000, scoped, tag = 'input window, operand 0']
    #allocation3 [shape = 's32[2]{0}', space=sflag, size = 0x8, scoped, tag = 'scoped memory for tpu_custom_call.1']
    #allocation4 [shape = 's32[2]{0}', space=sflag, size = 0x8, scoped, tag = 'scoped memory for tpu_custom_call.1']
    #allocation5 [shape = 'u8[614400]{0}', space=vmem, size = 0x96000, scoped, tag = 'input window, operand 1, single buffered']
    #allocation6 [shape = 's32[1]{0}', space=sflag, size = 0x4, scoped, tag = 'scoped memory for tpu_custom_call.1']
    #allocation7 [shape = 'u8[163840]{0}', space=vmem, size = 0x28000, scoped, tag = 'output window, operand 0']
    %7 = vsyncpa [#allocation3], 0
    %s8 = scalar_lea.sflag [#allocation3], 1
    %9 = vsyncpa %s8, 0
    %10 = vsyncpa [#allocation6], 0
    %11 = vsyncpa [#allocation4], 0
    %s12 = scalar_lea.sflag [#allocation4], 1
    %13 = vsyncpa %s12, 0
    loop: start=0, step=1, limit=9
    $region2: #{tpu_custom_call.1} parent=1 // loop_pre_header
      _
    $region3: #{tpu_custom_call.1} parent=1 // loop_header
      %s15 = sphi 0, %s19
      %p16 = scmp.ge.s32.totalorder %s15, 9
      %s25 = sphi 0, %s27
      %s28 = sphi 0, %s25
      %s29 = sphi 0, %s28
      %s45 = sphi 0, %s29
      %s49 = sphi 0, %s49
      %s51 = sphi 0, %s49
      %s52 = sphi 0, %s51
      %s66 = sphi 0, %s52
      %s72 = sphi 0, %s74
      %s75 = sphi 0, %s72
      %s76 = sphi 0, %s75
      %s92 = sphi 0, %s76
    $region4: #{tpu_custom_call.1} parent=1 // loop_header_branch
      %18 = sbr.rel (%p16) target = $region8
    $region5: #{tpu_custom_call.1} parent=1 // loop_body
      %s20 = ssub.s32 %s15, 1
      %s21 = ssub.s32 %s15, 2
      %s22 = sadd.s32 %s15, 1
      %s23 = ssub.s32 %s15, %s22
      %p24 = scmp.eq.s32.totalorder %s23, 0
      %s26 = sadd.s32 %s25, 1
      %s27 = scalar_select %p24, %s25, %s26
      %p30 = pneg %p24
      %p31 = scmp.eq.s32.totalorder %s15, 6
      %p32 = por %p30, %p31
      %p33 = scmp.ne.s32.totalorder %s25, %s28
      %p34 = scmp.eq.s32.totalorder %s15, 0
      %p35 = por %p33, %p34
      %p36 = scmp.ne.s32.totalorder %s25, %s28
      %p37 = scmp.eq.s32.totalorder %s20, 6
      %p38 = por %p36, %p37
      %p39 = scmp.ne.s32.totalorder %s28, %s29
      %p40 = scmp.eq.s32.totalorder %s20, 0
      %p41 = por %p39, %p40
      %p42 = scmp.ne.s32.totalorder %s28, %s29
      %p43 = scmp.eq.s32.totalorder %s21, 6
      %p44 = por %p42, %p43
      %p46 = scmp.ne.s32.totalorder %s29, %s45
      %p47 = scmp.eq.s32.totalorder %s21, 0
      %p48 = por %p46, %p47
      %s50 = sadd.s32 %s49, 1
      %p53 = scmp.eq.s32.totalorder %s15, 6
      %p54 = scmp.ne.s32.totalorder %s49, %s51
      %p55 = scmp.eq.s32.totalorder %s15, 0
      %p56 = por %p54, %p55
      %p57 = scmp.ne.s32.totalorder %s49, %s51
      %p58 = scmp.eq.s32.totalorder %s20, 6
      %p59 = por %p57, %p58
      %p60 = scmp.ne.s32.totalorder %s51, %s52
      %p61 = scmp.eq.s32.totalorder %s20, 0
      %p62 = por %p60, %p61
      %p63 = scmp.ne.s32.totalorder %s51, %s52
      %p64 = scmp.eq.s32.totalorder %s21, 6
      %p65 = por %p63, %p64
      %p67 = scmp.ne.s32.totalorder %s52, %s66
      %p68 = scmp.eq.s32.totalorder %s21, 0
      %p69 = por %p67, %p68
      %s70 = ssub.s32 %s15, %s22
      %p71 = scmp.eq.s32.totalorder %s70, 0
      %s73 = sadd.s32 %s72, 1
      %s74 = scalar_select %p71, %s72, %s73
      %p77 = pneg %p71
      %p78 = scmp.eq.s32.totalorder %s15, 6
      %p79 = por %p77, %p78
      %p80 = scmp.ne.s32.totalorder %s72, %s75
      %p81 = scmp.eq.s32.totalorder %s15, 0
      %p82 = por %p80, %p81
      %p83 = scmp.ne.s32.totalorder %s72, %s75
      %p84 = scmp.eq.s32.totalorder %s20, 6
      %p85 = por %p83, %p84
      %p86 = scmp.ne.s32.totalorder %s75, %s76
      %p87 = scmp.eq.s32.totalorder %s20, 0
      %p88 = por %p86, %p87
      %p89 = scmp.ne.s32.totalorder %s75, %s76
      %p90 = scmp.eq.s32.totalorder %s21, 6
      %p91 = por %p89, %p90
      %p93 = scmp.ne.s32.totalorder %s76, %s92
      %p94 = scmp.eq.s32.totalorder %s21, 0
      %p95 = por %p93, %p94
      %p96 = scmp.le.s32.totalorder 1, %s15
      %p97 = scmp.lt.s32.totalorder %s15, 8
      %p98 = pnand %p96, %p97
      %p99 = pneg %p98
      // Predicated region
      $region9: #{tpu_custom_call.1} parent=5 // pred_check
        _
      $region10: #{tpu_custom_call.1} parent=5 // pred_check_branch
        %101 = sbr.rel (%p98) target = $region12
      $region11: #{tpu_custom_call.1} parent=5 // pred_region
        %s102 = ssub.s32 %s15, 1
        // Predicated region
        $region13: #{tpu_custom_call.1} parent=11 // pred_check
          %p103 = pneg %p62
        $region14: #{tpu_custom_call.1} parent=11 // pred_check_branch
          %105 = sbr.rel (%p103) target = $region16
        $region15: #{tpu_custom_call.1} parent=11 // pred_region
          %s107 = ssub.s32 19200, 19200
          %108 = vsyncadd [#allocation6], %s107
          %s109 = sshll.u32 [#allocation5], 4
          %s110 = int_to_ptr.vmem [resolvable:$true] %s109
          %115 = dma.hbm_to_vmem [thread:$0]  %s1, 19200, %s110, [#allocation6], 1280, 1280, 80
        $region16: #{tpu_custom_call.1} parent=11 // pred_fallthru
          _
      $region12: #{tpu_custom_call.1} parent=5 // pred_fallthru
        _
      %p116 = scmp.lt.s32.totalorder %s15, 7
      // Predicated region
      $region17: #{tpu_custom_call.1} parent=5 // pred_check
        %p117 = pneg %p116
      $region18: #{tpu_custom_call.1} parent=5 // pred_check_branch
        %119 = sbr.rel (%p117) target = $region20
      $region19: #{tpu_custom_call.1} parent=5 // pred_region
        // Predicated region
        $region21: #{tpu_custom_call.1} parent=19 // pred_check
          %p120 = pneg %p35
        $region22: #{tpu_custom_call.1} parent=19 // pred_check_branch
          %122 = sbr.rel (%p120) target = $region24
        $region23: #{tpu_custom_call.1} parent=19 // pred_region
          %s123 = sand.u32 %s25, 1
          %s124 = scalar_lea.sflag [#allocation3], %s123
          %s125 = sand.u32 %s25, 1
          %s126 = smul.addr %s125, 16
          %s127 = scalar_lea.vmem [#allocation2], %s126
          %s128 = smul.u32 2, %s15
          %s129 = ssub.s32 13, %s128
          %p130 = scmp.lt.s32.totalorder %s129, 2
          %s131 = scalar_select %p130, %s129, 2
          %s132 = smul.u32 128, %s131
          %s134 = ssub.s32 256, %s132
          %135 = vsyncadd %s124, %s134
          %p136 = scmp.ne.s32.totalorder 0, %s132
          %s137 = smul.addr %s128, 128
          %s138 = scalar_lea.hbm %s0, %s137
          %s139 = smul.u32 8, %s131
          %s140 = sshll.u32 %s127, 4
          %s141 = int_to_ptr.vmem [resolvable:$true] %s140
          %s142 = sshll.u32 %s139, 4
          %146 = dma.hbm_to_vmem [thread:$0]  (%p136), %s138, %s142, %s141, %s124, 128, 128, 8
        $region24: #{tpu_custom_call.1} parent=19 // pred_fallthru
          _
      $region20: #{tpu_custom_call.1} parent=5 // pred_fallthru
        _
      %p147 = scmp.le.s32.totalorder 1, %s15
      %p148 = scmp.lt.s32.totalorder %s15, 8
      %p149 = pnand %p147, %p148
      %p150 = pneg %p149
      // Predicated region
      $region25: #{tpu_custom_call.1} parent=5 // pred_check
        _
      $region26: #{tpu_custom_call.1} parent=5 // pred_check_branch
        %152 = sbr.rel (%p149) target = $region28
      $region27: #{tpu_custom_call.1} parent=5 // pred_region
        %s153 = ssub.s32 %s15, 1
        %s154 = sand.u32 %s28, 1
        %s155 = scalar_lea.sflag [#allocation3], %s154
        %s156 = sand.u32 %s28, 1
        %s157 = smul.addr %s156, 16
        %s158 = scalar_lea.vmem [#allocation2], %s157
        // Predicated region
        $region29: #{tpu_custom_call.1} parent=27 // pred_check
          %p159 = pneg %p41
        $region30: #{tpu_custom_call.1} parent=27 // pred_check_branch
          %161 = sbr.rel (%p159) target = $region32
        $region31: #{tpu_custom_call.1} parent=27 // pred_region
          %162 = dma.done %s155, 256
        $region32: #{tpu_custom_call.1} parent=27 // pred_fallthru
          _
        // Predicated region
        $region33: #{tpu_custom_call.1} parent=27 // pred_check
          %p163 = pneg %p62
        $region34: #{tpu_custom_call.1} parent=27 // pred_check_branch
          %165 = sbr.rel (%p163) target = $region36
        $region35: #{tpu_custom_call.1} parent=27 // pred_region
          %166 = dma.done [#allocation6], 19200
        $region36: #{tpu_custom_call.1} parent=27 // pred_fallthru
          _
        %s167 = sand.u32 %s28, 1
        %s168 = scalar_lea.sflag [#allocation3], %s167
        %s169 = sand.u32 %s28, 1
        %s170 = smul.addr %s169, 16
        %s171 = scalar_lea.vmem [#allocation2], %s170
        %p172 = pneg %p41
        %p173 = pneg %p38
        %p174 = pneg %p62
        %p175 = pneg %p59
        %p176 = pneg %p88
        %p177 = pneg %p85
        %s178 = sand.u32 %s75, 1
        %s179 = scalar_lea.sflag [#allocation4], %s178
        %s180 = sand.u32 %s75, 1
        %s181 = smul.addr %s180, 160
        %s182 = scalar_lea.vmem [#allocation7], %s181
        %s183 = smul.u32 2, %s20
        %s184 = ssub.s32 13, %s183
        %p185 = scmp.lt.s32.totalorder %s184, 2
        %s186 = scalar_select %p185, %s184, 2
        %s187 = smul.u32 128, %s186
        %s188 = smul.u32 2, %s20
        %s189 = ssub.s32 13, %s188
        %p190 = scmp.lt.s32.totalorder %s189, 2
        %s191 = scalar_select %p190, %s189, 2
        %s192 = smul.u32 128, %s191
        %s193 = smul.u32 %s192, 10
        %v194 = vld [vmem:[%s158] sm:$0xff]
        %v195 = vld [vmem:[%s158 + $0x8] sm:$0xff]
        %v196 = vld [vmem:[#allocation5] sm:$0xff]
        %v197 = vld [vmem:[#allocation5 + $0x8] sm:$0xff]
        %v198 = vld [vmem:[#allocation5 + $0x10] sm:$0xff]
        %v199 = vld [vmem:[#allocation5 + $0x18] sm:$0xff]
        %v200 = vld [vmem:[#allocation5 + $0x20] sm:$0xff]
        %v201 = vld [vmem:[#allocation5 + $0x28] sm:$0xff]
        %v202 = vld [vmem:[#allocation5 + $0x30] sm:$0xff]
        %v203 = vld [vmem:[#allocation5 + $0x38] sm:$0xff]
        %v204 = vld [vmem:[#allocation5 + $0x40] sm:$0xff]
        %v205 = vld [vmem:[#allocation5 + $0x48] sm:$0xff]
        %v206 = vld [vmem:[#allocation5 + $0x50] sm:$0xff]
        %v207 = vld [vmem:[#allocation5 + $0x58] sm:$0xff]
        %v208 = vld [vmem:[#allocation5 + $0x60] sm:$0xff]
        %v209 = vld [vmem:[#allocation5 + $0x68] sm:$0xff]
        %v210 = vld [vmem:[#allocation5 + $0x70] sm:$0xff]
        %v211 = vld [vmem:[#allocation5 + $0x78] sm:$0xff]
        %v212 = vld [vmem:[#allocation5 + $0x80] sm:$0xff]
        %v213 = vld [vmem:[#allocation5 + $0x88] sm:$0xff]
        %v214 = vld [vmem:[#allocation5 + $0x90] sm:$0xff]
        %v215 = vld [vmem:[#allocation5 + $0x98] sm:$0xff]
        %v216 = vld [vmem:[#allocation5 + $0xa0] sm:$0xff]
        %v217 = vld [vmem:[#allocation5 + $0xa8] sm:$0xff]
        %v218 = vld [vmem:[#allocation5 + $0xb0] sm:$0xff]
        %v219 = vld [vmem:[#allocation5 + $0xb8] sm:$0xff]
        %v220 = vld [vmem:[#allocation5 + $0xc0] sm:$0xff]
        %v221 = vld [vmem:[#allocation5 + $0xc8] sm:$0xff]
        %v222 = vld [vmem:[#allocation5 + $0xd0] sm:$0xff]
        %v223 = vld [vmem:[#allocation5 + $0xd8] sm:$0xff]
        %v224 = vld [vmem:[#allocation5 + $0xe0] sm:$0xff]
        %v225 = vld [vmem:[#allocation5 + $0xe8] sm:$0xff]
        %v226 = vld [vmem:[#allocation5 + $0xf0] sm:$0xff]
        %v227 = vld [vmem:[#allocation5 + $0xf8] sm:$0xff]
        %v228 = vld [vmem:[#allocation5 + $0x100] sm:$0xff]
        %v229 = vld [vmem:[#allocation5 + $0x108] sm:$0xff]
        %v230 = vld [vmem:[#allocation5 + $0x110] sm:$0xff]
        %v231 = vld [vmem:[#allocation5 + $0x118] sm:$0xff]
        %v232 = vld [vmem:[#allocation5 + $0x120] sm:$0xff]
        %v233 = vld [vmem:[#allocation5 + $0x128] sm:$0xff]
        %v234 = vld [vmem:[#allocation5 + $0x130] sm:$0xff]
        %v235 = vld [vmem:[#allocation5 + $0x138] sm:$0xff]
        %v236 = vld [vmem:[#allocation5 + $0x140] sm:$0xff]
        %v237 = vld [vmem:[#allocation5 + $0x148] sm:$0xff]
        %v238 = vld [vmem:[#allocation5 + $0x150] sm:$0xff]
        %v239 = vld [vmem:[#allocation5 + $0x158] sm:$0xff]
        %v240 = vld [vmem:[#allocation5 + $0x160] sm:$0xff]
        %v241 = vld [vmem:[#allocation5 + $0x168] sm:$0xff]
        %v242 = vld [vmem:[#allocation5 + $0x170] sm:$0xff]
        %v243 = vld [vmem:[#allocation5 + $0x178] sm:$0xff]
        %v244 = vld [vmem:[#allocation5 + $0x180] sm:$0xff]
        %v245 = vld [vmem:[#allocation5 + $0x188] sm:$0xff]
        %v246 = vld [vmem:[#allocation5 + $0x190] sm:$0xff]
        %v247 = vld [vmem:[#allocation5 + $0x198] sm:$0xff]
        %v248 = vld [vmem:[#allocation5 + $0x1a0] sm:$0xff]
        %v249 = vld [vmem:[#allocation5 + $0x1a8] sm:$0xff]
        %v250 = vld [vmem:[#allocation5 + $0x1b0] sm:$0xff]
        %v251 = vld [vmem:[#allocation5 + $0x1b8] sm:$0xff]
        %v252 = vld [vmem:[#allocation5 + $0x1c0] sm:$0xff]
        %v253 = vld [vmem:[#allocation5 + $0x1c8] sm:$0xff]
        %v254 = vld [vmem:[#allocation5 + $0x1d0] sm:$0xff]
        %v255 = vld [vmem:[#allocation5 + $0x1d8] sm:$0xff]
        %v256 = vld [vmem:[#allocation5 + $0x1e0] sm:$0xff]
        %v257 = vld [vmem:[#allocation5 + $0x1e8] sm:$0xff]
        %v258 = vld [vmem:[#allocation5 + $0x1f0] sm:$0xff]
        %v259 = vld [vmem:[#allocation5 + $0x1f8] sm:$0xff]
        %v260 = vld [vmem:[#allocation5 + $0x200] sm:$0xff]
        %v261 = vld [vmem:[#allocation5 + $0x208] sm:$0xff]
        %v262 = vld [vmem:[#allocation5 + $0x210] sm:$0xff]
        %v263 = vld [vmem:[#allocation5 + $0x218] sm:$0xff]
        %v264 = vld [vmem:[#allocation5 + $0x220] sm:$0xff]
        %v265 = vld [vmem:[#allocation5 + $0x228] sm:$0xff]
        %v266 = vld [vmem:[#allocation5 + $0x230] sm:$0xff]
        %v267 = vld [vmem:[#allocation5 + $0x238] sm:$0xff]
        %v268 = vld [vmem:[#allocation5 + $0x240] sm:$0xff]
        %v269 = vld [vmem:[#allocation5 + $0x248] sm:$0xff]
        %v270 = vld [vmem:[#allocation5 + $0x250] sm:$0xff]
        %v271 = vld [vmem:[#allocation5 + $0x258] sm:$0xff]
        %v272 = vld [vmem:[#allocation5 + $0x260] sm:$0xff]
        %v273 = vld [vmem:[#allocation5 + $0x268] sm:$0xff]
        %v274 = vld [vmem:[#allocation5 + $0x270] sm:$0xff]
        %v275 = vld [vmem:[#allocation5 + $0x278] sm:$0xff]
        %v276 = vld [vmem:[#allocation5 + $0x280] sm:$0xff]
        %v277 = vld [vmem:[#allocation5 + $0x288] sm:$0xff]
        %v278 = vld [vmem:[#allocation5 + $0x290] sm:$0xff]
        %v279 = vld [vmem:[#allocation5 + $0x298] sm:$0xff]
        %v280 = vld [vmem:[#allocation5 + $0x2a0] sm:$0xff]
        %v281 = vld [vmem:[#allocation5 + $0x2a8] sm:$0xff]
        %v282 = vld [vmem:[#allocation5 + $0x2b0] sm:$0xff]
        %v283 = vld [vmem:[#allocation5 + $0x2b8] sm:$0xff]
        %v284 = vld [vmem:[#allocation5 + $0x2c0] sm:$0xff]
        %v285 = vld [vmem:[#allocation5 + $0x2c8] sm:$0xff]
        %v286 = vld [vmem:[#allocation5 + $0x2d0] sm:$0xff]
        %v287 = vld [vmem:[#allocation5 + $0x2d8] sm:$0xff]
        %v288 = vld [vmem:[#allocation5 + $0x2e0] sm:$0xff]
        %v289 = vld [vmem:[#allocation5 + $0x2e8] sm:$0xff]
        %v290 = vld [vmem:[#allocation5 + $0x2f0] sm:$0xff]
        %v291 = vld [vmem:[#allocation5 + $0x2f8] sm:$0xff]
        %v292 = vld [vmem:[#allocation5 + $0x300] sm:$0xff]
        %v293 = vld [vmem:[#allocation5 + $0x308] sm:$0xff]
        %v294 = vld [vmem:[#allocation5 + $0x310] sm:$0xff]
        %v295 = vld [vmem:[#allocation5 + $0x318] sm:$0xff]
        %v296 = vld [vmem:[#allocation5 + $0x320] sm:$0xff]
        %v297 = vld [vmem:[#allocation5 + $0x328] sm:$0xff]
        %v298 = vld [vmem:[#allocation5 + $0x330] sm:$0xff]
        %v299 = vld [vmem:[#allocation5 + $0x338] sm:$0xff]
        %v300 = vld [vmem:[#allocation5 + $0x340] sm:$0xff]
        %v301 = vld [vmem:[#allocation5 + $0x348] sm:$0xff]
        %v302 = vld [vmem:[#allocation5 + $0x350] sm:$0xff]
        %v303 = vld [vmem:[#allocation5 + $0x358] sm:$0xff]
        %v304 = vld [vmem:[#allocation5 + $0x360] sm:$0xff]
        %v305 = vld [vmem:[#allocation5 + $0x368] sm:$0xff]
        %v306 = vld [vmem:[#allocation5 + $0x370] sm:$0xff]
        %v307 = vld [vmem:[#allocation5 + $0x378] sm:$0xff]
        %v308 = vld [vmem:[#allocation5 + $0x380] sm:$0xff]
        %v309 = vld [vmem:[#allocation5 + $0x388] sm:$0xff]
        %v310 = vld [vmem:[#allocation5 + $0x390] sm:$0xff]
        %v311 = vld [vmem:[#allocation5 + $0x398] sm:$0xff]
        %v312 = vld [vmem:[#allocation5 + $0x3a0] sm:$0xff]
        %v313 = vld [vmem:[#allocation5 + $0x3a8] sm:$0xff]
        %v314 = vld [vmem:[#allocation5 + $0x3b0] sm:$0xff]
        %v315 = vld [vmem:[#allocation5 + $0x3b8] sm:$0xff]
        %v316 = vld [vmem:[#allocation5 + $0x3c0] sm:$0xff]
        %v317 = vld [vmem:[#allocation5 + $0x3c8] sm:$0xff]
        %v318 = vld [vmem:[#allocation5 + $0x3d0] sm:$0xff]
        %v319 = vld [vmem:[#allocation5 + $0x3d8] sm:$0xff]
        %v320 = vld [vmem:[#allocation5 + $0x3e0] sm:$0xff]
        %v321 = vld [vmem:[#allocation5 + $0x3e8] sm:$0xff]
        %v322 = vld [vmem:[#allocation5 + $0x3f0] sm:$0xff]
        %v323 = vld [vmem:[#allocation5 + $0x3f8] sm:$0xff]
        %v324 = vld [vmem:[#allocation5 + $0x400] sm:$0xff]
        %v325 = vld [vmem:[#allocation5 + $0x408] sm:$0xff]
        %v326 = vld [vmem:[#allocation5 + $0x410] sm:$0xff]
        %v327 = vld [vmem:[#allocation5 + $0x418] sm:$0xff]
        %v328 = vld [vmem:[#allocation5 + $0x420] sm:$0xff]
        %v329 = vld [vmem:[#allocation5 + $0x428] sm:$0xff]
        %v330 = vld [vmem:[#allocation5 + $0x430] sm:$0xff]
        %v331 = vld [vmem:[#allocation5 + $0x438] sm:$0xff]
        %v332 = vld [vmem:[#allocation5 + $0x440] sm:$0xff]
        %v333 = vld [vmem:[#allocation5 + $0x448] sm:$0xff]
        %v334 = vld [vmem:[#allocation5 + $0x450] sm:$0xff]
        %v335 = vld [vmem:[#allocation5 + $0x458] sm:$0xff]
        %v336 = vld [vmem:[#allocation5 + $0x460] sm:$0xff]
        %v337 = vld [vmem:[#allocation5 + $0x468] sm:$0xff]
        %v338 = vld [vmem:[#allocation5 + $0x470] sm:$0xff]
        %v339 = vld [vmem:[#allocation5 + $0x478] sm:$0xff]
        %v340 = vld [vmem:[#allocation5 + $0x480] sm:$0xff]
        %v341 = vld [vmem:[#allocation5 + $0x488] sm:$0xff]
        %v342 = vld [vmem:[#allocation5 + $0x490] sm:$0xff]
        %v343 = vld [vmem:[#allocation5 + $0x498] sm:$0xff]
        %v344 = vld [vmem:[#allocation5 + $0x4a0] sm:$0xff]
        %v345 = vld [vmem:[#allocation5 + $0x4a8] sm:$0xff]
        %vm346 = vcmask 982016
        %v348 = vsel %vm346, %v194, 0
        %v351 = vsel %vm346, %v195, 0
        %v353 = vand.u32 %v197, 4294901760
        %354 = vmatprep.subr.mxu0 %v353
        %v355 = vand.u32 %v196, 4294901760
        %356 = vmatpush1.msra.mxu0 %v355
        %v357 = vand.u32 %v207, 4294901760
        %358 = vmatprep.subr.mxu0 %v357
        %v359 = vand.u32 %v206, 4294901760
        %360 = vmatpush1.msra.mxu0 %v359
        %v361 = vand.u32 %v217, 4294901760
        %362 = vmatprep.subr.mxu0 %v361
        %v363 = vand.u32 %v216, 4294901760
        %364 = vmatpush1.msra.mxu0 %v363
        %v365 = vand.u32 %v227, 4294901760
        %366 = vmatprep.subr.mxu0 %v365
        %v367 = vand.u32 %v226, 4294901760
        %368 = vmatpush1.msra.mxu0 %v367
        %v369 = vand.u32 %v237, 4294901760
        %370 = vmatprep.subr.mxu0 %v369
        %v371 = vand.u32 %v236, 4294901760
        %372 = vmatpush1.msra.mxu0 %v371
        %v373 = vand.u32 %v247, 4294901760
        %374 = vmatprep.subr.mxu0 %v373
        %v375 = vand.u32 %v246, 4294901760
        %376 = vmatpush1.msra.mxu0 %v375
        %v377 = vand.u32 %v257, 4294901760
        %378 = vmatprep.subr.mxu0 %v377
        %v379 = vand.u32 %v256, 4294901760
        %380 = vmatpush1.msra.mxu0 %v379
        %v381 = vand.u32 %v267, 4294901760
        %382 = vmatprep.subr.mxu0 %v381
        %v383 = vand.u32 %v266, 4294901760
        %384 = vmatpush1.msra.mxu0 %v383
        %v385 = vand.u32 %v277, 4294901760
        %386 = vmatprep.subr.mxu0 %v385
        %v387 = vand.u32 %v276, 4294901760
        %388 = vmatpush1.msra.mxu0 %v387
        %v389 = vand.u32 %v287, 4294901760
        %390 = vmatprep.subr.mxu0 %v389
        %v391 = vand.u32 %v286, 4294901760
        %392 = vmatpush1.msra.mxu0 %v391
        %v393 = vand.u32 %v297, 4294901760
        %394 = vmatprep.subr.mxu0 %v393
        %v395 = vand.u32 %v296, 4294901760
        %396 = vmatpush1.msra.mxu0 %v395
        %v397 = vand.u32 %v307, 4294901760
        %398 = vmatprep.subr.mxu0 %v397
        %v399 = vand.u32 %v306, 4294901760
        %400 = vmatpush1.msra.mxu0 %v399
        %v401 = vand.u32 %v317, 4294901760
        %402 = vmatprep.subr.mxu0 %v401
        %v403 = vand.u32 %v316, 4294901760
        %404 = vmatpush1.msra.mxu0 %v403
        %v405 = vand.u32 %v327, 4294901760
        %406 = vmatprep.subr.mxu0 %v405
        %v407 = vand.u32 %v326, 4294901760
        %408 = vmatpush1.msra.mxu0 %v407
        %v409 = vand.u32 %v337, 4294901760
        %410 = vmatprep.subr.mxu0 %v409
        %v411 = vand.u32 %v336, 4294901760
        %412 = vmatpush1.msra.mxu0 %v411
        %413 = vmatprep.subr.mxu0 0.0
        %414 = vmatpush1.msra.mxu0 0.0
        %415 = vmatprep.subr.mxu0 0.0
        %416 = vmatpush1.msra.mxu0 0.0
        %417 = vmatprep.subr.mxu0 0.0
        %418 = vmatpush1.msra.mxu0 0.0
        %419 = vmatprep.subr.mxu0 0.0
        %420 = vmatpush1.msra.mxu0 0.0
        %421 = vmatprep.subr.mxu0 0.0
        %422 = vmatpush1.msra.mxu0 0.0
        %423 = vmatprep.subr.mxu0 0.0
        %424 = vmatpush1.msra.mxu0 0.0
        %425 = vmatprep.subr.mxu0 0.0
        %426 = vmatpush1.msra.mxu0 0.0
        %427 = vmatprep.subr.mxu0 0.0
        %428 = vmatpush1.msra.mxu0 0.0
        %429 = vmatprep.subr.mxu0 0.0
        %430 = vmatpush1.msra.mxu0 0.0
        %431 = vmatprep.subr.mxu0 0.0
        %432 = vmatpush1.msra.mxu0 0.0
        %433 = vmatprep.subr.mxu0 0.0
        %434 = vmatpush1.msra.mxu0 0.0
        %435 = vmatprep.subr.mxu0 0.0
        %436 = vmatpush1.msra.mxu0 0.0
        %437 = vmatprep.subr.mxu0 0.0
        %438 = vmatpush1.msra.mxu0 0.0
        %439 = vmatprep.subr.mxu0 0.0
        %440 = vmatpush1.msra.mxu0 0.0
        %441 = vmatprep.subr.mxu0 0.0
        %442 = vmatpush1.msra.mxu0 0.0
        %443 = vmatprep.subr.mxu0 0.0
        %444 = vmatpush1.msra.mxu0 0.0
        %445 = vmatprep.subr.mxu0 0.0
        %446 = vmatpush1.msra.mxu0 0.0
        %447 = vmatprep.mubr.f32.mxu0 0.0
        %v448 = vand.u32 %v348, 4294901760
        %v449 = vsub.f32 %v348, %v448
        %v450 = vand.u32 %v449, 4294901760
        %v451 = vsub.f32 %v449, %v450
        %v452 = vand.u32 %v451, 4294901760
        %453 = vmatmul.mubr.f32.gmra.mrb[0].mxu0 %v452
        %v454 = vpop.f32.mrb[0].mxu0
        %v455 = vadd.f32 0.0, %v454
        %v456 = vpop.f32.mrb[0].mxu0
        %v457 = vadd.f32 0.0, %v456
        %458 = vmatprep.mubr.f32.mxu0 0.0
        %v459 = vand.u32 %v351, 4294901760
        %v460 = vsub.f32 %v351, %v459
        %v461 = vand.u32 %v460, 4294901760
        %v462 = vsub.f32 %v460, %v461
        %v463 = vand.u32 %v462, 4294901760
        %464 = vmatmul.mubr.f32.gmra.mrb[0].mxu0 %v463
        %v465 = vpop.f32.mrb[0].mxu0
        %v466 = vadd.f32 0.0, %v465
        %v467 = vpop.f32.mrb[0].mxu0
        %v468 = vadd.f32 0.0, %v467
        %469 = vdwg.mxu0
        %v470 = vand.u32 %v197, 4294901760
        %v471 = vsub.f32 %v197, %v470
        %v472 = vand.u32 %v471, 4294901760
        %v473 = vsub.f32 %v471, %v472
        %v474 = vand.u32 %v473, 4294901760
        %475 = vmatprep.subr.mxu0 %v474
        %v476 = vand.u32 %v196, 4294901760
        %v477 = vsub.f32 %v196, %v476
        %v478 = vand.u32 %v477, 4294901760
        %v479 = vsub.f32 %v477, %v478
        %v480 = vand.u32 %v479, 4294901760
        %481 = vmatpush1.msra.mxu0 %v480
        %v482 = vand.u32 %v207, 4294901760
        %v483 = vsub.f32 %v207, %v482
        %v484 = vand.u32 %v483, 4294901760
        %v485 = vsub.f32 %v483, %v484
        %v486 = vand.u32 %v485, 4294901760
        %487 = vmatprep.subr.mxu0 %v486
        %v488 = vand.u32 %v206, 4294901760
        %v489 = vsub.f32 %v206, %v488
        %v490 = vand.u32 %v489, 4294901760
        %v491 = vsub.f32 %v489, %v490
        %v492 = vand.u32 %v491, 4294901760
        %493 = vmatpush1.msra.mxu0 %v492
        %v494 = vand.u32 %v217, 4294901760
        %v495 = vsub.f32 %v217, %v494
        %v496 = vand.u32 %v495, 4294901760
        %v497 = vsub.f32 %v495, %v496
        %v498 = vand.u32 %v497, 4294901760
        %499 = vmatprep.subr.mxu0 %v498
        %v500 = vand.u32 %v216, 4294901760
        %v501 = vsub.f32 %v216, %v500
        %v502 = vand.u32 %v501, 4294901760
        %v503 = vsub.f32 %v501, %v502
        %v504 = vand.u32 %v503, 4294901760
        %505 = vmatpush1.msra.mxu0 %v504
        %v506 = vand.u32 %v227, 4294901760
        %v507 = vsub.f32 %v227, %v506
        %v508 = vand.u32 %v507, 4294901760
        %v509 = vsub.f32 %v507, %v508
        %v510 = vand.u32 %v509, 4294901760
        %511 = vmatprep.subr.mxu0 %v510
        %v512 = vand.u32 %v226, 4294901760
        %v513 = vsub.f32 %v226, %v512
        %v514 = vand.u32 %v513, 4294901760
        %v515 = vsub.f32 %v513, %v514
        %v516 = vand.u32 %v515, 4294901760
        %517 = vmatpush1.msra.mxu0 %v516
        %v518 = vand.u32 %v237, 4294901760
        %v519 = vsub.f32 %v237, %v518
        %v520 = vand.u32 %v519, 4294901760
        %v521 = vsub.f32 %v519, %v520
        %v522 = vand.u32 %v521, 4294901760
        %523 = vmatprep.subr.mxu0 %v522
        %v524 = vand.u32 %v236, 4294901760
        %v525 = vsub.f32 %v236, %v524
        %v526 = vand.u32 %v525, 4294901760
        %v527 = vsub.f32 %v525, %v526
        %v528 = vand.u32 %v527, 4294901760
        %529 = vmatpush1.msra.mxu0 %v528
        %v530 = vand.u32 %v247, 4294901760
        %v531 = vsub.f32 %v247, %v530
        %v532 = vand.u32 %v531, 4294901760
        %v533 = vsub.f32 %v531, %v532
        %v534 = vand.u32 %v533, 4294901760
        %535 = vmatprep.subr.mxu0 %v534
        %v536 = vand.u32 %v246, 4294901760
        %v537 = vsub.f32 %v246, %v536
        %v538 = vand.u32 %v537, 4294901760
        %v539 = vsub.f32 %v537, %v538
        %v540 = vand.u32 %v539, 4294901760
        %541 = vmatpush1.msra.mxu0 %v540
        %v542 = vand.u32 %v257, 4294901760
        %v543 = vsub.f32 %v257, %v542
        %v544 = vand.u32 %v543, 4294901760
        %v545 = vsub.f32 %v543, %v544
        %v546 = vand.u32 %v545, 4294901760
        %547 = vmatprep.subr.mxu0 %v546
        %v548 = vand.u32 %v256, 4294901760
        %v549 = vsub.f32 %v256, %v548
        %v550 = vand.u32 %v549, 4294901760
        %v551 = vsub.f32 %v549, %v550
        %v552 = vand.u32 %v551, 4294901760
        %553 = vmatpush1.msra.mxu0 %v552
        %v554 = vand.u32 %v267, 4294901760
        %v555 = vsub.f32 %v267, %v554
        %v556 = vand.u32 %v555, 4294901760
        %v557 = vsub.f32 %v555, %v556
        %v558 = vand.u32 %v557, 4294901760
        %559 = vmatprep.subr.mxu0 %v558
        %v560 = vand.u32 %v266, 4294901760
        %v561 = vsub.f32 %v266, %v560
        %v562 = vand.u32 %v561, 4294901760
        %v563 = vsub.f32 %v561, %v562
        %v564 = vand.u32 %v563, 4294901760
        %565 = vmatpush1.msra.mxu0 %v564
        %v566 = vand.u32 %v277, 4294901760
        %v567 = vsub.f32 %v277, %v566
        %v568 = vand.u32 %v567, 4294901760
        %v569 = vsub.f32 %v567, %v568
        %v570 = vand.u32 %v569, 4294901760
        %571 = vmatprep.subr.mxu0 %v570
        %v572 = vand.u32 %v276, 4294901760
        %v573 = vsub.f32 %v276, %v572
        %v574 = vand.u32 %v573, 4294901760
        %v575 = vsub.f32 %v573, %v574
        %v576 = vand.u32 %v575, 4294901760
        %577 = vmatpush1.msra.mxu0 %v576
        %v578 = vand.u32 %v287, 4294901760
        %v579 = vsub.f32 %v287, %v578
        %v580 = vand.u32 %v579, 4294901760
        %v581 = vsub.f32 %v579, %v580
        %v582 = vand.u32 %v581, 4294901760
        %583 = vmatprep.subr.mxu0 %v582
        %v584 = vand.u32 %v286, 4294901760
        %v585 = vsub.f32 %v286, %v584
        %v586 = vand.u32 %v585, 4294901760
        %v587 = vsub.f32 %v585, %v586
        %v588 = vand.u32 %v587, 4294901760
        %589 = vmatpush1.msra.mxu0 %v588
        %v590 = vand.u32 %v297, 4294901760
        %v591 = vsub.f32 %v297, %v590
        %v592 = vand.u32 %v591, 4294901760
        %v593 = vsub.f32 %v591, %v592
        %v594 = vand.u32 %v593, 4294901760
        %595 = vmatprep.subr.mxu0 %v594
        %v596 = vand.u32 %v296, 4294901760
        %v597 = vsub.f32 %v296, %v596
        %v598 = vand.u32 %v597, 4294901760
        %v599 = vsub.f32 %v597, %v598
        %v600 = vand.u32 %v599, 4294901760
        %601 = vmatpush1.msra.mxu0 %v600
        %v602 = vand.u32 %v307, 4294901760
        %v603 = vsub.f32 %v307, %v602
        %v604 = vand.u32 %v603, 4294901760
        %v605 = vsub.f32 %v603, %v604
        %v606 = vand.u32 %v605, 4294901760
        %607 = vmatprep.subr.mxu0 %v606
        %v608 = vand.u32 %v306, 4294901760
        %v609 = vsub.f32 %v306, %v608
        %v610 = vand.u32 %v609, 4294901760
        %v611 = vsub.f32 %v609, %v610
        %v612 = vand.u32 %v611, 4294901760
        %613 = vmatpush1.msra.mxu0 %v612
        %v614 = vand.u32 %v317, 4294901760
        %v615 = vsub.f32 %v317, %v614
        %v616 = vand.u32 %v615, 4294901760
        %v617 = vsub.f32 %v615, %v616
        %v618 = vand.u32 %v617, 4294901760
        %619 = vmatprep.subr.mxu0 %v618
        %v620 = vand.u32 %v316, 4294901760
        %v621 = vsub.f32 %v316, %v620
        %v622 = vand.u32 %v621, 4294901760
        %v623 = vsub.f32 %v621, %v622
        %v624 = vand.u32 %v623, 4294901760
        %625 = vmatpush1.msra.mxu0 %v624
        %v626 = vand.u32 %v327, 4294901760
        %v627 = vsub.f32 %v327, %v626
        %v628 = vand.u32 %v627, 4294901760
        %v629 = vsub.f32 %v627, %v628
        %v630 = vand.u32 %v629, 4294901760
        %631 = vmatprep.subr.mxu0 %v630
        %v632 = vand.u32 %v326, 4294901760
        %v633 = vsub.f32 %v326, %v632
        %v634 = vand.u32 %v633, 4294901760
        %v635 = vsub.f32 %v633, %v634
        %v636 = vand.u32 %v635, 4294901760
        %637 = vmatpush1.msra.mxu0 %v636
        %v638 = vand.u32 %v337, 4294901760
        %v639 = vsub.f32 %v337, %v638
        %v640 = vand.u32 %v639, 4294901760
        %v641 = vsub.f32 %v639, %v640
        %v642 = vand.u32 %v641, 4294901760
        %643 = vmatprep.subr.mxu0 %v642
        %v644 = vand.u32 %v336, 4294901760
        %v645 = vsub.f32 %v336, %v644
        %v646 = vand.u32 %v645, 4294901760
        %v647 = vsub.f32 %v645, %v646
        %v648 = vand.u32 %v647, 4294901760
        %649 = vmatpush1.msra.mxu0 %v648
        %650 = vmatprep.subr.mxu0 0.0
        %651 = vmatpush1.msra.mxu0 0.0
        %652 = vmatprep.subr.mxu0 0.0
        %653 = vmatpush1.msra.mxu0 0.0
        %654 = vmatprep.subr.mxu0 0.0
        %655 = vmatpush1.msra.mxu0 0.0
        %656 = vmatprep.subr.mxu0 0.0
        %657 = vmatpush1.msra.mxu0 0.0
        %658 = vmatprep.subr.mxu0 0.0
        %659 = vmatpush1.msra.mxu0 0.0
        %660 = vmatprep.subr.mxu0 0.0
        %661 = vmatpush1.msra.mxu0 0.0
        %662 = vmatprep.subr.mxu0 0.0
        %663 = vmatpush1.msra.mxu0 0.0
        %664 = vmatprep.subr.mxu0 0.0
        %665 = vmatpush1.msra.mxu0 0.0
        %666 = vmatprep.subr.mxu0 0.0
        %667 = vmatpush1.msra.mxu0 0.0
        %668 = vmatprep.subr.mxu0 0.0
        %669 = vmatpush1.msra.mxu0 0.0
        %670 = vmatprep.subr.mxu0 0.0
        %671 = vmatpush1.msra.mxu0 0.0
        %672 = vmatprep.subr.mxu0 0.0
        %673 = vmatpush1.msra.mxu0 0.0
        %674 = vmatprep.subr.mxu0 0.0
        %675 = vmatpush1.msra.mxu0 0.0
        %676 = vmatprep.subr.mxu0 0.0
        %677 = vmatpush1.msra.mxu0 0.0
        %678 = vmatprep.subr.mxu0 0.0
        %679 = vmatpush1.msra.mxu0 0.0
        %680 = vmatprep.subr.mxu0 0.0
        %681 = vmatpush1.msra.mxu0 0.0
        %682 = vmatprep.subr.mxu0 0.0
        %683 = vmatpush1.msra.mxu0 0.0
        %684 = vmatprep.mubr.f32.mxu0 0.0
        %v685 = vand.u32 %v348, 4294901760
        %686 = vmatmul.mubr.f32.gmra.mrb[0].mxu0 %v685
        %v687 = vpop.f32.mrb[0].mxu0
        %v688 = vadd.f32 %v455, %v687
        %v689 = vpop.f32.mrb[0].mxu0
        %v690 = vadd.f32 %v457, %v689
        %691 = vmatprep.mubr.f32.mxu0 0.0
        %v692 = vand.u32 %v351, 4294901760
        %693 = vmatmul.mubr.f32.gmra.mrb[0].mxu0 %v692
        %v694 = vpop.f32.mrb[0].mxu0
        %v695 = vadd.f32 %v466, %v694
        %v696 = vpop.f32.mrb[0].mxu0
        %v697 = vadd.f32 %v468, %v696
        %698 = vdwg.mxu0
        %v699 = vand.u32 %v197, 4294901760
        %v700 = vsub.f32 %v197, %v699
        %701 = vmatprep.subr.mxu0 %v700
        %v702 = vand.u32 %v196, 4294901760
        %v703 = vsub.f32 %v196, %v702
        %704 = vmatpush1.msra.mxu0 %v703
        %v705 = vand.u32 %v207, 4294901760
        %v706 = vsub.f32 %v207, %v705
        %707 = vmatprep.subr.mxu0 %v706
        %v708 = vand.u32 %v206, 4294901760
        %v709 = vsub.f32 %v206, %v708
        %710 = vmatpush1.msra.mxu0 %v709
        %v711 = vand.u32 %v217, 4294901760
        %v712 = vsub.f32 %v217, %v711
        %713 = vmatprep.subr.mxu0 %v712
        %v714 = vand.u32 %v216, 4294901760
        %v715 = vsub.f32 %v216, %v714
        %716 = vmatpush1.msra.mxu0 %v715
        %v717 = vand.u32 %v227, 4294901760
        %v718 = vsub.f32 %v227, %v717
        %719 = vmatprep.subr.mxu0 %v718
        %v720 = vand.u32 %v226, 4294901760
        %v721 = vsub.f32 %v226, %v720
        %722 = vmatpush1.msra.mxu0 %v721
        %v723 = vand.u32 %v237, 4294901760
        %v724 = vsub.f32 %v237, %v723
        %725 = vmatprep.subr.mxu0 %v724
        %v726 = vand.u32 %v236, 4294901760
        %v727 = vsub.f32 %v236, %v726
        %728 = vmatpush1.msra.mxu0 %v727
        %v729 = vand.u32 %v247, 4294901760
        %v730 = vsub.f32 %v247, %v729
        %731 = vmatprep.subr.mxu0 %v730
        %v732 = vand.u32 %v246, 4294901760
        %v733 = vsub.f32 %v246, %v732
        %734 = vmatpush1.msra.mxu0 %v733
        %v735 = vand.u32 %v257, 4294901760
        %v736 = vsub.f32 %v257, %v735
        %737 = vmatprep.subr.mxu0 %v736
        %v738 = vand.u32 %v256, 4294901760
        %v739 = vsub.f32 %v256, %v738
        %740 = vmatpush1.msra.mxu0 %v739
        %v741 = vand.u32 %v267, 4294901760
        %v742 = vsub.f32 %v267, %v741
        %743 = vmatprep.subr.mxu0 %v742
        %v744 = vand.u32 %v266, 4294901760
        %v745 = vsub.f32 %v266, %v744
        %746 = vmatpush1.msra.mxu0 %v745
        %v747 = vand.u32 %v277, 4294901760
        %v748 = vsub.f32 %v277, %v747
        %749 = vmatprep.subr.mxu0 %v748
        %v750 = vand.u32 %v276, 4294901760
        %v751 = vsub.f32 %v276, %v750
        %752 = vmatpush1.msra.mxu0 %v751
        %v753 = vand.u32 %v287, 4294901760
        %v754 = vsub.f32 %v287, %v753
        %755 = vmatprep.subr.mxu0 %v754
        %v756 = vand.u32 %v286, 4294901760
        %v757 = vsub.f32 %v286, %v756
        %758 = vmatpush1.msra.mxu0 %v757
        %v759 = vand.u32 %v297, 4294901760
        %v760 = vsub.f32 %v297, %v759
        %761 = vmatprep.subr.mxu0 %v760
        %v762 = vand.u32 %v296, 4294901760
        %v763 = vsub.f32 %v296, %v762
        %764 = vmatpush1.msra.mxu0 %v763
        %v765 = vand.u32 %v307, 4294901760
        %v766 = vsub.f32 %v307, %v765
        %767 = vmatprep.subr.mxu0 %v766
        %v768 = vand.u32 %v306, 4294901760
        %v769 = vsub.f32 %v306, %v768
        %770 = vmatpush1.msra.mxu0 %v769
        %v771 = vand.u32 %v317, 4294901760
        %v772 = vsub.f32 %v317, %v771
        %773 = vmatprep.subr.mxu0 %v772
        %v774 = vand.u32 %v316, 4294901760
        %v775 = vsub.f32 %v316, %v774
        %776 = vmatpush1.msra.mxu0 %v775
        %v777 = vand.u32 %v327, 4294901760
        %v778 = vsub.f32 %v327, %v777
        %779 = vmatprep.subr.mxu0 %v778
        %v780 = vand.u32 %v326, 4294901760
        %v781 = vsub.f32 %v326, %v780
        %782 = vmatpush1.msra.mxu0 %v781
        %v783 = vand.u32 %v337, 4294901760
        %v784 = vsub.f32 %v337, %v783
        %785 = vmatprep.subr.mxu0 %v784
        %v786 = vand.u32 %v336, 4294901760
        %v787 = vsub.f32 %v336, %v786
        %788 = vmatpush1.msra.mxu0 %v787
        %789 = vmatprep.subr.mxu0 0.0
        %790 = vmatpush1.msra.mxu0 0.0
        %791 = vmatprep.subr.mxu0 0.0
        %792 = vmatpush1.msra.mxu0 0.0
        %793 = vmatprep.subr.mxu0 0.0
        %794 = vmatpush1.msra.mxu0 0.0
        %795 = vmatprep.subr.mxu0 0.0
        %796 = vmatpush1.msra.mxu0 0.0
        %797 = vmatprep.subr.mxu0 0.0
        %798 = vmatpush1.msra.mxu0 0.0
        %799 = vmatprep.subr.mxu0 0.0
        %800 = vmatpush1.msra.mxu0 0.0
        %801 = vmatprep.subr.mxu0 0.0
        %802 = vmatpush1.msra.mxu0 0.0
        %803 = vmatprep.subr.mxu0 0.0
        %804 = vmatpush1.msra.mxu0 0.0
        %805 = vmatprep.subr.mxu0 0.0
        %806 = vmatpush1.msra.mxu0 0.0
        %807 = vmatprep.subr.mxu0 0.0
        %808 = vmatpush1.msra.mxu0 0.0
        %809 = vmatprep.subr.mxu0 0.0
        %810 = vmatpush1.msra.mxu0 0.0
        %811 = vmatprep.subr.mxu0 0.0
        %812 = vmatpush1.msra.mxu0 0.0
        %813 = vmatprep.subr.mxu0 0.0
        %814 = vmatpush1.msra.mxu0 0.0
        %815 = vmatprep.subr.mxu0 0.0
        %816 = vmatpush1.msra.mxu0 0.0
        %817 = vmatprep.subr.mxu0 0.0
        %818 = vmatpush1.msra.mxu0 0.0
        %819 = vmatprep.subr.mxu0 0.0
        %820 = vmatpush1.msra.mxu0 0.0
        %821 = vmatprep.subr.mxu0 0.0
        %822 = vmatpush1.msra.mxu0 0.0
        %823 = vmatprep.mubr.f32.mxu0 0.0
        %v824 = vand.u32 %v348, 4294901760
        %v825 = vsub.f32 %v348, %v824
        %826 = vmatmul.mubr.f32.gmra.mrb[0].mxu0 %v825
        %v827 = vpop.f32.mrb[0].mxu0
        %v828 = vadd.f32 %v688, %v827
        %v829 = vpop.f32.mrb[0].mxu0
        %v830 = vadd.f32 %v690, %v829
        %831 = vmatprep.mubr.f32.mxu0 0.0
        %v832 = vand.u32 %v351, 4294901760
        %v833 = vsub.f32 %v351, %v832
        %834 = vmatmul.mubr.f32.gmra.mrb[0].mxu0 %v833
        %v835 = vpop.f32.mrb[0].mxu0
        %v836 = vadd.f32 %v695, %v835
        %v837 = vpop.f32.mrb[0].mxu0
        %v838 = vadd.f32 %v697, %v837
        %839 = vdwg.mxu0
        %v840 = vand.u32 %v197, 4294901760
        %841 = vmatprep.subr.mxu0 %v840
        %v842 = vand.u32 %v196, 4294901760
        %843 = vmatpush1.msra.mxu0 %v842
        %v844 = vand.u32 %v207, 4294901760
        %845 = vmatprep.subr.mxu0 %v844
        %v846 = vand.u32 %v206, 4294901760
        %847 = vmatpush1.msra.mxu0 %v846
        %v848 = vand.u32 %v217, 4294901760
        %849 = vmatprep.subr.mxu0 %v848
        %v850 = vand.u32 %v216, 4294901760
        %851 = vmatpush1.msra.mxu0 %v850
        %v852 = vand.u32 %v227, 4294901760
        %853 = vmatprep.subr.mxu0 %v852
        %v854 = vand.u32 %v226, 4294901760
        %855 = vmatpush1.msra.mxu0 %v854
        %v856 = vand.u32 %v237, 4294901760
        %857 = vmatprep.subr.mxu0 %v856
        %v858 = vand.u32 %v236, 4294901760
        %859 = vmatpush1.msra.mxu0 %v858
        %v860 = vand.u32 %v247, 4294901760
        %861 = vmatprep.subr.mxu0 %v860
        %v862 = vand.u32 %v246, 4294901760
        %863 = vmatpush1.msra.mxu0 %v862
        %v864 = vand.u32 %v257, 4294901760
        %865 = vmatprep.subr.mxu0 %v864
        %v866 = vand.u32 %v256, 4294901760
        %867 = vmatpush1.msra.mxu0 %v866
        %v868 = vand.u32 %v267, 4294901760
        %869 = vmatprep.subr.mxu0 %v868
        %v870 = vand.u32 %v266, 4294901760
        %871 = vmatpush1.msra.mxu0 %v870
        %v872 = vand.u32 %v277, 4294901760
        %873 = vmatprep.subr.mxu0 %v872
        %v874 = vand.u32 %v276, 4294901760
        %875 = vmatpush1.msra.mxu0 %v874
        %v876 = vand.u32 %v287, 4294901760
        %877 = vmatprep.subr.mxu0 %v876
        %v878 = vand.u32 %v286, 4294901760
        %879 = vmatpush1.msra.mxu0 %v878
        %v880 = vand.u32 %v297, 4294901760
        %881 = vmatprep.subr.mxu0 %v880
        %v882 = vand.u32 %v296, 4294901760
        %883 = vmatpush1.msra.mxu0 %v882
        %v884 = vand.u32 %v307, 4294901760
        %885 = vmatprep.subr.mxu0 %v884
        %v886 = vand.u32 %v306, 4294901760
        %887 = vmatpush1.msra.mxu0 %v886
        %v888 = vand.u32 %v317, 4294901760
        %889 = vmatprep.subr.mxu0 %v888
        %v890 = vand.u32 %v316, 4294901760
        %891 = vmatpush1.msra.mxu0 %v890
        %v892 = vand.u32 %v327, 4294901760
        %893 = vmatprep.subr.mxu0 %v892
        %v894 = vand.u32 %v326, 4294901760
        %895 = vmatpush1.msra.mxu0 %v894
        %v896 = vand.u32 %v337, 4294901760
        %897 = vmatprep.subr.mxu0 %v896
        %v898 = vand.u32 %v336, 4294901760
        %899 = vmatpush1.msra.mxu0 %v898
        %900 = vmatprep.subr.mxu0 0.0
        %901 = vmatpush1.msra.mxu0 0.0
        %902 = vmatprep.subr.mxu0 0.0
        %903 = vmatpush1.msra.mxu0 0.0
        %904 = vmatprep.subr.mxu0 0.0
        %905 = vmatpush1.msra.mxu0 0.0
        %906 = vmatprep.subr.mxu0 0.0
        %907 = vmatpush1.msra.mxu0 0.0
        %908 = vmatprep.subr.mxu0 0.0
        %909 = vmatpush1.msra.mxu0 0.0
        %910 = vmatprep.subr.mxu0 0.0
        %911 = vmatpush1.msra.mxu0 0.0
        %912 = vmatprep.subr.mxu0 0.0
        %913 = vmatpush1.msra.mxu0 0.0
        %914 = vmatprep.subr.mxu0 0.0
        %915 = vmatpush1.msra.mxu0 0.0
        %916 = vmatprep.subr.mxu0 0.0
        %917 = vmatpush1.msra.mxu0 0.0
        %918 = vmatprep.subr.mxu0 0.0
        %919 = vmatpush1.msra.mxu0 0.0
        %920 = vmatprep.subr.mxu0 0.0
        %921 = vmatpush1.msra.mxu0 0.0
        %922 = vmatprep.subr.mxu0 0.0
        %923 = vmatpush1.msra.mxu0 0.0
        %924 = vmatprep.subr.mxu0 0.0
        %925 = vmatpush1.msra.mxu0 0.0
        %926 = vmatprep.subr.mxu0 0.0
        %927 = vmatpush1.msra.mxu0 0.0
        %928 = vmatprep.subr.mxu0 0.0
        %929 = vmatpush1.msra.mxu0 0.0
        %930 = vmatprep.subr.mxu0 0.0
        %931 = vmatpush1.msra.mxu0 0.0
        %932 = vmatprep.subr.mxu0 0.0
        %933 = vmatpush1.msra.mxu0 0.0
        %934 = vmatprep.mubr.f32.mxu0 0.0
        %v935 = vand.u32 %v348, 4294901760
        %v936 = vsub.f32 %v348, %v935
        %v937 = vand.u32 %v936, 4294901760
        %938 = vmatmul.mubr.f32.gmra.mrb[0].mxu0 %v937
        %v939 = vpop.f32.mrb[0].mxu0
        %v940 = vadd.f32 %v828, %v939
        %v941 = vpop.f32.mrb[0].mxu0
        %v942 = vadd.f32 %v830, %v941
        %943 = vmatprep.mubr.f32.mxu0 0.0
        %v944 = vand.u32 %v351, 4294901760
        %v945 = vsub.f32 %v351, %v944
        %v946 = vand.u32 %v945, 4294901760
        %947 = vmatmul.mubr.f32.gmra.mrb[0].mxu0 %v946
        %v948 = vpop.f32.mrb[0].mxu0
        %v949 = vadd.f32 %v836, %v948
        %v950 = vpop.f32.mrb[0].mxu0
        %v951 = vadd.f32 %v838, %v950
        %952 = vdwg.mxu0
        %v953 = vand.u32 %v197, 4294901760
        %v954 = vsub.f32 %v197, %v953
        %v955 = vand.u32 %v954, 4294901760
        %956 = vmatprep.subr.mxu0 %v955
        %v957 = vand.u32 %v196, 4294901760
        %v958 = vsub.f32 %v196, %v957
        %v959 = vand.u32 %v958, 4294901760
        %960 = vmatpush1.msra.mxu0 %v959
        %v961 = vand.u32 %v207, 4294901760
        %v962 = vsub.f32 %v207, %v961
        %v963 = vand.u32 %v962, 4294901760
        %964 = vmatprep.subr.mxu0 %v963
        %v965 = vand.u32 %v206, 4294901760
        %v966 = vsub.f32 %v206, %v965
        %v967 = vand.u32 %v966, 4294901760
        %968 = vmatpush1.msra.mxu0 %v967
        %v969 = vand.u32 %v217, 4294901760
        %v970 = vsub.f32 %v217, %v969
        %v971 = vand.u32 %v970, 4294901760
        %972 = vmatprep.subr.mxu0 %v971
        %v973 = vand.u32 %v216, 4294901760
        %v974 = vsub.f32 %v216, %v973
        %v975 = vand.u32 %v974, 4294901760
        %976 = vmatpush1.msra.mxu0 %v975
        %v977 = vand.u32 %v227, 4294901760
        %v978 = vsub.f32 %v227, %v977
        %v979 = vand.u32 %v978, 4294901760
        %980 = vmatprep.subr.mxu0 %v979
        %v981 = vand.u32 %v226, 4294901760
        %v982 = vsub.f32 %v226, %v981
        %v983 = vand.u32 %v982, 4294901760
        %984 = vmatpush1.msra.mxu0 %v983
        %v985 = vand.u32 %v237, 4294901760
        %v986 = vsub.f32 %v237, %v985
        %v987 = vand.u32 %v986, 4294901760
        %988 = vmatprep.subr.mxu0 %v987
        %v989 = vand.u32 %v236, 4294901760
        %v990 = vsub.f32 %v236, %v989
        %v991 = vand.u32 %v990, 4294901760
        %992 = vmatpush1.msra.mxu0 %v991
        %v993 = vand.u32 %v247, 4294901760
        %v994 = vsub.f32 %v247, %v993
        %v995 = vand.u32 %v994, 4294901760
        %996 = vmatprep.subr.mxu0 %v995
        %v997 = vand.u32 %v246, 4294901760
        %v998 = vsub.f32 %v246, %v997
        %v999 = vand.u32 %v998, 4294901760
        %1000 = vmatpush1.msra.mxu0 %v999
        %v1001 = vand.u32 %v257, 4294901760
        %v1002 = vsub.f32 %v257, %v1001
        %v1003 = vand.u32 %v1002, 4294901760
        %1004 = vmatprep.subr.mxu0 %v1003
        %v1005 = vand.u32 %v256, 4294901760
        %v1006 = vsub.f32 %v256, %v1005
        %v1007 = vand.u32 %v1006, 4294901760
        %1008 = vmatpush1.msra.mxu0 %v1007
        %v1009 = vand.u32 %v267, 4294901760
        %v1010 = vsub.f32 %v267, %v1009
        %v1011 = vand.u32 %v1010, 4294901760
        %1012 = vmatprep.subr.mxu0 %v1011
        %v1013 = vand.u32 %v266, 4294901760
        %v1014 = vsub.f32 %v266, %v1013
        %v1015 = vand.u32 %v1014, 4294901760
        %1016 = vmatpush1.msra.mxu0 %v1015
        %v1017 = vand.u32 %v277, 4294901760
        %v1018 = vsub.f32 %v277, %v1017
        %v1019 = vand.u32 %v1018, 4294901760
        %1020 = vmatprep.subr.mxu0 %v1019
        %v1021 = vand.u32 %v276, 4294901760
        %v1022 = vsub.f32 %v276, %v1021
        %v1023 = vand.u32 %v1022, 4294901760
        %1024 = vmatpush1.msra.mxu0 %v1023
        %v1025 = vand.u32 %v287, 4294901760
        %v1026 = vsub.f32 %v287, %v1025
        %v1027 = vand.u32 %v1026, 4294901760
        %1028 = vmatprep.subr.mxu0 %v1027
        %v1029 = vand.u32 %v286, 4294901760
        %v1030 = vsub.f32 %v286, %v1029
        %v1031 = vand.u32 %v1030, 4294901760
        %1032 = vmatpush1.msra.mxu0 %v1031
        %v1033 = vand.u32 %v297, 4294901760
        %v1034 = vsub.f32 %v297, %v1033
        %v1035 = vand.u32 %v1034, 4294901760
        %1036 = vmatprep.subr.mxu0 %v1035
        %v1037 = vand.u32 %v296, 4294901760
        %v1038 = vsub.f32 %v296, %v1037
        %v1039 = vand.u32 %v1038, 4294901760
        %1040 = vmatpush1.msra.mxu0 %v1039
        %v1041 = vand.u32 %v307, 4294901760
        %v1042 = vsub.f32 %v307, %v1041
        %v1043 = vand.u32 %v1042, 4294901760
        %1044 = vmatprep.subr.mxu0 %v1043
        %v1045 = vand.u32 %v306, 4294901760
        %v1046 = vsub.f32 %v306, %v1045
        %v1047 = vand.u32 %v1046, 4294901760
        %1048 = vmatpush1.msra.mxu0 %v1047
        %v1049 = vand.u32 %v317, 4294901760
        %v1050 = vsub.f32 %v317, %v1049
        %v1051 = vand.u32 %v1050, 4294901760
        %1052 = vmatprep.subr.mxu0 %v1051
        %v1053 = vand.u32 %v316, 4294901760
        %v1054 = vsub.f32 %v316, %v1053
        %v1055 = vand.u32 %v1054, 4294901760
        %1056 = vmatpush1.msra.mxu0 %v1055
        %v1057 = vand.u32 %v327, 4294901760
        %v1058 = vsub.f32 %v327, %v1057
        %v1059 = vand.u32 %v1058, 4294901760
        %1060 = vmatprep.subr.mxu0 %v1059
        %v1061 = vand.u32 %v326, 4294901760
        %v1062 = vsub.f32 %v326, %v1061
        %v1063 = vand.u32 %v1062, 4294901760
        %1064 = vmatpush1.msra.mxu0 %v1063
        %v1065 = vand.u32 %v337, 4294901760
        %v1066 = vsub.f32 %v337, %v1065
        %v1067 = vand.u32 %v1066, 4294901760
        %1068 = vmatprep.subr.mxu0 %v1067
        %v1069 = vand.u32 %v336, 4294901760
        %v1070 = vsub.f32 %v336, %v1069
        %v1071 = vand.u32 %v1070, 4294901760
        %1072 = vmatpush1.msra.mxu0 %v1071
        %1073 = vmatprep.subr.mxu0 0.0
        %1074 = vmatpush1.msra.mxu0 0.0
        %1075 = vmatprep.subr.mxu0 0.0
        %1076 = vmatpush1.msra.mxu0 0.0
        %1077 = vmatprep.subr.mxu0 0.0
        %1078 = vmatpush1.msra.mxu0 0.0
        %1079 = vmatprep.subr.mxu0 0.0
        %1080 = vmatpush1.msra.mxu0 0.0
        %1081 = vmatprep.subr.mxu0 0.0
        %1082 = vmatpush1.msra.mxu0 0.0
        %1083 = vmatprep.subr.mxu0 0.0
        %1084 = vmatpush1.msra.mxu0 0.0
        %1085 = vmatprep.subr.mxu0 0.0
        %1086 = vmatpush1.msra.mxu0 0.0
        %1087 = vmatprep.subr.mxu0 0.0
        %1088 = vmatpush1.msra.mxu0 0.0
        %1089 = vmatprep.subr.mxu0 0.0
        %1090 = vmatpush1.msra.mxu0 0.0
        %1091 = vmatprep.subr.mxu0 0.0
        %1092 = vmatpush1.msra.mxu0 0.0
        %1093 = vmatprep.subr.mxu0 0.0
        %1094 = vmatpush1.msra.mxu0 0.0
        %1095 = vmatprep.subr.mxu0 0.0
        %1096 = vmatpush1.msra.mxu0 0.0
        %1097 = vmatprep.subr.mxu0 0.0
        %1098 = vmatpush1.msra.mxu0 0.0
        %1099 = vmatprep.subr.mxu0 0.0
        %1100 = vmatpush1.msra.mxu0 0.0
        %1101 = vmatprep.subr.mxu0 0.0
        %1102 = vmatpush1.msra.mxu0 0.0
        %1103 = vmatprep.subr.mxu0 0.0
        %1104 = vmatpush1.msra.mxu0 0.0
        %1105 = vmatprep.subr.mxu0 0.0
        %1106 = vmatpush1.msra.mxu0 0.0
        %1107 = vmatprep.mubr.f32.mxu0 0.0
        %v1108 = vand.u32 %v348, 4294901760
        %1109 = vmatmul.mubr.f32.gmra.mrb[0].mxu0 %v1108
        %v1110 = vpop.f32.mrb[0].mxu0
        %v1111 = vadd.f32 %v940, %v1110
        %v1112 = vpop.f32.mrb[0].mxu0
        %v1113 = vadd.f32 %v942, %v1112
        %1114 = vmatprep.mubr.f32.mxu0 0.0
        %v1115 = vand.u32 %v351, 4294901760
        %1116 = vmatmul.mubr.f32.gmra.mrb[0].mxu0 %v1115
        %v1117 = vpop.f32.mrb[0].mxu0
        %v1118 = vadd.f32 %v949, %v1117
        %v1119 = vpop.f32.mrb[0].mxu0
        %v1120 = vadd.f32 %v951, %v1119
        %1121 = vdwg.mxu0
        %v1122 = vand.u32 %v197, 4294901760
        %1123 = vmatprep.subr.mxu0 %v1122
        %v1124 = vand.u32 %v196, 4294901760
        %1125 = vmatpush1.msra.mxu0 %v1124
        %v1126 = vand.u32 %v207, 4294901760
        %1127 = vmatprep.subr.mxu0 %v1126
        %v1128 = vand.u32 %v206, 4294901760
        %1129 = vmatpush1.msra.mxu0 %v1128
        %v1130 = vand.u32 %v217, 4294901760
        %1131 = vmatprep.subr.mxu0 %v1130
        %v1132 = vand.u32 %v216, 4294901760
        %1133 = vmatpush1.msra.mxu0 %v1132
        %v1134 = vand.u32 %v227, 4294901760
        %1135 = vmatprep.subr.mxu0 %v1134
        %v1136 = vand.u32 %v226, 4294901760
        %1137 = vmatpush1.msra.mxu0 %v1136
        %v1138 = vand.u32 %v237, 4294901760
        %1139 = vmatprep.subr.mxu0 %v1138
        %v1140 = vand.u32 %v236, 4294901760
        %1141 = vmatpush1.msra.mxu0 %v1140
        %v1142 = vand.u32 %v247, 4294901760
        %1143 = vmatprep.subr.mxu0 %v1142
        %v1144 = vand.u32 %v246, 4294901760
        %1145 = vmatpush1.msra.mxu0 %v1144
        %v1146 = vand.u32 %v257, 4294901760
        %1147 = vmatprep.subr.mxu0 %v1146
        %v1148 = vand.u32 %v256, 4294901760
        %1149 = vmatpush1.msra.mxu0 %v1148
        %v1150 = vand.u32 %v267, 4294901760
        %1151 = vmatprep.subr.mxu0 %v1150
        %v1152 = vand.u32 %v266, 4294901760
        %1153 = vmatpush1.msra.mxu0 %v1152
        %v1154 = vand.u32 %v277, 4294901760
        %1155 = vmatprep.subr.mxu0 %v1154
        %v1156 = vand.u32 %v276, 4294901760
        %1157 = vmatpush1.msra.mxu0 %v1156
        %v1158 = vand.u32 %v287, 4294901760
        %1159 = vmatprep.subr.mxu0 %v1158
        %v1160 = vand.u32 %v286, 4294901760
        %1161 = vmatpush1.msra.mxu0 %v1160
        %v1162 = vand.u32 %v297, 4294901760
        %1163 = vmatprep.subr.mxu0 %v1162
        %v1164 = vand.u32 %v296, 4294901760
        %1165 = vmatpush1.msra.mxu0 %v1164
        %v1166 = vand.u32 %v307, 4294901760
        %1167 = vmatprep.subr.mxu0 %v1166
        %v1168 = vand.u32 %v306, 4294901760
        %1169 = vmatpush1.msra.mxu0 %v1168
        %v1170 = vand.u32 %v317, 4294901760
        %1171 = vmatprep.subr.mxu0 %v1170
        %v1172 = vand.u32 %v316, 4294901760
        %1173 = vmatpush1.msra.mxu0 %v1172
        %v1174 = vand.u32 %v327, 4294901760
        %1175 = vmatprep.subr.mxu0 %v1174
        %v1176 = vand.u32 %v326, 4294901760
        %1177 = vmatpush1.msra.mxu0 %v1176
        %v1178 = vand.u32 %v337, 4294901760
        %1179 = vmatprep.subr.mxu0 %v1178
        %v1180 = vand.u32 %v336, 4294901760
        %1181 = vmatpush1.msra.mxu0 %v1180
        %1182 = vmatprep.subr.mxu0 0.0
        %1183 = vmatpush1.msra.mxu0 0.0
        %1184 = vmatprep.subr.mxu0 0.0
        %1185 = vmatpush1.msra.mxu0 0.0
        %1186 = vmatprep.subr.mxu0 0.0
        %1187 = vmatpush1.msra.mxu0 0.0
        %1188 = vmatprep.subr.mxu0 0.0
        %1189 = vmatpush1.msra.mxu0 0.0
        %1190 = vmatprep.subr.mxu0 0.0
        %1191 = vmatpush1.msra.mxu0 0.0
        %1192 = vmatprep.subr.mxu0 0.0
        %1193 = vmatpush1.msra.mxu0 0.0
        %1194 = vmatprep.subr.mxu0 0.0
        %1195 = vmatpush1.msra.mxu0 0.0
        %1196 = vmatprep.subr.mxu0 0.0
        %1197 = vmatpush1.msra.mxu0 0.0
        %1198 = vmatprep.subr.mxu0 0.0
        %1199 = vmatpush1.msra.mxu0 0.0
        %1200 = vmatprep.subr.mxu0 0.0
        %1201 = vmatpush1.msra.mxu0 0.0
        %1202 = vmatprep.subr.mxu0 0.0
        %1203 = vmatpush1.msra.mxu0 0.0
        %1204 = vmatprep.subr.mxu0 0.0
        %1205 = vmatpush1.msra.mxu0 0.0
        %1206 = vmatprep.subr.mxu0 0.0
        %1207 = vmatpush1.msra.mxu0 0.0
        %1208 = vmatprep.subr.mxu0 0.0
        %1209 = vmatpush1.msra.mxu0 0.0
        %1210 = vmatprep.subr.mxu0 0.0
        %1211 = vmatpush1.msra.mxu0 0.0
        %1212 = vmatprep.subr.mxu0 0.0
        %1213 = vmatpush1.msra.mxu0 0.0
        %1214 = vmatprep.subr.mxu0 0.0
        %1215 = vmatpush1.msra.mxu0 0.0
        %1216 = vmatprep.mubr.f32.mxu0 0.0
        %v1217 = vand.u32 %v348, 4294901760
        %1218 = vmatmul.mubr.f32.gmra.mrb[0].mxu0 %v1217
        %v1219 = vpop.f32.mrb[0].mxu0
        %v1220 = vadd.f32 %v1111, %v1219
        %v1221 = vpop.f32.mrb[0].mxu0
        %v1222 = vadd.f32 %v1113, %v1221
        %1223 = vmatprep.mubr.f32.mxu0 0.0
        %v1224 = vand.u32 %v351, 4294901760
        %1225 = vmatmul.mubr.f32.gmra.mrb[0].mxu0 %v1224
        %v1226 = vpop.f32.mrb[0].mxu0
        %v1227 = vadd.f32 %v1118, %v1226
        %v1228 = vpop.f32.mrb[0].mxu0
        %v1229 = vadd.f32 %v1120, %v1228
        %1230 = vdwg.mxu0
        %v1231 = vand.u32 %v199, 4294901760
        %1232 = vmatprep.subr.mxu0 %v1231
        %v1233 = vand.u32 %v198, 4294901760
        %1234 = vmatpush1.msra.mxu0 %v1233
        %v1235 = vand.u32 %v209, 4294901760
        %1236 = vmatprep.subr.mxu0 %v1235
        %v1237 = vand.u32 %v208, 4294901760
        %1238 = vmatpush1.msra.mxu0 %v1237
        %v1239 = vand.u32 %v219, 4294901760
        %1240 = vmatprep.subr.mxu0 %v1239
        %v1241 = vand.u32 %v218, 4294901760
        %1242 = vmatpush1.msra.mxu0 %v1241
        %v1243 = vand.u32 %v229, 4294901760
        %1244 = vmatprep.subr.mxu0 %v1243
        %v1245 = vand.u32 %v228, 4294901760
        %1246 = vmatpush1.msra.mxu0 %v1245
        %v1247 = vand.u32 %v239, 4294901760
        %1248 = vmatprep.subr.mxu0 %v1247
        %v1249 = vand.u32 %v238, 4294901760
        %1250 = vmatpush1.msra.mxu0 %v1249
        %v1251 = vand.u32 %v249, 4294901760
        %1252 = vmatprep.subr.mxu0 %v1251
        %v1253 = vand.u32 %v248, 4294901760
        %1254 = vmatpush1.msra.mxu0 %v1253
        %v1255 = vand.u32 %v259, 4294901760
        %1256 = vmatprep.subr.mxu0 %v1255
        %v1257 = vand.u32 %v258, 4294901760
        %1258 = vmatpush1.msra.mxu0 %v1257
        %v1259 = vand.u32 %v269, 4294901760
        %1260 = vmatprep.subr.mxu0 %v1259
        %v1261 = vand.u32 %v268, 4294901760
        %1262 = vmatpush1.msra.mxu0 %v1261
        %v1263 = vand.u32 %v279, 4294901760
        %1264 = vmatprep.subr.mxu0 %v1263
        %v1265 = vand.u32 %v278, 4294901760
        %1266 = vmatpush1.msra.mxu0 %v1265
        %v1267 = vand.u32 %v289, 4294901760
        %1268 = vmatprep.subr.mxu0 %v1267
        %v1269 = vand.u32 %v288, 4294901760
        %1270 = vmatpush1.msra.mxu0 %v1269
        %v1271 = vand.u32 %v299, 4294901760
        %1272 = vmatprep.subr.mxu0 %v1271
        %v1273 = vand.u32 %v298, 4294901760
        %1274 = vmatpush1.msra.mxu0 %v1273
        %v1275 = vand.u32 %v309, 4294901760
        %1276 = vmatprep.subr.mxu0 %v1275
        %v1277 = vand.u32 %v308, 4294901760
        %1278 = vmatpush1.msra.mxu0 %v1277
        %v1279 = vand.u32 %v319, 4294901760
        %1280 = vmatprep.subr.mxu0 %v1279
        %v1281 = vand.u32 %v318, 4294901760
        %1282 = vmatpush1.msra.mxu0 %v1281
        %v1283 = vand.u32 %v329, 4294901760
        %1284 = vmatprep.subr.mxu0 %v1283
        %v1285 = vand.u32 %v328, 4294901760
        %1286 = vmatpush1.msra.mxu0 %v1285
        %v1287 = vand.u32 %v339, 4294901760
        %1288 = vmatprep.subr.mxu0 %v1287
        %v1289 = vand.u32 %v338, 4294901760
        %1290 = vmatpush1.msra.mxu0 %v1289
        %1291 = vmatprep.subr.mxu0 0.0
        %1292 = vmatpush1.msra.mxu0 0.0
        %1293 = vmatprep.subr.mxu0 0.0
        %1294 = vmatpush1.msra.mxu0 0.0
        %1295 = vmatprep.subr.mxu0 0.0
        %1296 = vmatpush1.msra.mxu0 0.0
        %1297 = vmatprep.subr.mxu0 0.0
        %1298 = vmatpush1.msra.mxu0 0.0
        %1299 = vmatprep.subr.mxu0 0.0
        %1300 = vmatpush1.msra.mxu0 0.0
        %1301 = vmatprep.subr.mxu0 0.0
        %1302 = vmatpush1.msra.mxu0 0.0
        %1303 = vmatprep.subr.mxu0 0.0
        %1304 = vmatpush1.msra.mxu0 0.0
        %1305 = vmatprep.subr.mxu0 0.0
        %1306 = vmatpush1.msra.mxu0 0.0
        %1307 = vmatprep.subr.mxu0 0.0
        %1308 = vmatpush1.msra.mxu0 0.0
        %1309 = vmatprep.subr.mxu0 0.0
        %1310 = vmatpush1.msra.mxu0 0.0
        %1311 = vmatprep.subr.mxu0 0.0
        %1312 = vmatpush1.msra.mxu0 0.0
        %1313 = vmatprep.subr.mxu0 0.0
        %1314 = vmatpush1.msra.mxu0 0.0
        %1315 = vmatprep.subr.mxu0 0.0
        %1316 = vmatpush1.msra.mxu0 0.0
        %1317 = vmatprep.subr.mxu0 0.0
        %1318 = vmatpush1.msra.mxu0 0.0
        %1319 = vmatprep.subr.mxu0 0.0
        %1320 = vmatpush1.msra.mxu0 0.0
        %1321 = vmatprep.subr.mxu0 0.0
        %1322 = vmatpush1.msra.mxu0 0.0
        %1323 = vmatprep.subr.mxu0 0.0
        %1324 = vmatpush1.msra.mxu0 0.0
        %1325 = vmatprep.mubr.f32.mxu0 0.0
        %v1326 = vand.u32 %v348, 4294901760
        %v1327 = vsub.f32 %v348, %v1326
        %v1328 = vand.u32 %v1327, 4294901760
        %v1329 = vsub.f32 %v1327, %v1328
        %v1330 = vand.u32 %v1329, 4294901760
        %1331 = vmatmul.mubr.f32.gmra.mrb[0].mxu0 %v1330
        %v1332 = vpop.f32.mrb[0].mxu0
        %v1333 = vadd.f32 0.0, %v1332
        %v1334 = vpop.f32.mrb[0].mxu0
        %v1335 = vadd.f32 0.0, %v1334
        %1336 = vmatprep.mubr.f32.mxu0 0.0
        %v1337 = vand.u32 %v351, 4294901760
        %v1338 = vsub.f32 %v351, %v1337
        %v1339 = vand.u32 %v1338, 4294901760
        %v1340 = vsub.f32 %v1338, %v1339
        %v1341 = vand.u32 %v1340, 4294901760
        %1342 = vmatmul.mubr.f32.gmra.mrb[0].mxu0 %v1341
        %v1343 = vpop.f32.mrb[0].mxu0
        %v1344 = vadd.f32 0.0, %v1343
        %v1345 = vpop.f32.mrb[0].mxu0
        %v1346 = vadd.f32 0.0, %v1345
        %1347 = vdwg.mxu0
        %v1348 = vand.u32 %v199, 4294901760
        %v1349 = vsub.f32 %v199, %v1348
        %v1350 = vand.u32 %v1349, 4294901760
        %v1351 = vsub.f32 %v1349, %v1350
        %v1352 = vand.u32 %v1351, 4294901760
        %1353 = vmatprep.subr.mxu0 %v1352
        %v1354 = vand.u32 %v198, 4294901760
        %v1355 = vsub.f32 %v198, %v1354
        %v1356 = vand.u32 %v1355, 4294901760
        %v1357 = vsub.f32 %v1355, %v1356
        %v1358 = vand.u32 %v1357, 4294901760
        %1359 = vmatpush1.msra.mxu0 %v1358
        %v1360 = vand.u32 %v209, 4294901760
        %v1361 = vsub.f32 %v209, %v1360
        %v1362 = vand.u32 %v1361, 4294901760
        %v1363 = vsub.f32 %v1361, %v1362
        %v1364 = vand.u32 %v1363, 4294901760
        %1365 = vmatprep.subr.mxu0 %v1364
        %v1366 = vand.u32 %v208, 4294901760
        %v1367 = vsub.f32 %v208, %v1366
        %v1368 = vand.u32 %v1367, 4294901760
        %v1369 = vsub.f32 %v1367, %v1368
        %v1370 = vand.u32 %v1369, 4294901760
        %1371 = vmatpush1.msra.mxu0 %v1370
        %v1372 = vand.u32 %v219, 4294901760
        %v1373 = vsub.f32 %v219, %v1372
        %v1374 = vand.u32 %v1373, 4294901760
        %v1375 = vsub.f32 %v1373, %v1374
        %v1376 = vand.u32 %v1375, 4294901760
        %1377 = vmatprep.subr.mxu0 %v1376
        %v1378 = vand.u32 %v218, 4294901760
        %v1379 = vsub.f32 %v218, %v1378
        %v1380 = vand.u32 %v1379, 4294901760
        %v1381 = vsub.f32 %v1379, %v1380
        %v1382 = vand.u32 %v1381, 4294901760
        %1383 = vmatpush1.msra.mxu0 %v1382
        %v1384 = vand.u32 %v229, 4294901760
        %v1385 = vsub.f32 %v229, %v1384
        %v1386 = vand.u32 %v1385, 4294901760
        %v1387 = vsub.f32 %v1385, %v1386
        %v1388 = vand.u32 %v1387, 4294901760
        %1389 = vmatprep.subr.mxu0 %v1388
        %v1390 = vand.u32 %v228, 4294901760
        %v1391 = vsub.f32 %v228, %v1390
        %v1392 = vand.u32 %v1391, 4294901760
        %v1393 = vsub.f32 %v1391, %v1392
        %v1394 = vand.u32 %v1393, 4294901760
        %1395 = vmatpush1.msra.mxu0 %v1394
        %v1396 = vand.u32 %v239, 4294901760
        %v1397 = vsub.f32 %v239, %v1396
        %v1398 = vand.u32 %v1397, 4294901760
        %v1399 = vsub.f32 %v1397, %v1398
        %v1400 = vand.u32 %v1399, 4294901760
        %1401 = vmatprep.subr.mxu0 %v1400
        %v1402 = vand.u32 %v238, 4294901760
        %v1403 = vsub.f32 %v238, %v1402
        %v1404 = vand.u32 %v1403, 4294901760
        %v1405 = vsub.f32 %v1403, %v1404
        %v1406 = vand.u32 %v1405, 4294901760
        %1407 = vmatpush1.msra.mxu0 %v1406
        %v1408 = vand.u32 %v249, 4294901760
        %v1409 = vsub.f32 %v249, %v1408
        %v1410 = vand.u32 %v1409, 4294901760
        %v1411 = vsub.f32 %v1409, %v1410
        %v1412 = vand.u32 %v1411, 4294901760
        %1413 = vmatprep.subr.mxu0 %v1412
        %v1414 = vand.u32 %v248, 4294901760
        %v1415 = vsub.f32 %v248, %v1414
        %v1416 = vand.u32 %v1415, 4294901760
        %v1417 = vsub.f32 %v1415, %v1416
        %v1418 = vand.u32 %v1417, 4294901760
        %1419 = vmatpush1.msra.mxu0 %v1418
        %v1420 = vand.u32 %v259, 4294901760
        %v1421 = vsub.f32 %v259, %v1420
        %v1422 = vand.u32 %v1421, 4294901760
        %v1423 = vsub.f32 %v1421, %v1422
        %v1424 = vand.u32 %v1423, 4294901760
        %1425 = vmatprep.subr.mxu0 %v1424
        %v1426 = vand.u32 %v258, 4294901760
        %v1427 = vsub.f32 %v258, %v1426
        %v1428 = vand.u32 %v1427, 4294901760
        %v1429 = vsub.f32 %v1427, %v1428
        %v1430 = vand.u32 %v1429, 4294901760
        %1431 = vmatpush1.msra.mxu0 %v1430
        %v1432 = vand.u32 %v269, 4294901760
        %v1433 = vsub.f32 %v269, %v1432
        %v1434 = vand.u32 %v1433, 4294901760
        %v1435 = vsub.f32 %v1433, %v1434
        %v1436 = vand.u32 %v1435, 4294901760
        %1437 = vmatprep.subr.mxu0 %v1436
        %v1438 = vand.u32 %v268, 4294901760
        %v1439 = vsub.f32 %v268, %v1438
        %v1440 = vand.u32 %v1439, 4294901760
        %v1441 = vsub.f32 %v1439, %v1440
        %v1442 = vand.u32 %v1441, 4294901760
        %1443 = vmatpush1.msra.mxu0 %v1442
        %v1444 = vand.u32 %v279, 4294901760
        %v1445 = vsub.f32 %v279, %v1444
        %v1446 = vand.u32 %v1445, 4294901760
        %v1447 = vsub.f32 %v1445, %v1446
        %v1448 = vand.u32 %v1447, 4294901760
        %1449 = vmatprep.subr.mxu0 %v1448
        %v1450 = vand.u32 %v278, 4294901760
        %v1451 = vsub.f32 %v278, %v1450
        %v1452 = vand.u32 %v1451, 4294901760
        %v1453 = vsub.f32 %v1451, %v1452
        %v1454 = vand.u32 %v1453, 4294901760
        %1455 = vmatpush1.msra.mxu0 %v1454
        %v1456 = vand.u32 %v289, 4294901760
        %v1457 = vsub.f32 %v289, %v1456
        %v1458 = vand.u32 %v1457, 4294901760
        %v1459 = vsub.f32 %v1457, %v1458
        %v1460 = vand.u32 %v1459, 4294901760
        %1461 = vmatprep.subr.mxu0 %v1460
        %v1462 = vand.u32 %v288, 4294901760
        %v1463 = vsub.f32 %v288, %v1462
        %v1464 = vand.u32 %v1463, 4294901760
        %v1465 = vsub.f32 %v1463, %v1464
        %v1466 = vand.u32 %v1465, 4294901760
        %1467 = vmatpush1.msra.mxu0 %v1466
        %v1468 = vand.u32 %v299, 4294901760
        %v1469 = vsub.f32 %v299, %v1468
        %v1470 = vand.u32 %v1469, 4294901760
        %v1471 = vsub.f32 %v1469, %v1470
        %v1472 = vand.u32 %v1471, 4294901760
        %1473 = vmatprep.subr.mxu0 %v1472
        %v1474 = vand.u32 %v298, 4294901760
        %v1475 = vsub.f32 %v298, %v1474
        %v1476 = vand.u32 %v1475, 4294901760
        %v1477 = vsub.f32 %v1475, %v1476
        %v1478 = vand.u32 %v1477, 4294901760
        %1479 = vmatpush1.msra.mxu0 %v1478
        %v1480 = vand.u32 %v309, 4294901760
        %v1481 = vsub.f32 %v309, %v1480
        %v1482 = vand.u32 %v1481, 4294901760
        %v1483 = vsub.f32 %v1481, %v1482
        %v1484 = vand.u32 %v1483, 4294901760
        %1485 = vmatprep.subr.mxu0 %v1484
        %v1486 = vand.u32 %v308, 4294901760
        %v1487 = vsub.f32 %v308, %v1486
        %v1488 = vand.u32 %v1487, 4294901760
        %v1489 = vsub.f32 %v1487, %v1488
        %v1490 = vand.u32 %v1489, 4294901760
        %1491 = vmatpush1.msra.mxu0 %v1490
        %v1492 = vand.u32 %v319, 4294901760
        %v1493 = vsub.f32 %v319, %v1492
        %v1494 = vand.u32 %v1493, 4294901760
        %v1495 = vsub.f32 %v1493, %v1494
        %v1496 = vand.u32 %v1495, 4294901760
        %1497 = vmatprep.subr.mxu0 %v1496
        %v1498 = vand.u32 %v318, 4294901760
        %v1499 = vsub.f32 %v318, %v1498
        %v1500 = vand.u32 %v1499, 4294901760
        %v1501 = vsub.f32 %v1499, %v1500
        %v1502 = vand.u32 %v1501, 4294901760
        %1503 = vmatpush1.msra.mxu0 %v1502
        %v1504 = vand.u32 %v329, 4294901760
        %v1505 = vsub.f32 %v329, %v1504
        %v1506 = vand.u32 %v1505, 4294901760
        %v1507 = vsub.f32 %v1505, %v1506
        %v1508 = vand.u32 %v1507, 4294901760
        %1509 = vmatprep.subr.mxu0 %v1508
        %v1510 = vand.u32 %v328, 4294901760
        %v1511 = vsub.f32 %v328, %v1510
        %v1512 = vand.u32 %v1511, 4294901760
        %v1513 = vsub.f32 %v1511, %v1512
        %v1514 = vand.u32 %v1513, 4294901760
        %1515 = vmatpush1.msra.mxu0 %v1514
        %v1516 = vand.u32 %v339, 4294901760
        %v1517 = vsub.f32 %v339, %v1516
        %v1518 = vand.u32 %v1517, 4294901760
        %v1519 = vsub.f32 %v1517, %v1518
        %v1520 = vand.u32 %v1519, 4294901760
        %1521 = vmatprep.subr.mxu0 %v1520
        %v1522 = vand.u32 %v338, 4294901760
        %v1523 = vsub.f32 %v338, %v1522
        %v1524 = vand.u32 %v1523, 4294901760
        %v1525 = vsub.f32 %v1523, %v1524
        %v1526 = vand.u32 %v1525, 4294901760
        %1527 = vmatpush1.msra.mxu0 %v1526
        %1528 = vmatprep.subr.mxu0 0.0
        %1529 = vmatpush1.msra.mxu0 0.0
        %1530 = vmatprep.subr.mxu0 0.0
        %1531 = vmatpush1.msra.mxu0 0.0
        %1532 = vmatprep.subr.mxu0 0.0
        %1533 = vmatpush1.msra.mxu0 0.0
        %1534 = vmatprep.subr.mxu0 0.0
        %1535 = vmatpush1.msra.mxu0 0.0
        %1536 = vmatprep.subr.mxu0 0.0
        %1537 = vmatpush1.msra.mxu0 0.0
        %1538 = vmatprep.subr.mxu0 0.0
        %1539 = vmatpush1.msra.mxu0 0.0
        %1540 = vmatprep.subr.mxu0 0.0
        %1541 = vmatpush1.msra.mxu0 0.0
        %1542 = vmatprep.subr.mxu0 0.0
        %1543 = vmatpush1.msra.mxu0 0.0
        %1544 = vmatprep.subr.mxu0 0.0
        %1545 = vmatpush1.msra.mxu0 0.0
        %1546 = vmatprep.subr.mxu0 0.0
        %1547 = vmatpush1.msra.mxu0 0.0
        %1548 = vmatprep.subr.mxu0 0.0
        %1549 = vmatpush1.msra.mxu0 0.0
        %1550 = vmatprep.subr.mxu0 0.0
        %1551 = vmatpush1.msra.mxu0 0.0
        %1552 = vmatprep.subr.mxu0 0.0
        %1553 = vmatpush1.msra.mxu0 0.0
        %1554 = vmatprep.subr.mxu0 0.0
        %1555 = vmatpush1.msra.mxu0 0.0
        %1556 = vmatprep.subr.mxu0 0.0
        %1557 = vmatpush1.msra.mxu0 0.0
        %1558 = vmatprep.subr.mxu0 0.0
        %1559 = vmatpush1.msra.mxu0 0.0
        %1560 = vmatprep.subr.mxu0 0.0
        %1561 = vmatpush1.msra.mxu0 0.0
        %1562 = vmatprep.mubr.f32.mxu0 0.0
        %v1563 = vand.u32 %v348, 4294901760
        %1564 = vmatmul.mubr.f32.gmra.mrb[0].mxu0 %v1563
        %v1565 = vpop.f32.mrb[0].mxu0
        %v1566 = vadd.f32 %v1333, %v1565
        %v1567 = vpop.f32.mrb[0].mxu0
        %v1568 = vadd.f32 %v1335, %v1567
        %1569 = vmatprep.mubr.f32.mxu0 0.0
        %v1570 = vand.u32 %v351, 4294901760
        %1571 = vmatmul.mubr.f32.gmra.mrb[0].mxu0 %v1570
        %v1572 = vpop.f32.mrb[0].mxu0
        %v1573 = vadd.f32 %v1344, %v1572
        %v1574 = vpop.f32.mrb[0].mxu0
        %v1575 = vadd.f32 %v1346, %v1574
        %1576 = vdwg.mxu0
        %v1577 = vand.u32 %v199, 4294901760
        %v1578 = vsub.f32 %v199, %v1577
        %1579 = vmatprep.subr.mxu0 %v1578
        %v1580 = vand.u32 %v198, 4294901760
        %v1581 = vsub.f32 %v198, %v1580
        %1582 = vmatpush1.msra.mxu0 %v1581
        %v1583 = vand.u32 %v209, 4294901760
        %v1584 = vsub.f32 %v209, %v1583
        %1585 = vmatprep.subr.mxu0 %v1584
        %v1586 = vand.u32 %v208, 4294901760
        %v1587 = vsub.f32 %v208, %v1586
        %1588 = vmatpush1.msra.mxu0 %v1587
        %v1589 = vand.u32 %v219, 4294901760
        %v1590 = vsub.f32 %v219, %v1589
        %1591 = vmatprep.subr.mxu0 %v1590
        %v1592 = vand.u32 %v218, 4294901760
        %v1593 = vsub.f32 %v218, %v1592
        %1594 = vmatpush1.msra.mxu0 %v1593
        %v1595 = vand.u32 %v229, 4294901760
        %v1596 = vsub.f32 %v229, %v1595
        %1597 = vmatprep.subr.mxu0 %v1596
        %v1598 = vand.u32 %v228, 4294901760
        %v1599 = vsub.f32 %v228, %v1598
        %1600 = vmatpush1.msra.mxu0 %v1599
        %v1601 = vand.u32 %v239, 4294901760
        %v1602 = vsub.f32 %v239, %v1601
        %1603 = vmatprep.subr.mxu0 %v1602
        %v1604 = vand.u32 %v238, 4294901760
        %v1605 = vsub.f32 %v238, %v1604
        %1606 = vmatpush1.msra.mxu0 %v1605
        %v1607 = vand.u32 %v249, 4294901760
        %v1608 = vsub.f32 %v249, %v1607
        %1609 = vmatprep.subr.mxu0 %v1608
        %v1610 = vand.u32 %v248, 4294901760
        %v1611 = vsub.f32 %v248, %v1610
        %1612 = vmatpush1.msra.mxu0 %v1611
        %v1613 = vand.u32 %v259, 4294901760
        %v1614 = vsub.f32 %v259, %v1613
        %1615 = vmatprep.subr.mxu0 %v1614
        %v1616 = vand.u32 %v258, 4294901760
        %v1617 = vsub.f32 %v258, %v1616
        %1618 = vmatpush1.msra.mxu0 %v1617
        %v1619 = vand.u32 %v269, 4294901760
        %v1620 = vsub.f32 %v269, %v1619
        %1621 = vmatprep.subr.mxu0 %v1620
        %v1622 = vand.u32 %v268, 4294901760
        %v1623 = vsub.f32 %v268, %v1622
        %1624 = vmatpush1.msra.mxu0 %v1623
        %v1625 = vand.u32 %v279, 4294901760
        %v1626 = vsub.f32 %v279, %v1625
        %1627 = vmatprep.subr.mxu0 %v1626
        %v1628 = vand.u32 %v278, 4294901760
        %v1629 = vsub.f32 %v278, %v1628
        %1630 = vmatpush1.msra.mxu0 %v1629
        %v1631 = vand.u32 %v289, 4294901760
        %v1632 = vsub.f32 %v289, %v1631
        %1633 = vmatprep.subr.mxu0 %v1632
        %v1634 = vand.u32 %v288, 4294901760
        %v1635 = vsub.f32 %v288, %v1634
        %1636 = vmatpush1.msra.mxu0 %v1635
        %v1637 = vand.u32 %v299, 4294901760
        %v1638 = vsub.f32 %v299, %v1637
        %1639 = vmatprep.subr.mxu0 %v1638
        %v1640 = vand.u32 %v298, 4294901760
        %v1641 = vsub.f32 %v298, %v1640
        %1642 = vmatpush1.msra.mxu0 %v1641
        %v1643 = vand.u32 %v309, 4294901760
        %v1644 = vsub.f32 %v309, %v1643
        %1645 = vmatprep.subr.mxu0 %v1644
        %v1646 = vand.u32 %v308, 4294901760
        %v1647 = vsub.f32 %v308, %v1646
        %1648 = vmatpush1.msra.mxu0 %v1647
        %v1649 = vand.u32 %v319, 4294901760
        %v1650 = vsub.f32 %v319, %v1649
        %1651 = vmatprep.subr.mxu0 %v1650
        %v1652 = vand.u32 %v318, 4294901760
        %v1653 = vsub.f32 %v318, %v1652
        %1654 = vmatpush1.msra.mxu0 %v1653
        %v1655 = vand.u32 %v329, 4294901760
        %v1656 = vsub.f32 %v329, %v1655
        %1657 = vmatprep.subr.mxu0 %v1656
        %v1658 = vand.u32 %v328, 4294901760
        %v1659 = vsub.f32 %v328, %v1658
        %1660 = vmatpush1.msra.mxu0 %v1659
        %v1661 = vand.u32 %v339, 4294901760
        %v1662 = vsub.f32 %v339, %v1661
        %1663 = vmatprep.subr.mxu0 %v1662
        %v1664 = vand.u32 %v338, 4294901760
        %v1665 = vsub.f32 %v338, %v1664
        %1666 = vmatpush1.msra.mxu0 %v1665
        %1667 = vmatprep.subr.mxu0 0.0
        %1668 = vmatpush1.msra.mxu0 0.0
        %1669 = vmatprep.subr.mxu0 0.0
        %1670 = vmatpush1.msra.mxu0 0.0
        %1671 = vmatprep.subr.mxu0 0.0
        %1672 = vmatpush1.msra.mxu0 0.0
        %1673 = vmatprep.subr.mxu0 0.0
        %1674 = vmatpush1.msra.mxu0 0.0
        %1675 = vmatprep.subr.mxu0 0.0
        %1676 = vmatpush1.msra.mxu0 0.0
        %1677 = vmatprep.subr.mxu0 0.0
        %1678 = vmatpush1.msra.mxu0 0.0
        %1679 = vmatprep.subr.mxu0 0.0
        %1680 = vmatpush1.msra.mxu0 0.0
        %1681 = vmatprep.subr.mxu0 0.0
        %1682 = vmatpush1.msra.mxu0 0.0
        %1683 = vmatprep.subr.mxu0 0.0
        %1684 = vmatpush1.msra.mxu0 0.0
        %1685 = vmatprep.subr.mxu0 0.0
        %1686 = vmatpush1.msra.mxu0 0.0
        %1687 = vmatprep.subr.mxu0 0.0
        %1688 = vmatpush1.msra.mxu0 0.0
        %1689 = vmatprep.subr.mxu0 0.0
        %1690 = vmatpush1.msra.mxu0 0.0
        %1691 = vmatprep.subr.mxu0 0.0
        %1692 = vmatpush1.msra.mxu0 0.0
        %1693 = vmatprep.subr.mxu0 0.0
        %1694 = vmatpush1.msra.mxu0 0.0
        %1695 = vmatprep.subr.mxu0 0.0
        %1696 = vmatpush1.msra.mxu0 0.0
        %1697 = vmatprep.subr.mxu0 0.0
        %1698 = vmatpush1.msra.mxu0 0.0
        %1699 = vmatprep.subr.mxu0 0.0
        %1700 = vmatpush1.msra.mxu0 0.0
        %1701 = vmatprep.mubr.f32.mxu0 0.0
        %v1702 = vand.u32 %v348, 4294901760
        %v1703 = vsub.f32 %v348, %v1702
        %1704 = vmatmul.mubr.f32.gmra.mrb[0].mxu0 %v1703
        %v1705 = vpop.f32.mrb[0].mxu0
        %v1706 = vadd.f32 %v1566, %v1705
        %v1707 = vpop.f32.mrb[0].mxu0
        %v1708 = vadd.f32 %v1568, %v1707
        %1709 = vmatprep.mubr.f32.mxu0 0.0
        %v1710 = vand.u32 %v351, 4294901760
        %v1711 = vsub.f32 %v351, %v1710
        %1712 = vmatmul.mubr.f32.gmra.mrb[0].mxu0 %v1711
        %v1713 = vpop.f32.mrb[0].mxu0
        %v1714 = vadd.f32 %v1573, %v1713
        %v1715 = vpop.f32.mrb[0].mxu0
        %v1716 = vadd.f32 %v1575, %v1715
        %1717 = vdwg.mxu0
        %v1718 = vand.u32 %v199, 4294901760
        %1719 = vmatprep.subr.mxu0 %v1718
        %v1720 = vand.u32 %v198, 4294901760
        %1721 = vmatpush1.msra.mxu0 %v1720
        %v1722 = vand.u32 %v209, 4294901760
        %1723 = vmatprep.subr.mxu0 %v1722
        %v1724 = vand.u32 %v208, 4294901760
        %1725 = vmatpush1.msra.mxu0 %v1724
        %v1726 = vand.u32 %v219, 4294901760
        %1727 = vmatprep.subr.mxu0 %v1726
        %v1728 = vand.u32 %v218, 4294901760
        %1729 = vmatpush1.msra.mxu0 %v1728
        %v1730 = vand.u32 %v229, 4294901760
        %1731 = vmatprep.subr.mxu0 %v1730
        %v1732 = vand.u32 %v228, 4294901760
        %1733 = vmatpush1.msra.mxu0 %v1732
        %v1734 = vand.u32 %v239, 4294901760
        %1735 = vmatprep.subr.mxu0 %v1734
        %v1736 = vand.u32 %v238, 4294901760
        %1737 = vmatpush1.msra.mxu0 %v1736
        %v1738 = vand.u32 %v249, 4294901760
        %1739 = vmatprep.subr.mxu0 %v1738
        %v1740 = vand.u32 %v248, 4294901760
        %1741 = vmatpush1.msra.mxu0 %v1740
        %v1742 = vand.u32 %v259, 4294901760
        %1743 = vmatprep.subr.mxu0 %v1742
        %v1744 = vand.u32 %v258, 4294901760
        %1745 = vmatpush1.msra.mxu0 %v1744
        %v1746 = vand.u32 %v269, 4294901760
        %1747 = vmatprep.subr.mxu0 %v1746
        %v1748 = vand.u32 %v268, 4294901760
        %1749 = vmatpush1.msra.mxu0 %v1748
        %v1750 = vand.u32 %v279, 4294901760
        %1751 = vmatprep.subr.mxu0 %v1750
        %v1752 = vand.u32 %v278, 4294901760
        %1753 = vmatpush1.msra.mxu0 %v1752
        %v1754 = vand.u32 %v289, 4294901760
        %1755 = vmatprep.subr.mxu0 %v1754
        %v1756 = vand.u32 %v288, 4294901760
        %1757 = vmatpush1.msra.mxu0 %v1756
        %v1758 = vand.u32 %v299, 4294901760
        %1759 = vmatprep.subr.mxu0 %v1758
        %v1760 = vand.u32 %v298, 4294901760
        %1761 = vmatpush1.msra.mxu0 %v1760
        %v1762 = vand.u32 %v309, 4294901760
        %1763 = vmatprep.subr.mxu0 %v1762
        %v1764 = vand.u32 %v308, 4294901760
        %1765 = vmatpush1.msra.mxu0 %v1764
        %v1766 = vand.u32 %v319, 4294901760
        %1767 = vmatprep.subr.mxu0 %v1766
        %v1768 = vand.u32 %v318, 4294901760
        %1769 = vmatpush1.msra.mxu0 %v1768
        %v1770 = vand.u32 %v329, 4294901760
        %1771 = vmatprep.subr.mxu0 %v1770
        %v1772 = vand.u32 %v328, 4294901760
        %1773 = vmatpush1.msra.mxu0 %v1772
        %v1774 = vand.u32 %v339, 4294901760
        %1775 = vmatprep.subr.mxu0 %v1774
        %v1776 = vand.u32 %v338, 4294901760
        %1777 = vmatpush1.msra.mxu0 %v1776
        %1778 = vmatprep.subr.mxu0 0.0
        %1779 = vmatpush1.msra.mxu0 0.0
        %1780 = vmatprep.subr.mxu0 0.0
        %1781 = vmatpush1.msra.mxu0 0.0
        %1782 = vmatprep.subr.mxu0 0.0
        %1783 = vmatpush1.msra.mxu0 0.0
        %1784 = vmatprep.subr.mxu0 0.0
        %1785 = vmatpush1.msra.mxu0 0.0
        %1786 = vmatprep.subr.mxu0 0.0
        %1787 = vmatpush1.msra.mxu0 0.0
        %1788 = vmatprep.subr.mxu0 0.0
        %1789 = vmatpush1.msra.mxu0 0.0
        %1790 = vmatprep.subr.mxu0 0.0
        %1791 = vmatpush1.msra.mxu0 0.0
        %1792 = vmatprep.subr.mxu0 0.0
        %1793 = vmatpush1.msra.mxu0 0.0
        %1794 = vmatprep.subr.mxu0 0.0
        %1795 = vmatpush1.msra.mxu0 0.0
        %1796 = vmatprep.subr.mxu0 0.0
        %1797 = vmatpush1.msra.mxu0 0.0
        %1798 = vmatprep.subr.mxu0 0.0
        %1799 = vmatpush1.msra.mxu0 0.0
        %1800 = vmatprep.subr.mxu0 0.0
        %1801 = vmatpush1.msra.mxu0 0.0
        %1802 = vmatprep.subr.mxu0 0.0
        %1803 = vmatpush1.msra.mxu0 0.0
        %1804 = vmatprep.subr.mxu0 0.0
        %1805 = vmatpush1.msra.mxu0 0.0
        %1806 = vmatprep.subr.mxu0 0.0
        %1807 = vmatpush1.msra.mxu0 0.0
        %1808 = vmatprep.subr.mxu0 0.0
        %1809 = vmatpush1.msra.mxu0 0.0
        %1810 = vmatprep.subr.mxu0 0.0
        %1811 = vmatpush1.msra.mxu0 0.0
        %1812 = vmatprep.mubr.f32.mxu0 0.0
        %v1813 = vand.u32 %v348, 4294901760
        %v1814 = vsub.f32 %v348, %v1813
        %v1815 = vand.u32 %v1814, 4294901760
        %1816 = vmatmul.mubr.f32.gmra.mrb[0].mxu0 %v1815
        %v1817 = vpop.f32.mrb[0].mxu0
        %v1818 = vadd.f32 %v1706, %v1817
        %v1819 = vpop.f32.mrb[0].mxu0
        %v1820 = vadd.f32 %v1708, %v1819
        %1821 = vmatprep.mubr.f32.mxu0 0.0
        %v1822 = vand.u32 %v351, 4294901760
        %v1823 = vsub.f32 %v351, %v1822
        %v1824 = vand.u32 %v1823, 4294901760
        %1825 = vmatmul.mubr.f32.gmra.mrb[0].mxu0 %v1824
        %v1826 = vpop.f32.mrb[0].mxu0
        %v1827 = vadd.f32 %v1714, %v1826
        %v1828 = vpop.f32.mrb[0].mxu0
        %v1829 = vadd.f32 %v1716, %v1828
        %1830 = vdwg.mxu0
        %v1831 = vand.u32 %v199, 4294901760
        %v1832 = vsub.f32 %v199, %v1831
        %v1833 = vand.u32 %v1832, 4294901760
        %1834 = vmatprep.subr.mxu0 %v1833
        %v1835 = vand.u32 %v198, 4294901760
        %v1836 = vsub.f32 %v198, %v1835
        %v1837 = vand.u32 %v1836, 4294901760
        %1838 = vmatpush1.msra.mxu0 %v1837
        %v1839 = vand.u32 %v209, 4294901760
        %v1840 = vsub.f32 %v209, %v1839
        %v1841 = vand.u32 %v1840, 4294901760
        %1842 = vmatprep.subr.mxu0 %v1841
        %v1843 = vand.u32 %v208, 4294901760
        %v1844 = vsub.f32 %v208, %v1843
        %v1845 = vand.u32 %v1844, 4294901760
        %1846 = vmatpush1.msra.mxu0 %v1845
        %v1847 = vand.u32 %v219, 4294901760
        %v1848 = vsub.f32 %v219, %v1847
        %v1849 = vand.u32 %v1848, 4294901760
        %1850 = vmatprep.subr.mxu0 %v1849
        %v1851 = vand.u32 %v218, 4294901760
        %v1852 = vsub.f32 %v218, %v1851
        %v1853 = vand.u32 %v1852, 4294901760
        %1854 = vmatpush1.msra.mxu0 %v1853
        %v1855 = vand.u32 %v229, 4294901760
        %v1856 = vsub.f32 %v229, %v1855
        %v1857 = vand.u32 %v1856, 4294901760
        %1858 = vmatprep.subr.mxu0 %v1857
        %v1859 = vand.u32 %v228, 4294901760
        %v1860 = vsub.f32 %v228, %v1859
        %v1861 = vand.u32 %v1860, 4294901760
        %1862 = vmatpush1.msra.mxu0 %v1861
        %v1863 = vand.u32 %v239, 4294901760
        %v1864 = vsub.f32 %v239, %v1863
        %v1865 = vand.u32 %v1864, 4294901760
        %1866 = vmatprep.subr.mxu0 %v1865
        %v1867 = vand.u32 %v238, 4294901760
        %v1868 = vsub.f32 %v238, %v1867
        %v1869 = vand.u32 %v1868, 4294901760
        %1870 = vmatpush1.msra.mxu0 %v1869
        %v1871 = vand.u32 %v249, 4294901760
        %v1872 = vsub.f32 %v249, %v1871
        %v1873 = vand.u32 %v1872, 4294901760
        %1874 = vmatprep.subr.mxu0 %v1873
        %v1875 = vand.u32 %v248, 4294901760
        %v1876 = vsub.f32 %v248, %v1875
        %v1877 = vand.u32 %v1876, 4294901760
        %1878 = vmatpush1.msra.mxu0 %v1877
        %v1879 = vand.u32 %v259, 4294901760
        %v1880 = vsub.f32 %v259, %v1879
        %v1881 = vand.u32 %v1880, 4294901760
        %1882 = vmatprep.subr.mxu0 %v1881
        %v1883 = vand.u32 %v258, 4294901760
        %v1884 = vsub.f32 %v258, %v1883
        %v1885 = vand.u32 %v1884, 4294901760
        %1886 = vmatpush1.msra.mxu0 %v1885
        %v1887 = vand.u32 %v269, 4294901760
        %v1888 = vsub.f32 %v269, %v1887
        %v1889 = vand.u32 %v1888, 4294901760
        %1890 = vmatprep.subr.mxu0 %v1889
        %v1891 = vand.u32 %v268, 4294901760
        %v1892 = vsub.f32 %v268, %v1891
        %v1893 = vand.u32 %v1892, 4294901760
        %1894 = vmatpush1.msra.mxu0 %v1893
        %v1895 = vand.u32 %v279, 4294901760
        %v1896 = vsub.f32 %v279, %v1895
        %v1897 = vand.u32 %v1896, 4294901760
        %1898 = vmatprep.subr.mxu0 %v1897
        %v1899 = vand.u32 %v278, 4294901760
        %v1900 = vsub.f32 %v278, %v1899
        %v1901 = vand.u32 %v1900, 4294901760
        %1902 = vmatpush1.msra.mxu0 %v1901
        %v1903 = vand.u32 %v289, 4294901760
        %v1904 = vsub.f32 %v289, %v1903
        %v1905 = vand.u32 %v1904, 4294901760
        %1906 = vmatprep.subr.mxu0 %v1905
        %v1907 = vand.u32 %v288, 4294901760
        %v1908 = vsub.f32 %v288, %v1907
        %v1909 = vand.u32 %v1908, 4294901760
        %1910 = vmatpush1.msra.mxu0 %v1909
        %v1911 = vand.u32 %v299, 4294901760
        %v1912 = vsub.f32 %v299, %v1911
        %v1913 = vand.u32 %v1912, 4294901760
        %1914 = vmatprep.subr.mxu0 %v1913
        %v1915 = vand.u32 %v298, 4294901760
        %v1916 = vsub.f32 %v298, %v1915
        %v1917 = vand.u32 %v1916, 4294901760
        %1918 = vmatpush1.msra.mxu0 %v1917
        %v1919 = vand.u32 %v309, 4294901760
        %v1920 = vsub.f32 %v309, %v1919
        %v1921 = vand.u32 %v1920, 4294901760
        %1922 = vmatprep.subr.mxu0 %v1921
        %v1923 = vand.u32 %v308, 4294901760
        %v1924 = vsub.f32 %v308, %v1923
        %v1925 = vand.u32 %v1924, 4294901760
        %1926 = vmatpush1.msra.mxu0 %v1925
        %v1927 = vand.u32 %v319, 4294901760
        %v1928 = vsub.f32 %v319, %v1927
        %v1929 = vand.u32 %v1928, 4294901760
        %1930 = vmatprep.subr.mxu0 %v1929
        %v1931 = vand.u32 %v318, 4294901760
        %v1932 = vsub.f32 %v318, %v1931
        %v1933 = vand.u32 %v1932, 4294901760
        %1934 = vmatpush1.msra.mxu0 %v1933
        %v1935 = vand.u32 %v329, 4294901760
        %v1936 = vsub.f32 %v329, %v1935
        %v1937 = vand.u32 %v1936, 4294901760
        %1938 = vmatprep.subr.mxu0 %v1937
        %v1939 = vand.u32 %v328, 4294901760
        %v1940 = vsub.f32 %v328, %v1939
        %v1941 = vand.u32 %v1940, 4294901760
        %1942 = vmatpush1.msra.mxu0 %v1941
        %v1943 = vand.u32 %v339, 4294901760
        %v1944 = vsub.f32 %v339, %v1943
        %v1945 = vand.u32 %v1944, 4294901760
        %1946 = vmatprep.subr.mxu0 %v1945
        %v1947 = vand.u32 %v338, 4294901760
        %v1948 = vsub.f32 %v338, %v1947
        %v1949 = vand.u32 %v1948, 4294901760
        %1950 = vmatpush1.msra.mxu0 %v1949
        %1951 = vmatprep.subr.mxu0 0.0
        %1952 = vmatpush1.msra.mxu0 0.0
        %1953 = vmatprep.subr.mxu0 0.0
        %1954 = vmatpush1.msra.mxu0 0.0
        %1955 = vmatprep.subr.mxu0 0.0
        %1956 = vmatpush1.msra.mxu0 0.0
        %1957 = vmatprep.subr.mxu0 0.0
        %1958 = vmatpush1.msra.mxu0 0.0
        %1959 = vmatprep.subr.mxu0 0.0
        %1960 = vmatpush1.msra.mxu0 0.0
        %1961 = vmatprep.subr.mxu0 0.0
        %1962 = vmatpush1.msra.mxu0 0.0
        %1963 = vmatprep.subr.mxu0 0.0
        %1964 = vmatpush1.msra.mxu0 0.0
        %1965 = vmatprep.subr.mxu0 0.0
        %1966 = vmatpush1.msra.mxu0 0.0
        %1967 = vmatprep.subr.mxu0 0.0
        %1968 = vmatpush1.msra.mxu0 0.0
        %1969 = vmatprep.subr.mxu0 0.0
        %1970 = vmatpush1.msra.mxu0 0.0
        %1971 = vmatprep.subr.mxu0 0.0
        %1972 = vmatpush1.msra.mxu0 0.0
        %1973 = vmatprep.subr.mxu0 0.0
        %1974 = vmatpush1.msra.mxu0 0.0
        %1975 = vmatprep.subr.mxu0 0.0
        %1976 = vmatpush1.msra.mxu0 0.0
        %1977 = vmatprep.subr.mxu0 0.0
        %1978 = vmatpush1.msra.mxu0 0.0
        %1979 = vmatprep.subr.mxu0 0.0
        %1980 = vmatpush1.msra.mxu0 0.0
        %1981 = vmatprep.subr.mxu0 0.0
        %1982 = vmatpush1.msra.mxu0 0.0
        %1983 = vmatprep.subr.mxu0 0.0
        %1984 = vmatpush1.msra.mxu0 0.0
        %1985 = vmatprep.mubr.f32.mxu0 0.0
        %v1986 = vand.u32 %v348, 4294901760
        %1987 = vmatmul.mubr.f32.gmra.mrb[0].mxu0 %v1986
        %v1988 = vpop.f32.mrb[0].mxu0
        %v1989 = vadd.f32 %v1818, %v1988
        %v1990 = vpop.f32.mrb[0].mxu0
        %v1991 = vadd.f32 %v1820, %v1990
        %1992 = vmatprep.mubr.f32.mxu0 0.0
        %v1993 = vand.u32 %v351, 4294901760
        %1994 = vmatmul.mubr.f32.gmra.mrb[0].mxu0 %v1993
        %v1995 = vpop.f32.mrb[0].mxu0
        %v1996 = vadd.f32 %v1827, %v1995
        %v1997 = vpop.f32.mrb[0].mxu0
        %v1998 = vadd.f32 %v1829, %v1997
        %1999 = vdwg.mxu0
        %v2000 = vand.u32 %v199, 4294901760
        %2001 = vmatprep.subr.mxu0 %v2000
        %v2002 = vand.u32 %v198, 4294901760
        %2003 = vmatpush1.msra.mxu0 %v2002
        %v2004 = vand.u32 %v209, 4294901760
        %2005 = vmatprep.subr.mxu0 %v2004
        %v2006 = vand.u32 %v208, 4294901760
        %2007 = vmatpush1.msra.mxu0 %v2006
        %v2008 = vand.u32 %v219, 4294901760
        %2009 = vmatprep.subr.mxu0 %v2008
        %v2010 = vand.u32 %v218, 4294901760
        %2011 = vmatpush1.msra.mxu0 %v2010
        %v2012 = vand.u32 %v229, 4294901760
        %2013 = vmatprep.subr.mxu0 %v2012
        %v2014 = vand.u32 %v228, 4294901760
        %2015 = vmatpush1.msra.mxu0 %v2014
        %v2016 = vand.u32 %v239, 4294901760
        %2017 = vmatprep.subr.mxu0 %v2016
        %v2018 = vand.u32 %v238, 4294901760
        %2019 = vmatpush1.msra.mxu0 %v2018
        %v2020 = vand.u32 %v249, 4294901760
        %2021 = vmatprep.subr.mxu0 %v2020
        %v2022 = vand.u32 %v248, 4294901760
        %2023 = vmatpush1.msra.mxu0 %v2022
        %v2024 = vand.u32 %v259, 4294901760
        %2025 = vmatprep.subr.mxu0 %v2024
        %v2026 = vand.u32 %v258, 4294901760
        %2027 = vmatpush1.msra.mxu0 %v2026
        %v2028 = vand.u32 %v269, 4294901760
        %2029 = vmatprep.subr.mxu0 %v2028
        %v2030 = vand.u32 %v268, 4294901760
        %2031 = vmatpush1.msra.mxu0 %v2030
        %v2032 = vand.u32 %v279, 4294901760
        %2033 = vmatprep.subr.mxu0 %v2032
        %v2034 = vand.u32 %v278, 4294901760
        %2035 = vmatpush1.msra.mxu0 %v2034
        %v2036 = vand.u32 %v289, 4294901760
        %2037 = vmatprep.subr.mxu0 %v2036
        %v2038 = vand.u32 %v288, 4294901760
        %2039 = vmatpush1.msra.mxu0 %v2038
        %v2040 = vand.u32 %v299, 4294901760
        %2041 = vmatprep.subr.mxu0 %v2040
        %v2042 = vand.u32 %v298, 4294901760
        %2043 = vmatpush1.msra.mxu0 %v2042
        %v2044 = vand.u32 %v309, 4294901760
        %2045 = vmatprep.subr.mxu0 %v2044
        %v2046 = vand.u32 %v308, 4294901760
        %2047 = vmatpush1.msra.mxu0 %v2046
        %v2048 = vand.u32 %v319, 4294901760
        %2049 = vmatprep.subr.mxu0 %v2048
        %v2050 = vand.u32 %v318, 4294901760
        %2051 = vmatpush1.msra.mxu0 %v2050
        %v2052 = vand.u32 %v329, 4294901760
        %2053 = vmatprep.subr.mxu0 %v2052
        %v2054 = vand.u32 %v328, 4294901760
        %2055 = vmatpush1.msra.mxu0 %v2054
        %v2056 = vand.u32 %v339, 4294901760
        %2057 = vmatprep.subr.mxu0 %v2056
        %v2058 = vand.u32 %v338, 4294901760
        %2059 = vmatpush1.msra.mxu0 %v2058
        %2060 = vmatprep.subr.mxu0 0.0
        %2061 = vmatpush1.msra.mxu0 0.0
        %2062 = vmatprep.subr.mxu0 0.0
        %2063 = vmatpush1.msra.mxu0 0.0
        %2064 = vmatprep.subr.mxu0 0.0
        %2065 = vmatpush1.msra.mxu0 0.0
        %2066 = vmatprep.subr.mxu0 0.0
        %2067 = vmatpush1.msra.mxu0 0.0
        %2068 = vmatprep.subr.mxu0 0.0
        %2069 = vmatpush1.msra.mxu0 0.0
        %2070 = vmatprep.subr.mxu0 0.0
        %2071 = vmatpush1.msra.mxu0 0.0
        %2072 = vmatprep.subr.mxu0 0.0
        %2073 = vmatpush1.msra.mxu0 0.0
        %2074 = vmatprep.subr.mxu0 0.0
        %2075 = vmatpush1.msra.mxu0 0.0
        %2076 = vmatprep.subr.mxu0 0.0
        %2077 = vmatpush1.msra.mxu0 0.0
        %2078 = vmatprep.subr.mxu0 0.0
        %2079 = vmatpush1.msra.mxu0 0.0
        %2080 = vmatprep.subr.mxu0 0.0
        %2081 = vmatpush1.msra.mxu0 0.0
        %2082 = vmatprep.subr.mxu0 0.0
        %2083 = vmatpush1.msra.mxu0 0.0
        %2084 = vmatprep.subr.mxu0 0.0
        %2085 = vmatpush1.msra.mxu0 0.0
        %2086 = vmatprep.subr.mxu0 0.0
        %2087 = vmatpush1.msra.mxu0 0.0
        %2088 = vmatprep.subr.mxu0 0.0
        %2089 = vmatpush1.msra.mxu0 0.0
        %2090 = vmatprep.subr.mxu0 0.0
        %2091 = vmatpush1.msra.mxu0 0.0
        %2092 = vmatprep.subr.mxu0 0.0
        %2093 = vmatpush1.msra.mxu0 0.0
        %2094 = vmatprep.mubr.f32.mxu0 0.0
        %v2095 = vand.u32 %v348, 4294901760
        %2096 = vmatmul.mubr.f32.gmra.mrb[0].mxu0 %v2095
        %v2097 = vpop.f32.mrb[0].mxu0
        %v2098 = vadd.f32 %v1989, %v2097
        %v2099 = vpop.f32.mrb[0].mxu0
        %v2100 = vadd.f32 %v1991, %v2099
        %2101 = vmatprep.mubr.f32.mxu0 0.0
        %v2102 = vand.u32 %v351, 4294901760
        %2103 = vmatmul.mubr.f32.gmra.mrb[0].mxu0 %v2102
        %v2104 = vpop.f32.mrb[0].mxu0
        %v2105 = vadd.f32 %v1996, %v2104
        %v2106 = vpop.f32.mrb[0].mxu0
        %v2107 = vadd.f32 %v1998, %v2106
        %2108 = vdwg.mxu0
        %v2109 = vand.u32 %v201, 4294901760
        %2110 = vmatprep.subr.mxu0 %v2109
        %v2111 = vand.u32 %v200, 4294901760
        %2112 = vmatpush1.msra.mxu0 %v2111
        %v2113 = vand.u32 %v211, 4294901760
        %2114 = vmatprep.subr.mxu0 %v2113
        %v2115 = vand.u32 %v210, 4294901760
        %2116 = vmatpush1.msra.mxu0 %v2115
        %v2117 = vand.u32 %v221, 4294901760
        %2118 = vmatprep.subr.mxu0 %v2117
        %v2119 = vand.u32 %v220, 4294901760
        %2120 = vmatpush1.msra.mxu0 %v2119
        %v2121 = vand.u32 %v231, 4294901760
        %2122 = vmatprep.subr.mxu0 %v2121
        %v2123 = vand.u32 %v230, 4294901760
        %2124 = vmatpush1.msra.mxu0 %v2123
        %v2125 = vand.u32 %v241, 4294901760
        %2126 = vmatprep.subr.mxu0 %v2125
        %v2127 = vand.u32 %v240, 4294901760
        %2128 = vmatpush1.msra.mxu0 %v2127
        %v2129 = vand.u32 %v251, 4294901760
        %2130 = vmatprep.subr.mxu0 %v2129
        %v2131 = vand.u32 %v250, 4294901760
        %2132 = vmatpush1.msra.mxu0 %v2131
        %v2133 = vand.u32 %v261, 4294901760
        %2134 = vmatprep.subr.mxu0 %v2133
        %v2135 = vand.u32 %v260, 4294901760
        %2136 = vmatpush1.msra.mxu0 %v2135
        %v2137 = vand.u32 %v271, 4294901760
        %2138 = vmatprep.subr.mxu0 %v2137
        %v2139 = vand.u32 %v270, 4294901760
        %2140 = vmatpush1.msra.mxu0 %v2139
        %v2141 = vand.u32 %v281, 4294901760
        %2142 = vmatprep.subr.mxu0 %v2141
        %v2143 = vand.u32 %v280, 4294901760
        %2144 = vmatpush1.msra.mxu0 %v2143
        %v2145 = vand.u32 %v291, 4294901760
        %2146 = vmatprep.subr.mxu0 %v2145
        %v2147 = vand.u32 %v290, 4294901760
        %2148 = vmatpush1.msra.mxu0 %v2147
        %v2149 = vand.u32 %v301, 4294901760
        %2150 = vmatprep.subr.mxu0 %v2149
        %v2151 = vand.u32 %v300, 4294901760
        %2152 = vmatpush1.msra.mxu0 %v2151
        %v2153 = vand.u32 %v311, 4294901760
        %2154 = vmatprep.subr.mxu0 %v2153
        %v2155 = vand.u32 %v310, 4294901760
        %2156 = vmatpush1.msra.mxu0 %v2155
        %v2157 = vand.u32 %v321, 4294901760
        %2158 = vmatprep.subr.mxu0 %v2157
        %v2159 = vand.u32 %v320, 4294901760
        %2160 = vmatpush1.msra.mxu0 %v2159
        %v2161 = vand.u32 %v331, 4294901760
        %2162 = vmatprep.subr.mxu0 %v2161
        %v2163 = vand.u32 %v330, 4294901760
        %2164 = vmatpush1.msra.mxu0 %v2163
        %v2165 = vand.u32 %v341, 4294901760
        %2166 = vmatprep.subr.mxu0 %v2165
        %v2167 = vand.u32 %v340, 4294901760
        %2168 = vmatpush1.msra.mxu0 %v2167
        %2169 = vmatprep.subr.mxu0 0.0
        %2170 = vmatpush1.msra.mxu0 0.0
        %2171 = vmatprep.subr.mxu0 0.0
        %2172 = vmatpush1.msra.mxu0 0.0
        %2173 = vmatprep.subr.mxu0 0.0
        %2174 = vmatpush1.msra.mxu0 0.0
        %2175 = vmatprep.subr.mxu0 0.0
        %2176 = vmatpush1.msra.mxu0 0.0
        %2177 = vmatprep.subr.mxu0 0.0
        %2178 = vmatpush1.msra.mxu0 0.0
        %2179 = vmatprep.subr.mxu0 0.0
        %2180 = vmatpush1.msra.mxu0 0.0
        %2181 = vmatprep.subr.mxu0 0.0
        %2182 = vmatpush1.msra.mxu0 0.0
        %2183 = vmatprep.subr.mxu0 0.0
        %2184 = vmatpush1.msra.mxu0 0.0
        %2185 = vmatprep.subr.mxu0 0.0
        %2186 = vmatpush1.msra.mxu0 0.0
        %2187 = vmatprep.subr.mxu0 0.0
        %2188 = vmatpush1.msra.mxu0 0.0
        %2189 = vmatprep.subr.mxu0 0.0
        %2190 = vmatpush1.msra.mxu0 0.0
        %2191 = vmatprep.subr.mxu0 0.0
        %2192 = vmatpush1.msra.mxu0 0.0
        %2193 = vmatprep.subr.mxu0 0.0
        %2194 = vmatpush1.msra.mxu0 0.0
        %2195 = vmatprep.subr.mxu0 0.0
        %2196 = vmatpush1.msra.mxu0 0.0
        %2197 = vmatprep.subr.mxu0 0.0
        %2198 = vmatpush1.msra.mxu0 0.0
        %2199 = vmatprep.subr.mxu0 0.0
        %2200 = vmatpush1.msra.mxu0 0.0
        %2201 = vmatprep.subr.mxu0 0.0
        %2202 = vmatpush1.msra.mxu0 0.0
        %2203 = vmatprep.mubr.f32.mxu0 0.0
        %v2204 = vand.u32 %v348, 4294901760
        %v2205 = vsub.f32 %v348, %v2204
        %v2206 = vand.u32 %v2205, 4294901760
        %v2207 = vsub.f32 %v2205, %v2206
        %v2208 = vand.u32 %v2207, 4294901760
        %2209 = vmatmul.mubr.f32.gmra.mrb[0].mxu0 %v2208
        %v2210 = vpop.f32.mrb[0].mxu0
        %v2211 = vadd.f32 0.0, %v2210
        %v2212 = vpop.f32.mrb[0].mxu0
        %v2213 = vadd.f32 0.0, %v2212
        %2214 = vmatprep.mubr.f32.mxu0 0.0
        %v2215 = vand.u32 %v351, 4294901760
        %v2216 = vsub.f32 %v351, %v2215
        %v2217 = vand.u32 %v2216, 4294901760
        %v2218 = vsub.f32 %v2216, %v2217
        %v2219 = vand.u32 %v2218, 4294901760
        %2220 = vmatmul.mubr.f32.gmra.mrb[0].mxu0 %v2219
        %v2221 = vpop.f32.mrb[0].mxu0
        %v2222 = vadd.f32 0.0, %v2221
        %v2223 = vpop.f32.mrb[0].mxu0
        %v2224 = vadd.f32 0.0, %v2223
        %2225 = vdwg.mxu0
        %v2226 = vand.u32 %v201, 4294901760
        %v2227 = vsub.f32 %v201, %v2226
        %v2228 = vand.u32 %v2227, 4294901760
        %v2229 = vsub.f32 %v2227, %v2228
        %v2230 = vand.u32 %v2229, 4294901760
        %2231 = vmatprep.subr.mxu0 %v2230
        %v2232 = vand.u32 %v200, 4294901760
        %v2233 = vsub.f32 %v200, %v2232
        %v2234 = vand.u32 %v2233, 4294901760
        %v2235 = vsub.f32 %v2233, %v2234
        %v2236 = vand.u32 %v2235, 4294901760
        %2237 = vmatpush1.msra.mxu0 %v2236
        %v2238 = vand.u32 %v211, 4294901760
        %v2239 = vsub.f32 %v211, %v2238
        %v2240 = vand.u32 %v2239, 4294901760
        %v2241 = vsub.f32 %v2239, %v2240
        %v2242 = vand.u32 %v2241, 4294901760
        %2243 = vmatprep.subr.mxu0 %v2242
        %v2244 = vand.u32 %v210, 4294901760
        %v2245 = vsub.f32 %v210, %v2244
        %v2246 = vand.u32 %v2245, 4294901760
        %v2247 = vsub.f32 %v2245, %v2246
        %v2248 = vand.u32 %v2247, 4294901760
        %2249 = vmatpush1.msra.mxu0 %v2248
        %v2250 = vand.u32 %v221, 4294901760
        %v2251 = vsub.f32 %v221, %v2250
        %v2252 = vand.u32 %v2251, 4294901760
        %v2253 = vsub.f32 %v2251, %v2252
        %v2254 = vand.u32 %v2253, 4294901760
        %2255 = vmatprep.subr.mxu0 %v2254
        %v2256 = vand.u32 %v220, 4294901760
        %v2257 = vsub.f32 %v220, %v2256
        %v2258 = vand.u32 %v2257, 4294901760
        %v2259 = vsub.f32 %v2257, %v2258
        %v2260 = vand.u32 %v2259, 4294901760
        %2261 = vmatpush1.msra.mxu0 %v2260
        %v2262 = vand.u32 %v231, 4294901760
        %v2263 = vsub.f32 %v231, %v2262
        %v2264 = vand.u32 %v2263, 4294901760
        %v2265 = vsub.f32 %v2263, %v2264
        %v2266 = vand.u32 %v2265, 4294901760
        %2267 = vmatprep.subr.mxu0 %v2266
        %v2268 = vand.u32 %v230, 4294901760
        %v2269 = vsub.f32 %v230, %v2268
        %v2270 = vand.u32 %v2269, 4294901760
        %v2271 = vsub.f32 %v2269, %v2270
        %v2272 = vand.u32 %v2271, 4294901760
        %2273 = vmatpush1.msra.mxu0 %v2272
        %v2274 = vand.u32 %v241, 4294901760
        %v2275 = vsub.f32 %v241, %v2274
        %v2276 = vand.u32 %v2275, 4294901760
        %v2277 = vsub.f32 %v2275, %v2276
        %v2278 = vand.u32 %v2277, 4294901760
        %2279 = vmatprep.subr.mxu0 %v2278
        %v2280 = vand.u32 %v240, 4294901760
        %v2281 = vsub.f32 %v240, %v2280
        %v2282 = vand.u32 %v2281, 4294901760
        %v2283 = vsub.f32 %v2281, %v2282
        %v2284 = vand.u32 %v2283, 4294901760
        %2285 = vmatpush1.msra.mxu0 %v2284
        %v2286 = vand.u32 %v251, 4294901760
        %v2287 = vsub.f32 %v251, %v2286
        %v2288 = vand.u32 %v2287, 4294901760
        %v2289 = vsub.f32 %v2287, %v2288
        %v2290 = vand.u32 %v2289, 4294901760
        %2291 = vmatprep.subr.mxu0 %v2290
        %v2292 = vand.u32 %v250, 4294901760
        %v2293 = vsub.f32 %v250, %v2292
        %v2294 = vand.u32 %v2293, 4294901760
        %v2295 = vsub.f32 %v2293, %v2294
        %v2296 = vand.u32 %v2295, 4294901760
        %2297 = vmatpush1.msra.mxu0 %v2296
        %v2298 = vand.u32 %v261, 4294901760
        %v2299 = vsub.f32 %v261, %v2298
        %v2300 = vand.u32 %v2299, 4294901760
        %v2301 = vsub.f32 %v2299, %v2300
        %v2302 = vand.u32 %v2301, 4294901760
        %2303 = vmatprep.subr.mxu0 %v2302
        %v2304 = vand.u32 %v260, 4294901760
        %v2305 = vsub.f32 %v260, %v2304
        %v2306 = vand.u32 %v2305, 4294901760
        %v2307 = vsub.f32 %v2305, %v2306
        %v2308 = vand.u32 %v2307, 4294901760
        %2309 = vmatpush1.msra.mxu0 %v2308
        %v2310 = vand.u32 %v271, 4294901760
        %v2311 = vsub.f32 %v271, %v2310
        %v2312 = vand.u32 %v2311, 4294901760
        %v2313 = vsub.f32 %v2311, %v2312
        %v2314 = vand.u32 %v2313, 4294901760
        %2315 = vmatprep.subr.mxu0 %v2314
        %v2316 = vand.u32 %v270, 4294901760
        %v2317 = vsub.f32 %v270, %v2316
        %v2318 = vand.u32 %v2317, 4294901760
        %v2319 = vsub.f32 %v2317, %v2318
        %v2320 = vand.u32 %v2319, 4294901760
        %2321 = vmatpush1.msra.mxu0 %v2320
        %v2322 = vand.u32 %v281, 4294901760
        %v2323 = vsub.f32 %v281, %v2322
        %v2324 = vand.u32 %v2323, 4294901760
        %v2325 = vsub.f32 %v2323, %v2324
        %v2326 = vand.u32 %v2325, 4294901760
        %2327 = vmatprep.subr.mxu0 %v2326
        %v2328 = vand.u32 %v280, 4294901760
        %v2329 = vsub.f32 %v280, %v2328
        %v2330 = vand.u32 %v2329, 4294901760
        %v2331 = vsub.f32 %v2329, %v2330
        %v2332 = vand.u32 %v2331, 4294901760
        %2333 = vmatpush1.msra.mxu0 %v2332
        %v2334 = vand.u32 %v291, 4294901760
        %v2335 = vsub.f32 %v291, %v2334
        %v2336 = vand.u32 %v2335, 4294901760
        %v2337 = vsub.f32 %v2335, %v2336
        %v2338 = vand.u32 %v2337, 4294901760
        %2339 = vmatprep.subr.mxu0 %v2338
        %v2340 = vand.u32 %v290, 4294901760
        %v2341 = vsub.f32 %v290, %v2340
        %v2342 = vand.u32 %v2341, 4294901760
        %v2343 = vsub.f32 %v2341, %v2342
        %v2344 = vand.u32 %v2343, 4294901760
        %2345 = vmatpush1.msra.mxu0 %v2344
        %v2346 = vand.u32 %v301, 4294901760
        %v2347 = vsub.f32 %v301, %v2346
        %v2348 = vand.u32 %v2347, 4294901760
        %v2349 = vsub.f32 %v2347, %v2348
        %v2350 = vand.u32 %v2349, 4294901760
        %2351 = vmatprep.subr.mxu0 %v2350
        %v2352 = vand.u32 %v300, 4294901760
        %v2353 = vsub.f32 %v300, %v2352
        %v2354 = vand.u32 %v2353, 4294901760
        %v2355 = vsub.f32 %v2353, %v2354
        %v2356 = vand.u32 %v2355, 4294901760
        %2357 = vmatpush1.msra.mxu0 %v2356
        %v2358 = vand.u32 %v311, 4294901760
        %v2359 = vsub.f32 %v311, %v2358
        %v2360 = vand.u32 %v2359, 4294901760
        %v2361 = vsub.f32 %v2359, %v2360
        %v2362 = vand.u32 %v2361, 4294901760
        %2363 = vmatprep.subr.mxu0 %v2362
        %v2364 = vand.u32 %v310, 4294901760
        %v2365 = vsub.f32 %v310, %v2364
        %v2366 = vand.u32 %v2365, 4294901760
        %v2367 = vsub.f32 %v2365, %v2366
        %v2368 = vand.u32 %v2367, 4294901760
        %2369 = vmatpush1.msra.mxu0 %v2368
        %v2370 = vand.u32 %v321, 4294901760
        %v2371 = vsub.f32 %v321, %v2370
        %v2372 = vand.u32 %v2371, 4294901760
        %v2373 = vsub.f32 %v2371, %v2372
        %v2374 = vand.u32 %v2373, 4294901760
        %2375 = vmatprep.subr.mxu0 %v2374
        %v2376 = vand.u32 %v320, 4294901760
        %v2377 = vsub.f32 %v320, %v2376
        %v2378 = vand.u32 %v2377, 4294901760
        %v2379 = vsub.f32 %v2377, %v2378
        %v2380 = vand.u32 %v2379, 4294901760
        %2381 = vmatpush1.msra.mxu0 %v2380
        %v2382 = vand.u32 %v331, 4294901760
        %v2383 = vsub.f32 %v331, %v2382
        %v2384 = vand.u32 %v2383, 4294901760
        %v2385 = vsub.f32 %v2383, %v2384
        %v2386 = vand.u32 %v2385, 4294901760
        %2387 = vmatprep.subr.mxu0 %v2386
        %v2388 = vand.u32 %v330, 4294901760
        %v2389 = vsub.f32 %v330, %v2388
        %v2390 = vand.u32 %v2389, 4294901760
        %v2391 = vsub.f32 %v2389, %v2390
        %v2392 = vand.u32 %v2391, 4294901760
        %2393 = vmatpush1.msra.mxu0 %v2392
        %v2394 = vand.u32 %v341, 4294901760
        %v2395 = vsub.f32 %v341, %v2394
        %v2396 = vand.u32 %v2395, 4294901760
        %v2397 = vsub.f32 %v2395, %v2396
        %v2398 = vand.u32 %v2397, 4294901760
        %2399 = vmatprep.subr.mxu0 %v2398
        %v2400 = vand.u32 %v340, 4294901760
        %v2401 = vsub.f32 %v340, %v2400
        %v2402 = vand.u32 %v2401, 4294901760
        %v2403 = vsub.f32 %v2401, %v2402
        %v2404 = vand.u32 %v2403, 4294901760
        %2405 = vmatpush1.msra.mxu0 %v2404
        %2406 = vmatprep.subr.mxu0 0.0
        %2407 = vmatpush1.msra.mxu0 0.0
        %2408 = vmatprep.subr.mxu0 0.0
        %2409 = vmatpush1.msra.mxu0 0.0
        %2410 = vmatprep.subr.mxu0 0.0
        %2411 = vmatpush1.msra.mxu0 0.0
        %2412 = vmatprep.subr.mxu0 0.0
        %2413 = vmatpush1.msra.mxu0 0.0
        %2414 = vmatprep.subr.mxu0 0.0
        %2415 = vmatpush1.msra.mxu0 0.0
        %2416 = vmatprep.subr.mxu0 0.0
        %2417 = vmatpush1.msra.mxu0 0.0
        %2418 = vmatprep.subr.mxu0 0.0
        %2419 = vmatpush1.msra.mxu0 0.0
        %2420 = vmatprep.subr.mxu0 0.0
        %2421 = vmatpush1.msra.mxu0 0.0
        %2422 = vmatprep.subr.mxu0 0.0
        %2423 = vmatpush1.msra.mxu0 0.0
        %2424 = vmatprep.subr.mxu0 0.0
        %2425 = vmatpush1.msra.mxu0 0.0
        %2426 = vmatprep.subr.mxu0 0.0
        %2427 = vmatpush1.msra.mxu0 0.0
        %2428 = vmatprep.subr.mxu0 0.0
        %2429 = vmatpush1.msra.mxu0 0.0
        %2430 = vmatprep.subr.mxu0 0.0
        %2431 = vmatpush1.msra.mxu0 0.0
        %2432 = vmatprep.subr.mxu0 0.0
        %2433 = vmatpush1.msra.mxu0 0.0
        %2434 = vmatprep.subr.mxu0 0.0
        %2435 = vmatpush1.msra.mxu0 0.0
        %2436 = vmatprep.subr.mxu0 0.0
        %2437 = vmatpush1.msra.mxu0 0.0
        %2438 = vmatprep.subr.mxu0 0.0
        %2439 = vmatpush1.msra.mxu0 0.0
        %2440 = vmatprep.mubr.f32.mxu0 0.0
        %v2441 = vand.u32 %v348, 4294901760
        %2442 = vmatmul.mubr.f32.gmra.mrb[0].mxu0 %v2441
        %v2443 = vpop.f32.mrb[0].mxu0
        %v2444 = vadd.f32 %v2211, %v2443
        %v2445 = vpop.f32.mrb[0].mxu0
        %v2446 = vadd.f32 %v2213, %v2445
        %2447 = vmatprep.mubr.f32.mxu0 0.0
        %v2448 = vand.u32 %v351, 4294901760
        %2449 = vmatmul.mubr.f32.gmra.mrb[0].mxu0 %v2448
        %v2450 = vpop.f32.mrb[0].mxu0
        %v2451 = vadd.f32 %v2222, %v2450
        %v2452 = vpop.f32.mrb[0].mxu0
        %v2453 = vadd.f32 %v2224, %v2452
        %2454 = vdwg.mxu0
        %v2455 = vand.u32 %v201, 4294901760
        %v2456 = vsub.f32 %v201, %v2455
        %2457 = vmatprep.subr.mxu0 %v2456
        %v2458 = vand.u32 %v200, 4294901760
        %v2459 = vsub.f32 %v200, %v2458
        %2460 = vmatpush1.msra.mxu0 %v2459
        %v2461 = vand.u32 %v211, 4294901760
        %v2462 = vsub.f32 %v211, %v2461
        %2463 = vmatprep.subr.mxu0 %v2462
        %v2464 = vand.u32 %v210, 4294901760
        %v2465 = vsub.f32 %v210, %v2464
        %2466 = vmatpush1.msra.mxu0 %v2465
        %v2467 = vand.u32 %v221, 4294901760
        %v2468 = vsub.f32 %v221, %v2467
        %2469 = vmatprep.subr.mxu0 %v2468
        %v2470 = vand.u32 %v220, 4294901760
        %v2471 = vsub.f32 %v220, %v2470
        %2472 = vmatpush1.msra.mxu0 %v2471
        %v2473 = vand.u32 %v231, 4294901760
        %v2474 = vsub.f32 %v231, %v2473
        %2475 = vmatprep.subr.mxu0 %v2474
        %v2476 = vand.u32 %v230, 4294901760
        %v2477 = vsub.f32 %v230, %v2476
        %2478 = vmatpush1.msra.mxu0 %v2477
        %v2479 = vand.u32 %v241, 4294901760
        %v2480 = vsub.f32 %v241, %v2479
        %2481 = vmatprep.subr.mxu0 %v2480
        %v2482 = vand.u32 %v240, 4294901760
        %v2483 = vsub.f32 %v240, %v2482
        %2484 = vmatpush1.msra.mxu0 %v2483
        %v2485 = vand.u32 %v251, 4294901760
        %v2486 = vsub.f32 %v251, %v2485
        %2487 = vmatprep.subr.mxu0 %v2486
        %v2488 = vand.u32 %v250, 4294901760
        %v2489 = vsub.f32 %v250, %v2488
        %2490 = vmatpush1.msra.mxu0 %v2489
        %v2491 = vand.u32 %v261, 4294901760
        %v2492 = vsub.f32 %v261, %v2491
        %2493 = vmatprep.subr.mxu0 %v2492
        %v2494 = vand.u32 %v260, 4294901760
        %v2495 = vsub.f32 %v260, %v2494
        %2496 = vmatpush1.msra.mxu0 %v2495
        %v2497 = vand.u32 %v271, 4294901760
        %v2498 = vsub.f32 %v271, %v2497
        %2499 = vmatprep.subr.mxu0 %v2498
        %v2500 = vand.u32 %v270, 4294901760
        %v2501 = vsub.f32 %v270, %v2500
        %2502 = vmatpush1.msra.mxu0 %v2501
        %v2503 = vand.u32 %v281, 4294901760
        %v2504 = vsub.f32 %v281, %v2503
        %2505 = vmatprep.subr.mxu0 %v2504
        %v2506 = vand.u32 %v280, 4294901760
        %v2507 = vsub.f32 %v280, %v2506
        %2508 = vmatpush1.msra.mxu0 %v2507
        %v2509 = vand.u32 %v291, 4294901760
        %v2510 = vsub.f32 %v291, %v2509
        %2511 = vmatprep.subr.mxu0 %v2510
        %v2512 = vand.u32 %v290, 4294901760
        %v2513 = vsub.f32 %v290, %v2512
        %2514 = vmatpush1.msra.mxu0 %v2513
        %v2515 = vand.u32 %v301, 4294901760
        %v2516 = vsub.f32 %v301, %v2515
        %2517 = vmatprep.subr.mxu0 %v2516
        %v2518 = vand.u32 %v300, 4294901760
        %v2519 = vsub.f32 %v300, %v2518
        %2520 = vmatpush1.msra.mxu0 %v2519
        %v2521 = vand.u32 %v311, 4294901760
        %v2522 = vsub.f32 %v311, %v2521
        %2523 = vmatprep.subr.mxu0 %v2522
        %v2524 = vand.u32 %v310, 4294901760
        %v2525 = vsub.f32 %v310, %v2524
        %2526 = vmatpush1.msra.mxu0 %v2525
        %v2527 = vand.u32 %v321, 4294901760
        %v2528 = vsub.f32 %v321, %v2527
        %2529 = vmatprep.subr.mxu0 %v2528
        %v2530 = vand.u32 %v320, 4294901760
        %v2531 = vsub.f32 %v320, %v2530
        %2532 = vmatpush1.msra.mxu0 %v2531
        %v2533 = vand.u32 %v331, 4294901760
        %v2534 = vsub.f32 %v331, %v2533
        %2535 = vmatprep.subr.mxu0 %v2534
        %v2536 = vand.u32 %v330, 4294901760
        %v2537 = vsub.f32 %v330, %v2536
        %2538 = vmatpush1.msra.mxu0 %v2537
        %v2539 = vand.u32 %v341, 4294901760
        %v2540 = vsub.f32 %v341, %v2539
        %2541 = vmatprep.subr.mxu0 %v2540
        %v2542 = vand.u32 %v340, 4294901760
        %v2543 = vsub.f32 %v340, %v2542
        %2544 = vmatpush1.msra.mxu0 %v2543
        %2545 = vmatprep.subr.mxu0 0.0
        %2546 = vmatpush1.msra.mxu0 0.0
        %2547 = vmatprep.subr.mxu0 0.0
        %2548 = vmatpush1.msra.mxu0 0.0
        %2549 = vmatprep.subr.mxu0 0.0
        %2550 = vmatpush1.msra.mxu0 0.0
        %2551 = vmatprep.subr.mxu0 0.0
        %2552 = vmatpush1.msra.mxu0 0.0
        %2553 = vmatprep.subr.mxu0 0.0
        %2554 = vmatpush1.msra.mxu0 0.0
        %2555 = vmatprep.subr.mxu0 0.0
        %2556 = vmatpush1.msra.mxu0 0.0
        %2557 = vmatprep.subr.mxu0 0.0
        %2558 = vmatpush1.msra.mxu0 0.0
        %2559 = vmatprep.subr.mxu0 0.0
        %2560 = vmatpush1.msra.mxu0 0.0
        %2561 = vmatprep.subr.mxu0 0.0
        %2562 = vmatpush1.msra.mxu0 0.0
        %2563 = vmatprep.subr.mxu0 0.0
        %2564 = vmatpush1.msra.mxu0 0.0
        %2565 = vmatprep.subr.mxu0 0.0
        %2566 = vmatpush1.msra.mxu0 0.0
        %2567 = vmatprep.subr.mxu0 0.0
        %2568 = vmatpush1.msra.mxu0 0.0
        %2569 = vmatprep.subr.mxu0 0.0
        %2570 = vmatpush1.msra.mxu0 0.0
        %2571 = vmatprep.subr.mxu0 0.0
        %2572 = vmatpush1.msra.mxu0 0.0
        %2573 = vmatprep.subr.mxu0 0.0
        %2574 = vmatpush1.msra.mxu0 0.0
        %2575 = vmatprep.subr.mxu0 0.0
        %2576 = vmatpush1.msra.mxu0 0.0
        %2577 = vmatprep.subr.mxu0 0.0
        %2578 = vmatpush1.msra.mxu0 0.0
        %2579 = vmatprep.mubr.f32.mxu0 0.0
        %v2580 = vand.u32 %v348, 4294901760
        %v2581 = vsub.f32 %v348, %v2580
        %2582 = vmatmul.mubr.f32.gmra.mrb[0].mxu0 %v2581
        %v2583 = vpop.f32.mrb[0].mxu0
        %v2584 = vadd.f32 %v2444, %v2583
        %v2585 = vpop.f32.mrb[0].mxu0
        %v2586 = vadd.f32 %v2446, %v2585
        %2587 = vmatprep.mubr.f32.mxu0 0.0
        %v2588 = vand.u32 %v351, 4294901760
        %v2589 = vsub.f32 %v351, %v2588
        %2590 = vmatmul.mubr.f32.gmra.mrb[0].mxu0 %v2589
        %v2591 = vpop.f32.mrb[0].mxu0
        %v2592 = vadd.f32 %v2451, %v2591
        %v2593 = vpop.f32.mrb[0].mxu0
        %v2594 = vadd.f32 %v2453, %v2593
        %2595 = vdwg.mxu0
        %v2596 = vand.u32 %v201, 4294901760
        %2597 = vmatprep.subr.mxu0 %v2596
        %v2598 = vand.u32 %v200, 4294901760
        %2599 = vmatpush1.msra.mxu0 %v2598
        %v2600 = vand.u32 %v211, 4294901760
        %2601 = vmatprep.subr.mxu0 %v2600
        %v2602 = vand.u32 %v210, 4294901760
        %2603 = vmatpush1.msra.mxu0 %v2602
        %v2604 = vand.u32 %v221, 4294901760
        %2605 = vmatprep.subr.mxu0 %v2604
        %v2606 = vand.u32 %v220, 4294901760
        %2607 = vmatpush1.msra.mxu0 %v2606
        %v2608 = vand.u32 %v231, 4294901760
        %2609 = vmatprep.subr.mxu0 %v2608
        %v2610 = vand.u32 %v230, 4294901760
        %2611 = vmatpush1.msra.mxu0 %v2610
        %v2612 = vand.u32 %v241, 4294901760
        %2613 = vmatprep.subr.mxu0 %v2612
        %v2614 = vand.u32 %v240, 4294901760
        %2615 = vmatpush1.msra.mxu0 %v2614
        %v2616 = vand.u32 %v251, 4294901760
        %2617 = vmatprep.subr.mxu0 %v2616
        %v2618 = vand.u32 %v250, 4294901760
        %2619 = vmatpush1.msra.mxu0 %v2618
        %v2620 = vand.u32 %v261, 4294901760
        %2621 = vmatprep.subr.mxu0 %v2620
        %v2622 = vand.u32 %v260, 4294901760
        %2623 = vmatpush1.msra.mxu0 %v2622
        %v2624 = vand.u32 %v271, 4294901760
        %2625 = vmatprep.subr.mxu0 %v2624
        %v2626 = vand.u32 %v270, 4294901760
        %2627 = vmatpush1.msra.mxu0 %v2626
        %v2628 = vand.u32 %v281, 4294901760
        %2629 = vmatprep.subr.mxu0 %v2628
        %v2630 = vand.u32 %v280, 4294901760
        %2631 = vmatpush1.msra.mxu0 %v2630
        %v2632 = vand.u32 %v291, 4294901760
        %2633 = vmatprep.subr.mxu0 %v2632
        %v2634 = vand.u32 %v290, 4294901760
        %2635 = vmatpush1.msra.mxu0 %v2634
        %v2636 = vand.u32 %v301, 4294901760
        %2637 = vmatprep.subr.mxu0 %v2636
        %v2638 = vand.u32 %v300, 4294901760
        %2639 = vmatpush1.msra.mxu0 %v2638
        %v2640 = vand.u32 %v311, 4294901760
        %2641 = vmatprep.subr.mxu0 %v2640
        %v2642 = vand.u32 %v310, 4294901760
        %2643 = vmatpush1.msra.mxu0 %v2642
        %v2644 = vand.u32 %v321, 4294901760
        %2645 = vmatprep.subr.mxu0 %v2644
        %v2646 = vand.u32 %v320, 4294901760
        %2647 = vmatpush1.msra.mxu0 %v2646
        %v2648 = vand.u32 %v331, 4294901760
        %2649 = vmatprep.subr.mxu0 %v2648
        %v2650 = vand.u32 %v330, 4294901760
        %2651 = vmatpush1.msra.mxu0 %v2650
        %v2652 = vand.u32 %v341, 4294901760
        %2653 = vmatprep.subr.mxu0 %v2652
        %v2654 = vand.u32 %v340, 4294901760
        %2655 = vmatpush1.msra.mxu0 %v2654
        %2656 = vmatprep.subr.mxu0 0.0
        %2657 = vmatpush1.msra.mxu0 0.0
        %2658 = vmatprep.subr.mxu0 0.0
        %2659 = vmatpush1.msra.mxu0 0.0
        %2660 = vmatprep.subr.mxu0 0.0
        %2661 = vmatpush1.msra.mxu0 0.0
        %2662 = vmatprep.subr.mxu0 0.0
        %2663 = vmatpush1.msra.mxu0 0.0
        %2664 = vmatprep.subr.mxu0 0.0
        %2665 = vmatpush1.msra.mxu0 0.0
        %2666 = vmatprep.subr.mxu0 0.0
        %2667 = vmatpush1.msra.mxu0 0.0
        %2668 = vmatprep.subr.mxu0 0.0
        %2669 = vmatpush1.msra.mxu0 0.0
        %2670 = vmatprep.subr.mxu0 0.0
        %2671 = vmatpush1.msra.mxu0 0.0
        %2672 = vmatprep.subr.mxu0 0.0
        %2673 = vmatpush1.msra.mxu0 0.0
        %2674 = vmatprep.subr.mxu0 0.0
        %2675 = vmatpush1.msra.mxu0 0.0
        %2676 = vmatprep.subr.mxu0 0.0
        %2677 = vmatpush1.msra.mxu0 0.0
        %2678 = vmatprep.subr.mxu0 0.0
        %2679 = vmatpush1.msra.mxu0 0.0
        %2680 = vmatprep.subr.mxu0 0.0
        %2681 = vmatpush1.msra.mxu0 0.0
        %2682 = vmatprep.subr.mxu0 0.0
        %2683 = vmatpush1.msra.mxu0 0.0
        %2684 = vmatprep.subr.mxu0 0.0
        %2685 = vmatpush1.msra.mxu0 0.0
        %2686 = vmatprep.subr.mxu0 0.0
        %2687 = vmatpush1.msra.mxu0 0.0
        %2688 = vmatprep.subr.mxu0 0.0
        %2689 = vmatpush1.msra.mxu0 0.0
        %2690 = vmatprep.mubr.f32.mxu0 0.0
        %v2691 = vand.u32 %v348, 4294901760
        %v2692 = vsub.f32 %v348, %v2691
        %v2693 = vand.u32 %v2692, 4294901760
        %2694 = vmatmul.mubr.f32.gmra.mrb[0].mxu0 %v2693
        %v2695 = vpop.f32.mrb[0].mxu0
        %v2696 = vadd.f32 %v2584, %v2695
        %v2697 = vpop.f32.mrb[0].mxu0
        %v2698 = vadd.f32 %v2586, %v2697
        %2699 = vmatprep.mubr.f32.mxu0 0.0
        %v2700 = vand.u32 %v351, 4294901760
        %v2701 = vsub.f32 %v351, %v2700
        %v2702 = vand.u32 %v2701, 4294901760
        %2703 = vmatmul.mubr.f32.gmra.mrb[0].mxu0 %v2702
        %v2704 = vpop.f32.mrb[0].mxu0
        %v2705 = vadd.f32 %v2592, %v2704
        %v2706 = vpop.f32.mrb[0].mxu0
        %v2707 = vadd.f32 %v2594, %v2706
        %2708 = vdwg.mxu0
        %v2709 = vand.u32 %v201, 4294901760
        %v2710 = vsub.f32 %v201, %v2709
        %v2711 = vand.u32 %v2710, 4294901760
        %2712 = vmatprep.subr.mxu0 %v2711
        %v2713 = vand.u32 %v200, 4294901760
        %v2714 = vsub.f32 %v200, %v2713
        %v2715 = vand.u32 %v2714, 4294901760
        %2716 = vmatpush1.msra.mxu0 %v2715
        %v2717 = vand.u32 %v211, 4294901760
        %v2718 = vsub.f32 %v211, %v2717
        %v2719 = vand.u32 %v2718, 4294901760
        %2720 = vmatprep.subr.mxu0 %v2719
        %v2721 = vand.u32 %v210, 4294901760
        %v2722 = vsub.f32 %v210, %v2721
        %v2723 = vand.u32 %v2722, 4294901760
        %2724 = vmatpush1.msra.mxu0 %v2723
        %v2725 = vand.u32 %v221, 4294901760
        %v2726 = vsub.f32 %v221, %v2725
        %v2727 = vand.u32 %v2726, 4294901760
        %2728 = vmatprep.subr.mxu0 %v2727
        %v2729 = vand.u32 %v220, 4294901760
        %v2730 = vsub.f32 %v220, %v2729
        %v2731 = vand.u32 %v2730, 4294901760
        %2732 = vmatpush1.msra.mxu0 %v2731
        %v2733 = vand.u32 %v231, 4294901760
        %v2734 = vsub.f32 %v231, %v2733
        %v2735 = vand.u32 %v2734, 4294901760
        %2736 = vmatprep.subr.mxu0 %v2735
        %v2737 = vand.u32 %v230, 4294901760
        %v2738 = vsub.f32 %v230, %v2737
        %v2739 = vand.u32 %v2738, 4294901760
        %2740 = vmatpush1.msra.mxu0 %v2739
        %v2741 = vand.u32 %v241, 4294901760
        %v2742 = vsub.f32 %v241, %v2741
        %v2743 = vand.u32 %v2742, 4294901760
        %2744 = vmatprep.subr.mxu0 %v2743
        %v2745 = vand.u32 %v240, 4294901760
        %v2746 = vsub.f32 %v240, %v2745
        %v2747 = vand.u32 %v2746, 4294901760
        %2748 = vmatpush1.msra.mxu0 %v2747
        %v2749 = vand.u32 %v251, 4294901760
        %v2750 = vsub.f32 %v251, %v2749
        %v2751 = vand.u32 %v2750, 4294901760
        %2752 = vmatprep.subr.mxu0 %v2751
        %v2753 = vand.u32 %v250, 4294901760
        %v2754 = vsub.f32 %v250, %v2753
        %v2755 = vand.u32 %v2754, 4294901760
        %2756 = vmatpush1.msra.mxu0 %v2755
        %v2757 = vand.u32 %v261, 4294901760
        %v2758 = vsub.f32 %v261, %v2757
        %v2759 = vand.u32 %v2758, 4294901760
        %2760 = vmatprep.subr.mxu0 %v2759
        %v2761 = vand.u32 %v260, 4294901760
        %v2762 = vsub.f32 %v260, %v2761
        %v2763 = vand.u32 %v2762, 4294901760
        %2764 = vmatpush1.msra.mxu0 %v2763
        %v2765 = vand.u32 %v271, 4294901760
        %v2766 = vsub.f32 %v271, %v2765
        %v2767 = vand.u32 %v2766, 4294901760
        %2768 = vmatprep.subr.mxu0 %v2767
        %v2769 = vand.u32 %v270, 4294901760
        %v2770 = vsub.f32 %v270, %v2769
        %v2771 = vand.u32 %v2770, 4294901760
        %2772 = vmatpush1.msra.mxu0 %v2771
        %v2773 = vand.u32 %v281, 4294901760
        %v2774 = vsub.f32 %v281, %v2773
        %v2775 = vand.u32 %v2774, 4294901760
        %2776 = vmatprep.subr.mxu0 %v2775
        %v2777 = vand.u32 %v280, 4294901760
        %v2778 = vsub.f32 %v280, %v2777
        %v2779 = vand.u32 %v2778, 4294901760
        %2780 = vmatpush1.msra.mxu0 %v2779
        %v2781 = vand.u32 %v291, 4294901760
        %v2782 = vsub.f32 %v291, %v2781
        %v2783 = vand.u32 %v2782, 4294901760
        %2784 = vmatprep.subr.mxu0 %v2783
        %v2785 = vand.u32 %v290, 4294901760
        %v2786 = vsub.f32 %v290, %v2785
        %v2787 = vand.u32 %v2786, 4294901760
        %2788 = vmatpush1.msra.mxu0 %v2787
        %v2789 = vand.u32 %v301, 4294901760
        %v2790 = vsub.f32 %v301, %v2789
        %v2791 = vand.u32 %v2790, 4294901760
        %2792 = vmatprep.subr.mxu0 %v2791
        %v2793 = vand.u32 %v300, 4294901760
        %v2794 = vsub.f32 %v300, %v2793
        %v2795 = vand.u32 %v2794, 4294901760
        %2796 = vmatpush1.msra.mxu0 %v2795
        %v2797 = vand.u32 %v311, 4294901760
        %v2798 = vsub.f32 %v311, %v2797
        %v2799 = vand.u32 %v2798, 4294901760
        %2800 = vmatprep.subr.mxu0 %v2799
        %v2801 = vand.u32 %v310, 4294901760
        %v2802 = vsub.f32 %v310, %v2801
        %v2803 = vand.u32 %v2802, 4294901760
        %2804 = vmatpush1.msra.mxu0 %v2803
        %v2805 = vand.u32 %v321, 4294901760
        %v2806 = vsub.f32 %v321, %v2805
        %v2807 = vand.u32 %v2806, 4294901760
        %2808 = vmatprep.subr.mxu0 %v2807
        %v2809 = vand.u32 %v320, 4294901760
        %v2810 = vsub.f32 %v320, %v2809
        %v2811 = vand.u32 %v2810, 4294901760
        %2812 = vmatpush1.msra.mxu0 %v2811
        %v2813 = vand.u32 %v331, 4294901760
        %v2814 = vsub.f32 %v331, %v2813
        %v2815 = vand.u32 %v2814, 4294901760
        %2816 = vmatprep.subr.mxu0 %v2815
        %v2817 = vand.u32 %v330, 4294901760
        %v2818 = vsub.f32 %v330, %v2817
        %v2819 = vand.u32 %v2818, 4294901760
        %2820 = vmatpush1.msra.mxu0 %v2819
        %v2821 = vand.u32 %v341, 4294901760
        %v2822 = vsub.f32 %v341, %v2821
        %v2823 = vand.u32 %v2822, 4294901760
        %2824 = vmatprep.subr.mxu0 %v2823
        %v2825 = vand.u32 %v340, 4294901760
        %v2826 = vsub.f32 %v340, %v2825
        %v2827 = vand.u32 %v2826, 4294901760
        %2828 = vmatpush1.msra.mxu0 %v2827
        %2829 = vmatprep.subr.mxu0 0.0
        %2830 = vmatpush1.msra.mxu0 0.0
        %2831 = vmatprep.subr.mxu0 0.0
        %2832 = vmatpush1.msra.mxu0 0.0
        %2833 = vmatprep.subr.mxu0 0.0
        %2834 = vmatpush1.msra.mxu0 0.0
        %2835 = vmatprep.subr.mxu0 0.0
        %2836 = vmatpush1.msra.mxu0 0.0
        %2837 = vmatprep.subr.mxu0 0.0
        %2838 = vmatpush1.msra.mxu0 0.0
        %2839 = vmatprep.subr.mxu0 0.0
        %2840 = vmatpush1.msra.mxu0 0.0
        %2841 = vmatprep.subr.mxu0 0.0
        %2842 = vmatpush1.msra.mxu0 0.0
        %2843 = vmatprep.subr.mxu0 0.0
        %2844 = vmatpush1.msra.mxu0 0.0
        %2845 = vmatprep.subr.mxu0 0.0
        %2846 = vmatpush1.msra.mxu0 0.0
        %2847 = vmatprep.subr.mxu0 0.0
        %2848 = vmatpush1.msra.mxu0 0.0
        %2849 = vmatprep.subr.mxu0 0.0
        %2850 = vmatpush1.msra.mxu0 0.0
        %2851 = vmatprep.subr.mxu0 0.0
        %2852 = vmatpush1.msra.mxu0 0.0
        %2853 = vmatprep.subr.mxu0 0.0
        %2854 = vmatpush1.msra.mxu0 0.0
        %2855 = vmatprep.subr.mxu0 0.0
        %2856 = vmatpush1.msra.mxu0 0.0
        %2857 = vmatprep.subr.mxu0 0.0
        %2858 = vmatpush1.msra.mxu0 0.0
        %2859 = vmatprep.subr.mxu0 0.0
        %2860 = vmatpush1.msra.mxu0 0.0
        %2861 = vmatprep.subr.mxu0 0.0
        %2862 = vmatpush1.msra.mxu0 0.0
        %2863 = vmatprep.mubr.f32.mxu0 0.0
        %v2864 = vand.u32 %v348, 4294901760
        %2865 = vmatmul.mubr.f32.gmra.mrb[0].mxu0 %v2864
        %v2866 = vpop.f32.mrb[0].mxu0
        %v2867 = vadd.f32 %v2696, %v2866
        %v2868 = vpop.f32.mrb[0].mxu0
        %v2869 = vadd.f32 %v2698, %v2868
        %2870 = vmatprep.mubr.f32.mxu0 0.0
        %v2871 = vand.u32 %v351, 4294901760
        %2872 = vmatmul.mubr.f32.gmra.mrb[0].mxu0 %v2871
        %v2873 = vpop.f32.mrb[0].mxu0
        %v2874 = vadd.f32 %v2705, %v2873
        %v2875 = vpop.f32.mrb[0].mxu0
        %v2876 = vadd.f32 %v2707, %v2875
        %2877 = vdwg.mxu0
        %v2878 = vand.u32 %v201, 4294901760
        %2879 = vmatprep.subr.mxu0 %v2878
        %v2880 = vand.u32 %v200, 4294901760
        %2881 = vmatpush1.msra.mxu0 %v2880
        %v2882 = vand.u32 %v211, 4294901760
        %2883 = vmatprep.subr.mxu0 %v2882
        %v2884 = vand.u32 %v210, 4294901760
        %2885 = vmatpush1.msra.mxu0 %v2884
        %v2886 = vand.u32 %v221, 4294901760
        %2887 = vmatprep.subr.mxu0 %v2886
        %v2888 = vand.u32 %v220, 4294901760
        %2889 = vmatpush1.msra.mxu0 %v2888
        %v2890 = vand.u32 %v231, 4294901760
        %2891 = vmatprep.subr.mxu0 %v2890
        %v2892 = vand.u32 %v230, 4294901760
        %2893 = vmatpush1.msra.mxu0 %v2892
        %v2894 = vand.u32 %v241, 4294901760
        %2895 = vmatprep.subr.mxu0 %v2894
        %v2896 = vand.u32 %v240, 4294901760
        %2897 = vmatpush1.msra.mxu0 %v2896
        %v2898 = vand.u32 %v251, 4294901760
        %2899 = vmatprep.subr.mxu0 %v2898
        %v2900 = vand.u32 %v250, 4294901760
        %2901 = vmatpush1.msra.mxu0 %v2900
        %v2902 = vand.u32 %v261, 4294901760
        %2903 = vmatprep.subr.mxu0 %v2902
        %v2904 = vand.u32 %v260, 4294901760
        %2905 = vmatpush1.msra.mxu0 %v2904
        %v2906 = vand.u32 %v271, 4294901760
        %2907 = vmatprep.subr.mxu0 %v2906
        %v2908 = vand.u32 %v270, 4294901760
        %2909 = vmatpush1.msra.mxu0 %v2908
        %v2910 = vand.u32 %v281, 4294901760
        %2911 = vmatprep.subr.mxu0 %v2910
        %v2912 = vand.u32 %v280, 4294901760
        %2913 = vmatpush1.msra.mxu0 %v2912
        %v2914 = vand.u32 %v291, 4294901760
        %2915 = vmatprep.subr.mxu0 %v2914
        %v2916 = vand.u32 %v290, 4294901760
        %2917 = vmatpush1.msra.mxu0 %v2916
        %v2918 = vand.u32 %v301, 4294901760
        %2919 = vmatprep.subr.mxu0 %v2918
        %v2920 = vand.u32 %v300, 4294901760
        %2921 = vmatpush1.msra.mxu0 %v2920
        %v2922 = vand.u32 %v311, 4294901760
        %2923 = vmatprep.subr.mxu0 %v2922
        %v2924 = vand.u32 %v310, 4294901760
        %2925 = vmatpush1.msra.mxu0 %v2924
        %v2926 = vand.u32 %v321, 4294901760
        %2927 = vmatprep.subr.mxu0 %v2926
        %v2928 = vand.u32 %v320, 4294901760
        %2929 = vmatpush1.msra.mxu0 %v2928
        %v2930 = vand.u32 %v331, 4294901760
        %2931 = vmatprep.subr.mxu0 %v2930
        %v2932 = vand.u32 %v330, 4294901760
        %2933 = vmatpush1.msra.mxu0 %v2932
        %v2934 = vand.u32 %v341, 4294901760
        %2935 = vmatprep.subr.mxu0 %v2934
        %v2936 = vand.u32 %v340, 4294901760
        %2937 = vmatpush1.msra.mxu0 %v2936
        %2938 = vmatprep.subr.mxu0 0.0
        %2939 = vmatpush1.msra.mxu0 0.0
        %2940 = vmatprep.subr.mxu0 0.0
        %2941 = vmatpush1.msra.mxu0 0.0
        %2942 = vmatprep.subr.mxu0 0.0
        %2943 = vmatpush1.msra.mxu0 0.0
        %2944 = vmatprep.subr.mxu0 0.0
        %2945 = vmatpush1.msra.mxu0 0.0
        %2946 = vmatprep.subr.mxu0 0.0
        %2947 = vmatpush1.msra.mxu0 0.0
        %2948 = vmatprep.subr.mxu0 0.0
        %2949 = vmatpush1.msra.mxu0 0.0
        %2950 = vmatprep.subr.mxu0 0.0
        %2951 = vmatpush1.msra.mxu0 0.0
        %2952 = vmatprep.subr.mxu0 0.0
        %2953 = vmatpush1.msra.mxu0 0.0
        %2954 = vmatprep.subr.mxu0 0.0
        %2955 = vmatpush1.msra.mxu0 0.0
        %2956 = vmatprep.subr.mxu0 0.0
        %2957 = vmatpush1.msra.mxu0 0.0
        %2958 = vmatprep.subr.mxu0 0.0
        %2959 = vmatpush1.msra.mxu0 0.0
        %2960 = vmatprep.subr.mxu0 0.0
        %2961 = vmatpush1.msra.mxu0 0.0
        %2962 = vmatprep.subr.mxu0 0.0
        %2963 = vmatpush1.msra.mxu0 0.0
        %2964 = vmatprep.subr.mxu0 0.0
        %2965 = vmatpush1.msra.mxu0 0.0
        %2966 = vmatprep.subr.mxu0 0.0
        %2967 = vmatpush1.msra.mxu0 0.0
        %2968 = vmatprep.subr.mxu0 0.0
        %2969 = vmatpush1.msra.mxu0 0.0
        %2970 = vmatprep.subr.mxu0 0.0
        %2971 = vmatpush1.msra.mxu0 0.0
        %2972 = vmatprep.mubr.f32.mxu0 0.0
        %v2973 = vand.u32 %v348, 4294901760
        %2974 = vmatmul.mubr.f32.gmra.mrb[0].mxu0 %v2973
        %v2975 = vpop.f32.mrb[0].mxu0
        %v2976 = vadd.f32 %v2867, %v2975
        %v2977 = vpop.f32.mrb[0].mxu0
        %v2978 = vadd.f32 %v2869, %v2977
        %2979 = vmatprep.mubr.f32.mxu0 0.0
        %v2980 = vand.u32 %v351, 4294901760
        %2981 = vmatmul.mubr.f32.gmra.mrb[0].mxu0 %v2980
        %v2982 = vpop.f32.mrb[0].mxu0
        %v2983 = vadd.f32 %v2874, %v2982
        %v2984 = vpop.f32.mrb[0].mxu0
        %v2985 = vadd.f32 %v2876, %v2984
        %2986 = vdwg.mxu0
        %v2987 = vand.u32 %v203, 4294901760
        %2988 = vmatprep.subr.mxu0 %v2987
        %v2989 = vand.u32 %v202, 4294901760
        %2990 = vmatpush1.msra.mxu0 %v2989
        %v2991 = vand.u32 %v213, 4294901760
        %2992 = vmatprep.subr.mxu0 %v2991
        %v2993 = vand.u32 %v212, 4294901760
        %2994 = vmatpush1.msra.mxu0 %v2993
        %v2995 = vand.u32 %v223, 4294901760
        %2996 = vmatprep.subr.mxu0 %v2995
        %v2997 = vand.u32 %v222, 4294901760
        %2998 = vmatpush1.msra.mxu0 %v2997
        %v2999 = vand.u32 %v233, 4294901760
        %3000 = vmatprep.subr.mxu0 %v2999
        %v3001 = vand.u32 %v232, 4294901760
        %3002 = vmatpush1.msra.mxu0 %v3001
        %v3003 = vand.u32 %v243, 4294901760
        %3004 = vmatprep.subr.mxu0 %v3003
        %v3005 = vand.u32 %v242, 4294901760
        %3006 = vmatpush1.msra.mxu0 %v3005
        %v3007 = vand.u32 %v253, 4294901760
        %3008 = vmatprep.subr.mxu0 %v3007
        %v3009 = vand.u32 %v252, 4294901760
        %3010 = vmatpush1.msra.mxu0 %v3009
        %v3011 = vand.u32 %v263, 4294901760
        %3012 = vmatprep.subr.mxu0 %v3011
        %v3013 = vand.u32 %v262, 4294901760
        %3014 = vmatpush1.msra.mxu0 %v3013
        %v3015 = vand.u32 %v273, 4294901760
        %3016 = vmatprep.subr.mxu0 %v3015
        %v3017 = vand.u32 %v272, 4294901760
        %3018 = vmatpush1.msra.mxu0 %v3017
        %v3019 = vand.u32 %v283, 4294901760
        %3020 = vmatprep.subr.mxu0 %v3019
        %v3021 = vand.u32 %v282, 4294901760
        %3022 = vmatpush1.msra.mxu0 %v3021
        %v3023 = vand.u32 %v293, 4294901760
        %3024 = vmatprep.subr.mxu0 %v3023
        %v3025 = vand.u32 %v292, 4294901760
        %3026 = vmatpush1.msra.mxu0 %v3025
        %v3027 = vand.u32 %v303, 4294901760
        %3028 = vmatprep.subr.mxu0 %v3027
        %v3029 = vand.u32 %v302, 4294901760
        %3030 = vmatpush1.msra.mxu0 %v3029
        %v3031 = vand.u32 %v313, 4294901760
        %3032 = vmatprep.subr.mxu0 %v3031
        %v3033 = vand.u32 %v312, 4294901760
        %3034 = vmatpush1.msra.mxu0 %v3033
        %v3035 = vand.u32 %v323, 4294901760
        %3036 = vmatprep.subr.mxu0 %v3035
        %v3037 = vand.u32 %v322, 4294901760
        %3038 = vmatpush1.msra.mxu0 %v3037
        %v3039 = vand.u32 %v333, 4294901760
        %3040 = vmatprep.subr.mxu0 %v3039
        %v3041 = vand.u32 %v332, 4294901760
        %3042 = vmatpush1.msra.mxu0 %v3041
        %v3043 = vand.u32 %v343, 4294901760
        %3044 = vmatprep.subr.mxu0 %v3043
        %v3045 = vand.u32 %v342, 4294901760
        %3046 = vmatpush1.msra.mxu0 %v3045
        %3047 = vmatprep.subr.mxu0 0.0
        %3048 = vmatpush1.msra.mxu0 0.0
        %3049 = vmatprep.subr.mxu0 0.0
        %3050 = vmatpush1.msra.mxu0 0.0
        %3051 = vmatprep.subr.mxu0 0.0
        %3052 = vmatpush1.msra.mxu0 0.0
        %3053 = vmatprep.subr.mxu0 0.0
        %3054 = vmatpush1.msra.mxu0 0.0
        %3055 = vmatprep.subr.mxu0 0.0
        %3056 = vmatpush1.msra.mxu0 0.0
        %3057 = vmatprep.subr.mxu0 0.0
        %3058 = vmatpush1.msra.mxu0 0.0
        %3059 = vmatprep.subr.mxu0 0.0
        %3060 = vmatpush1.msra.mxu0 0.0
        %3061 = vmatprep.subr.mxu0 0.0
        %3062 = vmatpush1.msra.mxu0 0.0
        %3063 = vmatprep.subr.mxu0 0.0
        %3064 = vmatpush1.msra.mxu0 0.0
        %3065 = vmatprep.subr.mxu0 0.0
        %3066 = vmatpush1.msra.mxu0 0.0
        %3067 = vmatprep.subr.mxu0 0.0
        %3068 = vmatpush1.msra.mxu0 0.0
        %3069 = vmatprep.subr.mxu0 0.0
        %3070 = vmatpush1.msra.mxu0 0.0
        %3071 = vmatprep.subr.mxu0 0.0
        %3072 = vmatpush1.msra.mxu0 0.0
        %3073 = vmatprep.subr.mxu0 0.0
        %3074 = vmatpush1.msra.mxu0 0.0
        %3075 = vmatprep.subr.mxu0 0.0
        %3076 = vmatpush1.msra.mxu0 0.0
        %3077 = vmatprep.subr.mxu0 0.0
        %3078 = vmatpush1.msra.mxu0 0.0
        %3079 = vmatprep.subr.mxu0 0.0
        %3080 = vmatpush1.msra.mxu0 0.0
        %3081 = vmatprep.mubr.f32.mxu0 0.0
        %v3082 = vand.u32 %v348, 4294901760
        %v3083 = vsub.f32 %v348, %v3082
        %v3084 = vand.u32 %v3083, 4294901760
        %v3085 = vsub.f32 %v3083, %v3084
        %v3086 = vand.u32 %v3085, 4294901760
        %3087 = vmatmul.mubr.f32.gmra.mrb[0].mxu0 %v3086
        %v3088 = vpop.f32.mrb[0].mxu0
        %v3089 = vadd.f32 0.0, %v3088
        %v3090 = vpop.f32.mrb[0].mxu0
        %v3091 = vadd.f32 0.0, %v3090
        %3092 = vmatprep.mubr.f32.mxu0 0.0
        %v3093 = vand.u32 %v351, 4294901760
        %v3094 = vsub.f32 %v351, %v3093
        %v3095 = vand.u32 %v3094, 4294901760
        %v3096 = vsub.f32 %v3094, %v3095
        %v3097 = vand.u32 %v3096, 4294901760
        %3098 = vmatmul.mubr.f32.gmra.mrb[0].mxu0 %v3097
        %v3099 = vpop.f32.mrb[0].mxu0
        %v3100 = vadd.f32 0.0, %v3099
        %v3101 = vpop.f32.mrb[0].mxu0
        %v3102 = vadd.f32 0.0, %v3101
        %3103 = vdwg.mxu0
        %v3104 = vand.u32 %v203, 4294901760
        %v3105 = vsub.f32 %v203, %v3104
        %v3106 = vand.u32 %v3105, 4294901760
        %v3107 = vsub.f32 %v3105, %v3106
        %v3108 = vand.u32 %v3107, 4294901760
        %3109 = vmatprep.subr.mxu0 %v3108
        %v3110 = vand.u32 %v202, 4294901760
        %v3111 = vsub.f32 %v202, %v3110
        %v3112 = vand.u32 %v3111, 4294901760
        %v3113 = vsub.f32 %v3111, %v3112
        %v3114 = vand.u32 %v3113, 4294901760
        %3115 = vmatpush1.msra.mxu0 %v3114
        %v3116 = vand.u32 %v213, 4294901760
        %v3117 = vsub.f32 %v213, %v3116
        %v3118 = vand.u32 %v3117, 4294901760
        %v3119 = vsub.f32 %v3117, %v3118
        %v3120 = vand.u32 %v3119, 4294901760
        %3121 = vmatprep.subr.mxu0 %v3120
        %v3122 = vand.u32 %v212, 4294901760
        %v3123 = vsub.f32 %v212, %v3122
        %v3124 = vand.u32 %v3123, 4294901760
        %v3125 = vsub.f32 %v3123, %v3124
        %v3126 = vand.u32 %v3125, 4294901760
        %3127 = vmatpush1.msra.mxu0 %v3126
        %v3128 = vand.u32 %v223, 4294901760
        %v3129 = vsub.f32 %v223, %v3128
        %v3130 = vand.u32 %v3129, 4294901760
        %v3131 = vsub.f32 %v3129, %v3130
        %v3132 = vand.u32 %v3131, 4294901760
        %3133 = vmatprep.subr.mxu0 %v3132
        %v3134 = vand.u32 %v222, 4294901760
        %v3135 = vsub.f32 %v222, %v3134
        %v3136 = vand.u32 %v3135, 4294901760
        %v3137 = vsub.f32 %v3135, %v3136
        %v3138 = vand.u32 %v3137, 4294901760
        %3139 = vmatpush1.msra.mxu0 %v3138
        %v3140 = vand.u32 %v233, 4294901760
        %v3141 = vsub.f32 %v233, %v3140
        %v3142 = vand.u32 %v3141, 4294901760
        %v3143 = vsub.f32 %v3141, %v3142
        %v3144 = vand.u32 %v3143, 4294901760
        %3145 = vmatprep.subr.mxu0 %v3144
        %v3146 = vand.u32 %v232, 4294901760
        %v3147 = vsub.f32 %v232, %v3146
        %v3148 = vand.u32 %v3147, 4294901760
        %v3149 = vsub.f32 %v3147, %v3148
        %v3150 = vand.u32 %v3149, 4294901760
        %3151 = vmatpush1.msra.mxu0 %v3150
        %v3152 = vand.u32 %v243, 4294901760
        %v3153 = vsub.f32 %v243, %v3152
        %v3154 = vand.u32 %v3153, 4294901760
        %v3155 = vsub.f32 %v3153, %v3154
        %v3156 = vand.u32 %v3155, 4294901760
        %3157 = vmatprep.subr.mxu0 %v3156
        %v3158 = vand.u32 %v242, 4294901760
        %v3159 = vsub.f32 %v242, %v3158
        %v3160 = vand.u32 %v3159, 4294901760
        %v3161 = vsub.f32 %v3159, %v3160
        %v3162 = vand.u32 %v3161, 4294901760
        %3163 = vmatpush1.msra.mxu0 %v3162
        %v3164 = vand.u32 %v253, 4294901760
        %v3165 = vsub.f32 %v253, %v3164
        %v3166 = vand.u32 %v3165, 4294901760
        %v3167 = vsub.f32 %v3165, %v3166
        %v3168 = vand.u32 %v3167, 4294901760
        %3169 = vmatprep.subr.mxu0 %v3168
        %v3170 = vand.u32 %v252, 4294901760
        %v3171 = vsub.f32 %v252, %v3170
        %v3172 = vand.u32 %v3171, 4294901760
        %v3173 = vsub.f32 %v3171, %v3172
        %v3174 = vand.u32 %v3173, 4294901760
        %3175 = vmatpush1.msra.mxu0 %v3174
        %v3176 = vand.u32 %v263, 4294901760
        %v3177 = vsub.f32 %v263, %v3176
        %v3178 = vand.u32 %v3177, 4294901760
        %v3179 = vsub.f32 %v3177, %v3178
        %v3180 = vand.u32 %v3179, 4294901760
        %3181 = vmatprep.subr.mxu0 %v3180
        %v3182 = vand.u32 %v262, 4294901760
        %v3183 = vsub.f32 %v262, %v3182
        %v3184 = vand.u32 %v3183, 4294901760
        %v3185 = vsub.f32 %v3183, %v3184
        %v3186 = vand.u32 %v3185, 4294901760
        %3187 = vmatpush1.msra.mxu0 %v3186
        %v3188 = vand.u32 %v273, 4294901760
        %v3189 = vsub.f32 %v273, %v3188
        %v3190 = vand.u32 %v3189, 4294901760
        %v3191 = vsub.f32 %v3189, %v3190
        %v3192 = vand.u32 %v3191, 4294901760
        %3193 = vmatprep.subr.mxu0 %v3192
        %v3194 = vand.u32 %v272, 4294901760
        %v3195 = vsub.f32 %v272, %v3194
        %v3196 = vand.u32 %v3195, 4294901760
        %v3197 = vsub.f32 %v3195, %v3196
        %v3198 = vand.u32 %v3197, 4294901760
        %3199 = vmatpush1.msra.mxu0 %v3198
        %v3200 = vand.u32 %v283, 4294901760
        %v3201 = vsub.f32 %v283, %v3200
        %v3202 = vand.u32 %v3201, 4294901760
        %v3203 = vsub.f32 %v3201, %v3202
        %v3204 = vand.u32 %v3203, 4294901760
        %3205 = vmatprep.subr.mxu0 %v3204
        %v3206 = vand.u32 %v282, 4294901760
        %v3207 = vsub.f32 %v282, %v3206
        %v3208 = vand.u32 %v3207, 4294901760
        %v3209 = vsub.f32 %v3207, %v3208
        %v3210 = vand.u32 %v3209, 4294901760
        %3211 = vmatpush1.msra.mxu0 %v3210
        %v3212 = vand.u32 %v293, 4294901760
        %v3213 = vsub.f32 %v293, %v3212
        %v3214 = vand.u32 %v3213, 4294901760
        %v3215 = vsub.f32 %v3213, %v3214
        %v3216 = vand.u32 %v3215, 4294901760
        %3217 = vmatprep.subr.mxu0 %v3216
        %v3218 = vand.u32 %v292, 4294901760
        %v3219 = vsub.f32 %v292, %v3218
        %v3220 = vand.u32 %v3219, 4294901760
        %v3221 = vsub.f32 %v3219, %v3220
        %v3222 = vand.u32 %v3221, 4294901760
        %3223 = vmatpush1.msra.mxu0 %v3222
        %v3224 = vand.u32 %v303, 4294901760
        %v3225 = vsub.f32 %v303, %v3224
        %v3226 = vand.u32 %v3225, 4294901760
        %v3227 = vsub.f32 %v3225, %v3226
        %v3228 = vand.u32 %v3227, 4294901760
        %3229 = vmatprep.subr.mxu0 %v3228
        %v3230 = vand.u32 %v302, 4294901760
        %v3231 = vsub.f32 %v302, %v3230
        %v3232 = vand.u32 %v3231, 4294901760
        %v3233 = vsub.f32 %v3231, %v3232
        %v3234 = vand.u32 %v3233, 4294901760
        %3235 = vmatpush1.msra.mxu0 %v3234
        %v3236 = vand.u32 %v313, 4294901760
        %v3237 = vsub.f32 %v313, %v3236
        %v3238 = vand.u32 %v3237, 4294901760
        %v3239 = vsub.f32 %v3237, %v3238
        %v3240 = vand.u32 %v3239, 4294901760
        %3241 = vmatprep.subr.mxu0 %v3240
        %v3242 = vand.u32 %v312, 4294901760
        %v3243 = vsub.f32 %v312, %v3242
        %v3244 = vand.u32 %v3243, 4294901760
        %v3245 = vsub.f32 %v3243, %v3244
        %v3246 = vand.u32 %v3245, 4294901760
        %3247 = vmatpush1.msra.mxu0 %v3246
        %v3248 = vand.u32 %v323, 4294901760
        %v3249 = vsub.f32 %v323, %v3248
        %v3250 = vand.u32 %v3249, 4294901760
        %v3251 = vsub.f32 %v3249, %v3250
        %v3252 = vand.u32 %v3251, 4294901760
        %3253 = vmatprep.subr.mxu0 %v3252
        %v3254 = vand.u32 %v322, 4294901760
        %v3255 = vsub.f32 %v322, %v3254
        %v3256 = vand.u32 %v3255, 4294901760
        %v3257 = vsub.f32 %v3255, %v3256
        %v3258 = vand.u32 %v3257, 4294901760
        %3259 = vmatpush1.msra.mxu0 %v3258
        %v3260 = vand.u32 %v333, 4294901760
        %v3261 = vsub.f32 %v333, %v3260
        %v3262 = vand.u32 %v3261, 4294901760
        %v3263 = vsub.f32 %v3261, %v3262
        %v3264 = vand.u32 %v3263, 4294901760
        %3265 = vmatprep.subr.mxu0 %v3264
        %v3266 = vand.u32 %v332, 4294901760
        %v3267 = vsub.f32 %v332, %v3266
        %v3268 = vand.u32 %v3267, 4294901760
        %v3269 = vsub.f32 %v3267, %v3268
        %v3270 = vand.u32 %v3269, 4294901760
        %3271 = vmatpush1.msra.mxu0 %v3270
        %v3272 = vand.u32 %v343, 4294901760
        %v3273 = vsub.f32 %v343, %v3272
        %v3274 = vand.u32 %v3273, 4294901760
        %v3275 = vsub.f32 %v3273, %v3274
        %v3276 = vand.u32 %v3275, 4294901760
        %3277 = vmatprep.subr.mxu0 %v3276
        %v3278 = vand.u32 %v342, 4294901760
        %v3279 = vsub.f32 %v342, %v3278
        %v3280 = vand.u32 %v3279, 4294901760
        %v3281 = vsub.f32 %v3279, %v3280
        %v3282 = vand.u32 %v3281, 4294901760
        %3283 = vmatpush1.msra.mxu0 %v3282
        %3284 = vmatprep.subr.mxu0 0.0
        %3285 = vmatpush1.msra.mxu0 0.0
        %3286 = vmatprep.subr.mxu0 0.0
        %3287 = vmatpush1.msra.mxu0 0.0
        %3288 = vmatprep.subr.mxu0 0.0
        %3289 = vmatpush1.msra.mxu0 0.0
        %3290 = vmatprep.subr.mxu0 0.0
        %3291 = vmatpush1.msra.mxu0 0.0
        %3292 = vmatprep.subr.mxu0 0.0
        %3293 = vmatpush1.msra.mxu0 0.0
        %3294 = vmatprep.subr.mxu0 0.0
        %3295 = vmatpush1.msra.mxu0 0.0
        %3296 = vmatprep.subr.mxu0 0.0
        %3297 = vmatpush1.msra.mxu0 0.0
        %3298 = vmatprep.subr.mxu0 0.0
        %3299 = vmatpush1.msra.mxu0 0.0
        %3300 = vmatprep.subr.mxu0 0.0
        %3301 = vmatpush1.msra.mxu0 0.0
        %3302 = vmatprep.subr.mxu0 0.0
        %3303 = vmatpush1.msra.mxu0 0.0
        %3304 = vmatprep.subr.mxu0 0.0
        %3305 = vmatpush1.msra.mxu0 0.0
        %3306 = vmatprep.subr.mxu0 0.0
        %3307 = vmatpush1.msra.mxu0 0.0
        %3308 = vmatprep.subr.mxu0 0.0
        %3309 = vmatpush1.msra.mxu0 0.0
        %3310 = vmatprep.subr.mxu0 0.0
        %3311 = vmatpush1.msra.mxu0 0.0
        %3312 = vmatprep.subr.mxu0 0.0
        %3313 = vmatpush1.msra.mxu0 0.0
        %3314 = vmatprep.subr.mxu0 0.0
        %3315 = vmatpush1.msra.mxu0 0.0
        %3316 = vmatprep.subr.mxu0 0.0
        %3317 = vmatpush1.msra.mxu0 0.0
        %3318 = vmatprep.mubr.f32.mxu0 0.0
        %v3319 = vand.u32 %v348, 4294901760
        %3320 = vmatmul.mubr.f32.gmra.mrb[0].mxu0 %v3319
        %v3321 = vpop.f32.mrb[0].mxu0
        %v3322 = vadd.f32 %v3089, %v3321
        %v3323 = vpop.f32.mrb[0].mxu0
        %v3324 = vadd.f32 %v3091, %v3323
        %3325 = vmatprep.mubr.f32.mxu0 0.0
        %v3326 = vand.u32 %v351, 4294901760
        %3327 = vmatmul.mubr.f32.gmra.mrb[0].mxu0 %v3326
        %v3328 = vpop.f32.mrb[0].mxu0
        %v3329 = vadd.f32 %v3100, %v3328
        %v3330 = vpop.f32.mrb[0].mxu0
        %v3331 = vadd.f32 %v3102, %v3330
        %3332 = vdwg.mxu0
        %v3333 = vand.u32 %v203, 4294901760
        %v3334 = vsub.f32 %v203, %v3333
        %3335 = vmatprep.subr.mxu0 %v3334
        %v3336 = vand.u32 %v202, 4294901760
        %v3337 = vsub.f32 %v202, %v3336
        %3338 = vmatpush1.msra.mxu0 %v3337
        %v3339 = vand.u32 %v213, 4294901760
        %v3340 = vsub.f32 %v213, %v3339
        %3341 = vmatprep.subr.mxu0 %v3340
        %v3342 = vand.u32 %v212, 4294901760
        %v3343 = vsub.f32 %v212, %v3342
        %3344 = vmatpush1.msra.mxu0 %v3343
        %v3345 = vand.u32 %v223, 4294901760
        %v3346 = vsub.f32 %v223, %v3345
        %3347 = vmatprep.subr.mxu0 %v3346
        %v3348 = vand.u32 %v222, 4294901760
        %v3349 = vsub.f32 %v222, %v3348
        %3350 = vmatpush1.msra.mxu0 %v3349
        %v3351 = vand.u32 %v233, 4294901760
        %v3352 = vsub.f32 %v233, %v3351
        %3353 = vmatprep.subr.mxu0 %v3352
        %v3354 = vand.u32 %v232, 4294901760
        %v3355 = vsub.f32 %v232, %v3354
        %3356 = vmatpush1.msra.mxu0 %v3355
        %v3357 = vand.u32 %v243, 4294901760
        %v3358 = vsub.f32 %v243, %v3357
        %3359 = vmatprep.subr.mxu0 %v3358
        %v3360 = vand.u32 %v242, 4294901760
        %v3361 = vsub.f32 %v242, %v3360
        %3362 = vmatpush1.msra.mxu0 %v3361
        %v3363 = vand.u32 %v253, 4294901760
        %v3364 = vsub.f32 %v253, %v3363
        %3365 = vmatprep.subr.mxu0 %v3364
        %v3366 = vand.u32 %v252, 4294901760
        %v3367 = vsub.f32 %v252, %v3366
        %3368 = vmatpush1.msra.mxu0 %v3367
        %v3369 = vand.u32 %v263, 4294901760
        %v3370 = vsub.f32 %v263, %v3369
        %3371 = vmatprep.subr.mxu0 %v3370
        %v3372 = vand.u32 %v262, 4294901760
        %v3373 = vsub.f32 %v262, %v3372
        %3374 = vmatpush1.msra.mxu0 %v3373
        %v3375 = vand.u32 %v273, 4294901760
        %v3376 = vsub.f32 %v273, %v3375
        %3377 = vmatprep.subr.mxu0 %v3376
        %v3378 = vand.u32 %v272, 4294901760
        %v3379 = vsub.f32 %v272, %v3378
        %3380 = vmatpush1.msra.mxu0 %v3379
        %v3381 = vand.u32 %v283, 4294901760
        %v3382 = vsub.f32 %v283, %v3381
        %3383 = vmatprep.subr.mxu0 %v3382
        %v3384 = vand.u32 %v282, 4294901760
        %v3385 = vsub.f32 %v282, %v3384
        %3386 = vmatpush1.msra.mxu0 %v3385
        %v3387 = vand.u32 %v293, 4294901760
        %v3388 = vsub.f32 %v293, %v3387
        %3389 = vmatprep.subr.mxu0 %v3388
        %v3390 = vand.u32 %v292, 4294901760
        %v3391 = vsub.f32 %v292, %v3390
        %3392 = vmatpush1.msra.mxu0 %v3391
        %v3393 = vand.u32 %v303, 4294901760
        %v3394 = vsub.f32 %v303, %v3393
        %3395 = vmatprep.subr.mxu0 %v3394
        %v3396 = vand.u32 %v302, 4294901760
        %v3397 = vsub.f32 %v302, %v3396
        %3398 = vmatpush1.msra.mxu0 %v3397
        %v3399 = vand.u32 %v313, 4294901760
        %v3400 = vsub.f32 %v313, %v3399
        %3401 = vmatprep.subr.mxu0 %v3400
        %v3402 = vand.u32 %v312, 4294901760
        %v3403 = vsub.f32 %v312, %v3402
        %3404 = vmatpush1.msra.mxu0 %v3403
        %v3405 = vand.u32 %v323, 4294901760
        %v3406 = vsub.f32 %v323, %v3405
        %3407 = vmatprep.subr.mxu0 %v3406
        %v3408 = vand.u32 %v322, 4294901760
        %v3409 = vsub.f32 %v322, %v3408
        %3410 = vmatpush1.msra.mxu0 %v3409
        %v3411 = vand.u32 %v333, 4294901760
        %v3412 = vsub.f32 %v333, %v3411
        %3413 = vmatprep.subr.mxu0 %v3412
        %v3414 = vand.u32 %v332, 4294901760
        %v3415 = vsub.f32 %v332, %v3414
        %3416 = vmatpush1.msra.mxu0 %v3415
        %v3417 = vand.u32 %v343, 4294901760
        %v3418 = vsub.f32 %v343, %v3417
        %3419 = vmatprep.subr.mxu0 %v3418
        %v3420 = vand.u32 %v342, 4294901760
        %v3421 = vsub.f32 %v342, %v3420
        %3422 = vmatpush1.msra.mxu0 %v3421
        %3423 = vmatprep.subr.mxu0 0.0
        %3424 = vmatpush1.msra.mxu0 0.0
        %3425 = vmatprep.subr.mxu0 0.0
        %3426 = vmatpush1.msra.mxu0 0.0
        %3427 = vmatprep.subr.mxu0 0.0
        %3428 = vmatpush1.msra.mxu0 0.0
        %3429 = vmatprep.subr.mxu0 0.0
        %3430 = vmatpush1.msra.mxu0 0.0
        %3431 = vmatprep.subr.mxu0 0.0
        %3432 = vmatpush1.msra.mxu0 0.0
        %3433 = vmatprep.subr.mxu0 0.0
        %3434 = vmatpush1.msra.mxu0 0.0
        %3435 = vmatprep.subr.mxu0 0.0
        %3436 = vmatpush1.msra.mxu0 0.0
        %3437 = vmatprep.subr.mxu0 0.0
        %3438 = vmatpush1.msra.mxu0 0.0
        %3439 = vmatprep.subr.mxu0 0.0
        %3440 = vmatpush1.msra.mxu0 0.0
        %3441 = vmatprep.subr.mxu0 0.0
        %3442 = vmatpush1.msra.mxu0 0.0
        %3443 = vmatprep.subr.mxu0 0.0
        %3444 = vmatpush1.msra.mxu0 0.0
        %3445 = vmatprep.subr.mxu0 0.0
        %3446 = vmatpush1.msra.mxu0 0.0
        %3447 = vmatprep.subr.mxu0 0.0
        %3448 = vmatpush1.msra.mxu0 0.0
        %3449 = vmatprep.subr.mxu0 0.0
        %3450 = vmatpush1.msra.mxu0 0.0
        %3451 = vmatprep.subr.mxu0 0.0
        %3452 = vmatpush1.msra.mxu0 0.0
        %3453 = vmatprep.subr.mxu0 0.0
        %3454 = vmatpush1.msra.mxu0 0.0
        %3455 = vmatprep.subr.mxu0 0.0
        %3456 = vmatpush1.msra.mxu0 0.0
        %3457 = vmatprep.mubr.f32.mxu0 0.0
        %v3458 = vand.u32 %v348, 4294901760
        %v3459 = vsub.f32 %v348, %v3458
        %3460 = vmatmul.mubr.f32.gmra.mrb[0].mxu0 %v3459
        %v3461 = vpop.f32.mrb[0].mxu0
        %v3462 = vadd.f32 %v3322, %v3461
        %v3463 = vpop.f32.mrb[0].mxu0
        %v3464 = vadd.f32 %v3324, %v3463
        %3465 = vmatprep.mubr.f32.mxu0 0.0
        %v3466 = vand.u32 %v351, 4294901760
        %v3467 = vsub.f32 %v351, %v3466
        %3468 = vmatmul.mubr.f32.gmra.mrb[0].mxu0 %v3467
        %v3469 = vpop.f32.mrb[0].mxu0
        %v3470 = vadd.f32 %v3329, %v3469
        %v3471 = vpop.f32.mrb[0].mxu0
        %v3472 = vadd.f32 %v3331, %v3471
        %3473 = vdwg.mxu0
        %v3474 = vand.u32 %v203, 4294901760
        %3475 = vmatprep.subr.mxu0 %v3474
        %v3476 = vand.u32 %v202, 4294901760
        %3477 = vmatpush1.msra.mxu0 %v3476
        %v3478 = vand.u32 %v213, 4294901760
        %3479 = vmatprep.subr.mxu0 %v3478
        %v3480 = vand.u32 %v212, 4294901760
        %3481 = vmatpush1.msra.mxu0 %v3480
        %v3482 = vand.u32 %v223, 4294901760
        %3483 = vmatprep.subr.mxu0 %v3482
        %v3484 = vand.u32 %v222, 4294901760
        %3485 = vmatpush1.msra.mxu0 %v3484
        %v3486 = vand.u32 %v233, 4294901760
        %3487 = vmatprep.subr.mxu0 %v3486
        %v3488 = vand.u32 %v232, 4294901760
        %3489 = vmatpush1.msra.mxu0 %v3488
        %v3490 = vand.u32 %v243, 4294901760
        %3491 = vmatprep.subr.mxu0 %v3490
        %v3492 = vand.u32 %v242, 4294901760
        %3493 = vmatpush1.msra.mxu0 %v3492
        %v3494 = vand.u32 %v253, 4294901760
        %3495 = vmatprep.subr.mxu0 %v3494
        %v3496 = vand.u32 %v252, 4294901760
        %3497 = vmatpush1.msra.mxu0 %v3496
        %v3498 = vand.u32 %v263, 4294901760
        %3499 = vmatprep.subr.mxu0 %v3498
        %v3500 = vand.u32 %v262, 4294901760
        %3501 = vmatpush1.msra.mxu0 %v3500
        %v3502 = vand.u32 %v273, 4294901760
        %3503 = vmatprep.subr.mxu0 %v3502
        %v3504 = vand.u32 %v272, 4294901760
        %3505 = vmatpush1.msra.mxu0 %v3504
        %v3506 = vand.u32 %v283, 4294901760
        %3507 = vmatprep.subr.mxu0 %v3506
        %v3508 = vand.u32 %v282, 4294901760
        %3509 = vmatpush1.msra.mxu0 %v3508
        %v3510 = vand.u32 %v293, 4294901760
        %3511 = vmatprep.subr.mxu0 %v3510
        %v3512 = vand.u32 %v292, 4294901760
        %3513 = vmatpush1.msra.mxu0 %v3512
        %v3514 = vand.u32 %v303, 4294901760
        %3515 = vmatprep.subr.mxu0 %v3514
        %v3516 = vand.u32 %v302, 4294901760
        %3517 = vmatpush1.msra.mxu0 %v3516
        %v3518 = vand.u32 %v313, 4294901760
        %3519 = vmatprep.subr.mxu0 %v3518
        %v3520 = vand.u32 %v312, 4294901760
        %3521 = vmatpush1.msra.mxu0 %v3520
        %v3522 = vand.u32 %v323, 4294901760
        %3523 = vmatprep.subr.mxu0 %v3522
        %v3524 = vand.u32 %v322, 4294901760
        %3525 = vmatpush1.msra.mxu0 %v3524
        %v3526 = vand.u32 %v333, 4294901760
        %3527 = vmatprep.subr.mxu0 %v3526
        %v3528 = vand.u32 %v332, 4294901760
        %3529 = vmatpush1.msra.mxu0 %v3528
        %v3530 = vand.u32 %v343, 4294901760
        %3531 = vmatprep.subr.mxu0 %v3530
        %v3532 = vand.u32 %v342, 4294901760
        %3533 = vmatpush1.msra.mxu0 %v3532
        %3534 = vmatprep.subr.mxu0 0.0
        %3535 = vmatpush1.msra.mxu0 0.0
        %3536 = vmatprep.subr.mxu0 0.0
        %3537 = vmatpush1.msra.mxu0 0.0
        %3538 = vmatprep.subr.mxu0 0.0
        %3539 = vmatpush1.msra.mxu0 0.0
        %3540 = vmatprep.subr.mxu0 0.0
        %3541 = vmatpush1.msra.mxu0 0.0
        %3542 = vmatprep.subr.mxu0 0.0
        %3543 = vmatpush1.msra.mxu0 0.0
        %3544 = vmatprep.subr.mxu0 0.0
        %3545 = vmatpush1.msra.mxu0 0.0
        %3546 = vmatprep.subr.mxu0 0.0
        %3547 = vmatpush1.msra.mxu0 0.0
        %3548 = vmatprep.subr.mxu0 0.0
        %3549 = vmatpush1.msra.mxu0 0.0
        %3550 = vmatprep.subr.mxu0 0.0
        %3551 = vmatpush1.msra.mxu0 0.0
        %3552 = vmatprep.subr.mxu0 0.0
        %3553 = vmatpush1.msra.mxu0 0.0
        %3554 = vmatprep.subr.mxu0 0.0
        %3555 = vmatpush1.msra.mxu0 0.0
        %3556 = vmatprep.subr.mxu0 0.0
        %3557 = vmatpush1.msra.mxu0 0.0
        %3558 = vmatprep.subr.mxu0 0.0
        %3559 = vmatpush1.msra.mxu0 0.0
        %3560 = vmatprep.subr.mxu0 0.0
        %3561 = vmatpush1.msra.mxu0 0.0
        %3562 = vmatprep.subr.mxu0 0.0
        %3563 = vmatpush1.msra.mxu0 0.0
        %3564 = vmatprep.subr.mxu0 0.0
        %3565 = vmatpush1.msra.mxu0 0.0
        %3566 = vmatprep.subr.mxu0 0.0
        %3567 = vmatpush1.msra.mxu0 0.0
        %3568 = vmatprep.mubr.f32.mxu0 0.0
        %v3569 = vand.u32 %v348, 4294901760
        %v3570 = vsub.f32 %v348, %v3569
        %v3571 = vand.u32 %v3570, 4294901760
        %3572 = vmatmul.mubr.f32.gmra.mrb[0].mxu0 %v3571
        %v3573 = vpop.f32.mrb[0].mxu0
        %v3574 = vadd.f32 %v3462, %v3573
        %v3575 = vpop.f32.mrb[0].mxu0
        %v3576 = vadd.f32 %v3464, %v3575
        %3577 = vmatprep.mubr.f32.mxu0 0.0
        %v3578 = vand.u32 %v351, 4294901760
        %v3579 = vsub.f32 %v351, %v3578
        %v3580 = vand.u32 %v3579, 4294901760
        %3581 = vmatmul.mubr.f32.gmra.mrb[0].mxu0 %v3580
        %v3582 = vpop.f32.mrb[0].mxu0
        %v3583 = vadd.f32 %v3470, %v3582
        %v3584 = vpop.f32.mrb[0].mxu0
        %v3585 = vadd.f32 %v3472, %v3584
        %3586 = vdwg.mxu0
        %v3587 = vand.u32 %v203, 4294901760
        %v3588 = vsub.f32 %v203, %v3587
        %v3589 = vand.u32 %v3588, 4294901760
        %3590 = vmatprep.subr.mxu0 %v3589
        %v3591 = vand.u32 %v202, 4294901760
        %v3592 = vsub.f32 %v202, %v3591
        %v3593 = vand.u32 %v3592, 4294901760
        %3594 = vmatpush1.msra.mxu0 %v3593
        %v3595 = vand.u32 %v213, 4294901760
        %v3596 = vsub.f32 %v213, %v3595
        %v3597 = vand.u32 %v3596, 4294901760
        %3598 = vmatprep.subr.mxu0 %v3597
        %v3599 = vand.u32 %v212, 4294901760
        %v3600 = vsub.f32 %v212, %v3599
        %v3601 = vand.u32 %v3600, 4294901760
        %3602 = vmatpush1.msra.mxu0 %v3601
        %v3603 = vand.u32 %v223, 4294901760
        %v3604 = vsub.f32 %v223, %v3603
        %v3605 = vand.u32 %v3604, 4294901760
        %3606 = vmatprep.subr.mxu0 %v3605
        %v3607 = vand.u32 %v222, 4294901760
        %v3608 = vsub.f32 %v222, %v3607
        %v3609 = vand.u32 %v3608, 4294901760
        %3610 = vmatpush1.msra.mxu0 %v3609
        %v3611 = vand.u32 %v233, 4294901760
        %v3612 = vsub.f32 %v233, %v3611
        %v3613 = vand.u32 %v3612, 4294901760
        %3614 = vmatprep.subr.mxu0 %v3613
        %v3615 = vand.u32 %v232, 4294901760
        %v3616 = vsub.f32 %v232, %v3615
        %v3617 = vand.u32 %v3616, 4294901760
        %3618 = vmatpush1.msra.mxu0 %v3617
        %v3619 = vand.u32 %v243, 4294901760
        %v3620 = vsub.f32 %v243, %v3619
        %v3621 = vand.u32 %v3620, 4294901760
        %3622 = vmatprep.subr.mxu0 %v3621
        %v3623 = vand.u32 %v242, 4294901760
        %v3624 = vsub.f32 %v242, %v3623
        %v3625 = vand.u32 %v3624, 4294901760
        %3626 = vmatpush1.msra.mxu0 %v3625
        %v3627 = vand.u32 %v253, 4294901760
        %v3628 = vsub.f32 %v253, %v3627
        %v3629 = vand.u32 %v3628, 4294901760
        %3630 = vmatprep.subr.mxu0 %v3629
        %v3631 = vand.u32 %v252, 4294901760
        %v3632 = vsub.f32 %v252, %v3631
        %v3633 = vand.u32 %v3632, 4294901760
        %3634 = vmatpush1.msra.mxu0 %v3633
        %v3635 = vand.u32 %v263, 4294901760
        %v3636 = vsub.f32 %v263, %v3635
        %v3637 = vand.u32 %v3636, 4294901760
        %3638 = vmatprep.subr.mxu0 %v3637
        %v3639 = vand.u32 %v262, 4294901760
        %v3640 = vsub.f32 %v262, %v3639
        %v3641 = vand.u32 %v3640, 4294901760
        %3642 = vmatpush1.msra.mxu0 %v3641
        %v3643 = vand.u32 %v273, 4294901760
        %v3644 = vsub.f32 %v273, %v3643
        %v3645 = vand.u32 %v3644, 4294901760
        %3646 = vmatprep.subr.mxu0 %v3645
        %v3647 = vand.u32 %v272, 4294901760
        %v3648 = vsub.f32 %v272, %v3647
        %v3649 = vand.u32 %v3648, 4294901760
        %3650 = vmatpush1.msra.mxu0 %v3649
        %v3651 = vand.u32 %v283, 4294901760
        %v3652 = vsub.f32 %v283, %v3651
        %v3653 = vand.u32 %v3652, 4294901760
        %3654 = vmatprep.subr.mxu0 %v3653
        %v3655 = vand.u32 %v282, 4294901760
        %v3656 = vsub.f32 %v282, %v3655
        %v3657 = vand.u32 %v3656, 4294901760
        %3658 = vmatpush1.msra.mxu0 %v3657
        %v3659 = vand.u32 %v293, 4294901760
        %v3660 = vsub.f32 %v293, %v3659
        %v3661 = vand.u32 %v3660, 4294901760
        %3662 = vmatprep.subr.mxu0 %v3661
        %v3663 = vand.u32 %v292, 4294901760
        %v3664 = vsub.f32 %v292, %v3663
        %v3665 = vand.u32 %v3664, 4294901760
        %3666 = vmatpush1.msra.mxu0 %v3665
        %v3667 = vand.u32 %v303, 4294901760
        %v3668 = vsub.f32 %v303, %v3667
        %v3669 = vand.u32 %v3668, 4294901760
        %3670 = vmatprep.subr.mxu0 %v3669
        %v3671 = vand.u32 %v302, 4294901760
        %v3672 = vsub.f32 %v302, %v3671
        %v3673 = vand.u32 %v3672, 4294901760
        %3674 = vmatpush1.msra.mxu0 %v3673
        %v3675 = vand.u32 %v313, 4294901760
        %v3676 = vsub.f32 %v313, %v3675
        %v3677 = vand.u32 %v3676, 4294901760
        %3678 = vmatprep.subr.mxu0 %v3677
        %v3679 = vand.u32 %v312, 4294901760
        %v3680 = vsub.f32 %v312, %v3679
        %v3681 = vand.u32 %v3680, 4294901760
        %3682 = vmatpush1.msra.mxu0 %v3681
        %v3683 = vand.u32 %v323, 4294901760
        %v3684 = vsub.f32 %v323, %v3683
        %v3685 = vand.u32 %v3684, 4294901760
        %3686 = vmatprep.subr.mxu0 %v3685
        %v3687 = vand.u32 %v322, 4294901760
        %v3688 = vsub.f32 %v322, %v3687
        %v3689 = vand.u32 %v3688, 4294901760
        %3690 = vmatpush1.msra.mxu0 %v3689
        %v3691 = vand.u32 %v333, 4294901760
        %v3692 = vsub.f32 %v333, %v3691
        %v3693 = vand.u32 %v3692, 4294901760
        %3694 = vmatprep.subr.mxu0 %v3693
        %v3695 = vand.u32 %v332, 4294901760
        %v3696 = vsub.f32 %v332, %v3695
        %v3697 = vand.u32 %v3696, 4294901760
        %3698 = vmatpush1.msra.mxu0 %v3697
        %v3699 = vand.u32 %v343, 4294901760
        %v3700 = vsub.f32 %v343, %v3699
        %v3701 = vand.u32 %v3700, 4294901760
        %3702 = vmatprep.subr.mxu0 %v3701
        %v3703 = vand.u32 %v342, 4294901760
        %v3704 = vsub.f32 %v342, %v3703
        %v3705 = vand.u32 %v3704, 4294901760
        %3706 = vmatpush1.msra.mxu0 %v3705
        %3707 = vmatprep.subr.mxu0 0.0
        %3708 = vmatpush1.msra.mxu0 0.0
        %3709 = vmatprep.subr.mxu0 0.0
        %3710 = vmatpush1.msra.mxu0 0.0
        %3711 = vmatprep.subr.mxu0 0.0
        %3712 = vmatpush1.msra.mxu0 0.0
        %3713 = vmatprep.subr.mxu0 0.0
        %3714 = vmatpush1.msra.mxu0 0.0
        %3715 = vmatprep.subr.mxu0 0.0
        %3716 = vmatpush1.msra.mxu0 0.0
        %3717 = vmatprep.subr.mxu0 0.0
        %3718 = vmatpush1.msra.mxu0 0.0
        %3719 = vmatprep.subr.mxu0 0.0
        %3720 = vmatpush1.msra.mxu0 0.0
        %3721 = vmatprep.subr.mxu0 0.0
        %3722 = vmatpush1.msra.mxu0 0.0
        %3723 = vmatprep.subr.mxu0 0.0
        %3724 = vmatpush1.msra.mxu0 0.0
        %3725 = vmatprep.subr.mxu0 0.0
        %3726 = vmatpush1.msra.mxu0 0.0
        %3727 = vmatprep.subr.mxu0 0.0
        %3728 = vmatpush1.msra.mxu0 0.0
        %3729 = vmatprep.subr.mxu0 0.0
        %3730 = vmatpush1.msra.mxu0 0.0
        %3731 = vmatprep.subr.mxu0 0.0
        %3732 = vmatpush1.msra.mxu0 0.0
        %3733 = vmatprep.subr.mxu0 0.0
        %3734 = vmatpush1.msra.mxu0 0.0
        %3735 = vmatprep.subr.mxu0 0.0
        %3736 = vmatpush1.msra.mxu0 0.0
        %3737 = vmatprep.subr.mxu0 0.0
        %3738 = vmatpush1.msra.mxu0 0.0
        %3739 = vmatprep.subr.mxu0 0.0
        %3740 = vmatpush1.msra.mxu0 0.0
        %3741 = vmatprep.mubr.f32.mxu0 0.0
        %v3742 = vand.u32 %v348, 4294901760
        %3743 = vmatmul.mubr.f32.gmra.mrb[0].mxu0 %v3742
        %v3744 = vpop.f32.mrb[0].mxu0
        %v3745 = vadd.f32 %v3574, %v3744
        %v3746 = vpop.f32.mrb[0].mxu0
        %v3747 = vadd.f32 %v3576, %v3746
        %3748 = vmatprep.mubr.f32.mxu0 0.0
        %v3749 = vand.u32 %v351, 4294901760
        %3750 = vmatmul.mubr.f32.gmra.mrb[0].mxu0 %v3749
        %v3751 = vpop.f32.mrb[0].mxu0
        %v3752 = vadd.f32 %v3583, %v3751
        %v3753 = vpop.f32.mrb[0].mxu0
        %v3754 = vadd.f32 %v3585, %v3753
        %3755 = vdwg.mxu0
        %v3756 = vand.u32 %v203, 4294901760
        %3757 = vmatprep.subr.mxu0 %v3756
        %v3758 = vand.u32 %v202, 4294901760
        %3759 = vmatpush1.msra.mxu0 %v3758
        %v3760 = vand.u32 %v213, 4294901760
        %3761 = vmatprep.subr.mxu0 %v3760
        %v3762 = vand.u32 %v212, 4294901760
        %3763 = vmatpush1.msra.mxu0 %v3762
        %v3764 = vand.u32 %v223, 4294901760
        %3765 = vmatprep.subr.mxu0 %v3764
        %v3766 = vand.u32 %v222, 4294901760
        %3767 = vmatpush1.msra.mxu0 %v3766
        %v3768 = vand.u32 %v233, 4294901760
        %3769 = vmatprep.subr.mxu0 %v3768
        %v3770 = vand.u32 %v232, 4294901760
        %3771 = vmatpush1.msra.mxu0 %v3770
        %v3772 = vand.u32 %v243, 4294901760
        %3773 = vmatprep.subr.mxu0 %v3772
        %v3774 = vand.u32 %v242, 4294901760
        %3775 = vmatpush1.msra.mxu0 %v3774
        %v3776 = vand.u32 %v253, 4294901760
        %3777 = vmatprep.subr.mxu0 %v3776
        %v3778 = vand.u32 %v252, 4294901760
        %3779 = vmatpush1.msra.mxu0 %v3778
        %v3780 = vand.u32 %v263, 4294901760
        %3781 = vmatprep.subr.mxu0 %v3780
        %v3782 = vand.u32 %v262, 4294901760
        %3783 = vmatpush1.msra.mxu0 %v3782
        %v3784 = vand.u32 %v273, 4294901760
        %3785 = vmatprep.subr.mxu0 %v3784
        %v3786 = vand.u32 %v272, 4294901760
        %3787 = vmatpush1.msra.mxu0 %v3786
        %v3788 = vand.u32 %v283, 4294901760
        %3789 = vmatprep.subr.mxu0 %v3788
        %v3790 = vand.u32 %v282, 4294901760
        %3791 = vmatpush1.msra.mxu0 %v3790
        %v3792 = vand.u32 %v293, 4294901760
        %3793 = vmatprep.subr.mxu0 %v3792
        %v3794 = vand.u32 %v292, 4294901760
        %3795 = vmatpush1.msra.mxu0 %v3794
        %v3796 = vand.u32 %v303, 4294901760
        %3797 = vmatprep.subr.mxu0 %v3796
        %v3798 = vand.u32 %v302, 4294901760
        %3799 = vmatpush1.msra.mxu0 %v3798
        %v3800 = vand.u32 %v313, 4294901760
        %3801 = vmatprep.subr.mxu0 %v3800
        %v3802 = vand.u32 %v312, 4294901760
        %3803 = vmatpush1.msra.mxu0 %v3802
        %v3804 = vand.u32 %v323, 4294901760
        %3805 = vmatprep.subr.mxu0 %v3804
        %v3806 = vand.u32 %v322, 4294901760
        %3807 = vmatpush1.msra.mxu0 %v3806
        %v3808 = vand.u32 %v333, 4294901760
        %3809 = vmatprep.subr.mxu0 %v3808
        %v3810 = vand.u32 %v332, 4294901760
        %3811 = vmatpush1.msra.mxu0 %v3810
        %v3812 = vand.u32 %v343, 4294901760
        %3813 = vmatprep.subr.mxu0 %v3812
        %v3814 = vand.u32 %v342, 4294901760
        %3815 = vmatpush1.msra.mxu0 %v3814
        %3816 = vmatprep.subr.mxu0 0.0
        %3817 = vmatpush1.msra.mxu0 0.0
        %3818 = vmatprep.subr.mxu0 0.0
        %3819 = vmatpush1.msra.mxu0 0.0
        %3820 = vmatprep.subr.mxu0 0.0
        %3821 = vmatpush1.msra.mxu0 0.0
        %3822 = vmatprep.subr.mxu0 0.0
        %3823 = vmatpush1.msra.mxu0 0.0
        %3824 = vmatprep.subr.mxu0 0.0
        %3825 = vmatpush1.msra.mxu0 0.0
        %3826 = vmatprep.subr.mxu0 0.0
        %3827 = vmatpush1.msra.mxu0 0.0
        %3828 = vmatprep.subr.mxu0 0.0
        %3829 = vmatpush1.msra.mxu0 0.0
        %3830 = vmatprep.subr.mxu0 0.0
        %3831 = vmatpush1.msra.mxu0 0.0
        %3832 = vmatprep.subr.mxu0 0.0
        %3833 = vmatpush1.msra.mxu0 0.0
        %3834 = vmatprep.subr.mxu0 0.0
        %3835 = vmatpush1.msra.mxu0 0.0
        %3836 = vmatprep.subr.mxu0 0.0
        %3837 = vmatpush1.msra.mxu0 0.0
        %3838 = vmatprep.subr.mxu0 0.0
        %3839 = vmatpush1.msra.mxu0 0.0
        %3840 = vmatprep.subr.mxu0 0.0
        %3841 = vmatpush1.msra.mxu0 0.0
        %3842 = vmatprep.subr.mxu0 0.0
        %3843 = vmatpush1.msra.mxu0 0.0
        %3844 = vmatprep.subr.mxu0 0.0
        %3845 = vmatpush1.msra.mxu0 0.0
        %3846 = vmatprep.subr.mxu0 0.0
        %3847 = vmatpush1.msra.mxu0 0.0
        %3848 = vmatprep.subr.mxu0 0.0
        %3849 = vmatpush1.msra.mxu0 0.0
        %3850 = vmatprep.mubr.f32.mxu0 0.0
        %v3851 = vand.u32 %v348, 4294901760
        %3852 = vmatmul.mubr.f32.gmra.mrb[0].mxu0 %v3851
        %v3853 = vpop.f32.mrb[0].mxu0
        %v3854 = vadd.f32 %v3745, %v3853
        %v3855 = vpop.f32.mrb[0].mxu0
        %v3856 = vadd.f32 %v3747, %v3855
        %3857 = vmatprep.mubr.f32.mxu0 0.0
        %v3858 = vand.u32 %v351, 4294901760
        %3859 = vmatmul.mubr.f32.gmra.mrb[0].mxu0 %v3858
        %v3860 = vpop.f32.mrb[0].mxu0
        %v3861 = vadd.f32 %v3752, %v3860
        %v3862 = vpop.f32.mrb[0].mxu0
        %v3863 = vadd.f32 %v3754, %v3862
        %3864 = vdwg.mxu0
        %v3865 = vand.u32 %v205, 4294901760
        %3866 = vmatprep.subr.mxu0 %v3865
        %v3867 = vand.u32 %v204, 4294901760
        %3868 = vmatpush1.msra.mxu0 %v3867
        %v3869 = vand.u32 %v215, 4294901760
        %3870 = vmatprep.subr.mxu0 %v3869
        %v3871 = vand.u32 %v214, 4294901760
        %3872 = vmatpush1.msra.mxu0 %v3871
        %v3873 = vand.u32 %v225, 4294901760
        %3874 = vmatprep.subr.mxu0 %v3873
        %v3875 = vand.u32 %v224, 4294901760
        %3876 = vmatpush1.msra.mxu0 %v3875
        %v3877 = vand.u32 %v235, 4294901760
        %3878 = vmatprep.subr.mxu0 %v3877
        %v3879 = vand.u32 %v234, 4294901760
        %3880 = vmatpush1.msra.mxu0 %v3879
        %v3881 = vand.u32 %v245, 4294901760
        %3882 = vmatprep.subr.mxu0 %v3881
        %v3883 = vand.u32 %v244, 4294901760
        %3884 = vmatpush1.msra.mxu0 %v3883
        %v3885 = vand.u32 %v255, 4294901760
        %3886 = vmatprep.subr.mxu0 %v3885
        %v3887 = vand.u32 %v254, 4294901760
        %3888 = vmatpush1.msra.mxu0 %v3887
        %v3889 = vand.u32 %v265, 4294901760
        %3890 = vmatprep.subr.mxu0 %v3889
        %v3891 = vand.u32 %v264, 4294901760
        %3892 = vmatpush1.msra.mxu0 %v3891
        %v3893 = vand.u32 %v275, 4294901760
        %3894 = vmatprep.subr.mxu0 %v3893
        %v3895 = vand.u32 %v274, 4294901760
        %3896 = vmatpush1.msra.mxu0 %v3895
        %v3897 = vand.u32 %v285, 4294901760
        %3898 = vmatprep.subr.mxu0 %v3897
        %v3899 = vand.u32 %v284, 4294901760
        %3900 = vmatpush1.msra.mxu0 %v3899
        %v3901 = vand.u32 %v295, 4294901760
        %3902 = vmatprep.subr.mxu0 %v3901
        %v3903 = vand.u32 %v294, 4294901760
        %3904 = vmatpush1.msra.mxu0 %v3903
        %v3905 = vand.u32 %v305, 4294901760
        %3906 = vmatprep.subr.mxu0 %v3905
        %v3907 = vand.u32 %v304, 4294901760
        %3908 = vmatpush1.msra.mxu0 %v3907
        %v3909 = vand.u32 %v315, 4294901760
        %3910 = vmatprep.subr.mxu0 %v3909
        %v3911 = vand.u32 %v314, 4294901760
        %3912 = vmatpush1.msra.mxu0 %v3911
        %v3913 = vand.u32 %v325, 4294901760
        %3914 = vmatprep.subr.mxu0 %v3913
        %v3915 = vand.u32 %v324, 4294901760
        %3916 = vmatpush1.msra.mxu0 %v3915
        %v3917 = vand.u32 %v335, 4294901760
        %3918 = vmatprep.subr.mxu0 %v3917
        %v3919 = vand.u32 %v334, 4294901760
        %3920 = vmatpush1.msra.mxu0 %v3919
        %v3921 = vand.u32 %v345, 4294901760
        %3922 = vmatprep.subr.mxu0 %v3921
        %v3923 = vand.u32 %v344, 4294901760
        %3924 = vmatpush1.msra.mxu0 %v3923
        %3925 = vmatprep.subr.mxu0 0.0
        %3926 = vmatpush1.msra.mxu0 0.0
        %3927 = vmatprep.subr.mxu0 0.0
        %3928 = vmatpush1.msra.mxu0 0.0
        %3929 = vmatprep.subr.mxu0 0.0
        %3930 = vmatpush1.msra.mxu0 0.0
        %3931 = vmatprep.subr.mxu0 0.0
        %3932 = vmatpush1.msra.mxu0 0.0
        %3933 = vmatprep.subr.mxu0 0.0
        %3934 = vmatpush1.msra.mxu0 0.0
        %3935 = vmatprep.subr.mxu0 0.0
        %3936 = vmatpush1.msra.mxu0 0.0
        %3937 = vmatprep.subr.mxu0 0.0
        %3938 = vmatpush1.msra.mxu0 0.0
        %3939 = vmatprep.subr.mxu0 0.0
        %3940 = vmatpush1.msra.mxu0 0.0
        %3941 = vmatprep.subr.mxu0 0.0
        %3942 = vmatpush1.msra.mxu0 0.0
        %3943 = vmatprep.subr.mxu0 0.0
        %3944 = vmatpush1.msra.mxu0 0.0
        %3945 = vmatprep.subr.mxu0 0.0
        %3946 = vmatpush1.msra.mxu0 0.0
        %3947 = vmatprep.subr.mxu0 0.0
        %3948 = vmatpush1.msra.mxu0 0.0
        %3949 = vmatprep.subr.mxu0 0.0
        %3950 = vmatpush1.msra.mxu0 0.0
        %3951 = vmatprep.subr.mxu0 0.0
        %3952 = vmatpush1.msra.mxu0 0.0
        %3953 = vmatprep.subr.mxu0 0.0
        %3954 = vmatpush1.msra.mxu0 0.0
        %3955 = vmatprep.subr.mxu0 0.0
        %3956 = vmatpush1.msra.mxu0 0.0
        %3957 = vmatprep.subr.mxu0 0.0
        %3958 = vmatpush1.msra.mxu0 0.0
        %3959 = vmatprep.mubr.f32.mxu0 0.0
        %v3960 = vand.u32 %v348, 4294901760
        %v3961 = vsub.f32 %v348, %v3960
        %v3962 = vand.u32 %v3961, 4294901760
        %v3963 = vsub.f32 %v3961, %v3962
        %v3964 = vand.u32 %v3963, 4294901760
        %3965 = vmatmul.mubr.f32.gmra.mrb[0].mxu0 %v3964
        %v3966 = vpop.f32.mrb[0].mxu0
        %v3967 = vadd.f32 0.0, %v3966
        %v3968 = vpop.f32.mrb[0].mxu0
        %v3969 = vadd.f32 0.0, %v3968
        %3970 = vmatprep.mubr.f32.mxu0 0.0
        %v3971 = vand.u32 %v351, 4294901760
        %v3972 = vsub.f32 %v351, %v3971
        %v3973 = vand.u32 %v3972, 4294901760
        %v3974 = vsub.f32 %v3972, %v3973
        %v3975 = vand.u32 %v3974, 4294901760
        %3976 = vmatmul.mubr.f32.gmra.mrb[0].mxu0 %v3975
        %v3977 = vpop.f32.mrb[0].mxu0
        %v3978 = vadd.f32 0.0, %v3977
        %v3979 = vpop.f32.mrb[0].mxu0
        %v3980 = vadd.f32 0.0, %v3979
        %3981 = vdwg.mxu0
        %v3982 = vand.u32 %v205, 4294901760
        %v3983 = vsub.f32 %v205, %v3982
        %v3984 = vand.u32 %v3983, 4294901760
        %v3985 = vsub.f32 %v3983, %v3984
        %v3986 = vand.u32 %v3985, 4294901760
        %3987 = vmatprep.subr.mxu0 %v3986
        %v3988 = vand.u32 %v204, 4294901760
        %v3989 = vsub.f32 %v204, %v3988
        %v3990 = vand.u32 %v3989, 4294901760
        %v3991 = vsub.f32 %v3989, %v3990
        %v3992 = vand.u32 %v3991, 4294901760
        %3993 = vmatpush1.msra.mxu0 %v3992
        %v3994 = vand.u32 %v215, 4294901760
        %v3995 = vsub.f32 %v215, %v3994
        %v3996 = vand.u32 %v3995, 4294901760
        %v3997 = vsub.f32 %v3995, %v3996
        %v3998 = vand.u32 %v3997, 4294901760
        %3999 = vmatprep.subr.mxu0 %v3998
        %v4000 = vand.u32 %v214, 4294901760
        %v4001 = vsub.f32 %v214, %v4000
        %v4002 = vand.u32 %v4001, 4294901760
        %v4003 = vsub.f32 %v4001, %v4002
        %v4004 = vand.u32 %v4003, 4294901760
        %4005 = vmatpush1.msra.mxu0 %v4004
        %v4006 = vand.u32 %v225, 4294901760
        %v4007 = vsub.f32 %v225, %v4006
        %v4008 = vand.u32 %v4007, 4294901760
        %v4009 = vsub.f32 %v4007, %v4008
        %v4010 = vand.u32 %v4009, 4294901760
        %4011 = vmatprep.subr.mxu0 %v4010
        %v4012 = vand.u32 %v224, 4294901760
        %v4013 = vsub.f32 %v224, %v4012
        %v4014 = vand.u32 %v4013, 4294901760
        %v4015 = vsub.f32 %v4013, %v4014
        %v4016 = vand.u32 %v4015, 4294901760
        %4017 = vmatpush1.msra.mxu0 %v4016
        %v4018 = vand.u32 %v235, 4294901760
        %v4019 = vsub.f32 %v235, %v4018
        %v4020 = vand.u32 %v4019, 4294901760
        %v4021 = vsub.f32 %v4019, %v4020
        %v4022 = vand.u32 %v4021, 4294901760
        %4023 = vmatprep.subr.mxu0 %v4022
        %v4024 = vand.u32 %v234, 4294901760
        %v4025 = vsub.f32 %v234, %v4024
        %v4026 = vand.u32 %v4025, 4294901760
        %v4027 = vsub.f32 %v4025, %v4026
        %v4028 = vand.u32 %v4027, 4294901760
        %4029 = vmatpush1.msra.mxu0 %v4028
        %v4030 = vand.u32 %v245, 4294901760
        %v4031 = vsub.f32 %v245, %v4030
        %v4032 = vand.u32 %v4031, 4294901760
        %v4033 = vsub.f32 %v4031, %v4032
        %v4034 = vand.u32 %v4033, 4294901760
        %4035 = vmatprep.subr.mxu0 %v4034
        %v4036 = vand.u32 %v244, 4294901760
        %v4037 = vsub.f32 %v244, %v4036
        %v4038 = vand.u32 %v4037, 4294901760
        %v4039 = vsub.f32 %v4037, %v4038
        %v4040 = vand.u32 %v4039, 4294901760
        %4041 = vmatpush1.msra.mxu0 %v4040
        %v4042 = vand.u32 %v255, 4294901760
        %v4043 = vsub.f32 %v255, %v4042
        %v4044 = vand.u32 %v4043, 4294901760
        %v4045 = vsub.f32 %v4043, %v4044
        %v4046 = vand.u32 %v4045, 4294901760
        %4047 = vmatprep.subr.mxu0 %v4046
        %v4048 = vand.u32 %v254, 4294901760
        %v4049 = vsub.f32 %v254, %v4048
        %v4050 = vand.u32 %v4049, 4294901760
        %v4051 = vsub.f32 %v4049, %v4050
        %v4052 = vand.u32 %v4051, 4294901760
        %4053 = vmatpush1.msra.mxu0 %v4052
        %v4054 = vand.u32 %v265, 4294901760
        %v4055 = vsub.f32 %v265, %v4054
        %v4056 = vand.u32 %v4055, 4294901760
        %v4057 = vsub.f32 %v4055, %v4056
        %v4058 = vand.u32 %v4057, 4294901760
        %4059 = vmatprep.subr.mxu0 %v4058
        %v4060 = vand.u32 %v264, 4294901760
        %v4061 = vsub.f32 %v264, %v4060
        %v4062 = vand.u32 %v4061, 4294901760
        %v4063 = vsub.f32 %v4061, %v4062
        %v4064 = vand.u32 %v4063, 4294901760
        %4065 = vmatpush1.msra.mxu0 %v4064
        %v4066 = vand.u32 %v275, 4294901760
        %v4067 = vsub.f32 %v275, %v4066
        %v4068 = vand.u32 %v4067, 4294901760
        %v4069 = vsub.f32 %v4067, %v4068
        %v4070 = vand.u32 %v4069, 4294901760
        %4071 = vmatprep.subr.mxu0 %v4070
        %v4072 = vand.u32 %v274, 4294901760
        %v4073 = vsub.f32 %v274, %v4072
        %v4074 = vand.u32 %v4073, 4294901760
        %v4075 = vsub.f32 %v4073, %v4074
        %v4076 = vand.u32 %v4075, 4294901760
        %4077 = vmatpush1.msra.mxu0 %v4076
        %v4078 = vand.u32 %v285, 4294901760
        %v4079 = vsub.f32 %v285, %v4078
        %v4080 = vand.u32 %v4079, 4294901760
        %v4081 = vsub.f32 %v4079, %v4080
        %v4082 = vand.u32 %v4081, 4294901760
        %4083 = vmatprep.subr.mxu0 %v4082
        %v4084 = vand.u32 %v284, 4294901760
        %v4085 = vsub.f32 %v284, %v4084
        %v4086 = vand.u32 %v4085, 4294901760
        %v4087 = vsub.f32 %v4085, %v4086
        %v4088 = vand.u32 %v4087, 4294901760
        %4089 = vmatpush1.msra.mxu0 %v4088
        %v4090 = vand.u32 %v295, 4294901760
        %v4091 = vsub.f32 %v295, %v4090
        %v4092 = vand.u32 %v4091, 4294901760
        %v4093 = vsub.f32 %v4091, %v4092
        %v4094 = vand.u32 %v4093, 4294901760
        %4095 = vmatprep.subr.mxu0 %v4094
        %v4096 = vand.u32 %v294, 4294901760
        %v4097 = vsub.f32 %v294, %v4096
        %v4098 = vand.u32 %v4097, 4294901760
        %v4099 = vsub.f32 %v4097, %v4098
        %v4100 = vand.u32 %v4099, 4294901760
        %4101 = vmatpush1.msra.mxu0 %v4100
        %v4102 = vand.u32 %v305, 4294901760
        %v4103 = vsub.f32 %v305, %v4102
        %v4104 = vand.u32 %v4103, 4294901760
        %v4105 = vsub.f32 %v4103, %v4104
        %v4106 = vand.u32 %v4105, 4294901760
        %4107 = vmatprep.subr.mxu0 %v4106
        %v4108 = vand.u32 %v304, 4294901760
        %v4109 = vsub.f32 %v304, %v4108
        %v4110 = vand.u32 %v4109, 4294901760
        %v4111 = vsub.f32 %v4109, %v4110
        %v4112 = vand.u32 %v4111, 4294901760
        %4113 = vmatpush1.msra.mxu0 %v4112
        %v4114 = vand.u32 %v315, 4294901760
        %v4115 = vsub.f32 %v315, %v4114
        %v4116 = vand.u32 %v4115, 4294901760
        %v4117 = vsub.f32 %v4115, %v4116
        %v4118 = vand.u32 %v4117, 4294901760
        %4119 = vmatprep.subr.mxu0 %v4118
        %v4120 = vand.u32 %v314, 4294901760
        %v4121 = vsub.f32 %v314, %v4120
        %v4122 = vand.u32 %v4121, 4294901760
        %v4123 = vsub.f32 %v4121, %v4122
        %v4124 = vand.u32 %v4123, 4294901760
        %4125 = vmatpush1.msra.mxu0 %v4124
        %v4126 = vand.u32 %v325, 4294901760
        %v4127 = vsub.f32 %v325, %v4126
        %v4128 = vand.u32 %v4127, 4294901760
        %v4129 = vsub.f32 %v4127, %v4128
        %v4130 = vand.u32 %v4129, 4294901760
        %4131 = vmatprep.subr.mxu0 %v4130
        %v4132 = vand.u32 %v324, 4294901760
        %v4133 = vsub.f32 %v324, %v4132
        %v4134 = vand.u32 %v4133, 4294901760
        %v4135 = vsub.f32 %v4133, %v4134
        %v4136 = vand.u32 %v4135, 4294901760
        %4137 = vmatpush1.msra.mxu0 %v4136
        %v4138 = vand.u32 %v335, 4294901760
        %v4139 = vsub.f32 %v335, %v4138
        %v4140 = vand.u32 %v4139, 4294901760
        %v4141 = vsub.f32 %v4139, %v4140
        %v4142 = vand.u32 %v4141, 4294901760
        %4143 = vmatprep.subr.mxu0 %v4142
        %v4144 = vand.u32 %v334, 4294901760
        %v4145 = vsub.f32 %v334, %v4144
        %v4146 = vand.u32 %v4145, 4294901760
        %v4147 = vsub.f32 %v4145, %v4146
        %v4148 = vand.u32 %v4147, 4294901760
        %4149 = vmatpush1.msra.mxu0 %v4148
        %v4150 = vand.u32 %v345, 4294901760
        %v4151 = vsub.f32 %v345, %v4150
        %v4152 = vand.u32 %v4151, 4294901760
        %v4153 = vsub.f32 %v4151, %v4152
        %v4154 = vand.u32 %v4153, 4294901760
        %4155 = vmatprep.subr.mxu0 %v4154
        %v4156 = vand.u32 %v344, 4294901760
        %v4157 = vsub.f32 %v344, %v4156
        %v4158 = vand.u32 %v4157, 4294901760
        %v4159 = vsub.f32 %v4157, %v4158
        %v4160 = vand.u32 %v4159, 4294901760
        %4161 = vmatpush1.msra.mxu0 %v4160
        %4162 = vmatprep.subr.mxu0 0.0
        %4163 = vmatpush1.msra.mxu0 0.0
        %4164 = vmatprep.subr.mxu0 0.0
        %4165 = vmatpush1.msra.mxu0 0.0
        %4166 = vmatprep.subr.mxu0 0.0
        %4167 = vmatpush1.msra.mxu0 0.0
        %4168 = vmatprep.subr.mxu0 0.0
        %4169 = vmatpush1.msra.mxu0 0.0
        %4170 = vmatprep.subr.mxu0 0.0
        %4171 = vmatpush1.msra.mxu0 0.0
        %4172 = vmatprep.subr.mxu0 0.0
        %4173 = vmatpush1.msra.mxu0 0.0
        %4174 = vmatprep.subr.mxu0 0.0
        %4175 = vmatpush1.msra.mxu0 0.0
        %4176 = vmatprep.subr.mxu0 0.0
        %4177 = vmatpush1.msra.mxu0 0.0
        %4178 = vmatprep.subr.mxu0 0.0
        %4179 = vmatpush1.msra.mxu0 0.0
        %4180 = vmatprep.subr.mxu0 0.0
        %4181 = vmatpush1.msra.mxu0 0.0
        %4182 = vmatprep.subr.mxu0 0.0
        %4183 = vmatpush1.msra.mxu0 0.0
        %4184 = vmatprep.subr.mxu0 0.0
        %4185 = vmatpush1.msra.mxu0 0.0
        %4186 = vmatprep.subr.mxu0 0.0
        %4187 = vmatpush1.msra.mxu0 0.0
        %4188 = vmatprep.subr.mxu0 0.0
        %4189 = vmatpush1.msra.mxu0 0.0
        %4190 = vmatprep.subr.mxu0 0.0
        %4191 = vmatpush1.msra.mxu0 0.0
        %4192 = vmatprep.subr.mxu0 0.0
        %4193 = vmatpush1.msra.mxu0 0.0
        %4194 = vmatprep.subr.mxu0 0.0
        %4195 = vmatpush1.msra.mxu0 0.0
        %4196 = vmatprep.mubr.f32.mxu0 0.0
        %v4197 = vand.u32 %v348, 4294901760
        %4198 = vmatmul.mubr.f32.gmra.mrb[0].mxu0 %v4197
        %v4199 = vpop.f32.mrb[0].mxu0
        %v4200 = vadd.f32 %v3967, %v4199
        %v4201 = vpop.f32.mrb[0].mxu0
        %v4202 = vadd.f32 %v3969, %v4201
        %4203 = vmatprep.mubr.f32.mxu0 0.0
        %v4204 = vand.u32 %v351, 4294901760
        %4205 = vmatmul.mubr.f32.gmra.mrb[0].mxu0 %v4204
        %v4206 = vpop.f32.mrb[0].mxu0
        %v4207 = vadd.f32 %v3978, %v4206
        %v4208 = vpop.f32.mrb[0].mxu0
        %v4209 = vadd.f32 %v3980, %v4208
        %4210 = vdwg.mxu0
        %v4211 = vand.u32 %v205, 4294901760
        %v4212 = vsub.f32 %v205, %v4211
        %4213 = vmatprep.subr.mxu0 %v4212
        %v4214 = vand.u32 %v204, 4294901760
        %v4215 = vsub.f32 %v204, %v4214
        %4216 = vmatpush1.msra.mxu0 %v4215
        %v4217 = vand.u32 %v215, 4294901760
        %v4218 = vsub.f32 %v215, %v4217
        %4219 = vmatprep.subr.mxu0 %v4218
        %v4220 = vand.u32 %v214, 4294901760
        %v4221 = vsub.f32 %v214, %v4220
        %4222 = vmatpush1.msra.mxu0 %v4221
        %v4223 = vand.u32 %v225, 4294901760
        %v4224 = vsub.f32 %v225, %v4223
        %4225 = vmatprep.subr.mxu0 %v4224
        %v4226 = vand.u32 %v224, 4294901760
        %v4227 = vsub.f32 %v224, %v4226
        %4228 = vmatpush1.msra.mxu0 %v4227
        %v4229 = vand.u32 %v235, 4294901760
        %v4230 = vsub.f32 %v235, %v4229
        %4231 = vmatprep.subr.mxu0 %v4230
        %v4232 = vand.u32 %v234, 4294901760
        %v4233 = vsub.f32 %v234, %v4232
        %4234 = vmatpush1.msra.mxu0 %v4233
        %v4235 = vand.u32 %v245, 4294901760
        %v4236 = vsub.f32 %v245, %v4235
        %4237 = vmatprep.subr.mxu0 %v4236
        %v4238 = vand.u32 %v244, 4294901760
        %v4239 = vsub.f32 %v244, %v4238
        %4240 = vmatpush1.msra.mxu0 %v4239
        %v4241 = vand.u32 %v255, 4294901760
        %v4242 = vsub.f32 %v255, %v4241
        %4243 = vmatprep.subr.mxu0 %v4242
        %v4244 = vand.u32 %v254, 4294901760
        %v4245 = vsub.f32 %v254, %v4244
        %4246 = vmatpush1.msra.mxu0 %v4245
        %v4247 = vand.u32 %v265, 4294901760
        %v4248 = vsub.f32 %v265, %v4247
        %4249 = vmatprep.subr.mxu0 %v4248
        %v4250 = vand.u32 %v264, 4294901760
        %v4251 = vsub.f32 %v264, %v4250
        %4252 = vmatpush1.msra.mxu0 %v4251
        %v4253 = vand.u32 %v275, 4294901760
        %v4254 = vsub.f32 %v275, %v4253
        %4255 = vmatprep.subr.mxu0 %v4254
        %v4256 = vand.u32 %v274, 4294901760
        %v4257 = vsub.f32 %v274, %v4256
        %4258 = vmatpush1.msra.mxu0 %v4257
        %v4259 = vand.u32 %v285, 4294901760
        %v4260 = vsub.f32 %v285, %v4259
        %4261 = vmatprep.subr.mxu0 %v4260
        %v4262 = vand.u32 %v284, 4294901760
        %v4263 = vsub.f32 %v284, %v4262
        %4264 = vmatpush1.msra.mxu0 %v4263
        %v4265 = vand.u32 %v295, 4294901760
        %v4266 = vsub.f32 %v295, %v4265
        %4267 = vmatprep.subr.mxu0 %v4266
        %v4268 = vand.u32 %v294, 4294901760
        %v4269 = vsub.f32 %v294, %v4268
        %4270 = vmatpush1.msra.mxu0 %v4269
        %v4271 = vand.u32 %v305, 4294901760
        %v4272 = vsub.f32 %v305, %v4271
        %4273 = vmatprep.subr.mxu0 %v4272
        %v4274 = vand.u32 %v304, 4294901760
        %v4275 = vsub.f32 %v304, %v4274
        %4276 = vmatpush1.msra.mxu0 %v4275
        %v4277 = vand.u32 %v315, 4294901760
        %v4278 = vsub.f32 %v315, %v4277
        %4279 = vmatprep.subr.mxu0 %v4278
        %v4280 = vand.u32 %v314, 4294901760
        %v4281 = vsub.f32 %v314, %v4280
        %4282 = vmatpush1.msra.mxu0 %v4281
        %v4283 = vand.u32 %v325, 4294901760
        %v4284 = vsub.f32 %v325, %v4283
        %4285 = vmatprep.subr.mxu0 %v4284
        %v4286 = vand.u32 %v324, 4294901760
        %v4287 = vsub.f32 %v324, %v4286
        %4288 = vmatpush1.msra.mxu0 %v4287
        %v4289 = vand.u32 %v335, 4294901760
        %v4290 = vsub.f32 %v335, %v4289
        %4291 = vmatprep.subr.mxu0 %v4290
        %v4292 = vand.u32 %v334, 4294901760
        %v4293 = vsub.f32 %v334, %v4292
        %4294 = vmatpush1.msra.mxu0 %v4293
        %v4295 = vand.u32 %v345, 4294901760
        %v4296 = vsub.f32 %v345, %v4295
        %4297 = vmatprep.subr.mxu0 %v4296
        %v4298 = vand.u32 %v344, 4294901760
        %v4299 = vsub.f32 %v344, %v4298
        %4300 = vmatpush1.msra.mxu0 %v4299
        %4301 = vmatprep.subr.mxu0 0.0
        %4302 = vmatpush1.msra.mxu0 0.0
        %4303 = vmatprep.subr.mxu0 0.0
        %4304 = vmatpush1.msra.mxu0 0.0
        %4305 = vmatprep.subr.mxu0 0.0
        %4306 = vmatpush1.msra.mxu0 0.0
        %4307 = vmatprep.subr.mxu0 0.0
        %4308 = vmatpush1.msra.mxu0 0.0
        %4309 = vmatprep.subr.mxu0 0.0
        %4310 = vmatpush1.msra.mxu0 0.0
        %4311 = vmatprep.subr.mxu0 0.0
        %4312 = vmatpush1.msra.mxu0 0.0
        %4313 = vmatprep.subr.mxu0 0.0
        %4314 = vmatpush1.msra.mxu0 0.0
        %4315 = vmatprep.subr.mxu0 0.0
        %4316 = vmatpush1.msra.mxu0 0.0
        %4317 = vmatprep.subr.mxu0 0.0
        %4318 = vmatpush1.msra.mxu0 0.0
        %4319 = vmatprep.subr.mxu0 0.0
        %4320 = vmatpush1.msra.mxu0 0.0
        %4321 = vmatprep.subr.mxu0 0.0
        %4322 = vmatpush1.msra.mxu0 0.0
        %4323 = vmatprep.subr.mxu0 0.0
        %4324 = vmatpush1.msra.mxu0 0.0
        %4325 = vmatprep.subr.mxu0 0.0
        %4326 = vmatpush1.msra.mxu0 0.0
        %4327 = vmatprep.subr.mxu0 0.0
        %4328 = vmatpush1.msra.mxu0 0.0
        %4329 = vmatprep.subr.mxu0 0.0
        %4330 = vmatpush1.msra.mxu0 0.0
        %4331 = vmatprep.subr.mxu0 0.0
        %4332 = vmatpush1.msra.mxu0 0.0
        %4333 = vmatprep.subr.mxu0 0.0
        %4334 = vmatpush1.msra.mxu0 0.0
        %4335 = vmatprep.mubr.f32.mxu0 0.0
        %v4336 = vand.u32 %v348, 4294901760
        %v4337 = vsub.f32 %v348, %v4336
        %4338 = vmatmul.mubr.f32.gmra.mrb[0].mxu0 %v4337
        %v4339 = vpop.f32.mrb[0].mxu0
        %v4340 = vadd.f32 %v4200, %v4339
        %v4341 = vpop.f32.mrb[0].mxu0
        %v4342 = vadd.f32 %v4202, %v4341
        %4343 = vmatprep.mubr.f32.mxu0 0.0
        %v4344 = vand.u32 %v351, 4294901760
        %v4345 = vsub.f32 %v351, %v4344
        %4346 = vmatmul.mubr.f32.gmra.mrb[0].mxu0 %v4345
        %v4347 = vpop.f32.mrb[0].mxu0
        %v4348 = vadd.f32 %v4207, %v4347
        %v4349 = vpop.f32.mrb[0].mxu0
        %v4350 = vadd.f32 %v4209, %v4349
        %4351 = vdwg.mxu0
        %v4352 = vand.u32 %v205, 4294901760
        %4353 = vmatprep.subr.mxu0 %v4352
        %v4354 = vand.u32 %v204, 4294901760
        %4355 = vmatpush1.msra.mxu0 %v4354
        %v4356 = vand.u32 %v215, 4294901760
        %4357 = vmatprep.subr.mxu0 %v4356
        %v4358 = vand.u32 %v214, 4294901760
        %4359 = vmatpush1.msra.mxu0 %v4358
        %v4360 = vand.u32 %v225, 4294901760
        %4361 = vmatprep.subr.mxu0 %v4360
        %v4362 = vand.u32 %v224, 4294901760
        %4363 = vmatpush1.msra.mxu0 %v4362
        %v4364 = vand.u32 %v235, 4294901760
        %4365 = vmatprep.subr.mxu0 %v4364
        %v4366 = vand.u32 %v234, 4294901760
        %4367 = vmatpush1.msra.mxu0 %v4366
        %v4368 = vand.u32 %v245, 4294901760
        %4369 = vmatprep.subr.mxu0 %v4368
        %v4370 = vand.u32 %v244, 4294901760
        %4371 = vmatpush1.msra.mxu0 %v4370
        %v4372 = vand.u32 %v255, 4294901760
        %4373 = vmatprep.subr.mxu0 %v4372
        %v4374 = vand.u32 %v254, 4294901760
        %4375 = vmatpush1.msra.mxu0 %v4374
        %v4376 = vand.u32 %v265, 4294901760
        %4377 = vmatprep.subr.mxu0 %v4376
        %v4378 = vand.u32 %v264, 4294901760
        %4379 = vmatpush1.msra.mxu0 %v4378
        %v4380 = vand.u32 %v275, 4294901760
        %4381 = vmatprep.subr.mxu0 %v4380
        %v4382 = vand.u32 %v274, 4294901760
        %4383 = vmatpush1.msra.mxu0 %v4382
        %v4384 = vand.u32 %v285, 4294901760
        %4385 = vmatprep.subr.mxu0 %v4384
        %v4386 = vand.u32 %v284, 4294901760
        %4387 = vmatpush1.msra.mxu0 %v4386
        %v4388 = vand.u32 %v295, 4294901760
        %4389 = vmatprep.subr.mxu0 %v4388
        %v4390 = vand.u32 %v294, 4294901760
        %4391 = vmatpush1.msra.mxu0 %v4390
        %v4392 = vand.u32 %v305, 4294901760
        %4393 = vmatprep.subr.mxu0 %v4392
        %v4394 = vand.u32 %v304, 4294901760
        %4395 = vmatpush1.msra.mxu0 %v4394
        %v4396 = vand.u32 %v315, 4294901760
        %4397 = vmatprep.subr.mxu0 %v4396
        %v4398 = vand.u32 %v314, 4294901760
        %4399 = vmatpush1.msra.mxu0 %v4398
        %v4400 = vand.u32 %v325, 4294901760
        %4401 = vmatprep.subr.mxu0 %v4400
        %v4402 = vand.u32 %v324, 4294901760
        %4403 = vmatpush1.msra.mxu0 %v4402
        %v4404 = vand.u32 %v335, 4294901760
        %4405 = vmatprep.subr.mxu0 %v4404
        %v4406 = vand.u32 %v334, 4294901760
        %4407 = vmatpush1.msra.mxu0 %v4406
        %v4408 = vand.u32 %v345, 4294901760
        %4409 = vmatprep.subr.mxu0 %v4408
        %v4410 = vand.u32 %v344, 4294901760
        %4411 = vmatpush1.msra.mxu0 %v4410
        %4412 = vmatprep.subr.mxu0 0.0
        %4413 = vmatpush1.msra.mxu0 0.0
        %4414 = vmatprep.subr.mxu0 0.0
        %4415 = vmatpush1.msra.mxu0 0.0
        %4416 = vmatprep.subr.mxu0 0.0
        %4417 = vmatpush1.msra.mxu0 0.0
        %4418 = vmatprep.subr.mxu0 0.0
        %4419 = vmatpush1.msra.mxu0 0.0
        %4420 = vmatprep.subr.mxu0 0.0
        %4421 = vmatpush1.msra.mxu0 0.0
        %4422 = vmatprep.subr.mxu0 0.0
        %4423 = vmatpush1.msra.mxu0 0.0
        %4424 = vmatprep.subr.mxu0 0.0
        %4425 = vmatpush1.msra.mxu0 0.0
        %4426 = vmatprep.subr.mxu0 0.0
        %4427 = vmatpush1.msra.mxu0 0.0
        %4428 = vmatprep.subr.mxu0 0.0
        %4429 = vmatpush1.msra.mxu0 0.0
        %4430 = vmatprep.subr.mxu0 0.0
        %4431 = vmatpush1.msra.mxu0 0.0
        %4432 = vmatprep.subr.mxu0 0.0
        %4433 = vmatpush1.msra.mxu0 0.0
        %4434 = vmatprep.subr.mxu0 0.0
        %4435 = vmatpush1.msra.mxu0 0.0
        %4436 = vmatprep.subr.mxu0 0.0
        %4437 = vmatpush1.msra.mxu0 0.0
        %4438 = vmatprep.subr.mxu0 0.0
        %4439 = vmatpush1.msra.mxu0 0.0
        %4440 = vmatprep.subr.mxu0 0.0
        %4441 = vmatpush1.msra.mxu0 0.0
        %4442 = vmatprep.subr.mxu0 0.0
        %4443 = vmatpush1.msra.mxu0 0.0
        %4444 = vmatprep.subr.mxu0 0.0
        %4445 = vmatpush1.msra.mxu0 0.0
        %4446 = vmatprep.mubr.f32.mxu0 0.0
        %v4447 = vand.u32 %v348, 4294901760
        %v4448 = vsub.f32 %v348, %v4447
        %v4449 = vand.u32 %v4448, 4294901760
        %4450 = vmatmul.mubr.f32.gmra.mrb[0].mxu0 %v4449
        %v4451 = vpop.f32.mrb[0].mxu0
        %v4452 = vadd.f32 %v4340, %v4451
        %v4453 = vpop.f32.mrb[0].mxu0
        %v4454 = vadd.f32 %v4342, %v4453
        %4455 = vmatprep.mubr.f32.mxu0 0.0
        %v4456 = vand.u32 %v351, 4294901760
        %v4457 = vsub.f32 %v351, %v4456
        %v4458 = vand.u32 %v4457, 4294901760
        %4459 = vmatmul.mubr.f32.gmra.mrb[0].mxu0 %v4458
        %v4460 = vpop.f32.mrb[0].mxu0
        %v4461 = vadd.f32 %v4348, %v4460
        %v4462 = vpop.f32.mrb[0].mxu0
        %v4463 = vadd.f32 %v4350, %v4462
        %4464 = vdwg.mxu0
        %v4465 = vand.u32 %v205, 4294901760
        %v4466 = vsub.f32 %v205, %v4465
        %v4467 = vand.u32 %v4466, 4294901760
        %4468 = vmatprep.subr.mxu0 %v4467
        %v4469 = vand.u32 %v204, 4294901760
        %v4470 = vsub.f32 %v204, %v4469
        %v4471 = vand.u32 %v4470, 4294901760
        %4472 = vmatpush1.msra.mxu0 %v4471
        %v4473 = vand.u32 %v215, 4294901760
        %v4474 = vsub.f32 %v215, %v4473
        %v4475 = vand.u32 %v4474, 4294901760
        %4476 = vmatprep.subr.mxu0 %v4475
        %v4477 = vand.u32 %v214, 4294901760
        %v4478 = vsub.f32 %v214, %v4477
        %v4479 = vand.u32 %v4478, 4294901760
        %4480 = vmatpush1.msra.mxu0 %v4479
        %v4481 = vand.u32 %v225, 4294901760
        %v4482 = vsub.f32 %v225, %v4481
        %v4483 = vand.u32 %v4482, 4294901760
        %4484 = vmatprep.subr.mxu0 %v4483
        %v4485 = vand.u32 %v224, 4294901760
        %v4486 = vsub.f32 %v224, %v4485
        %v4487 = vand.u32 %v4486, 4294901760
        %4488 = vmatpush1.msra.mxu0 %v4487
        %v4489 = vand.u32 %v235, 4294901760
        %v4490 = vsub.f32 %v235, %v4489
        %v4491 = vand.u32 %v4490, 4294901760
        %4492 = vmatprep.subr.mxu0 %v4491
        %v4493 = vand.u32 %v234, 4294901760
        %v4494 = vsub.f32 %v234, %v4493
        %v4495 = vand.u32 %v4494, 4294901760
        %4496 = vmatpush1.msra.mxu0 %v4495
        %v4497 = vand.u32 %v245, 4294901760
        %v4498 = vsub.f32 %v245, %v4497
        %v4499 = vand.u32 %v4498, 4294901760
        %4500 = vmatprep.subr.mxu0 %v4499
        %v4501 = vand.u32 %v244, 4294901760
        %v4502 = vsub.f32 %v244, %v4501
        %v4503 = vand.u32 %v4502, 4294901760
        %4504 = vmatpush1.msra.mxu0 %v4503
        %v4505 = vand.u32 %v255, 4294901760
        %v4506 = vsub.f32 %v255, %v4505
        %v4507 = vand.u32 %v4506, 4294901760
        %4508 = vmatprep.subr.mxu0 %v4507
        %v4509 = vand.u32 %v254, 4294901760
        %v4510 = vsub.f32 %v254, %v4509
        %v4511 = vand.u32 %v4510, 4294901760
        %4512 = vmatpush1.msra.mxu0 %v4511
        %v4513 = vand.u32 %v265, 4294901760
        %v4514 = vsub.f32 %v265, %v4513
        %v4515 = vand.u32 %v4514, 4294901760
        %4516 = vmatprep.subr.mxu0 %v4515
        %v4517 = vand.u32 %v264, 4294901760
        %v4518 = vsub.f32 %v264, %v4517
        %v4519 = vand.u32 %v4518, 4294901760
        %4520 = vmatpush1.msra.mxu0 %v4519
        %v4521 = vand.u32 %v275, 4294901760
        %v4522 = vsub.f32 %v275, %v4521
        %v4523 = vand.u32 %v4522, 4294901760
        %4524 = vmatprep.subr.mxu0 %v4523
        %v4525 = vand.u32 %v274, 4294901760
        %v4526 = vsub.f32 %v274, %v4525
        %v4527 = vand.u32 %v4526, 4294901760
        %4528 = vmatpush1.msra.mxu0 %v4527
        %v4529 = vand.u32 %v285, 4294901760
        %v4530 = vsub.f32 %v285, %v4529
        %v4531 = vand.u32 %v4530, 4294901760
        %4532 = vmatprep.subr.mxu0 %v4531
        %v4533 = vand.u32 %v284, 4294901760
        %v4534 = vsub.f32 %v284, %v4533
        %v4535 = vand.u32 %v4534, 4294901760
        %4536 = vmatpush1.msra.mxu0 %v4535
        %v4537 = vand.u32 %v295, 4294901760
        %v4538 = vsub.f32 %v295, %v4537
        %v4539 = vand.u32 %v4538, 4294901760
        %4540 = vmatprep.subr.mxu0 %v4539
        %v4541 = vand.u32 %v294, 4294901760
        %v4542 = vsub.f32 %v294, %v4541
        %v4543 = vand.u32 %v4542, 4294901760
        %4544 = vmatpush1.msra.mxu0 %v4543
        %v4545 = vand.u32 %v305, 4294901760
        %v4546 = vsub.f32 %v305, %v4545
        %v4547 = vand.u32 %v4546, 4294901760
        %4548 = vmatprep.subr.mxu0 %v4547
        %v4549 = vand.u32 %v304, 4294901760
        %v4550 = vsub.f32 %v304, %v4549
        %v4551 = vand.u32 %v4550, 4294901760
        %4552 = vmatpush1.msra.mxu0 %v4551
        %v4553 = vand.u32 %v315, 4294901760
        %v4554 = vsub.f32 %v315, %v4553
        %v4555 = vand.u32 %v4554, 4294901760
        %4556 = vmatprep.subr.mxu0 %v4555
        %v4557 = vand.u32 %v314, 4294901760
        %v4558 = vsub.f32 %v314, %v4557
        %v4559 = vand.u32 %v4558, 4294901760
        %4560 = vmatpush1.msra.mxu0 %v4559
        %v4561 = vand.u32 %v325, 4294901760
        %v4562 = vsub.f32 %v325, %v4561
        %v4563 = vand.u32 %v4562, 4294901760
        %4564 = vmatprep.subr.mxu0 %v4563
        %v4565 = vand.u32 %v324, 4294901760
        %v4566 = vsub.f32 %v324, %v4565
        %v4567 = vand.u32 %v4566, 4294901760
        %4568 = vmatpush1.msra.mxu0 %v4567
        %v4569 = vand.u32 %v335, 4294901760
        %v4570 = vsub.f32 %v335, %v4569
        %v4571 = vand.u32 %v4570, 4294901760
        %4572 = vmatprep.subr.mxu0 %v4571
        %v4573 = vand.u32 %v334, 4294901760
        %v4574 = vsub.f32 %v334, %v4573
        %v4575 = vand.u32 %v4574, 4294901760
        %4576 = vmatpush1.msra.mxu0 %v4575
        %v4577 = vand.u32 %v345, 4294901760
        %v4578 = vsub.f32 %v345, %v4577
        %v4579 = vand.u32 %v4578, 4294901760
        %4580 = vmatprep.subr.mxu0 %v4579
        %v4581 = vand.u32 %v344, 4294901760
        %v4582 = vsub.f32 %v344, %v4581
        %v4583 = vand.u32 %v4582, 4294901760
        %4584 = vmatpush1.msra.mxu0 %v4583
        %4585 = vmatprep.subr.mxu0 0.0
        %4586 = vmatpush1.msra.mxu0 0.0
        %4587 = vmatprep.subr.mxu0 0.0
        %4588 = vmatpush1.msra.mxu0 0.0
        %4589 = vmatprep.subr.mxu0 0.0
        %4590 = vmatpush1.msra.mxu0 0.0
        %4591 = vmatprep.subr.mxu0 0.0
        %4592 = vmatpush1.msra.mxu0 0.0
        %4593 = vmatprep.subr.mxu0 0.0
        %4594 = vmatpush1.msra.mxu0 0.0
        %4595 = vmatprep.subr.mxu0 0.0
        %4596 = vmatpush1.msra.mxu0 0.0
        %4597 = vmatprep.subr.mxu0 0.0
        %4598 = vmatpush1.msra.mxu0 0.0
        %4599 = vmatprep.subr.mxu0 0.0
        %4600 = vmatpush1.msra.mxu0 0.0
        %4601 = vmatprep.subr.mxu0 0.0
        %4602 = vmatpush1.msra.mxu0 0.0
        %4603 = vmatprep.subr.mxu0 0.0
        %4604 = vmatpush1.msra.mxu0 0.0
        %4605 = vmatprep.subr.mxu0 0.0
        %4606 = vmatpush1.msra.mxu0 0.0
        %4607 = vmatprep.subr.mxu0 0.0
        %4608 = vmatpush1.msra.mxu0 0.0
        %4609 = vmatprep.subr.mxu0 0.0
        %4610 = vmatpush1.msra.mxu0 0.0
        %4611 = vmatprep.subr.mxu0 0.0
        %4612 = vmatpush1.msra.mxu0 0.0
        %4613 = vmatprep.subr.mxu0 0.0
        %4614 = vmatpush1.msra.mxu0 0.0
        %4615 = vmatprep.subr.mxu0 0.0
        %4616 = vmatpush1.msra.mxu0 0.0
        %4617 = vmatprep.subr.mxu0 0.0
        %4618 = vmatpush1.msra.mxu0 0.0
        %4619 = vmatprep.mubr.f32.mxu0 0.0
        %v4620 = vand.u32 %v348, 4294901760
        %4621 = vmatmul.mubr.f32.gmra.mrb[0].mxu0 %v4620
        %v4622 = vpop.f32.mrb[0].mxu0
        %v4623 = vadd.f32 %v4452, %v4622
        %v4624 = vpop.f32.mrb[0].mxu0
        %v4625 = vadd.f32 %v4454, %v4624
        %4626 = vmatprep.mubr.f32.mxu0 0.0
        %v4627 = vand.u32 %v351, 4294901760
        %4628 = vmatmul.mubr.f32.gmra.mrb[0].mxu0 %v4627
        %v4629 = vpop.f32.mrb[0].mxu0
        %v4630 = vadd.f32 %v4461, %v4629
        %v4631 = vpop.f32.mrb[0].mxu0
        %v4632 = vadd.f32 %v4463, %v4631
        %4633 = vdwg.mxu0
        %v4634 = vand.u32 %v205, 4294901760
        %4635 = vmatprep.subr.mxu0 %v4634
        %v4636 = vand.u32 %v204, 4294901760
        %4637 = vmatpush1.msra.mxu0 %v4636
        %v4638 = vand.u32 %v215, 4294901760
        %4639 = vmatprep.subr.mxu0 %v4638
        %v4640 = vand.u32 %v214, 4294901760
        %4641 = vmatpush1.msra.mxu0 %v4640
        %v4642 = vand.u32 %v225, 4294901760
        %4643 = vmatprep.subr.mxu0 %v4642
        %v4644 = vand.u32 %v224, 4294901760
        %4645 = vmatpush1.msra.mxu0 %v4644
        %v4646 = vand.u32 %v235, 4294901760
        %4647 = vmatprep.subr.mxu0 %v4646
        %v4648 = vand.u32 %v234, 4294901760
        %4649 = vmatpush1.msra.mxu0 %v4648
        %v4650 = vand.u32 %v245, 4294901760
        %4651 = vmatprep.subr.mxu0 %v4650
        %v4652 = vand.u32 %v244, 4294901760
        %4653 = vmatpush1.msra.mxu0 %v4652
        %v4654 = vand.u32 %v255, 4294901760
        %4655 = vmatprep.subr.mxu0 %v4654
        %v4656 = vand.u32 %v254, 4294901760
        %4657 = vmatpush1.msra.mxu0 %v4656
        %v4658 = vand.u32 %v265, 4294901760
        %4659 = vmatprep.subr.mxu0 %v4658
        %v4660 = vand.u32 %v264, 4294901760
        %4661 = vmatpush1.msra.mxu0 %v4660
        %v4662 = vand.u32 %v275, 4294901760
        %4663 = vmatprep.subr.mxu0 %v4662
        %v4664 = vand.u32 %v274, 4294901760
        %4665 = vmatpush1.msra.mxu0 %v4664
        %v4666 = vand.u32 %v285, 4294901760
        %4667 = vmatprep.subr.mxu0 %v4666
        %v4668 = vand.u32 %v284, 4294901760
        %4669 = vmatpush1.msra.mxu0 %v4668
        %v4670 = vand.u32 %v295, 4294901760
        %4671 = vmatprep.subr.mxu0 %v4670
        %v4672 = vand.u32 %v294, 4294901760
        %4673 = vmatpush1.msra.mxu0 %v4672
        %v4674 = vand.u32 %v305, 4294901760
        %4675 = vmatprep.subr.mxu0 %v4674
        %v4676 = vand.u32 %v304, 4294901760
        %4677 = vmatpush1.msra.mxu0 %v4676
        %v4678 = vand.u32 %v315, 4294901760
        %4679 = vmatprep.subr.mxu0 %v4678
        %v4680 = vand.u32 %v314, 4294901760
        %4681 = vmatpush1.msra.mxu0 %v4680
        %v4682 = vand.u32 %v325, 4294901760
        %4683 = vmatprep.subr.mxu0 %v4682
        %v4684 = vand.u32 %v324, 4294901760
        %4685 = vmatpush1.msra.mxu0 %v4684
        %v4686 = vand.u32 %v335, 4294901760
        %4687 = vmatprep.subr.mxu0 %v4686
        %v4688 = vand.u32 %v334, 4294901760
        %4689 = vmatpush1.msra.mxu0 %v4688
        %v4690 = vand.u32 %v345, 4294901760
        %4691 = vmatprep.subr.mxu0 %v4690
        %v4692 = vand.u32 %v344, 4294901760
        %4693 = vmatpush1.msra.mxu0 %v4692
        %4694 = vmatprep.subr.mxu0 0.0
        %4695 = vmatpush1.msra.mxu0 0.0
        %4696 = vmatprep.subr.mxu0 0.0
        %4697 = vmatpush1.msra.mxu0 0.0
        %4698 = vmatprep.subr.mxu0 0.0
        %4699 = vmatpush1.msra.mxu0 0.0
        %4700 = vmatprep.subr.mxu0 0.0
        %4701 = vmatpush1.msra.mxu0 0.0
        %4702 = vmatprep.subr.mxu0 0.0
        %4703 = vmatpush1.msra.mxu0 0.0
        %4704 = vmatprep.subr.mxu0 0.0
        %4705 = vmatpush1.msra.mxu0 0.0
        %4706 = vmatprep.subr.mxu0 0.0
        %4707 = vmatpush1.msra.mxu0 0.0
        %4708 = vmatprep.subr.mxu0 0.0
        %4709 = vmatpush1.msra.mxu0 0.0
        %4710 = vmatprep.subr.mxu0 0.0
        %4711 = vmatpush1.msra.mxu0 0.0
        %4712 = vmatprep.subr.mxu0 0.0
        %4713 = vmatpush1.msra.mxu0 0.0
        %4714 = vmatprep.subr.mxu0 0.0
        %4715 = vmatpush1.msra.mxu0 0.0
        %4716 = vmatprep.subr.mxu0 0.0
        %4717 = vmatpush1.msra.mxu0 0.0
        %4718 = vmatprep.subr.mxu0 0.0
        %4719 = vmatpush1.msra.mxu0 0.0
        %4720 = vmatprep.subr.mxu0 0.0
        %4721 = vmatpush1.msra.mxu0 0.0
        %4722 = vmatprep.subr.mxu0 0.0
        %4723 = vmatpush1.msra.mxu0 0.0
        %4724 = vmatprep.subr.mxu0 0.0
        %4725 = vmatpush1.msra.mxu0 0.0
        %4726 = vmatprep.subr.mxu0 0.0
        %4727 = vmatpush1.msra.mxu0 0.0
        %4728 = vmatprep.mubr.f32.mxu0 0.0
        %v4729 = vand.u32 %v348, 4294901760
        %4730 = vmatmul.mubr.f32.gmra.mrb[0].mxu0 %v4729
        %v4731 = vpop.f32.mrb[0].mxu0
        %v4732 = vadd.f32 %v4623, %v4731
        %v4733 = vpop.f32.mrb[0].mxu0
        %v4734 = vadd.f32 %v4625, %v4733
        %4735 = vmatprep.mubr.f32.mxu0 0.0
        %v4736 = vand.u32 %v351, 4294901760
        %4737 = vmatmul.mubr.f32.gmra.mrb[0].mxu0 %v4736
        %v4738 = vpop.f32.mrb[0].mxu0
        %v4739 = vadd.f32 %v4630, %v4738
        %v4740 = vpop.f32.mrb[0].mxu0
        %v4741 = vadd.f32 %v4632, %v4740
        %4742 = vdwg.mxu0
        %v4743 = vtanh.pop %v1220
        %v4744 = vtanh.pop %v1222
        %v4745 = vtanh.pop %v2098
        %v4746 = vtanh.pop %v2100
        %v4747 = vtanh.pop %v2976
        %v4748 = vtanh.pop %v2978
        %v4749 = vtanh.pop %v3854
        %v4750 = vtanh.pop %v3856
        %v4751 = vtanh.pop %v4732
        %v4752 = vtanh.pop %v4734
        %v4753 = vtanh.pop %v1227
        %v4754 = vtanh.pop %v1229
        %v4755 = vtanh.pop %v2105
        %v4756 = vtanh.pop %v2107
        %v4757 = vtanh.pop %v2983
        %v4758 = vtanh.pop %v2985
        %v4759 = vtanh.pop %v3861
        %v4760 = vtanh.pop %v3863
        %v4761 = vtanh.pop %v4739
        %v4762 = vtanh.pop %v4741
        %v4763 = vmul.f32 %v4743, 3.1415927
        %v4764 = vmul.f32 %v4744, 3.1415927
        %v4765 = vmul.f32 %v4745, 3.1415927
        %v4766 = vmul.f32 %v4746, 3.1415927
        %v4767 = vmul.f32 %v4747, 3.1415927
        %v4768 = vmul.f32 %v4748, 3.1415927
        %v4769 = vmul.f32 %v4749, 3.1415927
        %v4770 = vmul.f32 %v4750, 3.1415927
        %v4771 = vmul.f32 %v4751, 3.1415927
        %v4772 = vmul.f32 %v4752, 3.1415927
        %v4773 = vmul.f32 %v4753, 3.1415927
        %v4774 = vmul.f32 %v4754, 3.1415927
        %v4775 = vmul.f32 %v4755, 3.1415927
        %v4776 = vmul.f32 %v4756, 3.1415927
        %v4777 = vmul.f32 %v4757, 3.1415927
        %v4778 = vmul.f32 %v4758, 3.1415927
        %v4779 = vmul.f32 %v4759, 3.1415927
        %v4780 = vmul.f32 %v4760, 3.1415927
        %v4781 = vmul.f32 %v4761, 3.1415927
        %v4782 = vmul.f32 %v4762, 3.1415927
        %v4783 = vand.u32 2147483647, %v4763
        %vm4784 = vcmp.le.f32.partialorder %v4783, 0.7853982
        %vm4785 = vcmp.lt.s32.totalorder %v4763, 0
        %v4786 = vand.u32 %v4763, 2139095040
        %v4787 = vshrl.u32 %v4786, 23
        %v4788 = vsub.s32 %v4787, 127
        %v4789 = vand.u32 2147483647, %v4763
        %v4790 = vand.u32 %v4789, 8388607
        %v4791 = vor.u32 %v4790, 8388608
        %v4792 = vsub.s32 0, %v4791
        %v4793 = vadd.s32 %v4788, 1
        %vm4794 = vcmp.gt.s32.totalorder %v4793, 0
        %v4795 = vsel %vm4794, %v4793, 0
        %v4796 = vshrl.u32 %v4795, 5
        %v4797 = vand.u32 %v4795, 31
        %v4798 = vsub.s32 32, %v4797
        %v4799 = vshrl.u32 683565275, %v4798
        %v4800 = vshll.u32 683565275, %v4797
        %v4801 = vshrl.u32 2475754826, %v4798
        %v4802 = vor.u32 %v4800, %v4801
        %v4803 = vshll.u32 2475754826, %v4797
        %v4804 = vshrl.u32 2131351028, %v4798
        %v4805 = vor.u32 %v4803, %v4804
        %v4806 = vshll.u32 2131351028, %v4797
        %v4807 = vshrl.u32 2102212464, %v4798
        %v4808 = vor.u32 %v4806, %v4807
        %v4809 = vshll.u32 2102212464, %v4797
        %v4810 = vshrl.u32 920167782, %v4798
        %v4811 = vor.u32 %v4809, %v4810
        %v4812 = vshll.u32 920167782, %v4797
        %v4813 = vshrl.u32 1326507024, %v4798
        %v4814 = vor.u32 %v4812, %v4813
        %vm4815 = vcmp.lt.s32.totalorder %v4796, 1
        %vm4816 = vcmp.lt.s32.totalorder %v4796, 2
        %vm4817 = vcmp.lt.s32.totalorder %v4796, 3
        %vm4818 = vcmp.lt.s32.totalorder %v4796, 4
        %v4819 = vsel %vm4815, %v4799, %v4802
        %v4820 = vsel %vm4818, %v4808, 2102212464
        %v4821 = vsel %vm4817, %v4805, %v4820
        %v4822 = vsel %vm4816, %v4819, %v4821
        %v4823 = vsel %vm4815, %v4802, %v4805
        %v4824 = vsel %vm4818, %v4811, 920167782
        %v4825 = vsel %vm4817, %v4808, %v4824
        %v4826 = vsel %vm4816, %v4823, %v4825
        %v4827 = vsel %vm4815, %v4805, %v4808
        %v4828 = vsel %vm4818, %v4814, 1326507024
        %v4829 = vsel %vm4817, %v4811, %v4828
        %v4830 = vsel %vm4816, %v4827, %v4829
        %v4831 = vshll.u32 %v4791, 8
        %v4832 = vmul.u32.u64.compose %v4831, %v4830
        %v4833 = vextract.low.u32 %v4832
        %v4834 = vextract.high.u32 %v4832
        %v4835 = vmul.u32.u64.compose %v4831, %v4826
        %v4836 = vextract.low.u32 %v4835
        %v4837 = vextract.high.u32 %v4835
        %v4838 = vmul.u32 %v4831, %v4822
        %v4839 = vadd.s32 %v4834, %v4836
        %vm4840 = vc.u32 %v4834, %v4836
        %v4841 = vadd.s32 %v4837, 1
        %v4842 = vsel %vm4840, %v4841, %v4837
        %v4843 = vadd.s32 %v4838, %v4842
        %v4844 = vadd.s32 %v4843, 536870912
        %v4845 = vshrl.u32 %v4844, 30
        %v4846 = vshll.u32 %v4845, 30
        %v4847 = vsub.s32 %v4843, %v4846
        %vm4848 = vcmp.lt.s32.totalorder %v4847, 0
        %v4849 = vsub.s32 0, %v4847
        %v4850 = vsel %vm4848, %v4849, %v4847
        %v4851 = vclz %v4850
        %v4852 = vsub.s32 %v4851, 2
        %vm4853 = vcmp.gt.s32.totalorder 0, %v4852
        %v4854 = vsel %vm4853, 0, %v4852
        %v4855 = vsub.s32 32, %v4854
        %v4856 = vshll.u32 %v4847, %v4854
        %v4857 = vshrl.u32 %v4839, %v4855
        %v4858 = vor.u32 %v4856, %v4857
        %v4859 = vsub.s32 4294967266, %v4854
        %v4860 = vadd.s32 %v4859, 127
        %v4861 = vshll.u32 %v4860, 23
        %v4862 = vor.u32 4788187, %v4861
        %v4863 = vand.u32 2147483647, %v4862
        %v4865 = vcvt.s32.f32 %v4858
        %v4866 = vmul.f32 %v4865, %v4863
        %v4867 = vxor.u32 %v4866, 2147483648
        %v4868 = vsel %vm4785, %v4867, %v4866
        %v4869 = vsub.s32 4, %v4845
        %v4870 = vsel %vm4785, %v4869, %v4845
        %v4871 = vsel %vm4784, %v4763, %v4868
        %v4872 = vsel %vm4784, 0, %v4870
        %v4873 = vcosq.f32.pop %v4871
        %v4874 = vsinq.f32.pop %v4871
        %vm4875 = vweird.f32 %v4763
        %v4876 = vadd.s32 %v4872, 3
        %v4877 = vand.u32 %v4876, 3
        %vm4878 = vcmp.lt.s32.totalorder %v4877, 2
        %vm4879 = vcmp.eq.s32.totalorder %v4877, 0
        %v4880 = vxor.u32 %v4874, 2147483648
        %v4881 = vsel %vm4879, %v4873, %v4880
        %vm4882 = vcmp.eq.s32.totalorder %v4877, 2
        %v4883 = vxor.u32 %v4873, 2147483648
        %v4884 = vsel %vm4882, %v4883, %v4874
        %v4885 = vsel %vm4878, %v4881, %v4884
        %v4886 = vsel %vm4875, nan, %v4885
        %v4887 = vand.u32 2147483647, %v4764
        %vm4888 = vcmp.le.f32.partialorder %v4887, 0.7853982
        %vm4889 = vcmp.lt.s32.totalorder %v4764, 0
        %v4890 = vand.u32 %v4764, 2139095040
        %v4891 = vshrl.u32 %v4890, 23
        %v4892 = vsub.s32 %v4891, 127
        %v4893 = vand.u32 2147483647, %v4764
        %v4894 = vand.u32 %v4893, 8388607
        %v4895 = vor.u32 %v4894, 8388608
        %v4896 = vsub.s32 0, %v4895
        %v4897 = vadd.s32 %v4892, 1
        %vm4898 = vcmp.gt.s32.totalorder %v4897, 0
        %v4899 = vsel %vm4898, %v4897, 0
        %v4900 = vshrl.u32 %v4899, 5
        %v4901 = vand.u32 %v4899, 31
        %v4902 = vsub.s32 32, %v4901
        %v4903 = vshrl.u32 683565275, %v4902
        %v4904 = vshll.u32 683565275, %v4901
        %v4905 = vshrl.u32 2475754826, %v4902
        %v4906 = vor.u32 %v4904, %v4905
        %v4907 = vshll.u32 2475754826, %v4901
        %v4908 = vshrl.u32 2131351028, %v4902
        %v4909 = vor.u32 %v4907, %v4908
        %v4910 = vshll.u32 2131351028, %v4901
        %v4911 = vshrl.u32 2102212464, %v4902
        %v4912 = vor.u32 %v4910, %v4911
        %v4913 = vshll.u32 2102212464, %v4901
        %v4914 = vshrl.u32 920167782, %v4902
        %v4915 = vor.u32 %v4913, %v4914
        %v4916 = vshll.u32 920167782, %v4901
        %v4917 = vshrl.u32 1326507024, %v4902
        %v4918 = vor.u32 %v4916, %v4917
        %vm4919 = vcmp.lt.s32.totalorder %v4900, 1
        %vm4920 = vcmp.lt.s32.totalorder %v4900, 2
        %vm4921 = vcmp.lt.s32.totalorder %v4900, 3
        %vm4922 = vcmp.lt.s32.totalorder %v4900, 4
        %v4923 = vsel %vm4919, %v4903, %v4906
        %v4924 = vsel %vm4922, %v4912, 2102212464
        %v4925 = vsel %vm4921, %v4909, %v4924
        %v4926 = vsel %vm4920, %v4923, %v4925
        %v4927 = vsel %vm4919, %v4906, %v4909
        %v4928 = vsel %vm4922, %v4915, 920167782
        %v4929 = vsel %vm4921, %v4912, %v4928
        %v4930 = vsel %vm4920, %v4927, %v4929
        %v4931 = vsel %vm4919, %v4909, %v4912
        %v4932 = vsel %vm4922, %v4918, 1326507024
        %v4933 = vsel %vm4921, %v4915, %v4932
        %v4934 = vsel %vm4920, %v4931, %v4933
        %v4935 = vshll.u32 %v4895, 8
        %v4936 = vmul.u32.u64.compose %v4935, %v4934
        %v4937 = vextract.low.u32 %v4936
        %v4938 = vextract.high.u32 %v4936
        %v4939 = vmul.u32.u64.compose %v4935, %v4930
        %v4940 = vextract.low.u32 %v4939
        %v4941 = vextract.high.u32 %v4939
        %v4942 = vmul.u32 %v4935, %v4926
        %v4943 = vadd.s32 %v4938, %v4940
        %vm4944 = vc.u32 %v4938, %v4940
        %v4945 = vadd.s32 %v4941, 1
        %v4946 = vsel %vm4944, %v4945, %v4941
        %v4947 = vadd.s32 %v4942, %v4946
        %v4948 = vadd.s32 %v4947, 536870912
        %v4949 = vshrl.u32 %v4948, 30
        %v4950 = vshll.u32 %v4949, 30
        %v4951 = vsub.s32 %v4947, %v4950
        %vm4952 = vcmp.lt.s32.totalorder %v4951, 0
        %v4953 = vsub.s32 0, %v4951
        %v4954 = vsel %vm4952, %v4953, %v4951
        %v4955 = vclz %v4954
        %v4956 = vsub.s32 %v4955, 2
        %vm4957 = vcmp.gt.s32.totalorder 0, %v4956
        %v4958 = vsel %vm4957, 0, %v4956
        %v4959 = vsub.s32 32, %v4958
        %v4960 = vshll.u32 %v4951, %v4958
        %v4961 = vshrl.u32 %v4943, %v4959
        %v4962 = vor.u32 %v4960, %v4961
        %v4963 = vsub.s32 4294967266, %v4958
        %v4964 = vadd.s32 %v4963, 127
        %v4965 = vshll.u32 %v4964, 23
        %v4966 = vor.u32 4788187, %v4965
        %v4967 = vand.u32 2147483647, %v4966
        %v4969 = vcvt.s32.f32 %v4962
        %v4970 = vmul.f32 %v4969, %v4967
        %v4971 = vxor.u32 %v4970, 2147483648
        %v4972 = vsel %vm4889, %v4971, %v4970
        %v4973 = vsub.s32 4, %v4949
        %v4974 = vsel %vm4889, %v4973, %v4949
        %v4975 = vsel %vm4888, %v4764, %v4972
        %v4976 = vsel %vm4888, 0, %v4974
        %v4977 = vcosq.f32.pop %v4975
        %v4978 = vsinq.f32.pop %v4975
        %vm4979 = vweird.f32 %v4764
        %v4980 = vadd.s32 %v4976, 3
        %v4981 = vand.u32 %v4980, 3
        %vm4982 = vcmp.lt.s32.totalorder %v4981, 2
        %vm4983 = vcmp.eq.s32.totalorder %v4981, 0
        %v4984 = vxor.u32 %v4978, 2147483648
        %v4985 = vsel %vm4983, %v4977, %v4984
        %vm4986 = vcmp.eq.s32.totalorder %v4981, 2
        %v4987 = vxor.u32 %v4977, 2147483648
        %v4988 = vsel %vm4986, %v4987, %v4978
        %v4989 = vsel %vm4982, %v4985, %v4988
        %v4990 = vsel %vm4979, nan, %v4989
        %v4991 = vand.u32 2147483647, %v4765
        %vm4992 = vcmp.le.f32.partialorder %v4991, 0.7853982
        %vm4993 = vcmp.lt.s32.totalorder %v4765, 0
        %v4994 = vand.u32 %v4765, 2139095040
        %v4995 = vshrl.u32 %v4994, 23
        %v4996 = vsub.s32 %v4995, 127
        %v4997 = vand.u32 2147483647, %v4765
        %v4998 = vand.u32 %v4997, 8388607
        %v4999 = vor.u32 %v4998, 8388608
        %v5000 = vsub.s32 0, %v4999
        %v5001 = vadd.s32 %v4996, 1
        %vm5002 = vcmp.gt.s32.totalorder %v5001, 0
        %v5003 = vsel %vm5002, %v5001, 0
        %v5004 = vshrl.u32 %v5003, 5
        %v5005 = vand.u32 %v5003, 31
        %v5006 = vsub.s32 32, %v5005
        %v5007 = vshrl.u32 683565275, %v5006
        %v5008 = vshll.u32 683565275, %v5005
        %v5009 = vshrl.u32 2475754826, %v5006
        %v5010 = vor.u32 %v5008, %v5009
        %v5011 = vshll.u32 2475754826, %v5005
        %v5012 = vshrl.u32 2131351028, %v5006
        %v5013 = vor.u32 %v5011, %v5012
        %v5014 = vshll.u32 2131351028, %v5005
        %v5015 = vshrl.u32 2102212464, %v5006
        %v5016 = vor.u32 %v5014, %v5015
        %v5017 = vshll.u32 2102212464, %v5005
        %v5018 = vshrl.u32 920167782, %v5006
        %v5019 = vor.u32 %v5017, %v5018
        %v5020 = vshll.u32 920167782, %v5005
        %v5021 = vshrl.u32 1326507024, %v5006
        %v5022 = vor.u32 %v5020, %v5021
        %vm5023 = vcmp.lt.s32.totalorder %v5004, 1
        %vm5024 = vcmp.lt.s32.totalorder %v5004, 2
        %vm5025 = vcmp.lt.s32.totalorder %v5004, 3
        %vm5026 = vcmp.lt.s32.totalorder %v5004, 4
        %v5027 = vsel %vm5023, %v5007, %v5010
        %v5028 = vsel %vm5026, %v5016, 2102212464
        %v5029 = vsel %vm5025, %v5013, %v5028
        %v5030 = vsel %vm5024, %v5027, %v5029
        %v5031 = vsel %vm5023, %v5010, %v5013
        %v5032 = vsel %vm5026, %v5019, 920167782
        %v5033 = vsel %vm5025, %v5016, %v5032
        %v5034 = vsel %vm5024, %v5031, %v5033
        %v5035 = vsel %vm5023, %v5013, %v5016
        %v5036 = vsel %vm5026, %v5022, 1326507024
        %v5037 = vsel %vm5025, %v5019, %v5036
        %v5038 = vsel %vm5024, %v5035, %v5037
        %v5039 = vshll.u32 %v4999, 8
        %v5040 = vmul.u32.u64.compose %v5039, %v5038
        %v5041 = vextract.low.u32 %v5040
        %v5042 = vextract.high.u32 %v5040
        %v5043 = vmul.u32.u64.compose %v5039, %v5034
        %v5044 = vextract.low.u32 %v5043
        %v5045 = vextract.high.u32 %v5043
        %v5046 = vmul.u32 %v5039, %v5030
        %v5047 = vadd.s32 %v5042, %v5044
        %vm5048 = vc.u32 %v5042, %v5044
        %v5049 = vadd.s32 %v5045, 1
        %v5050 = vsel %vm5048, %v5049, %v5045
        %v5051 = vadd.s32 %v5046, %v5050
        %v5052 = vadd.s32 %v5051, 536870912
        %v5053 = vshrl.u32 %v5052, 30
        %v5054 = vshll.u32 %v5053, 30
        %v5055 = vsub.s32 %v5051, %v5054
        %vm5056 = vcmp.lt.s32.totalorder %v5055, 0
        %v5057 = vsub.s32 0, %v5055
        %v5058 = vsel %vm5056, %v5057, %v5055
        %v5059 = vclz %v5058
        %v5060 = vsub.s32 %v5059, 2
        %vm5061 = vcmp.gt.s32.totalorder 0, %v5060
        %v5062 = vsel %vm5061, 0, %v5060
        %v5063 = vsub.s32 32, %v5062
        %v5064 = vshll.u32 %v5055, %v5062
        %v5065 = vshrl.u32 %v5047, %v5063
        %v5066 = vor.u32 %v5064, %v5065
        %v5067 = vsub.s32 4294967266, %v5062
        %v5068 = vadd.s32 %v5067, 127
        %v5069 = vshll.u32 %v5068, 23
        %v5070 = vor.u32 4788187, %v5069
        %v5071 = vand.u32 2147483647, %v5070
        %v5073 = vcvt.s32.f32 %v5066
        %v5074 = vmul.f32 %v5073, %v5071
        %v5075 = vxor.u32 %v5074, 2147483648
        %v5076 = vsel %vm4993, %v5075, %v5074
        %v5077 = vsub.s32 4, %v5053
        %v5078 = vsel %vm4993, %v5077, %v5053
        %v5079 = vsel %vm4992, %v4765, %v5076
        %v5080 = vsel %vm4992, 0, %v5078
        %v5081 = vcosq.f32.pop %v5079
        %v5082 = vsinq.f32.pop %v5079
        %vm5083 = vweird.f32 %v4765
        %v5084 = vadd.s32 %v5080, 3
        %v5085 = vand.u32 %v5084, 3
        %vm5086 = vcmp.lt.s32.totalorder %v5085, 2
        %vm5087 = vcmp.eq.s32.totalorder %v5085, 0
        %v5088 = vxor.u32 %v5082, 2147483648
        %v5089 = vsel %vm5087, %v5081, %v5088
        %vm5090 = vcmp.eq.s32.totalorder %v5085, 2
        %v5091 = vxor.u32 %v5081, 2147483648
        %v5092 = vsel %vm5090, %v5091, %v5082
        %v5093 = vsel %vm5086, %v5089, %v5092
        %v5094 = vsel %vm5083, nan, %v5093
        %v5095 = vand.u32 2147483647, %v4766
        %vm5096 = vcmp.le.f32.partialorder %v5095, 0.7853982
        %vm5097 = vcmp.lt.s32.totalorder %v4766, 0
        %v5098 = vand.u32 %v4766, 2139095040
        %v5099 = vshrl.u32 %v5098, 23
        %v5100 = vsub.s32 %v5099, 127
        %v5101 = vand.u32 2147483647, %v4766
        %v5102 = vand.u32 %v5101, 8388607
        %v5103 = vor.u32 %v5102, 8388608
        %v5104 = vsub.s32 0, %v5103
        %v5105 = vadd.s32 %v5100, 1
        %vm5106 = vcmp.gt.s32.totalorder %v5105, 0
        %v5107 = vsel %vm5106, %v5105, 0
        %v5108 = vshrl.u32 %v5107, 5
        %v5109 = vand.u32 %v5107, 31
        %v5110 = vsub.s32 32, %v5109
        %v5111 = vshrl.u32 683565275, %v5110
        %v5112 = vshll.u32 683565275, %v5109
        %v5113 = vshrl.u32 2475754826, %v5110
        %v5114 = vor.u32 %v5112, %v5113
        %v5115 = vshll.u32 2475754826, %v5109
        %v5116 = vshrl.u32 2131351028, %v5110
        %v5117 = vor.u32 %v5115, %v5116
        %v5118 = vshll.u32 2131351028, %v5109
        %v5119 = vshrl.u32 2102212464, %v5110
        %v5120 = vor.u32 %v5118, %v5119
        %v5121 = vshll.u32 2102212464, %v5109
        %v5122 = vshrl.u32 920167782, %v5110
        %v5123 = vor.u32 %v5121, %v5122
        %v5124 = vshll.u32 920167782, %v5109
        %v5125 = vshrl.u32 1326507024, %v5110
        %v5126 = vor.u32 %v5124, %v5125
        %vm5127 = vcmp.lt.s32.totalorder %v5108, 1
        %vm5128 = vcmp.lt.s32.totalorder %v5108, 2
        %vm5129 = vcmp.lt.s32.totalorder %v5108, 3
        %vm5130 = vcmp.lt.s32.totalorder %v5108, 4
        %v5131 = vsel %vm5127, %v5111, %v5114
        %v5132 = vsel %vm5130, %v5120, 2102212464
        %v5133 = vsel %vm5129, %v5117, %v5132
        %v5134 = vsel %vm5128, %v5131, %v5133
        %v5135 = vsel %vm5127, %v5114, %v5117
        %v5136 = vsel %vm5130, %v5123, 920167782
        %v5137 = vsel %vm5129, %v5120, %v5136
        %v5138 = vsel %vm5128, %v5135, %v5137
        %v5139 = vsel %vm5127, %v5117, %v5120
        %v5140 = vsel %vm5130, %v5126, 1326507024
        %v5141 = vsel %vm5129, %v5123, %v5140
        %v5142 = vsel %vm5128, %v5139, %v5141
        %v5143 = vshll.u32 %v5103, 8
        %v5144 = vmul.u32.u64.compose %v5143, %v5142
        %v5145 = vextract.low.u32 %v5144
        %v5146 = vextract.high.u32 %v5144
        %v5147 = vmul.u32.u64.compose %v5143, %v5138
        %v5148 = vextract.low.u32 %v5147
        %v5149 = vextract.high.u32 %v5147
        %v5150 = vmul.u32 %v5143, %v5134
        %v5151 = vadd.s32 %v5146, %v5148
        %vm5152 = vc.u32 %v5146, %v5148
        %v5153 = vadd.s32 %v5149, 1
        %v5154 = vsel %vm5152, %v5153, %v5149
        %v5155 = vadd.s32 %v5150, %v5154
        %v5156 = vadd.s32 %v5155, 536870912
        %v5157 = vshrl.u32 %v5156, 30
        %v5158 = vshll.u32 %v5157, 30
        %v5159 = vsub.s32 %v5155, %v5158
        %vm5160 = vcmp.lt.s32.totalorder %v5159, 0
        %v5161 = vsub.s32 0, %v5159
        %v5162 = vsel %vm5160, %v5161, %v5159
        %v5163 = vclz %v5162
        %v5164 = vsub.s32 %v5163, 2
        %vm5165 = vcmp.gt.s32.totalorder 0, %v5164
        %v5166 = vsel %vm5165, 0, %v5164
        %v5167 = vsub.s32 32, %v5166
        %v5168 = vshll.u32 %v5159, %v5166
        %v5169 = vshrl.u32 %v5151, %v5167
        %v5170 = vor.u32 %v5168, %v5169
        %v5171 = vsub.s32 4294967266, %v5166
        %v5172 = vadd.s32 %v5171, 127
        %v5173 = vshll.u32 %v5172, 23
        %v5174 = vor.u32 4788187, %v5173
        %v5175 = vand.u32 2147483647, %v5174
        %v5177 = vcvt.s32.f32 %v5170
        %v5178 = vmul.f32 %v5177, %v5175
        %v5179 = vxor.u32 %v5178, 2147483648
        %v5180 = vsel %vm5097, %v5179, %v5178
        %v5181 = vsub.s32 4, %v5157
        %v5182 = vsel %vm5097, %v5181, %v5157
        %v5183 = vsel %vm5096, %v4766, %v5180
        %v5184 = vsel %vm5096, 0, %v5182
        %v5185 = vcosq.f32.pop %v5183
        %v5186 = vsinq.f32.pop %v5183
        %vm5187 = vweird.f32 %v4766
        %v5188 = vadd.s32 %v5184, 3
        %v5189 = vand.u32 %v5188, 3
        %vm5190 = vcmp.lt.s32.totalorder %v5189, 2
        %vm5191 = vcmp.eq.s32.totalorder %v5189, 0
        %v5192 = vxor.u32 %v5186, 2147483648
        %v5193 = vsel %vm5191, %v5185, %v5192
        %vm5194 = vcmp.eq.s32.totalorder %v5189, 2
        %v5195 = vxor.u32 %v5185, 2147483648
        %v5196 = vsel %vm5194, %v5195, %v5186
        %v5197 = vsel %vm5190, %v5193, %v5196
        %v5198 = vsel %vm5187, nan, %v5197
        %v5199 = vand.u32 2147483647, %v4767
        %vm5200 = vcmp.le.f32.partialorder %v5199, 0.7853982
        %vm5201 = vcmp.lt.s32.totalorder %v4767, 0
        %v5202 = vand.u32 %v4767, 2139095040
        %v5203 = vshrl.u32 %v5202, 23
        %v5204 = vsub.s32 %v5203, 127
        %v5205 = vand.u32 2147483647, %v4767
        %v5206 = vand.u32 %v5205, 8388607
        %v5207 = vor.u32 %v5206, 8388608
        %v5208 = vsub.s32 0, %v5207
        %v5209 = vadd.s32 %v5204, 1
        %vm5210 = vcmp.gt.s32.totalorder %v5209, 0
        %v5211 = vsel %vm5210, %v5209, 0
        %v5212 = vshrl.u32 %v5211, 5
        %v5213 = vand.u32 %v5211, 31
        %v5214 = vsub.s32 32, %v5213
        %v5215 = vshrl.u32 683565275, %v5214
        %v5216 = vshll.u32 683565275, %v5213
        %v5217 = vshrl.u32 2475754826, %v5214
        %v5218 = vor.u32 %v5216, %v5217
        %v5219 = vshll.u32 2475754826, %v5213
        %v5220 = vshrl.u32 2131351028, %v5214
        %v5221 = vor.u32 %v5219, %v5220
        %v5222 = vshll.u32 2131351028, %v5213
        %v5223 = vshrl.u32 2102212464, %v5214
        %v5224 = vor.u32 %v5222, %v5223
        %v5225 = vshll.u32 2102212464, %v5213
        %v5226 = vshrl.u32 920167782, %v5214
        %v5227 = vor.u32 %v5225, %v5226
        %v5228 = vshll.u32 920167782, %v5213
        %v5229 = vshrl.u32 1326507024, %v5214
        %v5230 = vor.u32 %v5228, %v5229
        %vm5231 = vcmp.lt.s32.totalorder %v5212, 1
        %vm5232 = vcmp.lt.s32.totalorder %v5212, 2
        %vm5233 = vcmp.lt.s32.totalorder %v5212, 3
        %vm5234 = vcmp.lt.s32.totalorder %v5212, 4
        %v5235 = vsel %vm5231, %v5215, %v5218
        %v5236 = vsel %vm5234, %v5224, 2102212464
        %v5237 = vsel %vm5233, %v5221, %v5236
        %v5238 = vsel %vm5232, %v5235, %v5237
        %v5239 = vsel %vm5231, %v5218, %v5221
        %v5240 = vsel %vm5234, %v5227, 920167782
        %v5241 = vsel %vm5233, %v5224, %v5240
        %v5242 = vsel %vm5232, %v5239, %v5241
        %v5243 = vsel %vm5231, %v5221, %v5224
        %v5244 = vsel %vm5234, %v5230, 1326507024
        %v5245 = vsel %vm5233, %v5227, %v5244
        %v5246 = vsel %vm5232, %v5243, %v5245
        %v5247 = vshll.u32 %v5207, 8
        %v5248 = vmul.u32.u64.compose %v5247, %v5246
        %v5249 = vextract.low.u32 %v5248
        %v5250 = vextract.high.u32 %v5248
        %v5251 = vmul.u32.u64.compose %v5247, %v5242
        %v5252 = vextract.low.u32 %v5251
        %v5253 = vextract.high.u32 %v5251
        %v5254 = vmul.u32 %v5247, %v5238
        %v5255 = vadd.s32 %v5250, %v5252
        %vm5256 = vc.u32 %v5250, %v5252
        %v5257 = vadd.s32 %v5253, 1
        %v5258 = vsel %vm5256, %v5257, %v5253
        %v5259 = vadd.s32 %v5254, %v5258
        %v5260 = vadd.s32 %v5259, 536870912
        %v5261 = vshrl.u32 %v5260, 30
        %v5262 = vshll.u32 %v5261, 30
        %v5263 = vsub.s32 %v5259, %v5262
        %vm5264 = vcmp.lt.s32.totalorder %v5263, 0
        %v5265 = vsub.s32 0, %v5263
        %v5266 = vsel %vm5264, %v5265, %v5263
        %v5267 = vclz %v5266
        %v5268 = vsub.s32 %v5267, 2
        %vm5269 = vcmp.gt.s32.totalorder 0, %v5268
        %v5270 = vsel %vm5269, 0, %v5268
        %v5271 = vsub.s32 32, %v5270
        %v5272 = vshll.u32 %v5263, %v5270
        %v5273 = vshrl.u32 %v5255, %v5271
        %v5274 = vor.u32 %v5272, %v5273
        %v5275 = vsub.s32 4294967266, %v5270
        %v5276 = vadd.s32 %v5275, 127
        %v5277 = vshll.u32 %v5276, 23
        %v5278 = vor.u32 4788187, %v5277
        %v5279 = vand.u32 2147483647, %v5278
        %v5281 = vcvt.s32.f32 %v5274
        %v5282 = vmul.f32 %v5281, %v5279
        %v5283 = vxor.u32 %v5282, 2147483648
        %v5284 = vsel %vm5201, %v5283, %v5282
        %v5285 = vsub.s32 4, %v5261
        %v5286 = vsel %vm5201, %v5285, %v5261
        %v5287 = vsel %vm5200, %v4767, %v5284
        %v5288 = vsel %vm5200, 0, %v5286
        %v5289 = vcosq.f32.pop %v5287
        %v5290 = vsinq.f32.pop %v5287
        %vm5291 = vweird.f32 %v4767
        %v5292 = vadd.s32 %v5288, 3
        %v5293 = vand.u32 %v5292, 3
        %vm5294 = vcmp.lt.s32.totalorder %v5293, 2
        %vm5295 = vcmp.eq.s32.totalorder %v5293, 0
        %v5296 = vxor.u32 %v5290, 2147483648
        %v5297 = vsel %vm5295, %v5289, %v5296
        %vm5298 = vcmp.eq.s32.totalorder %v5293, 2
        %v5299 = vxor.u32 %v5289, 2147483648
        %v5300 = vsel %vm5298, %v5299, %v5290
        %v5301 = vsel %vm5294, %v5297, %v5300
        %v5302 = vsel %vm5291, nan, %v5301
        %v5303 = vand.u32 2147483647, %v4768
        %vm5304 = vcmp.le.f32.partialorder %v5303, 0.7853982
        %vm5305 = vcmp.lt.s32.totalorder %v4768, 0
        %v5306 = vand.u32 %v4768, 2139095040
        %v5307 = vshrl.u32 %v5306, 23
        %v5308 = vsub.s32 %v5307, 127
        %v5309 = vand.u32 2147483647, %v4768
        %v5310 = vand.u32 %v5309, 8388607
        %v5311 = vor.u32 %v5310, 8388608
        %v5312 = vsub.s32 0, %v5311
        %v5313 = vadd.s32 %v5308, 1
        %vm5314 = vcmp.gt.s32.totalorder %v5313, 0
        %v5315 = vsel %vm5314, %v5313, 0
        %v5316 = vshrl.u32 %v5315, 5
        %v5317 = vand.u32 %v5315, 31
        %v5318 = vsub.s32 32, %v5317
        %v5319 = vshrl.u32 683565275, %v5318
        %v5320 = vshll.u32 683565275, %v5317
        %v5321 = vshrl.u32 2475754826, %v5318
        %v5322 = vor.u32 %v5320, %v5321
        %v5323 = vshll.u32 2475754826, %v5317
        %v5324 = vshrl.u32 2131351028, %v5318
        %v5325 = vor.u32 %v5323, %v5324
        %v5326 = vshll.u32 2131351028, %v5317
        %v5327 = vshrl.u32 2102212464, %v5318
        %v5328 = vor.u32 %v5326, %v5327
        %v5329 = vshll.u32 2102212464, %v5317
        %v5330 = vshrl.u32 920167782, %v5318
        %v5331 = vor.u32 %v5329, %v5330
        %v5332 = vshll.u32 920167782, %v5317
        %v5333 = vshrl.u32 1326507024, %v5318
        %v5334 = vor.u32 %v5332, %v5333
        %vm5335 = vcmp.lt.s32.totalorder %v5316, 1
        %vm5336 = vcmp.lt.s32.totalorder %v5316, 2
        %vm5337 = vcmp.lt.s32.totalorder %v5316, 3
        %vm5338 = vcmp.lt.s32.totalorder %v5316, 4
        %v5339 = vsel %vm5335, %v5319, %v5322
        %v5340 = vsel %vm5338, %v5328, 2102212464
        %v5341 = vsel %vm5337, %v5325, %v5340
        %v5342 = vsel %vm5336, %v5339, %v5341
        %v5343 = vsel %vm5335, %v5322, %v5325
        %v5344 = vsel %vm5338, %v5331, 920167782
        %v5345 = vsel %vm5337, %v5328, %v5344
        %v5346 = vsel %vm5336, %v5343, %v5345
        %v5347 = vsel %vm5335, %v5325, %v5328
        %v5348 = vsel %vm5338, %v5334, 1326507024
        %v5349 = vsel %vm5337, %v5331, %v5348
        %v5350 = vsel %vm5336, %v5347, %v5349
        %v5351 = vshll.u32 %v5311, 8
        %v5352 = vmul.u32.u64.compose %v5351, %v5350
        %v5353 = vextract.low.u32 %v5352
        %v5354 = vextract.high.u32 %v5352
        %v5355 = vmul.u32.u64.compose %v5351, %v5346
        %v5356 = vextract.low.u32 %v5355
        %v5357 = vextract.high.u32 %v5355
        %v5358 = vmul.u32 %v5351, %v5342
        %v5359 = vadd.s32 %v5354, %v5356
        %vm5360 = vc.u32 %v5354, %v5356
        %v5361 = vadd.s32 %v5357, 1
        %v5362 = vsel %vm5360, %v5361, %v5357
        %v5363 = vadd.s32 %v5358, %v5362
        %v5364 = vadd.s32 %v5363, 536870912
        %v5365 = vshrl.u32 %v5364, 30
        %v5366 = vshll.u32 %v5365, 30
        %v5367 = vsub.s32 %v5363, %v5366
        %vm5368 = vcmp.lt.s32.totalorder %v5367, 0
        %v5369 = vsub.s32 0, %v5367
        %v5370 = vsel %vm5368, %v5369, %v5367
        %v5371 = vclz %v5370
        %v5372 = vsub.s32 %v5371, 2
        %vm5373 = vcmp.gt.s32.totalorder 0, %v5372
        %v5374 = vsel %vm5373, 0, %v5372
        %v5375 = vsub.s32 32, %v5374
        %v5376 = vshll.u32 %v5367, %v5374
        %v5377 = vshrl.u32 %v5359, %v5375
        %v5378 = vor.u32 %v5376, %v5377
        %v5379 = vsub.s32 4294967266, %v5374
        %v5380 = vadd.s32 %v5379, 127
        %v5381 = vshll.u32 %v5380, 23
        %v5382 = vor.u32 4788187, %v5381
        %v5383 = vand.u32 2147483647, %v5382
        %v5385 = vcvt.s32.f32 %v5378
        %v5386 = vmul.f32 %v5385, %v5383
        %v5387 = vxor.u32 %v5386, 2147483648
        %v5388 = vsel %vm5305, %v5387, %v5386
        %v5389 = vsub.s32 4, %v5365
        %v5390 = vsel %vm5305, %v5389, %v5365
        %v5391 = vsel %vm5304, %v4768, %v5388
        %v5392 = vsel %vm5304, 0, %v5390
        %v5393 = vcosq.f32.pop %v5391
        %v5394 = vsinq.f32.pop %v5391
        %vm5395 = vweird.f32 %v4768
        %v5396 = vadd.s32 %v5392, 3
        %v5397 = vand.u32 %v5396, 3
        %vm5398 = vcmp.lt.s32.totalorder %v5397, 2
        %vm5399 = vcmp.eq.s32.totalorder %v5397, 0
        %v5400 = vxor.u32 %v5394, 2147483648
        %v5401 = vsel %vm5399, %v5393, %v5400
        %vm5402 = vcmp.eq.s32.totalorder %v5397, 2
        %v5403 = vxor.u32 %v5393, 2147483648
        %v5404 = vsel %vm5402, %v5403, %v5394
        %v5405 = vsel %vm5398, %v5401, %v5404
        %v5406 = vsel %vm5395, nan, %v5405
        %v5407 = vand.u32 2147483647, %v4769
        %vm5408 = vcmp.le.f32.partialorder %v5407, 0.7853982
        %vm5409 = vcmp.lt.s32.totalorder %v4769, 0
        %v5410 = vand.u32 %v4769, 2139095040
        %v5411 = vshrl.u32 %v5410, 23
        %v5412 = vsub.s32 %v5411, 127
        %v5413 = vand.u32 2147483647, %v4769
        %v5414 = vand.u32 %v5413, 8388607
        %v5415 = vor.u32 %v5414, 8388608
        %v5416 = vsub.s32 0, %v5415
        %v5417 = vadd.s32 %v5412, 1
        %vm5418 = vcmp.gt.s32.totalorder %v5417, 0
        %v5419 = vsel %vm5418, %v5417, 0
        %v5420 = vshrl.u32 %v5419, 5
        %v5421 = vand.u32 %v5419, 31
        %v5422 = vsub.s32 32, %v5421
        %v5423 = vshrl.u32 683565275, %v5422
        %v5424 = vshll.u32 683565275, %v5421
        %v5425 = vshrl.u32 2475754826, %v5422
        %v5426 = vor.u32 %v5424, %v5425
        %v5427 = vshll.u32 2475754826, %v5421
        %v5428 = vshrl.u32 2131351028, %v5422
        %v5429 = vor.u32 %v5427, %v5428
        %v5430 = vshll.u32 2131351028, %v5421
        %v5431 = vshrl.u32 2102212464, %v5422
        %v5432 = vor.u32 %v5430, %v5431
        %v5433 = vshll.u32 2102212464, %v5421
        %v5434 = vshrl.u32 920167782, %v5422
        %v5435 = vor.u32 %v5433, %v5434
        %v5436 = vshll.u32 920167782, %v5421
        %v5437 = vshrl.u32 1326507024, %v5422
        %v5438 = vor.u32 %v5436, %v5437
        %vm5439 = vcmp.lt.s32.totalorder %v5420, 1
        %vm5440 = vcmp.lt.s32.totalorder %v5420, 2
        %vm5441 = vcmp.lt.s32.totalorder %v5420, 3
        %vm5442 = vcmp.lt.s32.totalorder %v5420, 4
        %v5443 = vsel %vm5439, %v5423, %v5426
        %v5444 = vsel %vm5442, %v5432, 2102212464
        %v5445 = vsel %vm5441, %v5429, %v5444
        %v5446 = vsel %vm5440, %v5443, %v5445
        %v5447 = vsel %vm5439, %v5426, %v5429
        %v5448 = vsel %vm5442, %v5435, 920167782
        %v5449 = vsel %vm5441, %v5432, %v5448
        %v5450 = vsel %vm5440, %v5447, %v5449
        %v5451 = vsel %vm5439, %v5429, %v5432
        %v5452 = vsel %vm5442, %v5438, 1326507024
        %v5453 = vsel %vm5441, %v5435, %v5452
        %v5454 = vsel %vm5440, %v5451, %v5453
        %v5455 = vshll.u32 %v5415, 8
        %v5456 = vmul.u32.u64.compose %v5455, %v5454
        %v5457 = vextract.low.u32 %v5456
        %v5458 = vextract.high.u32 %v5456
        %v5459 = vmul.u32.u64.compose %v5455, %v5450
        %v5460 = vextract.low.u32 %v5459
        %v5461 = vextract.high.u32 %v5459
        %v5462 = vmul.u32 %v5455, %v5446
        %v5463 = vadd.s32 %v5458, %v5460
        %vm5464 = vc.u32 %v5458, %v5460
        %v5465 = vadd.s32 %v5461, 1
        %v5466 = vsel %vm5464, %v5465, %v5461
        %v5467 = vadd.s32 %v5462, %v5466
        %v5468 = vadd.s32 %v5467, 536870912
        %v5469 = vshrl.u32 %v5468, 30
        %v5470 = vshll.u32 %v5469, 30
        %v5471 = vsub.s32 %v5467, %v5470
        %vm5472 = vcmp.lt.s32.totalorder %v5471, 0
        %v5473 = vsub.s32 0, %v5471
        %v5474 = vsel %vm5472, %v5473, %v5471
        %v5475 = vclz %v5474
        %v5476 = vsub.s32 %v5475, 2
        %vm5477 = vcmp.gt.s32.totalorder 0, %v5476
        %v5478 = vsel %vm5477, 0, %v5476
        %v5479 = vsub.s32 32, %v5478
        %v5480 = vshll.u32 %v5471, %v5478
        %v5481 = vshrl.u32 %v5463, %v5479
        %v5482 = vor.u32 %v5480, %v5481
        %v5483 = vsub.s32 4294967266, %v5478
        %v5484 = vadd.s32 %v5483, 127
        %v5485 = vshll.u32 %v5484, 23
        %v5486 = vor.u32 4788187, %v5485
        %v5487 = vand.u32 2147483647, %v5486
        %v5489 = vcvt.s32.f32 %v5482
        %v5490 = vmul.f32 %v5489, %v5487
        %v5491 = vxor.u32 %v5490, 2147483648
        %v5492 = vsel %vm5409, %v5491, %v5490
        %v5493 = vsub.s32 4, %v5469
        %v5494 = vsel %vm5409, %v5493, %v5469
        %v5495 = vsel %vm5408, %v4769, %v5492
        %v5496 = vsel %vm5408, 0, %v5494
        %v5497 = vcosq.f32.pop %v5495
        %v5498 = vsinq.f32.pop %v5495
        %vm5499 = vweird.f32 %v4769
        %v5500 = vadd.s32 %v5496, 3
        %v5501 = vand.u32 %v5500, 3
        %vm5502 = vcmp.lt.s32.totalorder %v5501, 2
        %vm5503 = vcmp.eq.s32.totalorder %v5501, 0
        %v5504 = vxor.u32 %v5498, 2147483648
        %v5505 = vsel %vm5503, %v5497, %v5504
        %vm5506 = vcmp.eq.s32.totalorder %v5501, 2
        %v5507 = vxor.u32 %v5497, 2147483648
        %v5508 = vsel %vm5506, %v5507, %v5498
        %v5509 = vsel %vm5502, %v5505, %v5508
        %v5510 = vsel %vm5499, nan, %v5509
        %v5511 = vand.u32 2147483647, %v4770
        %vm5512 = vcmp.le.f32.partialorder %v5511, 0.7853982
        %vm5513 = vcmp.lt.s32.totalorder %v4770, 0
        %v5514 = vand.u32 %v4770, 2139095040
        %v5515 = vshrl.u32 %v5514, 23
        %v5516 = vsub.s32 %v5515, 127
        %v5517 = vand.u32 2147483647, %v4770
        %v5518 = vand.u32 %v5517, 8388607
        %v5519 = vor.u32 %v5518, 8388608
        %v5520 = vsub.s32 0, %v5519
        %v5521 = vadd.s32 %v5516, 1
        %vm5522 = vcmp.gt.s32.totalorder %v5521, 0
        %v5523 = vsel %vm5522, %v5521, 0
        %v5524 = vshrl.u32 %v5523, 5
        %v5525 = vand.u32 %v5523, 31
        %v5526 = vsub.s32 32, %v5525
        %v5527 = vshrl.u32 683565275, %v5526
        %v5528 = vshll.u32 683565275, %v5525
        %v5529 = vshrl.u32 2475754826, %v5526
        %v5530 = vor.u32 %v5528, %v5529
        %v5531 = vshll.u32 2475754826, %v5525
        %v5532 = vshrl.u32 2131351028, %v5526
        %v5533 = vor.u32 %v5531, %v5532
        %v5534 = vshll.u32 2131351028, %v5525
        %v5535 = vshrl.u32 2102212464, %v5526
        %v5536 = vor.u32 %v5534, %v5535
        %v5537 = vshll.u32 2102212464, %v5525
        %v5538 = vshrl.u32 920167782, %v5526
        %v5539 = vor.u32 %v5537, %v5538
        %v5540 = vshll.u32 920167782, %v5525
        %v5541 = vshrl.u32 1326507024, %v5526
        %v5542 = vor.u32 %v5540, %v5541
        %vm5543 = vcmp.lt.s32.totalorder %v5524, 1
        %vm5544 = vcmp.lt.s32.totalorder %v5524, 2
        %vm5545 = vcmp.lt.s32.totalorder %v5524, 3
        %vm5546 = vcmp.lt.s32.totalorder %v5524, 4
        %v5547 = vsel %vm5543, %v5527, %v5530
        %v5548 = vsel %vm5546, %v5536, 2102212464
        %v5549 = vsel %vm5545, %v5533, %v5548
        %v5550 = vsel %vm5544, %v5547, %v5549
        %v5551 = vsel %vm5543, %v5530, %v5533
        %v5552 = vsel %vm5546, %v5539, 920167782
        %v5553 = vsel %vm5545, %v5536, %v5552
        %v5554 = vsel %vm5544, %v5551, %v5553
        %v5555 = vsel %vm5543, %v5533, %v5536
        %v5556 = vsel %vm5546, %v5542, 1326507024
        %v5557 = vsel %vm5545, %v5539, %v5556
        %v5558 = vsel %vm5544, %v5555, %v5557
        %v5559 = vshll.u32 %v5519, 8
        %v5560 = vmul.u32.u64.compose %v5559, %v5558
        %v5561 = vextract.low.u32 %v5560
        %v5562 = vextract.high.u32 %v5560
        %v5563 = vmul.u32.u64.compose %v5559, %v5554
        %v5564 = vextract.low.u32 %v5563
        %v5565 = vextract.high.u32 %v5563
        %v5566 = vmul.u32 %v5559, %v5550
        %v5567 = vadd.s32 %v5562, %v5564
        %vm5568 = vc.u32 %v5562, %v5564
        %v5569 = vadd.s32 %v5565, 1
        %v5570 = vsel %vm5568, %v5569, %v5565
        %v5571 = vadd.s32 %v5566, %v5570
        %v5572 = vadd.s32 %v5571, 536870912
        %v5573 = vshrl.u32 %v5572, 30
        %v5574 = vshll.u32 %v5573, 30
        %v5575 = vsub.s32 %v5571, %v5574
        %vm5576 = vcmp.lt.s32.totalorder %v5575, 0
        %v5577 = vsub.s32 0, %v5575
        %v5578 = vsel %vm5576, %v5577, %v5575
        %v5579 = vclz %v5578
        %v5580 = vsub.s32 %v5579, 2
        %vm5581 = vcmp.gt.s32.totalorder 0, %v5580
        %v5582 = vsel %vm5581, 0, %v5580
        %v5583 = vsub.s32 32, %v5582
        %v5584 = vshll.u32 %v5575, %v5582
        %v5585 = vshrl.u32 %v5567, %v5583
        %v5586 = vor.u32 %v5584, %v5585
        %v5587 = vsub.s32 4294967266, %v5582
        %v5588 = vadd.s32 %v5587, 127
        %v5589 = vshll.u32 %v5588, 23
        %v5590 = vor.u32 4788187, %v5589
        %v5591 = vand.u32 2147483647, %v5590
        %v5593 = vcvt.s32.f32 %v5586
        %v5594 = vmul.f32 %v5593, %v5591
        %v5595 = vxor.u32 %v5594, 2147483648
        %v5596 = vsel %vm5513, %v5595, %v5594
        %v5597 = vsub.s32 4, %v5573
        %v5598 = vsel %vm5513, %v5597, %v5573
        %v5599 = vsel %vm5512, %v4770, %v5596
        %v5600 = vsel %vm5512, 0, %v5598
        %v5601 = vcosq.f32.pop %v5599
        %v5602 = vsinq.f32.pop %v5599
        %vm5603 = vweird.f32 %v4770
        %v5604 = vadd.s32 %v5600, 3
        %v5605 = vand.u32 %v5604, 3
        %vm5606 = vcmp.lt.s32.totalorder %v5605, 2
        %vm5607 = vcmp.eq.s32.totalorder %v5605, 0
        %v5608 = vxor.u32 %v5602, 2147483648
        %v5609 = vsel %vm5607, %v5601, %v5608
        %vm5610 = vcmp.eq.s32.totalorder %v5605, 2
        %v5611 = vxor.u32 %v5601, 2147483648
        %v5612 = vsel %vm5610, %v5611, %v5602
        %v5613 = vsel %vm5606, %v5609, %v5612
        %v5614 = vsel %vm5603, nan, %v5613
        %v5615 = vand.u32 2147483647, %v4771
        %vm5616 = vcmp.le.f32.partialorder %v5615, 0.7853982
        %vm5617 = vcmp.lt.s32.totalorder %v4771, 0
        %v5618 = vand.u32 %v4771, 2139095040
        %v5619 = vshrl.u32 %v5618, 23
        %v5620 = vsub.s32 %v5619, 127
        %v5621 = vand.u32 2147483647, %v4771
        %v5622 = vand.u32 %v5621, 8388607
        %v5623 = vor.u32 %v5622, 8388608
        %v5624 = vsub.s32 0, %v5623
        %v5625 = vadd.s32 %v5620, 1
        %vm5626 = vcmp.gt.s32.totalorder %v5625, 0
        %v5627 = vsel %vm5626, %v5625, 0
        %v5628 = vshrl.u32 %v5627, 5
        %v5629 = vand.u32 %v5627, 31
        %v5630 = vsub.s32 32, %v5629
        %v5631 = vshrl.u32 683565275, %v5630
        %v5632 = vshll.u32 683565275, %v5629
        %v5633 = vshrl.u32 2475754826, %v5630
        %v5634 = vor.u32 %v5632, %v5633
        %v5635 = vshll.u32 2475754826, %v5629
        %v5636 = vshrl.u32 2131351028, %v5630
        %v5637 = vor.u32 %v5635, %v5636
        %v5638 = vshll.u32 2131351028, %v5629
        %v5639 = vshrl.u32 2102212464, %v5630
        %v5640 = vor.u32 %v5638, %v5639
        %v5641 = vshll.u32 2102212464, %v5629
        %v5642 = vshrl.u32 920167782, %v5630
        %v5643 = vor.u32 %v5641, %v5642
        %v5644 = vshll.u32 920167782, %v5629
        %v5645 = vshrl.u32 1326507024, %v5630
        %v5646 = vor.u32 %v5644, %v5645
        %vm5647 = vcmp.lt.s32.totalorder %v5628, 1
        %vm5648 = vcmp.lt.s32.totalorder %v5628, 2
        %vm5649 = vcmp.lt.s32.totalorder %v5628, 3
        %vm5650 = vcmp.lt.s32.totalorder %v5628, 4
        %v5651 = vsel %vm5647, %v5631, %v5634
        %v5652 = vsel %vm5650, %v5640, 2102212464
        %v5653 = vsel %vm5649, %v5637, %v5652
        %v5654 = vsel %vm5648, %v5651, %v5653
        %v5655 = vsel %vm5647, %v5634, %v5637
        %v5656 = vsel %vm5650, %v5643, 920167782
        %v5657 = vsel %vm5649, %v5640, %v5656
        %v5658 = vsel %vm5648, %v5655, %v5657
        %v5659 = vsel %vm5647, %v5637, %v5640
        %v5660 = vsel %vm5650, %v5646, 1326507024
        %v5661 = vsel %vm5649, %v5643, %v5660
        %v5662 = vsel %vm5648, %v5659, %v5661
        %v5663 = vshll.u32 %v5623, 8
        %v5664 = vmul.u32.u64.compose %v5663, %v5662
        %v5665 = vextract.low.u32 %v5664
        %v5666 = vextract.high.u32 %v5664
        %v5667 = vmul.u32.u64.compose %v5663, %v5658
        %v5668 = vextract.low.u32 %v5667
        %v5669 = vextract.high.u32 %v5667
        %v5670 = vmul.u32 %v5663, %v5654
        %v5671 = vadd.s32 %v5666, %v5668
        %vm5672 = vc.u32 %v5666, %v5668
        %v5673 = vadd.s32 %v5669, 1
        %v5674 = vsel %vm5672, %v5673, %v5669
        %v5675 = vadd.s32 %v5670, %v5674
        %v5676 = vadd.s32 %v5675, 536870912
        %v5677 = vshrl.u32 %v5676, 30
        %v5678 = vshll.u32 %v5677, 30
        %v5679 = vsub.s32 %v5675, %v5678
        %vm5680 = vcmp.lt.s32.totalorder %v5679, 0
        %v5681 = vsub.s32 0, %v5679
        %v5682 = vsel %vm5680, %v5681, %v5679
        %v5683 = vclz %v5682
        %v5684 = vsub.s32 %v5683, 2
        %vm5685 = vcmp.gt.s32.totalorder 0, %v5684
        %v5686 = vsel %vm5685, 0, %v5684
        %v5687 = vsub.s32 32, %v5686
        %v5688 = vshll.u32 %v5679, %v5686
        %v5689 = vshrl.u32 %v5671, %v5687
        %v5690 = vor.u32 %v5688, %v5689
        %v5691 = vsub.s32 4294967266, %v5686
        %v5692 = vadd.s32 %v5691, 127
        %v5693 = vshll.u32 %v5692, 23
        %v5694 = vor.u32 4788187, %v5693
        %v5695 = vand.u32 2147483647, %v5694
        %v5697 = vcvt.s32.f32 %v5690
        %v5698 = vmul.f32 %v5697, %v5695
        %v5699 = vxor.u32 %v5698, 2147483648
        %v5700 = vsel %vm5617, %v5699, %v5698
        %v5701 = vsub.s32 4, %v5677
        %v5702 = vsel %vm5617, %v5701, %v5677
        %v5703 = vsel %vm5616, %v4771, %v5700
        %v5704 = vsel %vm5616, 0, %v5702
        %v5705 = vcosq.f32.pop %v5703
        %v5706 = vsinq.f32.pop %v5703
        %vm5707 = vweird.f32 %v4771
        %v5708 = vadd.s32 %v5704, 3
        %v5709 = vand.u32 %v5708, 3
        %vm5710 = vcmp.lt.s32.totalorder %v5709, 2
        %vm5711 = vcmp.eq.s32.totalorder %v5709, 0
        %v5712 = vxor.u32 %v5706, 2147483648
        %v5713 = vsel %vm5711, %v5705, %v5712
        %vm5714 = vcmp.eq.s32.totalorder %v5709, 2
        %v5715 = vxor.u32 %v5705, 2147483648
        %v5716 = vsel %vm5714, %v5715, %v5706
        %v5717 = vsel %vm5710, %v5713, %v5716
        %v5718 = vsel %vm5707, nan, %v5717
        %v5719 = vand.u32 2147483647, %v4772
        %vm5720 = vcmp.le.f32.partialorder %v5719, 0.7853982
        %vm5721 = vcmp.lt.s32.totalorder %v4772, 0
        %v5722 = vand.u32 %v4772, 2139095040
        %v5723 = vshrl.u32 %v5722, 23
        %v5724 = vsub.s32 %v5723, 127
        %v5725 = vand.u32 2147483647, %v4772
        %v5726 = vand.u32 %v5725, 8388607
        %v5727 = vor.u32 %v5726, 8388608
        %v5728 = vsub.s32 0, %v5727
        %v5729 = vadd.s32 %v5724, 1
        %vm5730 = vcmp.gt.s32.totalorder %v5729, 0
        %v5731 = vsel %vm5730, %v5729, 0
        %v5732 = vshrl.u32 %v5731, 5
        %v5733 = vand.u32 %v5731, 31
        %v5734 = vsub.s32 32, %v5733
        %v5735 = vshrl.u32 683565275, %v5734
        %v5736 = vshll.u32 683565275, %v5733
        %v5737 = vshrl.u32 2475754826, %v5734
        %v5738 = vor.u32 %v5736, %v5737
        %v5739 = vshll.u32 2475754826, %v5733
        %v5740 = vshrl.u32 2131351028, %v5734
        %v5741 = vor.u32 %v5739, %v5740
        %v5742 = vshll.u32 2131351028, %v5733
        %v5743 = vshrl.u32 2102212464, %v5734
        %v5744 = vor.u32 %v5742, %v5743
        %v5745 = vshll.u32 2102212464, %v5733
        %v5746 = vshrl.u32 920167782, %v5734
        %v5747 = vor.u32 %v5745, %v5746
        %v5748 = vshll.u32 920167782, %v5733
        %v5749 = vshrl.u32 1326507024, %v5734
        %v5750 = vor.u32 %v5748, %v5749
        %vm5751 = vcmp.lt.s32.totalorder %v5732, 1
        %vm5752 = vcmp.lt.s32.totalorder %v5732, 2
        %vm5753 = vcmp.lt.s32.totalorder %v5732, 3
        %vm5754 = vcmp.lt.s32.totalorder %v5732, 4
        %v5755 = vsel %vm5751, %v5735, %v5738
        %v5756 = vsel %vm5754, %v5744, 2102212464
        %v5757 = vsel %vm5753, %v5741, %v5756
        %v5758 = vsel %vm5752, %v5755, %v5757
        %v5759 = vsel %vm5751, %v5738, %v5741
        %v5760 = vsel %vm5754, %v5747, 920167782
        %v5761 = vsel %vm5753, %v5744, %v5760
        %v5762 = vsel %vm5752, %v5759, %v5761
        %v5763 = vsel %vm5751, %v5741, %v5744
        %v5764 = vsel %vm5754, %v5750, 1326507024
        %v5765 = vsel %vm5753, %v5747, %v5764
        %v5766 = vsel %vm5752, %v5763, %v5765
        %v5767 = vshll.u32 %v5727, 8
        %v5768 = vmul.u32.u64.compose %v5767, %v5766
        %v5769 = vextract.low.u32 %v5768
        %v5770 = vextract.high.u32 %v5768
        %v5771 = vmul.u32.u64.compose %v5767, %v5762
        %v5772 = vextract.low.u32 %v5771
        %v5773 = vextract.high.u32 %v5771
        %v5774 = vmul.u32 %v5767, %v5758
        %v5775 = vadd.s32 %v5770, %v5772
        %vm5776 = vc.u32 %v5770, %v5772
        %v5777 = vadd.s32 %v5773, 1
        %v5778 = vsel %vm5776, %v5777, %v5773
        %v5779 = vadd.s32 %v5774, %v5778
        %v5780 = vadd.s32 %v5779, 536870912
        %v5781 = vshrl.u32 %v5780, 30
        %v5782 = vshll.u32 %v5781, 30
        %v5783 = vsub.s32 %v5779, %v5782
        %vm5784 = vcmp.lt.s32.totalorder %v5783, 0
        %v5785 = vsub.s32 0, %v5783
        %v5786 = vsel %vm5784, %v5785, %v5783
        %v5787 = vclz %v5786
        %v5788 = vsub.s32 %v5787, 2
        %vm5789 = vcmp.gt.s32.totalorder 0, %v5788
        %v5790 = vsel %vm5789, 0, %v5788
        %v5791 = vsub.s32 32, %v5790
        %v5792 = vshll.u32 %v5783, %v5790
        %v5793 = vshrl.u32 %v5775, %v5791
        %v5794 = vor.u32 %v5792, %v5793
        %v5795 = vsub.s32 4294967266, %v5790
        %v5796 = vadd.s32 %v5795, 127
        %v5797 = vshll.u32 %v5796, 23
        %v5798 = vor.u32 4788187, %v5797
        %v5799 = vand.u32 2147483647, %v5798
        %v5801 = vcvt.s32.f32 %v5794
        %v5802 = vmul.f32 %v5801, %v5799
        %v5803 = vxor.u32 %v5802, 2147483648
        %v5804 = vsel %vm5721, %v5803, %v5802
        %v5805 = vsub.s32 4, %v5781
        %v5806 = vsel %vm5721, %v5805, %v5781
        %v5807 = vsel %vm5720, %v4772, %v5804
        %v5808 = vsel %vm5720, 0, %v5806
        %v5809 = vcosq.f32.pop %v5807
        %v5810 = vsinq.f32.pop %v5807
        %vm5811 = vweird.f32 %v4772
        %v5812 = vadd.s32 %v5808, 3
        %v5813 = vand.u32 %v5812, 3
        %vm5814 = vcmp.lt.s32.totalorder %v5813, 2
        %vm5815 = vcmp.eq.s32.totalorder %v5813, 0
        %v5816 = vxor.u32 %v5810, 2147483648
        %v5817 = vsel %vm5815, %v5809, %v5816
        %vm5818 = vcmp.eq.s32.totalorder %v5813, 2
        %v5819 = vxor.u32 %v5809, 2147483648
        %v5820 = vsel %vm5818, %v5819, %v5810
        %v5821 = vsel %vm5814, %v5817, %v5820
        %v5822 = vsel %vm5811, nan, %v5821
        %v5823 = vand.u32 2147483647, %v4773
        %vm5824 = vcmp.le.f32.partialorder %v5823, 0.7853982
        %vm5825 = vcmp.lt.s32.totalorder %v4773, 0
        %v5826 = vand.u32 %v4773, 2139095040
        %v5827 = vshrl.u32 %v5826, 23
        %v5828 = vsub.s32 %v5827, 127
        %v5829 = vand.u32 2147483647, %v4773
        %v5830 = vand.u32 %v5829, 8388607
        %v5831 = vor.u32 %v5830, 8388608
        %v5832 = vsub.s32 0, %v5831
        %v5833 = vadd.s32 %v5828, 1
        %vm5834 = vcmp.gt.s32.totalorder %v5833, 0
        %v5835 = vsel %vm5834, %v5833, 0
        %v5836 = vshrl.u32 %v5835, 5
        %v5837 = vand.u32 %v5835, 31
        %v5838 = vsub.s32 32, %v5837
        %v5839 = vshrl.u32 683565275, %v5838
        %v5840 = vshll.u32 683565275, %v5837
        %v5841 = vshrl.u32 2475754826, %v5838
        %v5842 = vor.u32 %v5840, %v5841
        %v5843 = vshll.u32 2475754826, %v5837
        %v5844 = vshrl.u32 2131351028, %v5838
        %v5845 = vor.u32 %v5843, %v5844
        %v5846 = vshll.u32 2131351028, %v5837
        %v5847 = vshrl.u32 2102212464, %v5838
        %v5848 = vor.u32 %v5846, %v5847
        %v5849 = vshll.u32 2102212464, %v5837
        %v5850 = vshrl.u32 920167782, %v5838
        %v5851 = vor.u32 %v5849, %v5850
        %v5852 = vshll.u32 920167782, %v5837
        %v5853 = vshrl.u32 1326507024, %v5838
        %v5854 = vor.u32 %v5852, %v5853
        %vm5855 = vcmp.lt.s32.totalorder %v5836, 1
        %vm5856 = vcmp.lt.s32.totalorder %v5836, 2
        %vm5857 = vcmp.lt.s32.totalorder %v5836, 3
        %vm5858 = vcmp.lt.s32.totalorder %v5836, 4
        %v5859 = vsel %vm5855, %v5839, %v5842
        %v5860 = vsel %vm5858, %v5848, 2102212464
        %v5861 = vsel %vm5857, %v5845, %v5860
        %v5862 = vsel %vm5856, %v5859, %v5861
        %v5863 = vsel %vm5855, %v5842, %v5845
        %v5864 = vsel %vm5858, %v5851, 920167782
        %v5865 = vsel %vm5857, %v5848, %v5864
        %v5866 = vsel %vm5856, %v5863, %v5865
        %v5867 = vsel %vm5855, %v5845, %v5848
        %v5868 = vsel %vm5858, %v5854, 1326507024
        %v5869 = vsel %vm5857, %v5851, %v5868
        %v5870 = vsel %vm5856, %v5867, %v5869
        %v5871 = vshll.u32 %v5831, 8
        %v5872 = vmul.u32.u64.compose %v5871, %v5870
        %v5873 = vextract.low.u32 %v5872
        %v5874 = vextract.high.u32 %v5872
        %v5875 = vmul.u32.u64.compose %v5871, %v5866
        %v5876 = vextract.low.u32 %v5875
        %v5877 = vextract.high.u32 %v5875
        %v5878 = vmul.u32 %v5871, %v5862
        %v5879 = vadd.s32 %v5874, %v5876
        %vm5880 = vc.u32 %v5874, %v5876
        %v5881 = vadd.s32 %v5877, 1
        %v5882 = vsel %vm5880, %v5881, %v5877
        %v5883 = vadd.s32 %v5878, %v5882
        %v5884 = vadd.s32 %v5883, 536870912
        %v5885 = vshrl.u32 %v5884, 30
        %v5886 = vshll.u32 %v5885, 30
        %v5887 = vsub.s32 %v5883, %v5886
        %vm5888 = vcmp.lt.s32.totalorder %v5887, 0
        %v5889 = vsub.s32 0, %v5887
        %v5890 = vsel %vm5888, %v5889, %v5887
        %v5891 = vclz %v5890
        %v5892 = vsub.s32 %v5891, 2
        %vm5893 = vcmp.gt.s32.totalorder 0, %v5892
        %v5894 = vsel %vm5893, 0, %v5892
        %v5895 = vsub.s32 32, %v5894
        %v5896 = vshll.u32 %v5887, %v5894
        %v5897 = vshrl.u32 %v5879, %v5895
        %v5898 = vor.u32 %v5896, %v5897
        %v5899 = vsub.s32 4294967266, %v5894
        %v5900 = vadd.s32 %v5899, 127
        %v5901 = vshll.u32 %v5900, 23
        %v5902 = vor.u32 4788187, %v5901
        %v5903 = vand.u32 2147483647, %v5902
        %v5905 = vcvt.s32.f32 %v5898
        %v5906 = vmul.f32 %v5905, %v5903
        %v5907 = vxor.u32 %v5906, 2147483648
        %v5908 = vsel %vm5825, %v5907, %v5906
        %v5909 = vsub.s32 4, %v5885
        %v5910 = vsel %vm5825, %v5909, %v5885
        %v5911 = vsel %vm5824, %v4773, %v5908
        %v5912 = vsel %vm5824, 0, %v5910
        %v5913 = vcosq.f32.pop %v5911
        %v5914 = vsinq.f32.pop %v5911
        %vm5915 = vweird.f32 %v4773
        %v5916 = vadd.s32 %v5912, 3
        %v5917 = vand.u32 %v5916, 3
        %vm5918 = vcmp.lt.s32.totalorder %v5917, 2
        %vm5919 = vcmp.eq.s32.totalorder %v5917, 0
        %v5920 = vxor.u32 %v5914, 2147483648
        %v5921 = vsel %vm5919, %v5913, %v5920
        %vm5922 = vcmp.eq.s32.totalorder %v5917, 2
        %v5923 = vxor.u32 %v5913, 2147483648
        %v5924 = vsel %vm5922, %v5923, %v5914
        %v5925 = vsel %vm5918, %v5921, %v5924
        %v5926 = vsel %vm5915, nan, %v5925
        %v5927 = vand.u32 2147483647, %v4774
        %vm5928 = vcmp.le.f32.partialorder %v5927, 0.7853982
        %vm5929 = vcmp.lt.s32.totalorder %v4774, 0
        %v5930 = vand.u32 %v4774, 2139095040
        %v5931 = vshrl.u32 %v5930, 23
        %v5932 = vsub.s32 %v5931, 127
        %v5933 = vand.u32 2147483647, %v4774
        %v5934 = vand.u32 %v5933, 8388607
        %v5935 = vor.u32 %v5934, 8388608
        %v5936 = vsub.s32 0, %v5935
        %v5937 = vadd.s32 %v5932, 1
        %vm5938 = vcmp.gt.s32.totalorder %v5937, 0
        %v5939 = vsel %vm5938, %v5937, 0
        %v5940 = vshrl.u32 %v5939, 5
        %v5941 = vand.u32 %v5939, 31
        %v5942 = vsub.s32 32, %v5941
        %v5943 = vshrl.u32 683565275, %v5942
        %v5944 = vshll.u32 683565275, %v5941
        %v5945 = vshrl.u32 2475754826, %v5942
        %v5946 = vor.u32 %v5944, %v5945
        %v5947 = vshll.u32 2475754826, %v5941
        %v5948 = vshrl.u32 2131351028, %v5942
        %v5949 = vor.u32 %v5947, %v5948
        %v5950 = vshll.u32 2131351028, %v5941
        %v5951 = vshrl.u32 2102212464, %v5942
        %v5952 = vor.u32 %v5950, %v5951
        %v5953 = vshll.u32 2102212464, %v5941
        %v5954 = vshrl.u32 920167782, %v5942
        %v5955 = vor.u32 %v5953, %v5954
        %v5956 = vshll.u32 920167782, %v5941
        %v5957 = vshrl.u32 1326507024, %v5942
        %v5958 = vor.u32 %v5956, %v5957
        %vm5959 = vcmp.lt.s32.totalorder %v5940, 1
        %vm5960 = vcmp.lt.s32.totalorder %v5940, 2
        %vm5961 = vcmp.lt.s32.totalorder %v5940, 3
        %vm5962 = vcmp.lt.s32.totalorder %v5940, 4
        %v5963 = vsel %vm5959, %v5943, %v5946
        %v5964 = vsel %vm5962, %v5952, 2102212464
        %v5965 = vsel %vm5961, %v5949, %v5964
        %v5966 = vsel %vm5960, %v5963, %v5965
        %v5967 = vsel %vm5959, %v5946, %v5949
        %v5968 = vsel %vm5962, %v5955, 920167782
        %v5969 = vsel %vm5961, %v5952, %v5968
        %v5970 = vsel %vm5960, %v5967, %v5969
        %v5971 = vsel %vm5959, %v5949, %v5952
        %v5972 = vsel %vm5962, %v5958, 1326507024
        %v5973 = vsel %vm5961, %v5955, %v5972
        %v5974 = vsel %vm5960, %v5971, %v5973
        %v5975 = vshll.u32 %v5935, 8
        %v5976 = vmul.u32.u64.compose %v5975, %v5974
        %v5977 = vextract.low.u32 %v5976
        %v5978 = vextract.high.u32 %v5976
        %v5979 = vmul.u32.u64.compose %v5975, %v5970
        %v5980 = vextract.low.u32 %v5979
        %v5981 = vextract.high.u32 %v5979
        %v5982 = vmul.u32 %v5975, %v5966
        %v5983 = vadd.s32 %v5978, %v5980
        %vm5984 = vc.u32 %v5978, %v5980
        %v5985 = vadd.s32 %v5981, 1
        %v5986 = vsel %vm5984, %v5985, %v5981
        %v5987 = vadd.s32 %v5982, %v5986
        %v5988 = vadd.s32 %v5987, 536870912
        %v5989 = vshrl.u32 %v5988, 30
        %v5990 = vshll.u32 %v5989, 30
        %v5991 = vsub.s32 %v5987, %v5990
        %vm5992 = vcmp.lt.s32.totalorder %v5991, 0
        %v5993 = vsub.s32 0, %v5991
        %v5994 = vsel %vm5992, %v5993, %v5991
        %v5995 = vclz %v5994
        %v5996 = vsub.s32 %v5995, 2
        %vm5997 = vcmp.gt.s32.totalorder 0, %v5996
        %v5998 = vsel %vm5997, 0, %v5996
        %v5999 = vsub.s32 32, %v5998
        %v6000 = vshll.u32 %v5991, %v5998
        %v6001 = vshrl.u32 %v5983, %v5999
        %v6002 = vor.u32 %v6000, %v6001
        %v6003 = vsub.s32 4294967266, %v5998
        %v6004 = vadd.s32 %v6003, 127
        %v6005 = vshll.u32 %v6004, 23
        %v6006 = vor.u32 4788187, %v6005
        %v6007 = vand.u32 2147483647, %v6006
        %v6009 = vcvt.s32.f32 %v6002
        %v6010 = vmul.f32 %v6009, %v6007
        %v6011 = vxor.u32 %v6010, 2147483648
        %v6012 = vsel %vm5929, %v6011, %v6010
        %v6013 = vsub.s32 4, %v5989
        %v6014 = vsel %vm5929, %v6013, %v5989
        %v6015 = vsel %vm5928, %v4774, %v6012
        %v6016 = vsel %vm5928, 0, %v6014
        %v6017 = vcosq.f32.pop %v6015
        %v6018 = vsinq.f32.pop %v6015
        %vm6019 = vweird.f32 %v4774
        %v6020 = vadd.s32 %v6016, 3
        %v6021 = vand.u32 %v6020, 3
        %vm6022 = vcmp.lt.s32.totalorder %v6021, 2
        %vm6023 = vcmp.eq.s32.totalorder %v6021, 0
        %v6024 = vxor.u32 %v6018, 2147483648
        %v6025 = vsel %vm6023, %v6017, %v6024
        %vm6026 = vcmp.eq.s32.totalorder %v6021, 2
        %v6027 = vxor.u32 %v6017, 2147483648
        %v6028 = vsel %vm6026, %v6027, %v6018
        %v6029 = vsel %vm6022, %v6025, %v6028
        %v6030 = vsel %vm6019, nan, %v6029
        %v6031 = vand.u32 2147483647, %v4775
        %vm6032 = vcmp.le.f32.partialorder %v6031, 0.7853982
        %vm6033 = vcmp.lt.s32.totalorder %v4775, 0
        %v6034 = vand.u32 %v4775, 2139095040
        %v6035 = vshrl.u32 %v6034, 23
        %v6036 = vsub.s32 %v6035, 127
        %v6037 = vand.u32 2147483647, %v4775
        %v6038 = vand.u32 %v6037, 8388607
        %v6039 = vor.u32 %v6038, 8388608
        %v6040 = vsub.s32 0, %v6039
        %v6041 = vadd.s32 %v6036, 1
        %vm6042 = vcmp.gt.s32.totalorder %v6041, 0
        %v6043 = vsel %vm6042, %v6041, 0
        %v6044 = vshrl.u32 %v6043, 5
        %v6045 = vand.u32 %v6043, 31
        %v6046 = vsub.s32 32, %v6045
        %v6047 = vshrl.u32 683565275, %v6046
        %v6048 = vshll.u32 683565275, %v6045
        %v6049 = vshrl.u32 2475754826, %v6046
        %v6050 = vor.u32 %v6048, %v6049
        %v6051 = vshll.u32 2475754826, %v6045
        %v6052 = vshrl.u32 2131351028, %v6046
        %v6053 = vor.u32 %v6051, %v6052
        %v6054 = vshll.u32 2131351028, %v6045
        %v6055 = vshrl.u32 2102212464, %v6046
        %v6056 = vor.u32 %v6054, %v6055
        %v6057 = vshll.u32 2102212464, %v6045
        %v6058 = vshrl.u32 920167782, %v6046
        %v6059 = vor.u32 %v6057, %v6058
        %v6060 = vshll.u32 920167782, %v6045
        %v6061 = vshrl.u32 1326507024, %v6046
        %v6062 = vor.u32 %v6060, %v6061
        %vm6063 = vcmp.lt.s32.totalorder %v6044, 1
        %vm6064 = vcmp.lt.s32.totalorder %v6044, 2
        %vm6065 = vcmp.lt.s32.totalorder %v6044, 3
        %vm6066 = vcmp.lt.s32.totalorder %v6044, 4
        %v6067 = vsel %vm6063, %v6047, %v6050
        %v6068 = vsel %vm6066, %v6056, 2102212464
        %v6069 = vsel %vm6065, %v6053, %v6068
        %v6070 = vsel %vm6064, %v6067, %v6069
        %v6071 = vsel %vm6063, %v6050, %v6053
        %v6072 = vsel %vm6066, %v6059, 920167782
        %v6073 = vsel %vm6065, %v6056, %v6072
        %v6074 = vsel %vm6064, %v6071, %v6073
        %v6075 = vsel %vm6063, %v6053, %v6056
        %v6076 = vsel %vm6066, %v6062, 1326507024
        %v6077 = vsel %vm6065, %v6059, %v6076
        %v6078 = vsel %vm6064, %v6075, %v6077
        %v6079 = vshll.u32 %v6039, 8
        %v6080 = vmul.u32.u64.compose %v6079, %v6078
        %v6081 = vextract.low.u32 %v6080
        %v6082 = vextract.high.u32 %v6080
        %v6083 = vmul.u32.u64.compose %v6079, %v6074
        %v6084 = vextract.low.u32 %v6083
        %v6085 = vextract.high.u32 %v6083
        %v6086 = vmul.u32 %v6079, %v6070
        %v6087 = vadd.s32 %v6082, %v6084
        %vm6088 = vc.u32 %v6082, %v6084
        %v6089 = vadd.s32 %v6085, 1
        %v6090 = vsel %vm6088, %v6089, %v6085
        %v6091 = vadd.s32 %v6086, %v6090
        %v6092 = vadd.s32 %v6091, 536870912
        %v6093 = vshrl.u32 %v6092, 30
        %v6094 = vshll.u32 %v6093, 30
        %v6095 = vsub.s32 %v6091, %v6094
        %vm6096 = vcmp.lt.s32.totalorder %v6095, 0
        %v6097 = vsub.s32 0, %v6095
        %v6098 = vsel %vm6096, %v6097, %v6095
        %v6099 = vclz %v6098
        %v6100 = vsub.s32 %v6099, 2
        %vm6101 = vcmp.gt.s32.totalorder 0, %v6100
        %v6102 = vsel %vm6101, 0, %v6100
        %v6103 = vsub.s32 32, %v6102
        %v6104 = vshll.u32 %v6095, %v6102
        %v6105 = vshrl.u32 %v6087, %v6103
        %v6106 = vor.u32 %v6104, %v6105
        %v6107 = vsub.s32 4294967266, %v6102
        %v6108 = vadd.s32 %v6107, 127
        %v6109 = vshll.u32 %v6108, 23
        %v6110 = vor.u32 4788187, %v6109
        %v6111 = vand.u32 2147483647, %v6110
        %v6113 = vcvt.s32.f32 %v6106
        %v6114 = vmul.f32 %v6113, %v6111
        %v6115 = vxor.u32 %v6114, 2147483648
        %v6116 = vsel %vm6033, %v6115, %v6114
        %v6117 = vsub.s32 4, %v6093
        %v6118 = vsel %vm6033, %v6117, %v6093
        %v6119 = vsel %vm6032, %v4775, %v6116
        %v6120 = vsel %vm6032, 0, %v6118
        %v6121 = vcosq.f32.pop %v6119
        %v6122 = vsinq.f32.pop %v6119
        %vm6123 = vweird.f32 %v4775
        %v6124 = vadd.s32 %v6120, 3
        %v6125 = vand.u32 %v6124, 3
        %vm6126 = vcmp.lt.s32.totalorder %v6125, 2
        %vm6127 = vcmp.eq.s32.totalorder %v6125, 0
        %v6128 = vxor.u32 %v6122, 2147483648
        %v6129 = vsel %vm6127, %v6121, %v6128
        %vm6130 = vcmp.eq.s32.totalorder %v6125, 2
        %v6131 = vxor.u32 %v6121, 2147483648
        %v6132 = vsel %vm6130, %v6131, %v6122
        %v6133 = vsel %vm6126, %v6129, %v6132
        %v6134 = vsel %vm6123, nan, %v6133
        %v6135 = vand.u32 2147483647, %v4776
        %vm6136 = vcmp.le.f32.partialorder %v6135, 0.7853982
        %vm6137 = vcmp.lt.s32.totalorder %v4776, 0
        %v6138 = vand.u32 %v4776, 2139095040
        %v6139 = vshrl.u32 %v6138, 23
        %v6140 = vsub.s32 %v6139, 127
        %v6141 = vand.u32 2147483647, %v4776
        %v6142 = vand.u32 %v6141, 8388607
        %v6143 = vor.u32 %v6142, 8388608
        %v6144 = vsub.s32 0, %v6143
        %v6145 = vadd.s32 %v6140, 1
        %vm6146 = vcmp.gt.s32.totalorder %v6145, 0
        %v6147 = vsel %vm6146, %v6145, 0
        %v6148 = vshrl.u32 %v6147, 5
        %v6149 = vand.u32 %v6147, 31
        %v6150 = vsub.s32 32, %v6149
        %v6151 = vshrl.u32 683565275, %v6150
        %v6152 = vshll.u32 683565275, %v6149
        %v6153 = vshrl.u32 2475754826, %v6150
        %v6154 = vor.u32 %v6152, %v6153
        %v6155 = vshll.u32 2475754826, %v6149
        %v6156 = vshrl.u32 2131351028, %v6150
        %v6157 = vor.u32 %v6155, %v6156
        %v6158 = vshll.u32 2131351028, %v6149
        %v6159 = vshrl.u32 2102212464, %v6150
        %v6160 = vor.u32 %v6158, %v6159
        %v6161 = vshll.u32 2102212464, %v6149
        %v6162 = vshrl.u32 920167782, %v6150
        %v6163 = vor.u32 %v6161, %v6162
        %v6164 = vshll.u32 920167782, %v6149
        %v6165 = vshrl.u32 1326507024, %v6150
        %v6166 = vor.u32 %v6164, %v6165
        %vm6167 = vcmp.lt.s32.totalorder %v6148, 1
        %vm6168 = vcmp.lt.s32.totalorder %v6148, 2
        %vm6169 = vcmp.lt.s32.totalorder %v6148, 3
        %vm6170 = vcmp.lt.s32.totalorder %v6148, 4
        %v6171 = vsel %vm6167, %v6151, %v6154
        %v6172 = vsel %vm6170, %v6160, 2102212464
        %v6173 = vsel %vm6169, %v6157, %v6172
        %v6174 = vsel %vm6168, %v6171, %v6173
        %v6175 = vsel %vm6167, %v6154, %v6157
        %v6176 = vsel %vm6170, %v6163, 920167782
        %v6177 = vsel %vm6169, %v6160, %v6176
        %v6178 = vsel %vm6168, %v6175, %v6177
        %v6179 = vsel %vm6167, %v6157, %v6160
        %v6180 = vsel %vm6170, %v6166, 1326507024
        %v6181 = vsel %vm6169, %v6163, %v6180
        %v6182 = vsel %vm6168, %v6179, %v6181
        %v6183 = vshll.u32 %v6143, 8
        %v6184 = vmul.u32.u64.compose %v6183, %v6182
        %v6185 = vextract.low.u32 %v6184
        %v6186 = vextract.high.u32 %v6184
        %v6187 = vmul.u32.u64.compose %v6183, %v6178
        %v6188 = vextract.low.u32 %v6187
        %v6189 = vextract.high.u32 %v6187
        %v6190 = vmul.u32 %v6183, %v6174
        %v6191 = vadd.s32 %v6186, %v6188
        %vm6192 = vc.u32 %v6186, %v6188
        %v6193 = vadd.s32 %v6189, 1
        %v6194 = vsel %vm6192, %v6193, %v6189
        %v6195 = vadd.s32 %v6190, %v6194
        %v6196 = vadd.s32 %v6195, 536870912
        %v6197 = vshrl.u32 %v6196, 30
        %v6198 = vshll.u32 %v6197, 30
        %v6199 = vsub.s32 %v6195, %v6198
        %vm6200 = vcmp.lt.s32.totalorder %v6199, 0
        %v6201 = vsub.s32 0, %v6199
        %v6202 = vsel %vm6200, %v6201, %v6199
        %v6203 = vclz %v6202
        %v6204 = vsub.s32 %v6203, 2
        %vm6205 = vcmp.gt.s32.totalorder 0, %v6204
        %v6206 = vsel %vm6205, 0, %v6204
        %v6207 = vsub.s32 32, %v6206
        %v6208 = vshll.u32 %v6199, %v6206
        %v6209 = vshrl.u32 %v6191, %v6207
        %v6210 = vor.u32 %v6208, %v6209
        %v6211 = vsub.s32 4294967266, %v6206
        %v6212 = vadd.s32 %v6211, 127
        %v6213 = vshll.u32 %v6212, 23
        %v6214 = vor.u32 4788187, %v6213
        %v6215 = vand.u32 2147483647, %v6214
        %v6217 = vcvt.s32.f32 %v6210
        %v6218 = vmul.f32 %v6217, %v6215
        %v6219 = vxor.u32 %v6218, 2147483648
        %v6220 = vsel %vm6137, %v6219, %v6218
        %v6221 = vsub.s32 4, %v6197
        %v6222 = vsel %vm6137, %v6221, %v6197
        %v6223 = vsel %vm6136, %v4776, %v6220
        %v6224 = vsel %vm6136, 0, %v6222
        %v6225 = vcosq.f32.pop %v6223
        %v6226 = vsinq.f32.pop %v6223
        %vm6227 = vweird.f32 %v4776
        %v6228 = vadd.s32 %v6224, 3
        %v6229 = vand.u32 %v6228, 3
        %vm6230 = vcmp.lt.s32.totalorder %v6229, 2
        %vm6231 = vcmp.eq.s32.totalorder %v6229, 0
        %v6232 = vxor.u32 %v6226, 2147483648
        %v6233 = vsel %vm6231, %v6225, %v6232
        %vm6234 = vcmp.eq.s32.totalorder %v6229, 2
        %v6235 = vxor.u32 %v6225, 2147483648
        %v6236 = vsel %vm6234, %v6235, %v6226
        %v6237 = vsel %vm6230, %v6233, %v6236
        %v6238 = vsel %vm6227, nan, %v6237
        %v6239 = vand.u32 2147483647, %v4777
        %vm6240 = vcmp.le.f32.partialorder %v6239, 0.7853982
        %vm6241 = vcmp.lt.s32.totalorder %v4777, 0
        %v6242 = vand.u32 %v4777, 2139095040
        %v6243 = vshrl.u32 %v6242, 23
        %v6244 = vsub.s32 %v6243, 127
        %v6245 = vand.u32 2147483647, %v4777
        %v6246 = vand.u32 %v6245, 8388607
        %v6247 = vor.u32 %v6246, 8388608
        %v6248 = vsub.s32 0, %v6247
        %v6249 = vadd.s32 %v6244, 1
        %vm6250 = vcmp.gt.s32.totalorder %v6249, 0
        %v6251 = vsel %vm6250, %v6249, 0
        %v6252 = vshrl.u32 %v6251, 5
        %v6253 = vand.u32 %v6251, 31
        %v6254 = vsub.s32 32, %v6253
        %v6255 = vshrl.u32 683565275, %v6254
        %v6256 = vshll.u32 683565275, %v6253
        %v6257 = vshrl.u32 2475754826, %v6254
        %v6258 = vor.u32 %v6256, %v6257
        %v6259 = vshll.u32 2475754826, %v6253
        %v6260 = vshrl.u32 2131351028, %v6254
        %v6261 = vor.u32 %v6259, %v6260
        %v6262 = vshll.u32 2131351028, %v6253
        %v6263 = vshrl.u32 2102212464, %v6254
        %v6264 = vor.u32 %v6262, %v6263
        %v6265 = vshll.u32 2102212464, %v6253
        %v6266 = vshrl.u32 920167782, %v6254
        %v6267 = vor.u32 %v6265, %v6266
        %v6268 = vshll.u32 920167782, %v6253
        %v6269 = vshrl.u32 1326507024, %v6254
        %v6270 = vor.u32 %v6268, %v6269
        %vm6271 = vcmp.lt.s32.totalorder %v6252, 1
        %vm6272 = vcmp.lt.s32.totalorder %v6252, 2
        %vm6273 = vcmp.lt.s32.totalorder %v6252, 3
        %vm6274 = vcmp.lt.s32.totalorder %v6252, 4
        %v6275 = vsel %vm6271, %v6255, %v6258
        %v6276 = vsel %vm6274, %v6264, 2102212464
        %v6277 = vsel %vm6273, %v6261, %v6276
        %v6278 = vsel %vm6272, %v6275, %v6277
        %v6279 = vsel %vm6271, %v6258, %v6261
        %v6280 = vsel %vm6274, %v6267, 920167782
        %v6281 = vsel %vm6273, %v6264, %v6280
        %v6282 = vsel %vm6272, %v6279, %v6281
        %v6283 = vsel %vm6271, %v6261, %v6264
        %v6284 = vsel %vm6274, %v6270, 1326507024
        %v6285 = vsel %vm6273, %v6267, %v6284
        %v6286 = vsel %vm6272, %v6283, %v6285
        %v6287 = vshll.u32 %v6247, 8
        %v6288 = vmul.u32.u64.compose %v6287, %v6286
        %v6289 = vextract.low.u32 %v6288
        %v6290 = vextract.high.u32 %v6288
        %v6291 = vmul.u32.u64.compose %v6287, %v6282
        %v6292 = vextract.low.u32 %v6291
        %v6293 = vextract.high.u32 %v6291
        %v6294 = vmul.u32 %v6287, %v6278
        %v6295 = vadd.s32 %v6290, %v6292
        %vm6296 = vc.u32 %v6290, %v6292
        %v6297 = vadd.s32 %v6293, 1
        %v6298 = vsel %vm6296, %v6297, %v6293
        %v6299 = vadd.s32 %v6294, %v6298
        %v6300 = vadd.s32 %v6299, 536870912
        %v6301 = vshrl.u32 %v6300, 30
        %v6302 = vshll.u32 %v6301, 30
        %v6303 = vsub.s32 %v6299, %v6302
        %vm6304 = vcmp.lt.s32.totalorder %v6303, 0
        %v6305 = vsub.s32 0, %v6303
        %v6306 = vsel %vm6304, %v6305, %v6303
        %v6307 = vclz %v6306
        %v6308 = vsub.s32 %v6307, 2
        %vm6309 = vcmp.gt.s32.totalorder 0, %v6308
        %v6310 = vsel %vm6309, 0, %v6308
        %v6311 = vsub.s32 32, %v6310
        %v6312 = vshll.u32 %v6303, %v6310
        %v6313 = vshrl.u32 %v6295, %v6311
        %v6314 = vor.u32 %v6312, %v6313
        %v6315 = vsub.s32 4294967266, %v6310
        %v6316 = vadd.s32 %v6315, 127
        %v6317 = vshll.u32 %v6316, 23
        %v6318 = vor.u32 4788187, %v6317
        %v6319 = vand.u32 2147483647, %v6318
        %v6321 = vcvt.s32.f32 %v6314
        %v6322 = vmul.f32 %v6321, %v6319
        %v6323 = vxor.u32 %v6322, 2147483648
        %v6324 = vsel %vm6241, %v6323, %v6322
        %v6325 = vsub.s32 4, %v6301
        %v6326 = vsel %vm6241, %v6325, %v6301
        %v6327 = vsel %vm6240, %v4777, %v6324
        %v6328 = vsel %vm6240, 0, %v6326
        %v6329 = vcosq.f32.pop %v6327
        %v6330 = vsinq.f32.pop %v6327
        %vm6331 = vweird.f32 %v4777
        %v6332 = vadd.s32 %v6328, 3
        %v6333 = vand.u32 %v6332, 3
        %vm6334 = vcmp.lt.s32.totalorder %v6333, 2
        %vm6335 = vcmp.eq.s32.totalorder %v6333, 0
        %v6336 = vxor.u32 %v6330, 2147483648
        %v6337 = vsel %vm6335, %v6329, %v6336
        %vm6338 = vcmp.eq.s32.totalorder %v6333, 2
        %v6339 = vxor.u32 %v6329, 2147483648
        %v6340 = vsel %vm6338, %v6339, %v6330
        %v6341 = vsel %vm6334, %v6337, %v6340
        %v6342 = vsel %vm6331, nan, %v6341
        %v6343 = vand.u32 2147483647, %v4778
        %vm6344 = vcmp.le.f32.partialorder %v6343, 0.7853982
        %vm6345 = vcmp.lt.s32.totalorder %v4778, 0
        %v6346 = vand.u32 %v4778, 2139095040
        %v6347 = vshrl.u32 %v6346, 23
        %v6348 = vsub.s32 %v6347, 127
        %v6349 = vand.u32 2147483647, %v4778
        %v6350 = vand.u32 %v6349, 8388607
        %v6351 = vor.u32 %v6350, 8388608
        %v6352 = vsub.s32 0, %v6351
        %v6353 = vadd.s32 %v6348, 1
        %vm6354 = vcmp.gt.s32.totalorder %v6353, 0
        %v6355 = vsel %vm6354, %v6353, 0
        %v6356 = vshrl.u32 %v6355, 5
        %v6357 = vand.u32 %v6355, 31
        %v6358 = vsub.s32 32, %v6357
        %v6359 = vshrl.u32 683565275, %v6358
        %v6360 = vshll.u32 683565275, %v6357
        %v6361 = vshrl.u32 2475754826, %v6358
        %v6362 = vor.u32 %v6360, %v6361
        %v6363 = vshll.u32 2475754826, %v6357
        %v6364 = vshrl.u32 2131351028, %v6358
        %v6365 = vor.u32 %v6363, %v6364
        %v6366 = vshll.u32 2131351028, %v6357
        %v6367 = vshrl.u32 2102212464, %v6358
        %v6368 = vor.u32 %v6366, %v6367
        %v6369 = vshll.u32 2102212464, %v6357
        %v6370 = vshrl.u32 920167782, %v6358
        %v6371 = vor.u32 %v6369, %v6370
        %v6372 = vshll.u32 920167782, %v6357
        %v6373 = vshrl.u32 1326507024, %v6358
        %v6374 = vor.u32 %v6372, %v6373
        %vm6375 = vcmp.lt.s32.totalorder %v6356, 1
        %vm6376 = vcmp.lt.s32.totalorder %v6356, 2
        %vm6377 = vcmp.lt.s32.totalorder %v6356, 3
        %vm6378 = vcmp.lt.s32.totalorder %v6356, 4
        %v6379 = vsel %vm6375, %v6359, %v6362
        %v6380 = vsel %vm6378, %v6368, 2102212464
        %v6381 = vsel %vm6377, %v6365, %v6380
        %v6382 = vsel %vm6376, %v6379, %v6381
        %v6383 = vsel %vm6375, %v6362, %v6365
        %v6384 = vsel %vm6378, %v6371, 920167782
        %v6385 = vsel %vm6377, %v6368, %v6384
        %v6386 = vsel %vm6376, %v6383, %v6385
        %v6387 = vsel %vm6375, %v6365, %v6368
        %v6388 = vsel %vm6378, %v6374, 1326507024
        %v6389 = vsel %vm6377, %v6371, %v6388
        %v6390 = vsel %vm6376, %v6387, %v6389
        %v6391 = vshll.u32 %v6351, 8
        %v6392 = vmul.u32.u64.compose %v6391, %v6390
        %v6393 = vextract.low.u32 %v6392
        %v6394 = vextract.high.u32 %v6392
        %v6395 = vmul.u32.u64.compose %v6391, %v6386
        %v6396 = vextract.low.u32 %v6395
        %v6397 = vextract.high.u32 %v6395
        %v6398 = vmul.u32 %v6391, %v6382
        %v6399 = vadd.s32 %v6394, %v6396
        %vm6400 = vc.u32 %v6394, %v6396
        %v6401 = vadd.s32 %v6397, 1
        %v6402 = vsel %vm6400, %v6401, %v6397
        %v6403 = vadd.s32 %v6398, %v6402
        %v6404 = vadd.s32 %v6403, 536870912
        %v6405 = vshrl.u32 %v6404, 30
        %v6406 = vshll.u32 %v6405, 30
        %v6407 = vsub.s32 %v6403, %v6406
        %vm6408 = vcmp.lt.s32.totalorder %v6407, 0
        %v6409 = vsub.s32 0, %v6407
        %v6410 = vsel %vm6408, %v6409, %v6407
        %v6411 = vclz %v6410
        %v6412 = vsub.s32 %v6411, 2
        %vm6413 = vcmp.gt.s32.totalorder 0, %v6412
        %v6414 = vsel %vm6413, 0, %v6412
        %v6415 = vsub.s32 32, %v6414
        %v6416 = vshll.u32 %v6407, %v6414
        %v6417 = vshrl.u32 %v6399, %v6415
        %v6418 = vor.u32 %v6416, %v6417
        %v6419 = vsub.s32 4294967266, %v6414
        %v6420 = vadd.s32 %v6419, 127
        %v6421 = vshll.u32 %v6420, 23
        %v6422 = vor.u32 4788187, %v6421
        %v6423 = vand.u32 2147483647, %v6422
        %v6425 = vcvt.s32.f32 %v6418
        %v6426 = vmul.f32 %v6425, %v6423
        %v6427 = vxor.u32 %v6426, 2147483648
        %v6428 = vsel %vm6345, %v6427, %v6426
        %v6429 = vsub.s32 4, %v6405
        %v6430 = vsel %vm6345, %v6429, %v6405
        %v6431 = vsel %vm6344, %v4778, %v6428
        %v6432 = vsel %vm6344, 0, %v6430
        %v6433 = vcosq.f32.pop %v6431
        %v6434 = vsinq.f32.pop %v6431
        %vm6435 = vweird.f32 %v4778
        %v6436 = vadd.s32 %v6432, 3
        %v6437 = vand.u32 %v6436, 3
        %vm6438 = vcmp.lt.s32.totalorder %v6437, 2
        %vm6439 = vcmp.eq.s32.totalorder %v6437, 0
        %v6440 = vxor.u32 %v6434, 2147483648
        %v6441 = vsel %vm6439, %v6433, %v6440
        %vm6442 = vcmp.eq.s32.totalorder %v6437, 2
        %v6443 = vxor.u32 %v6433, 2147483648
        %v6444 = vsel %vm6442, %v6443, %v6434
        %v6445 = vsel %vm6438, %v6441, %v6444
        %v6446 = vsel %vm6435, nan, %v6445
        %v6447 = vand.u32 2147483647, %v4779
        %vm6448 = vcmp.le.f32.partialorder %v6447, 0.7853982
        %vm6449 = vcmp.lt.s32.totalorder %v4779, 0
        %v6450 = vand.u32 %v4779, 2139095040
        %v6451 = vshrl.u32 %v6450, 23
        %v6452 = vsub.s32 %v6451, 127
        %v6453 = vand.u32 2147483647, %v4779
        %v6454 = vand.u32 %v6453, 8388607
        %v6455 = vor.u32 %v6454, 8388608
        %v6456 = vsub.s32 0, %v6455
        %v6457 = vadd.s32 %v6452, 1
        %vm6458 = vcmp.gt.s32.totalorder %v6457, 0
        %v6459 = vsel %vm6458, %v6457, 0
        %v6460 = vshrl.u32 %v6459, 5
        %v6461 = vand.u32 %v6459, 31
        %v6462 = vsub.s32 32, %v6461
        %v6463 = vshrl.u32 683565275, %v6462
        %v6464 = vshll.u32 683565275, %v6461
        %v6465 = vshrl.u32 2475754826, %v6462
        %v6466 = vor.u32 %v6464, %v6465
        %v6467 = vshll.u32 2475754826, %v6461
        %v6468 = vshrl.u32 2131351028, %v6462
        %v6469 = vor.u32 %v6467, %v6468
        %v6470 = vshll.u32 2131351028, %v6461
        %v6471 = vshrl.u32 2102212464, %v6462
        %v6472 = vor.u32 %v6470, %v6471
        %v6473 = vshll.u32 2102212464, %v6461
        %v6474 = vshrl.u32 920167782, %v6462
        %v6475 = vor.u32 %v6473, %v6474
        %v6476 = vshll.u32 920167782, %v6461
        %v6477 = vshrl.u32 1326507024, %v6462
        %v6478 = vor.u32 %v6476, %v6477
        %vm6479 = vcmp.lt.s32.totalorder %v6460, 1
        %vm6480 = vcmp.lt.s32.totalorder %v6460, 2
        %vm6481 = vcmp.lt.s32.totalorder %v6460, 3
        %vm6482 = vcmp.lt.s32.totalorder %v6460, 4
        %v6483 = vsel %vm6479, %v6463, %v6466
        %v6484 = vsel %vm6482, %v6472, 2102212464
        %v6485 = vsel %vm6481, %v6469, %v6484
        %v6486 = vsel %vm6480, %v6483, %v6485
        %v6487 = vsel %vm6479, %v6466, %v6469
        %v6488 = vsel %vm6482, %v6475, 920167782
        %v6489 = vsel %vm6481, %v6472, %v6488
        %v6490 = vsel %vm6480, %v6487, %v6489
        %v6491 = vsel %vm6479, %v6469, %v6472
        %v6492 = vsel %vm6482, %v6478, 1326507024
        %v6493 = vsel %vm6481, %v6475, %v6492
        %v6494 = vsel %vm6480, %v6491, %v6493
        %v6495 = vshll.u32 %v6455, 8
        %v6496 = vmul.u32.u64.compose %v6495, %v6494
        %v6497 = vextract.low.u32 %v6496
        %v6498 = vextract.high.u32 %v6496
        %v6499 = vmul.u32.u64.compose %v6495, %v6490
        %v6500 = vextract.low.u32 %v6499
        %v6501 = vextract.high.u32 %v6499
        %v6502 = vmul.u32 %v6495, %v6486
        %v6503 = vadd.s32 %v6498, %v6500
        %vm6504 = vc.u32 %v6498, %v6500
        %v6505 = vadd.s32 %v6501, 1
        %v6506 = vsel %vm6504, %v6505, %v6501
        %v6507 = vadd.s32 %v6502, %v6506
        %v6508 = vadd.s32 %v6507, 536870912
        %v6509 = vshrl.u32 %v6508, 30
        %v6510 = vshll.u32 %v6509, 30
        %v6511 = vsub.s32 %v6507, %v6510
        %vm6512 = vcmp.lt.s32.totalorder %v6511, 0
        %v6513 = vsub.s32 0, %v6511
        %v6514 = vsel %vm6512, %v6513, %v6511
        %v6515 = vclz %v6514
        %v6516 = vsub.s32 %v6515, 2
        %vm6517 = vcmp.gt.s32.totalorder 0, %v6516
        %v6518 = vsel %vm6517, 0, %v6516
        %v6519 = vsub.s32 32, %v6518
        %v6520 = vshll.u32 %v6511, %v6518
        %v6521 = vshrl.u32 %v6503, %v6519
        %v6522 = vor.u32 %v6520, %v6521
        %v6523 = vsub.s32 4294967266, %v6518
        %v6524 = vadd.s32 %v6523, 127
        %v6525 = vshll.u32 %v6524, 23
        %v6526 = vor.u32 4788187, %v6525
        %v6527 = vand.u32 2147483647, %v6526
        %v6529 = vcvt.s32.f32 %v6522
        %v6530 = vmul.f32 %v6529, %v6527
        %v6531 = vxor.u32 %v6530, 2147483648
        %v6532 = vsel %vm6449, %v6531, %v6530
        %v6533 = vsub.s32 4, %v6509
        %v6534 = vsel %vm6449, %v6533, %v6509
        %v6535 = vsel %vm6448, %v4779, %v6532
        %v6536 = vsel %vm6448, 0, %v6534
        %v6537 = vcosq.f32.pop %v6535
        %v6538 = vsinq.f32.pop %v6535
        %vm6539 = vweird.f32 %v4779
        %v6540 = vadd.s32 %v6536, 3
        %v6541 = vand.u32 %v6540, 3
        %vm6542 = vcmp.lt.s32.totalorder %v6541, 2
        %vm6543 = vcmp.eq.s32.totalorder %v6541, 0
        %v6544 = vxor.u32 %v6538, 2147483648
        %v6545 = vsel %vm6543, %v6537, %v6544
        %vm6546 = vcmp.eq.s32.totalorder %v6541, 2
        %v6547 = vxor.u32 %v6537, 2147483648
        %v6548 = vsel %vm6546, %v6547, %v6538
        %v6549 = vsel %vm6542, %v6545, %v6548
        %v6550 = vsel %vm6539, nan, %v6549
        %v6551 = vand.u32 2147483647, %v4780
        %vm6552 = vcmp.le.f32.partialorder %v6551, 0.7853982
        %vm6553 = vcmp.lt.s32.totalorder %v4780, 0
        %v6554 = vand.u32 %v4780, 2139095040
        %v6555 = vshrl.u32 %v6554, 23
        %v6556 = vsub.s32 %v6555, 127
        %v6557 = vand.u32 2147483647, %v4780
        %v6558 = vand.u32 %v6557, 8388607
        %v6559 = vor.u32 %v6558, 8388608
        %v6560 = vsub.s32 0, %v6559
        %v6561 = vadd.s32 %v6556, 1
        %vm6562 = vcmp.gt.s32.totalorder %v6561, 0
        %v6563 = vsel %vm6562, %v6561, 0
        %v6564 = vshrl.u32 %v6563, 5
        %v6565 = vand.u32 %v6563, 31
        %v6566 = vsub.s32 32, %v6565
        %v6567 = vshrl.u32 683565275, %v6566
        %v6568 = vshll.u32 683565275, %v6565
        %v6569 = vshrl.u32 2475754826, %v6566
        %v6570 = vor.u32 %v6568, %v6569
        %v6571 = vshll.u32 2475754826, %v6565
        %v6572 = vshrl.u32 2131351028, %v6566
        %v6573 = vor.u32 %v6571, %v6572
        %v6574 = vshll.u32 2131351028, %v6565
        %v6575 = vshrl.u32 2102212464, %v6566
        %v6576 = vor.u32 %v6574, %v6575
        %v6577 = vshll.u32 2102212464, %v6565
        %v6578 = vshrl.u32 920167782, %v6566
        %v6579 = vor.u32 %v6577, %v6578
        %v6580 = vshll.u32 920167782, %v6565
        %v6581 = vshrl.u32 1326507024, %v6566
        %v6582 = vor.u32 %v6580, %v6581
        %vm6583 = vcmp.lt.s32.totalorder %v6564, 1
        %vm6584 = vcmp.lt.s32.totalorder %v6564, 2
        %vm6585 = vcmp.lt.s32.totalorder %v6564, 3
        %vm6586 = vcmp.lt.s32.totalorder %v6564, 4
        %v6587 = vsel %vm6583, %v6567, %v6570
        %v6588 = vsel %vm6586, %v6576, 2102212464
        %v6589 = vsel %vm6585, %v6573, %v6588
        %v6590 = vsel %vm6584, %v6587, %v6589
        %v6591 = vsel %vm6583, %v6570, %v6573
        %v6592 = vsel %vm6586, %v6579, 920167782
        %v6593 = vsel %vm6585, %v6576, %v6592
        %v6594 = vsel %vm6584, %v6591, %v6593
        %v6595 = vsel %vm6583, %v6573, %v6576
        %v6596 = vsel %vm6586, %v6582, 1326507024
        %v6597 = vsel %vm6585, %v6579, %v6596
        %v6598 = vsel %vm6584, %v6595, %v6597
        %v6599 = vshll.u32 %v6559, 8
        %v6600 = vmul.u32.u64.compose %v6599, %v6598
        %v6601 = vextract.low.u32 %v6600
        %v6602 = vextract.high.u32 %v6600
        %v6603 = vmul.u32.u64.compose %v6599, %v6594
        %v6604 = vextract.low.u32 %v6603
        %v6605 = vextract.high.u32 %v6603
        %v6606 = vmul.u32 %v6599, %v6590
        %v6607 = vadd.s32 %v6602, %v6604
        %vm6608 = vc.u32 %v6602, %v6604
        %v6609 = vadd.s32 %v6605, 1
        %v6610 = vsel %vm6608, %v6609, %v6605
        %v6611 = vadd.s32 %v6606, %v6610
        %v6612 = vadd.s32 %v6611, 536870912
        %v6613 = vshrl.u32 %v6612, 30
        %v6614 = vshll.u32 %v6613, 30
        %v6615 = vsub.s32 %v6611, %v6614
        %vm6616 = vcmp.lt.s32.totalorder %v6615, 0
        %v6617 = vsub.s32 0, %v6615
        %v6618 = vsel %vm6616, %v6617, %v6615
        %v6619 = vclz %v6618
        %v6620 = vsub.s32 %v6619, 2
        %vm6621 = vcmp.gt.s32.totalorder 0, %v6620
        %v6622 = vsel %vm6621, 0, %v6620
        %v6623 = vsub.s32 32, %v6622
        %v6624 = vshll.u32 %v6615, %v6622
        %v6625 = vshrl.u32 %v6607, %v6623
        %v6626 = vor.u32 %v6624, %v6625
        %v6627 = vsub.s32 4294967266, %v6622
        %v6628 = vadd.s32 %v6627, 127
        %v6629 = vshll.u32 %v6628, 23
        %v6630 = vor.u32 4788187, %v6629
        %v6631 = vand.u32 2147483647, %v6630
        %v6633 = vcvt.s32.f32 %v6626
        %v6634 = vmul.f32 %v6633, %v6631
        %v6635 = vxor.u32 %v6634, 2147483648
        %v6636 = vsel %vm6553, %v6635, %v6634
        %v6637 = vsub.s32 4, %v6613
        %v6638 = vsel %vm6553, %v6637, %v6613
        %v6639 = vsel %vm6552, %v4780, %v6636
        %v6640 = vsel %vm6552, 0, %v6638
        %v6641 = vcosq.f32.pop %v6639
        %v6642 = vsinq.f32.pop %v6639
        %vm6643 = vweird.f32 %v4780
        %v6644 = vadd.s32 %v6640, 3
        %v6645 = vand.u32 %v6644, 3
        %vm6646 = vcmp.lt.s32.totalorder %v6645, 2
        %vm6647 = vcmp.eq.s32.totalorder %v6645, 0
        %v6648 = vxor.u32 %v6642, 2147483648
        %v6649 = vsel %vm6647, %v6641, %v6648
        %vm6650 = vcmp.eq.s32.totalorder %v6645, 2
        %v6651 = vxor.u32 %v6641, 2147483648
        %v6652 = vsel %vm6650, %v6651, %v6642
        %v6653 = vsel %vm6646, %v6649, %v6652
        %v6654 = vsel %vm6643, nan, %v6653
        %v6655 = vand.u32 2147483647, %v4781
        %vm6656 = vcmp.le.f32.partialorder %v6655, 0.7853982
        %vm6657 = vcmp.lt.s32.totalorder %v4781, 0
        %v6658 = vand.u32 %v4781, 2139095040
        %v6659 = vshrl.u32 %v6658, 23
        %v6660 = vsub.s32 %v6659, 127
        %v6661 = vand.u32 2147483647, %v4781
        %v6662 = vand.u32 %v6661, 8388607
        %v6663 = vor.u32 %v6662, 8388608
        %v6664 = vsub.s32 0, %v6663
        %v6665 = vadd.s32 %v6660, 1
        %vm6666 = vcmp.gt.s32.totalorder %v6665, 0
        %v6667 = vsel %vm6666, %v6665, 0
        %v6668 = vshrl.u32 %v6667, 5
        %v6669 = vand.u32 %v6667, 31
        %v6670 = vsub.s32 32, %v6669
        %v6671 = vshrl.u32 683565275, %v6670
        %v6672 = vshll.u32 683565275, %v6669
        %v6673 = vshrl.u32 2475754826, %v6670
        %v6674 = vor.u32 %v6672, %v6673
        %v6675 = vshll.u32 2475754826, %v6669
        %v6676 = vshrl.u32 2131351028, %v6670
        %v6677 = vor.u32 %v6675, %v6676
        %v6678 = vshll.u32 2131351028, %v6669
        %v6679 = vshrl.u32 2102212464, %v6670
        %v6680 = vor.u32 %v6678, %v6679
        %v6681 = vshll.u32 2102212464, %v6669
        %v6682 = vshrl.u32 920167782, %v6670
        %v6683 = vor.u32 %v6681, %v6682
        %v6684 = vshll.u32 920167782, %v6669
        %v6685 = vshrl.u32 1326507024, %v6670
        %v6686 = vor.u32 %v6684, %v6685
        %vm6687 = vcmp.lt.s32.totalorder %v6668, 1
        %vm6688 = vcmp.lt.s32.totalorder %v6668, 2
        %vm6689 = vcmp.lt.s32.totalorder %v6668, 3
        %vm6690 = vcmp.lt.s32.totalorder %v6668, 4
        %v6691 = vsel %vm6687, %v6671, %v6674
        %v6692 = vsel %vm6690, %v6680, 2102212464
        %v6693 = vsel %vm6689, %v6677, %v6692
        %v6694 = vsel %vm6688, %v6691, %v6693
        %v6695 = vsel %vm6687, %v6674, %v6677
        %v6696 = vsel %vm6690, %v6683, 920167782
        %v6697 = vsel %vm6689, %v6680, %v6696
        %v6698 = vsel %vm6688, %v6695, %v6697
        %v6699 = vsel %vm6687, %v6677, %v6680
        %v6700 = vsel %vm6690, %v6686, 1326507024
        %v6701 = vsel %vm6689, %v6683, %v6700
        %v6702 = vsel %vm6688, %v6699, %v6701
        %v6703 = vshll.u32 %v6663, 8
        %v6704 = vmul.u32.u64.compose %v6703, %v6702
        %v6705 = vextract.low.u32 %v6704
        %v6706 = vextract.high.u32 %v6704
        %v6707 = vmul.u32.u64.compose %v6703, %v6698
        %v6708 = vextract.low.u32 %v6707
        %v6709 = vextract.high.u32 %v6707
        %v6710 = vmul.u32 %v6703, %v6694
        %v6711 = vadd.s32 %v6706, %v6708
        %vm6712 = vc.u32 %v6706, %v6708
        %v6713 = vadd.s32 %v6709, 1
        %v6714 = vsel %vm6712, %v6713, %v6709
        %v6715 = vadd.s32 %v6710, %v6714
        %v6716 = vadd.s32 %v6715, 536870912
        %v6717 = vshrl.u32 %v6716, 30
        %v6718 = vshll.u32 %v6717, 30
        %v6719 = vsub.s32 %v6715, %v6718
        %vm6720 = vcmp.lt.s32.totalorder %v6719, 0
        %v6721 = vsub.s32 0, %v6719
        %v6722 = vsel %vm6720, %v6721, %v6719
        %v6723 = vclz %v6722
        %v6724 = vsub.s32 %v6723, 2
        %vm6725 = vcmp.gt.s32.totalorder 0, %v6724
        %v6726 = vsel %vm6725, 0, %v6724
        %v6727 = vsub.s32 32, %v6726
        %v6728 = vshll.u32 %v6719, %v6726
        %v6729 = vshrl.u32 %v6711, %v6727
        %v6730 = vor.u32 %v6728, %v6729
        %v6731 = vsub.s32 4294967266, %v6726
        %v6732 = vadd.s32 %v6731, 127
        %v6733 = vshll.u32 %v6732, 23
        %v6734 = vor.u32 4788187, %v6733
        %v6735 = vand.u32 2147483647, %v6734
        %v6737 = vcvt.s32.f32 %v6730
        %v6738 = vmul.f32 %v6737, %v6735
        %v6739 = vxor.u32 %v6738, 2147483648
        %v6740 = vsel %vm6657, %v6739, %v6738
        %v6741 = vsub.s32 4, %v6717
        %v6742 = vsel %vm6657, %v6741, %v6717
        %v6743 = vsel %vm6656, %v4781, %v6740
        %v6744 = vsel %vm6656, 0, %v6742
        %v6745 = vcosq.f32.pop %v6743
        %v6746 = vsinq.f32.pop %v6743
        %vm6747 = vweird.f32 %v4781
        %v6748 = vadd.s32 %v6744, 3
        %v6749 = vand.u32 %v6748, 3
        %vm6750 = vcmp.lt.s32.totalorder %v6749, 2
        %vm6751 = vcmp.eq.s32.totalorder %v6749, 0
        %v6752 = vxor.u32 %v6746, 2147483648
        %v6753 = vsel %vm6751, %v6745, %v6752
        %vm6754 = vcmp.eq.s32.totalorder %v6749, 2
        %v6755 = vxor.u32 %v6745, 2147483648
        %v6756 = vsel %vm6754, %v6755, %v6746
        %v6757 = vsel %vm6750, %v6753, %v6756
        %v6758 = vsel %vm6747, nan, %v6757
        %v6759 = vand.u32 2147483647, %v4782
        %vm6760 = vcmp.le.f32.partialorder %v6759, 0.7853982
        %vm6761 = vcmp.lt.s32.totalorder %v4782, 0
        %v6762 = vand.u32 %v4782, 2139095040
        %v6763 = vshrl.u32 %v6762, 23
        %v6764 = vsub.s32 %v6763, 127
        %v6765 = vand.u32 2147483647, %v4782
        %v6766 = vand.u32 %v6765, 8388607
        %v6767 = vor.u32 %v6766, 8388608
        %v6768 = vsub.s32 0, %v6767
        %v6769 = vadd.s32 %v6764, 1
        %vm6770 = vcmp.gt.s32.totalorder %v6769, 0
        %v6771 = vsel %vm6770, %v6769, 0
        %v6772 = vshrl.u32 %v6771, 5
        %v6773 = vand.u32 %v6771, 31
        %v6774 = vsub.s32 32, %v6773
        %v6775 = vshrl.u32 683565275, %v6774
        %v6776 = vshll.u32 683565275, %v6773
        %v6777 = vshrl.u32 2475754826, %v6774
        %v6778 = vor.u32 %v6776, %v6777
        %v6779 = vshll.u32 2475754826, %v6773
        %v6780 = vshrl.u32 2131351028, %v6774
        %v6781 = vor.u32 %v6779, %v6780
        %v6782 = vshll.u32 2131351028, %v6773
        %v6783 = vshrl.u32 2102212464, %v6774
        %v6784 = vor.u32 %v6782, %v6783
        %v6785 = vshll.u32 2102212464, %v6773
        %v6786 = vshrl.u32 920167782, %v6774
        %v6787 = vor.u32 %v6785, %v6786
        %v6788 = vshll.u32 920167782, %v6773
        %v6789 = vshrl.u32 1326507024, %v6774
        %v6790 = vor.u32 %v6788, %v6789
        %vm6791 = vcmp.lt.s32.totalorder %v6772, 1
        %vm6792 = vcmp.lt.s32.totalorder %v6772, 2
        %vm6793 = vcmp.lt.s32.totalorder %v6772, 3
        %vm6794 = vcmp.lt.s32.totalorder %v6772, 4
        %v6795 = vsel %vm6791, %v6775, %v6778
        %v6796 = vsel %vm6794, %v6784, 2102212464
        %v6797 = vsel %vm6793, %v6781, %v6796
        %v6798 = vsel %vm6792, %v6795, %v6797
        %v6799 = vsel %vm6791, %v6778, %v6781
        %v6800 = vsel %vm6794, %v6787, 920167782
        %v6801 = vsel %vm6793, %v6784, %v6800
        %v6802 = vsel %vm6792, %v6799, %v6801
        %v6803 = vsel %vm6791, %v6781, %v6784
        %v6804 = vsel %vm6794, %v6790, 1326507024
        %v6805 = vsel %vm6793, %v6787, %v6804
        %v6806 = vsel %vm6792, %v6803, %v6805
        %v6807 = vshll.u32 %v6767, 8
        %v6808 = vmul.u32.u64.compose %v6807, %v6806
        %v6809 = vextract.low.u32 %v6808
        %v6810 = vextract.high.u32 %v6808
        %v6811 = vmul.u32.u64.compose %v6807, %v6802
        %v6812 = vextract.low.u32 %v6811
        %v6813 = vextract.high.u32 %v6811
        %v6814 = vmul.u32 %v6807, %v6798
        %v6815 = vadd.s32 %v6810, %v6812
        %vm6816 = vc.u32 %v6810, %v6812
        %v6817 = vadd.s32 %v6813, 1
        %v6818 = vsel %vm6816, %v6817, %v6813
        %v6819 = vadd.s32 %v6814, %v6818
        %v6820 = vadd.s32 %v6819, 536870912
        %v6821 = vshrl.u32 %v6820, 30
        %v6822 = vshll.u32 %v6821, 30
        %v6823 = vsub.s32 %v6819, %v6822
        %vm6824 = vcmp.lt.s32.totalorder %v6823, 0
        %v6825 = vsub.s32 0, %v6823
        %v6826 = vsel %vm6824, %v6825, %v6823
        %v6827 = vclz %v6826
        %v6828 = vsub.s32 %v6827, 2
        %vm6829 = vcmp.gt.s32.totalorder 0, %v6828
        %v6830 = vsel %vm6829, 0, %v6828
        %v6831 = vsub.s32 32, %v6830
        %v6832 = vshll.u32 %v6823, %v6830
        %v6833 = vshrl.u32 %v6815, %v6831
        %v6834 = vor.u32 %v6832, %v6833
        %v6835 = vsub.s32 4294967266, %v6830
        %v6836 = vadd.s32 %v6835, 127
        %v6837 = vshll.u32 %v6836, 23
        %v6838 = vor.u32 4788187, %v6837
        %v6839 = vand.u32 2147483647, %v6838
        %v6841 = vcvt.s32.f32 %v6834
        %v6842 = vmul.f32 %v6841, %v6839
        %v6843 = vxor.u32 %v6842, 2147483648
        %v6844 = vsel %vm6761, %v6843, %v6842
        %v6845 = vsub.s32 4, %v6821
        %v6846 = vsel %vm6761, %v6845, %v6821
        %v6847 = vsel %vm6760, %v4782, %v6844
        %v6848 = vsel %vm6760, 0, %v6846
        %v6849 = vcosq.f32.pop %v6847
        %v6850 = vsinq.f32.pop %v6847
        %vm6851 = vweird.f32 %v4782
        %v6852 = vadd.s32 %v6848, 3
        %v6853 = vand.u32 %v6852, 3
        %vm6854 = vcmp.lt.s32.totalorder %v6853, 2
        %vm6855 = vcmp.eq.s32.totalorder %v6853, 0
        %v6856 = vxor.u32 %v6850, 2147483648
        %v6857 = vsel %vm6855, %v6849, %v6856
        %vm6858 = vcmp.eq.s32.totalorder %v6853, 2
        %v6859 = vxor.u32 %v6849, 2147483648
        %v6860 = vsel %vm6858, %v6859, %v6850
        %v6861 = vsel %vm6854, %v6857, %v6860
        %v6862 = vsel %vm6851, nan, %v6861
        %6863 = vst [vmem:[%s182] sm:$0xff] %v4886
        %6864 = vst [vmem:[%s182 + $0x8] sm:$0xff] %v4990
        %6865 = vst [vmem:[%s182 + $0x10] sm:$0xff] %v5094
        %6866 = vst [vmem:[%s182 + $0x18] sm:$0xff] %v5198
        %6867 = vst [vmem:[%s182 + $0x20] sm:$0xff] %v5302
        %6868 = vst [vmem:[%s182 + $0x28] sm:$0xff] %v5406
        %6869 = vst [vmem:[%s182 + $0x30] sm:$0xff] %v5510
        %6870 = vst [vmem:[%s182 + $0x38] sm:$0xff] %v5614
        %6871 = vst [vmem:[%s182 + $0x40] sm:$0xff] %v5718
        %6872 = vst [vmem:[%s182 + $0x48] sm:$0xff] %v5822
        %6873 = vst [vmem:[%s182 + $0x50] sm:$0xff] %v5926
        %6874 = vst [vmem:[%s182 + $0x58] sm:$0xff] %v6030
        %6875 = vst [vmem:[%s182 + $0x60] sm:$0xff] %v6134
        %6876 = vst [vmem:[%s182 + $0x68] sm:$0xff] %v6238
        %6877 = vst [vmem:[%s182 + $0x70] sm:$0xff] %v6342
        %6878 = vst [vmem:[%s182 + $0x78] sm:$0xff] %v6446
        %6879 = vst [vmem:[%s182 + $0x80] sm:$0xff] %v6550
        %6880 = vst [vmem:[%s182 + $0x88] sm:$0xff] %v6654
        %6881 = vst [vmem:[%s182 + $0x90] sm:$0xff] %v6758
        %6882 = vst [vmem:[%s182 + $0x98] sm:$0xff] %v6862
        %s6883 = sand.u32 %s75, 1
        %s6884 = scalar_lea.sflag [#allocation4], %s6883
        %s6885 = sand.u32 %s75, 1
        %s6886 = smul.addr %s6885, 160
        %s6887 = scalar_lea.vmem [#allocation7], %s6886
        // Predicated region
        $region37: #{tpu_custom_call.1} parent=27 // pred_check
          %p6888 = pneg %p85
        $region38: #{tpu_custom_call.1} parent=27 // pred_check_branch
          %6890 = sbr.rel (%p6888) target = $region40
        $region39: #{tpu_custom_call.1} parent=27 // pred_region
          %s6891 = smul.u32 2, %s20
          %s6892 = ssub.s32 13, %s6891
          %p6893 = scmp.lt.s32.totalorder %s6892, 2
          %s6894 = scalar_select %p6893, %s6892, 2
          %s6895 = smul.u32 128, %s6894
          %s6896 = smul.u32 %s6895, 10
          %s6898 = ssub.s32 2560, %s6896
          %6899 = vsyncadd %s6884, %s6898
          %p6900 = scmp.ne.s32.totalorder 0, %s6896
          %s6901 = smul.addr %s6891, 10
          %s6902 = smul.addr %s6901, 128
          %s6903 = scalar_lea.hbm %s2, %s6902
          %s6904 = smul.u32 80, %s6894
          %s6905 = sshll.u32 %s6887, 4
          %s6906 = int_to_ptr.vmem [resolvable:$true] %s6905
          %s6907 = sshll.u32 %s6904, 4
          %6911 = dma.vmem_to_hbm [thread:$0]  (%p6900), %s6906, %s6907, %s6903, %s6884, 1280, 1280, 80
        $region40: #{tpu_custom_call.1} parent=27 // pred_fallthru
          _
      $region28: #{tpu_custom_call.1} parent=5 // pred_fallthru
        _
      %p6912 = scmp.le.s32.totalorder 2, %s15
      // Predicated region
      $region41: #{tpu_custom_call.1} parent=5 // pred_check
        %p6913 = pneg %p6912
      $region42: #{tpu_custom_call.1} parent=5 // pred_check_branch
        %6915 = sbr.rel (%p6913) target = $region44
      $region43: #{tpu_custom_call.1} parent=5 // pred_region
        %s6916 = ssub.s32 %s15, 2
        // Predicated region
        $region45: #{tpu_custom_call.1} parent=43 // pred_check
          %p6917 = pneg %p91
        $region46: #{tpu_custom_call.1} parent=43 // pred_check_branch
          %6919 = sbr.rel (%p6917) target = $region48
        $region47: #{tpu_custom_call.1} parent=43 // pred_region
          %s6920 = sand.u32 %s76, 1
          %s6921 = scalar_lea.sflag [#allocation4], %s6920
          %s6922 = sand.u32 %s76, 1
          %s6923 = smul.addr %s6922, 160
          %s6924 = scalar_lea.vmem [#allocation7], %s6923
          %6925 = dma.done %s6921, 2560
        $region48: #{tpu_custom_call.1} parent=43 // pred_fallthru
          _
      $region44: #{tpu_custom_call.1} parent=5 // pred_fallthru
        _
    $region6: #{tpu_custom_call.1} parent=1 // loop_footer
      %s19 = sadd.s32 1, %s15
    $region7: #{tpu_custom_call.1} parent=1 // loop_footer_branch
      %14 = sbr.rel target = $region3
    $region8: #{tpu_custom_call.1} parent=1 // loop_exit
      _
    %6926 = vsyncpa [#allocation3], 1
    %s6927 = scalar_lea.sflag [#allocation3], 1
    %6928 = vsyncpa %s6927, 1
    %6929 = vsyncpa [#allocation6], 1
    %6930 = vsyncpa [#allocation4], 1
    %s6931 = scalar_lea.sflag [#allocation4], 1
    %6932 = vsyncpa %s6931, 1

</llo_original>
